<compile_context>
chip_gen: v7x
topology: tpu7x:2x2x1
jax: 0.10.0
libtpu: 0.0.40
codegen_flags: <defaults>
</compile_context>

<pallas_src>
import jax
import jax.numpy as jnp
from jax.experimental import pallas as pl
from jax.experimental.pallas import tpu as pltpu


BT = 8  # crops (24x24 RGB boxes) processed per grid step


def _prelu(y, a):
    # a is a (1, 1) array (nn.PReLU() has a single shared alpha).
    return jnp.where(y > 0.0, y, a * y)


# ----------------------------------------------------------------------------
# Fused RNet kernel: one grid step = BT crops, start to finish.
# ----------------------------------------------------------------------------
def _rnet_kernel(x_ref, w1_ref, b1_ref, w2_ref, b2_ref, w3_ref, b3_ref,
                 w4_ref, b4_ref, w5_ref, b5_ref, alpha_ref, sel1_ref, sel2_ref,
                 out_ref):
    a1 = alpha_ref[0:1, 0:1]
    a2 = alpha_ref[0:1, 1:2]
    a3 = alpha_ref[0:1, 2:3]
    a4 = alpha_ref[0:1, 3:4]

    def crop_body(n, carry):
        # ------------------------------------------------------------------
        # conv1: 3x3 s1, 3 -> 28, PReLU; streamed together with pool1
        # (MaxPool 3x3, stride 2, floor mode: 22x22 -> 10x10).
        # ------------------------------------------------------------------
        def wcat1(h):                                    # W-dir im2col of image row h
            row = x_ref[n, h]                            # (24, 3)
            return jnp.concatenate([row[0:22, :], row[1:23, :], row[2:24, :]],
                                   axis=-1)              # (22, 9)

        def conv1_row(i):                                # conv1 output row i
            patch = jnp.concatenate([wcat1(i), wcat1(i + 1), wcat1(i + 2)],
                                    axis=-1)             # (22, 27)
            y = jnp.dot(patch.astype(jnp.bfloat16), w1_ref[...],
                        preferred_element_type=jnp.float32) + b1_ref[...]
            return _prelu(y, a1)                         # (22, 28)

        x2 = []                                          # pool1 rows, each (10, 28)
        r_prev = conv1_row(0)
        for p in range(10):
            r0 = r_prev
            r1 = conv1_row(2 * p + 1)
            r2 = conv1_row(2 * p + 2)
            r_prev = r2                                  # shared with next window
            m = jnp.maximum(jnp.maximum(r0, r1), r2)     # (22, 28) max over dy
            sl = jnp.maximum(jnp.maximum(m[0:20, :], m[1:21, :]), m[2:22, :])
            # stride-2 column subsample via 0/1 selection matmul -> (10, 28)
            x2.append(jnp.dot(sel1_ref[...], sl,
                              preferred_element_type=jnp.float32))

        # ------------------------------------------------------------------
        # conv2: 3x3 s1, 28 -> 48, PReLU  (one (64,252)x(252,48) matmul).
        # ------------------------------------------------------------------
        xr2 = [jnp.concatenate([x2[h][0:8, :], x2[h][1:9, :], x2[h][2:10, :]],
                               axis=-1) for h in range(10)]            # (8, 84)
        p2 = [jnp.concatenate([xr2[i], xr2[i + 1], xr2[i + 2]], axis=-1)
              for i in range(8)]                                       # (8, 252)
        big2 = jnp.concatenate(p2, axis=0)                             # (64, 252)
        y2 = jnp.dot(big2.astype(jnp.bfloat16), w2_ref[...],
                     preferred_element_type=jnp.float32) + b2_ref[...]
        y2 = _prelu(y2, a2)                                            # (64, 48)
        rows2 = [y2[8 * i:8 * (i + 1), :] for i in range(8)]           # (8, 48)

        # ------------------------------------------------------------------
        # pool2: MaxPool 3x3, stride 2, floor mode: 8x8 -> 3x3.
        # ------------------------------------------------------------------
        x3 = []                                          # pool2 rows, each (3, 48)
        for p in range(3):
            m = jnp.maximum(jnp.maximum(rows2[2 * p], rows2[2 * p + 1]),
                            rows2[2 * p + 2])                          # (8, 48)
            sl = jnp.maximum(jnp.maximum(m[0:6, :], m[1:7, :]), m[2:8, :])
            x3.append(jnp.dot(sel2_ref[...], sl,
                              preferred_element_type=jnp.float32))     # (3, 48)

        # ------------------------------------------------------------------
        # conv3: 2x2 s1, 48 -> 64, PReLU.
        # ------------------------------------------------------------------
        xr3 = [jnp.concatenate([x3[h][0:2, :], x3[h][1:3, :]], axis=-1)
               for h in range(3)]                                      # (2, 96)
        rows3 = []
        for i in range(2):
            patch = jnp.concatenate([xr3[i], xr3[i + 1]], axis=-1)     # (2, 192)
            y = jnp.dot(patch.astype(jnp.bfloat16), w3_ref[...],
                        preferred_element_type=jnp.float32) + b3_ref[...]
            rows3.append(_prelu(y, a3))                                # (2, 64)

        # ------------------------------------------------------------------
        # Flatten in PyTorch NCHW view order (index = c*4 + h*2 + w): the
        # packed fc4 weight rows are ordered (s = h*2+w, c) to match this
        # lane concatenation, so no transpose is needed.
        # ------------------------------------------------------------------
        flat = jnp.concatenate([rows3[0][0:1, :], rows3[0][1:2, :],
                                rows3[1][0:1, :], rows3[1][1:2, :]],
                               axis=-1)                                # (1, 256)

        # fc4 + PReLU, then fused det/box heads (one (128,5) matmul).
        h4 = jnp.dot(flat.astype(jnp.bfloat16), w4_ref[...],
                     preferred_element_type=jnp.float32) + b4_ref[...]
        h4 = _prelu(h4, a4)                                            # (1, 128)
        yh = jnp.dot(h4.astype(jnp.bfloat16), w5_ref[...],
                     preferred_element_type=jnp.float32) + b5_ref[...] # (1, 5)
        det = 1.0 / (1.0 + jnp.exp(-yh[:, 0:1]))                       # sigmoid head
        out_ref[n] = jnp.concatenate([det, yh[:, 1:5]], axis=-1)       # (1, 5)
        return carry

    jax.lax.fori_loop(0, BT, crop_body, 0)


# ----------------------------------------------------------------------------
# Parameters (PyTorch layouts) and one-time packing into kernel layouts.
# ----------------------------------------------------------------------------
def init_params(key):
    ks = jax.random.split(key, 8)

    def w(k, shape, scale=0.05):
        return jax.random.normal(k, shape, jnp.float32) * scale

    return {
        "conv1_w": w(ks[0], (28, 3, 3, 3)), "conv1_b": jnp.zeros((28,), jnp.float32),
        "prelu1_a": jnp.array([0.25], jnp.float32),
        "conv2_w": w(ks[1], (48, 28, 3, 3)), "conv2_b": jnp.zeros((48,), jnp.float32),
        "prelu2_a": jnp.array([0.25], jnp.float32),
        "conv3_w": w(ks[2], (64, 48, 2, 2)), "conv3_b": jnp.zeros((64,), jnp.float32),
        "prelu3_a": jnp.array([0.25], jnp.float32),
        "fc4_w": w(ks[3], (128, 256)), "fc4_b": jnp.zeros((128,), jnp.float32),
        "prelu4_a": jnp.array([0.25], jnp.float32),
        "fc5_1_w": w(ks[4], (1, 128)), "fc5_1_b": jnp.zeros((1,), jnp.float32),
        "fc5_2_w": w(ks[5], (4, 128)), "fc5_2_b": jnp.zeros((4,), jnp.float32),
        # conv5_3 exists in the PyTorch module but is unused in forward();
        # kept only for parameter parity.
        "fc5_3_w": w(ks[6], (10, 128)), "fc5_3_b": jnp.zeros((10,), jnp.float32),
    }


def pack_params(p):
    """One-time weight repacking into kernel-ready layouts (bf16 matmul mats)."""
    def conv_mat(w):  # (Cout, Cin, k, k) -> (k*k*Cin, Cout), row order (dy, dx, ci)
        cout, cin, k, _ = w.shape
        return jnp.transpose(w, (2, 3, 1, 0)).reshape(k * k * cin, cout).astype(jnp.bfloat16)

    # fc4: PyTorch flat index = c*4 + h*2 + w.  Kernel flat lane order is
    # s*64 + c with s = h*2 + w, so reorder rows accordingly.
    w4 = jnp.transpose(p["fc4_w"].reshape(128, 64, 4), (2, 1, 0)).reshape(256, 128)
    # Fused heads: column 0 = det (fc5_1), columns 1..4 = box (fc5_2).
    w5 = jnp.concatenate([p["fc5_1_w"], p["fc5_2_w"]], axis=0).T        # (128, 5)
    b5 = jnp.concatenate([p["fc5_1_b"], p["fc5_2_b"]])[None, :]          # (1, 5)
    # 0/1 stride-2 column-selection matrices used by the in-kernel max-pool.
    sel1 = (jnp.arange(20)[None, :] == 2 * jnp.arange(10)[:, None]).astype(jnp.float32)
    sel2 = (jnp.arange(6)[None, :] == 2 * jnp.arange(3)[:, None]).astype(jnp.float32)

    return {
        "w1": conv_mat(p["conv1_w"]), "b1": p["conv1_b"][None, :],
        "w2": conv_mat(p["conv2_w"]), "b2": p["conv2_b"][None, :],
        "w3": conv_mat(p["conv3_w"]), "b3": p["conv3_b"][None, :],
        "w4": w4.astype(jnp.bfloat16), "b4": p["fc4_b"][None, :],
        "w5": w5.astype(jnp.bfloat16), "b5": b5,
        "alphas": jnp.concatenate([p["prelu1_a"], p["prelu2_a"],
                                   p["prelu3_a"], p["prelu4_a"]])[None, :],  # (1, 4)
        "sel1": sel1, "sel2": sel2,
    }


# ----------------------------------------------------------------------------
# Full RNet forward: single pallas_call gridded over batch tiles.
# ----------------------------------------------------------------------------
def rnet_forward(params, x_nchw):
    x = jnp.transpose(x_nchw, (0, 2, 3, 1)).astype(jnp.float32)   # NCHW -> NHWC
    b = x.shape[0]
    grid_n = pl.cdiv(b, BT)
    b_pad = grid_n * BT
    if b_pad != b:
        x = jnp.pad(x, ((0, b_pad - b), (0, 0), (0, 0), (0, 0)))

    full = lambda i: (0, 0)
    out = pl.pallas_call(
        _rnet_kernel,
        out_shape=jax.ShapeDtypeStruct((b_pad, 1, 5), jnp.float32),
        grid=(grid_n,),
        in_specs=[
            pl.BlockSpec((BT, 24, 24, 3), lambda i: (i, 0, 0, 0)),   # x (batch tile)
            pl.BlockSpec((27, 28), full),    # w1
            pl.BlockSpec((1, 28), full),     # b1
            pl.BlockSpec((252, 48), full),   # w2
            pl.BlockSpec((1, 48), full),     # b2
            pl.BlockSpec((192, 64), full),   # w3
            pl.BlockSpec((1, 64), full),     # b3
            pl.BlockSpec((256, 128), full),  # w4
            pl.BlockSpec((1, 128), full),    # b4
            pl.BlockSpec((128, 5), full),    # w5 (fused heads)
            pl.BlockSpec((1, 5), full),      # b5
            pl.BlockSpec((1, 4), full),      # PReLU alphas
            pl.BlockSpec((10, 20), full),    # pool1 selection matrix
            pl.BlockSpec((3, 6), full),      # pool2 selection matrix
        ],
        out_specs=pl.BlockSpec((BT, 1, 5), lambda i: (i, 0, 0)),
        compiler_params=pltpu.CompilerParams(
            dimension_semantics=("parallel",),
            internal_scratch_in_bytes=4 * 1024 * 1024,
        ),
    )(x, params["w1"], params["b1"], params["w2"], params["b2"],
      params["w3"], params["b3"], params["w4"], params["b4"],
      params["w5"], params["b5"], params["alphas"],
      params["sel1"], params["sel2"])

    out = out.reshape(b_pad, 5)[:b]
    det = out[:, 0:1]
    box = out[:, 1:5]
    return det, box


# ----------------------------------------------------------------------------
if __name__ == "__main__":
    key = jax.random.PRNGKey(0)
    pkey, xkey = jax.random.split(key)
    params = pack_params(init_params(pkey))

    # RNet expects 24x24 RGB crops; batch = 2.
    x = jax.random.normal(xkey, (2, 3, 24, 24), jnp.float32)

    det, box = jax.jit(rnet_forward)(params, x)
    jax.block_until_ready((det, box))

    assert det.shape == (2, 1) and box.shape == (2, 4)
    assert bool(jnp.all(jnp.isfinite(det))) and bool(jnp.all(jnp.isfinite(box)))
    print("KERNEL_OK")
</pallas_src>

<mosaic_0001>
module attributes {stable_mosaic.version = 11 : i64} {
  func.func @_rnet_kernel(%arg0: i32, %arg1: memref<8x24x24x3xf32, #tpu.memory_space<vmem>>, %arg2: memref<27x28xbf16, #tpu.memory_space<vmem>>, %arg3: memref<1x28xf32, #tpu.memory_space<vmem>>, %arg4: memref<252x48xbf16, #tpu.memory_space<vmem>>, %arg5: memref<1x48xf32, #tpu.memory_space<vmem>>, %arg6: memref<192x64xbf16, #tpu.memory_space<vmem>>, %arg7: memref<1x64xf32, #tpu.memory_space<vmem>>, %arg8: memref<256x128xbf16, #tpu.memory_space<vmem>>, %arg9: memref<1x128xf32, #tpu.memory_space<vmem>>, %arg10: memref<128x5xbf16, #tpu.memory_space<vmem>>, %arg11: memref<1x5xf32, #tpu.memory_space<vmem>>, %arg12: memref<1x4xf32, #tpu.memory_space<vmem>>, %arg13: memref<10x20xf32, #tpu.memory_space<vmem>>, %arg14: memref<3x6xf32, #tpu.memory_space<vmem>>, %arg15: memref<8x1x5xf32, #tpu.memory_space<vmem>>) attributes {dimension_semantics = [#tpu.dimension_semantics<parallel>], iteration_bounds = array<i64: 1>, scalar_prefetch = 0 : i64, scratch_operands = 0 : i64, tpu.core_type = #tpu.core_type<tc>, window_params = [{transform_indices = @transform_0, window_bounds = array<i64: 8, 24, 24, 3>}, {pipeline_mode = #tpu.pipeline_mode<synchronous>, transform_indices = @transform_1, window_bounds = array<i64: 27, 28>}, {pipeline_mode = #tpu.pipeline_mode<synchronous>, transform_indices = @transform_2, window_bounds = array<i64: 1, 28>}, {pipeline_mode = #tpu.pipeline_mode<synchronous>, transform_indices = @transform_3, window_bounds = array<i64: 252, 48>}, {pipeline_mode = #tpu.pipeline_mode<synchronous>, transform_indices = @transform_4, window_bounds = array<i64: 1, 48>}, {pipeline_mode = #tpu.pipeline_mode<synchronous>, transform_indices = @transform_5, window_bounds = array<i64: 192, 64>}, {pipeline_mode = #tpu.pipeline_mode<synchronous>, transform_indices = @transform_6, window_bounds = array<i64: 1, 64>}, {pipeline_mode = #tpu.pipeline_mode<synchronous>, transform_indices = @transform_7, window_bounds = array<i64: 256, 128>}, {pipeline_mode = #tpu.pipeline_mode<synchronous>, transform_indices = @transform_8, window_bounds = array<i64: 1, 128>}, {pipeline_mode = #tpu.pipeline_mode<synchronous>, transform_indices = @transform_9, window_bounds = array<i64: 128, 5>}, {pipeline_mode = #tpu.pipeline_mode<synchronous>, transform_indices = @transform_10, window_bounds = array<i64: 1, 5>}, {pipeline_mode = #tpu.pipeline_mode<synchronous>, transform_indices = @transform_11, window_bounds = array<i64: 1, 4>}, {pipeline_mode = #tpu.pipeline_mode<synchronous>, transform_indices = @transform_12, window_bounds = array<i64: 10, 20>}, {pipeline_mode = #tpu.pipeline_mode<synchronous>, transform_indices = @transform_13, window_bounds = array<i64: 3, 6>}, {transform_indices = @transform_14, window_bounds = array<i64: 8, 1, 5>}]} {
    %c0 = arith.constant 0 : index
    %c0_0 = arith.constant 0 : index
    %0 = vector.load %arg12[%c0, %c0_0] : memref<1x4xf32, #tpu.memory_space<vmem>>, vector<1x1xf32>
    %c0_1 = arith.constant 0 : index
    %c1 = arith.constant 1 : index
    %1 = vector.load %arg12[%c0_1, %c1] : memref<1x4xf32, #tpu.memory_space<vmem>>, vector<1x1xf32>
    %c0_2 = arith.constant 0 : index
    %c2 = arith.constant 2 : index
    %2 = vector.load %arg12[%c0_2, %c2] : memref<1x4xf32, #tpu.memory_space<vmem>>, vector<1x1xf32>
    %c0_3 = arith.constant 0 : index
    %c3 = arith.constant 3 : index
    %3 = vector.load %arg12[%c0_3, %c3] : memref<1x4xf32, #tpu.memory_space<vmem>>, vector<1x1xf32>
    %c0_i32 = arith.constant 0 : i32
    %c8_i32 = arith.constant 8 : i32
    %4 = arith.addi %c0_i32, %c8_i32 : i32
    %c1_i32 = arith.constant 1 : i32
    scf.for %arg16 = %c0_i32 to %4 step %c1_i32  : i32 {
      %5 = arith.index_cast %arg16 : i32 to index
      %c0_5 = arith.constant 0 : index
      %c0_6 = arith.constant 0 : index
      %c0_7 = arith.constant 0 : index
      %6 = vector.load %arg1[%5, %c0_5, %c0_6, %c0_7] : memref<8x24x24x3xf32, #tpu.memory_space<vmem>>, vector<1x1x24x3xf32>
      %7 = vector.shape_cast %6 : vector<1x1x24x3xf32> to vector<24x3xf32>
      %8 = vector.extract_strided_slice %7 {offsets = [0, 0], sizes = [22, 3], strides = [1, 1]} : vector<24x3xf32> to vector<22x3xf32>
      %9 = vector.extract_strided_slice %7 {offsets = [1, 0], sizes = [22, 3], strides = [1, 1]} : vector<24x3xf32> to vector<22x3xf32>
      %10 = vector.extract_strided_slice %7 {offsets = [2, 0], sizes = [22, 3], strides = [1, 1]} : vector<24x3xf32> to vector<22x3xf32>
      %11 = tpu.concatenate %8, %9, %10 in 1 : vector<22x3xf32>, vector<22x3xf32>, vector<22x3xf32> -> vector<22x9xf32>
      %12 = arith.index_cast %arg16 : i32 to index
      %c1_8 = arith.constant 1 : index
      %c0_9 = arith.constant 0 : index
      %c0_10 = arith.constant 0 : index
      %13 = vector.load %arg1[%12, %c1_8, %c0_9, %c0_10] : memref<8x24x24x3xf32, #tpu.memory_space<vmem>>, vector<1x1x24x3xf32>
      %14 = vector.shape_cast %13 : vector<1x1x24x3xf32> to vector<24x3xf32>
      %15 = vector.extract_strided_slice %14 {offsets = [0, 0], sizes = [22, 3], strides = [1, 1]} : vector<24x3xf32> to vector<22x3xf32>
      %16 = vector.extract_strided_slice %14 {offsets = [1, 0], sizes = [22, 3], strides = [1, 1]} : vector<24x3xf32> to vector<22x3xf32>
      %17 = vector.extract_strided_slice %14 {offsets = [2, 0], sizes = [22, 3], strides = [1, 1]} : vector<24x3xf32> to vector<22x3xf32>
      %18 = tpu.concatenate %15, %16, %17 in 1 : vector<22x3xf32>, vector<22x3xf32>, vector<22x3xf32> -> vector<22x9xf32>
      %19 = arith.index_cast %arg16 : i32 to index
      %c2_11 = arith.constant 2 : index
      %c0_12 = arith.constant 0 : index
      %c0_13 = arith.constant 0 : index
      %20 = vector.load %arg1[%19, %c2_11, %c0_12, %c0_13] : memref<8x24x24x3xf32, #tpu.memory_space<vmem>>, vector<1x1x24x3xf32>
      %21 = vector.shape_cast %20 : vector<1x1x24x3xf32> to vector<24x3xf32>
      %22 = vector.extract_strided_slice %21 {offsets = [0, 0], sizes = [22, 3], strides = [1, 1]} : vector<24x3xf32> to vector<22x3xf32>
      %23 = vector.extract_strided_slice %21 {offsets = [1, 0], sizes = [22, 3], strides = [1, 1]} : vector<24x3xf32> to vector<22x3xf32>
      %24 = vector.extract_strided_slice %21 {offsets = [2, 0], sizes = [22, 3], strides = [1, 1]} : vector<24x3xf32> to vector<22x3xf32>
      %25 = tpu.concatenate %22, %23, %24 in 1 : vector<22x3xf32>, vector<22x3xf32>, vector<22x3xf32> -> vector<22x9xf32>
      %26 = tpu.concatenate %11, %18, %25 in 1 : vector<22x9xf32>, vector<22x9xf32>, vector<22x9xf32> -> vector<22x27xf32>
      %27 = arith.truncf %26 : vector<22x27xf32> to vector<22x27xbf16>
      %c0_14 = arith.constant 0 : index
      %c0_15 = arith.constant 0 : index
      %28 = vector.load %arg2[%c0_14, %c0_15] : memref<27x28xbf16, #tpu.memory_space<vmem>>, vector<27x28xbf16>
      %cst = arith.constant dense<0.000000e+00> : vector<22x28xf32>
      %29 = tpu.matmul %27, %28, %cst {dimension_numbers = #tpu.dot_dimension_numbers<[1], [0], [0], [1], [0, 0, 1, 1], [], []>} : vector<22x27xbf16>, vector<27x28xbf16>, vector<22x28xf32> -> vector<22x28xf32>
      %c0_16 = arith.constant 0 : index
      %c0_17 = arith.constant 0 : index
      %30 = vector.load %arg3[%c0_16, %c0_17] : memref<1x28xf32, #tpu.memory_space<vmem>>, vector<1x28xf32>
      %31 = vector.broadcast %30 : vector<1x28xf32> to vector<22x28xf32>
      %32 = arith.addf %29, %31 : vector<22x28xf32>
      %cst_18 = arith.constant 0.000000e+00 : f32
      %33 = vector.broadcast %cst_18 : f32 to vector<22x28xf32>
      %34 = arith.cmpf ogt, %32, %33 : vector<22x28xf32>
      %35 = vector.broadcast %0 : vector<1x1xf32> to vector<22x28xf32>
      %36 = arith.mulf %35, %32 : vector<22x28xf32>
      %37 = arith.select %34, %32, %36 : vector<22x28xi1>, vector<22x28xf32>
      %38 = arith.index_cast %arg16 : i32 to index
      %c1_19 = arith.constant 1 : index
      %c0_20 = arith.constant 0 : index
      %c0_21 = arith.constant 0 : index
      %39 = vector.load %arg1[%38, %c1_19, %c0_20, %c0_21] : memref<8x24x24x3xf32, #tpu.memory_space<vmem>>, vector<1x1x24x3xf32>
      %40 = vector.shape_cast %39 : vector<1x1x24x3xf32> to vector<24x3xf32>
      %41 = vector.extract_strided_slice %40 {offsets = [0, 0], sizes = [22, 3], strides = [1, 1]} : vector<24x3xf32> to vector<22x3xf32>
      %42 = vector.extract_strided_slice %40 {offsets = [1, 0], sizes = [22, 3], strides = [1, 1]} : vector<24x3xf32> to vector<22x3xf32>
      %43 = vector.extract_strided_slice %40 {offsets = [2, 0], sizes = [22, 3], strides = [1, 1]} : vector<24x3xf32> to vector<22x3xf32>
      %44 = tpu.concatenate %41, %42, %43 in 1 : vector<22x3xf32>, vector<22x3xf32>, vector<22x3xf32> -> vector<22x9xf32>
      %45 = arith.index_cast %arg16 : i32 to index
      %c2_22 = arith.constant 2 : index
      %c0_23 = arith.constant 0 : index
      %c0_24 = arith.constant 0 : index
      %46 = vector.load %arg1[%45, %c2_22, %c0_23, %c0_24] : memref<8x24x24x3xf32, #tpu.memory_space<vmem>>, vector<1x1x24x3xf32>
      %47 = vector.shape_cast %46 : vector<1x1x24x3xf32> to vector<24x3xf32>
      %48 = vector.extract_strided_slice %47 {offsets = [0, 0], sizes = [22, 3], strides = [1, 1]} : vector<24x3xf32> to vector<22x3xf32>
      %49 = vector.extract_strided_slice %47 {offsets = [1, 0], sizes = [22, 3], strides = [1, 1]} : vector<24x3xf32> to vector<22x3xf32>
      %50 = vector.extract_strided_slice %47 {offsets = [2, 0], sizes = [22, 3], strides = [1, 1]} : vector<24x3xf32> to vector<22x3xf32>
      %51 = tpu.concatenate %48, %49, %50 in 1 : vector<22x3xf32>, vector<22x3xf32>, vector<22x3xf32> -> vector<22x9xf32>
      %52 = arith.index_cast %arg16 : i32 to index
      %c3_25 = arith.constant 3 : index
      %c0_26 = arith.constant 0 : index
      %c0_27 = arith.constant 0 : index
      %53 = vector.load %arg1[%52, %c3_25, %c0_26, %c0_27] : memref<8x24x24x3xf32, #tpu.memory_space<vmem>>, vector<1x1x24x3xf32>
      %54 = vector.shape_cast %53 : vector<1x1x24x3xf32> to vector<24x3xf32>
      %55 = vector.extract_strided_slice %54 {offsets = [0, 0], sizes = [22, 3], strides = [1, 1]} : vector<24x3xf32> to vector<22x3xf32>
      %56 = vector.extract_strided_slice %54 {offsets = [1, 0], sizes = [22, 3], strides = [1, 1]} : vector<24x3xf32> to vector<22x3xf32>
      %57 = vector.extract_strided_slice %54 {offsets = [2, 0], sizes = [22, 3], strides = [1, 1]} : vector<24x3xf32> to vector<22x3xf32>
      %58 = tpu.concatenate %55, %56, %57 in 1 : vector<22x3xf32>, vector<22x3xf32>, vector<22x3xf32> -> vector<22x9xf32>
      %59 = tpu.concatenate %44, %51, %58 in 1 : vector<22x9xf32>, vector<22x9xf32>, vector<22x9xf32> -> vector<22x27xf32>
      %60 = arith.truncf %59 : vector<22x27xf32> to vector<22x27xbf16>
      %c0_28 = arith.constant 0 : index
      %c0_29 = arith.constant 0 : index
      %61 = vector.load %arg2[%c0_28, %c0_29] : memref<27x28xbf16, #tpu.memory_space<vmem>>, vector<27x28xbf16>
      %cst_30 = arith.constant dense<0.000000e+00> : vector<22x28xf32>
      %62 = tpu.matmul %60, %61, %cst_30 {dimension_numbers = #tpu.dot_dimension_numbers<[1], [0], [0], [1], [0, 0, 1, 1], [], []>} : vector<22x27xbf16>, vector<27x28xbf16>, vector<22x28xf32> -> vector<22x28xf32>
      %c0_31 = arith.constant 0 : index
      %c0_32 = arith.constant 0 : index
      %63 = vector.load %arg3[%c0_31, %c0_32] : memref<1x28xf32, #tpu.memory_space<vmem>>, vector<1x28xf32>
      %64 = vector.broadcast %63 : vector<1x28xf32> to vector<22x28xf32>
      %65 = arith.addf %62, %64 : vector<22x28xf32>
      %cst_33 = arith.constant 0.000000e+00 : f32
      %66 = vector.broadcast %cst_33 : f32 to vector<22x28xf32>
      %67 = arith.cmpf ogt, %65, %66 : vector<22x28xf32>
      %68 = vector.broadcast %0 : vector<1x1xf32> to vector<22x28xf32>
      %69 = arith.mulf %68, %65 : vector<22x28xf32>
      %70 = arith.select %67, %65, %69 : vector<22x28xi1>, vector<22x28xf32>
      %71 = arith.index_cast %arg16 : i32 to index
      %c2_34 = arith.constant 2 : index
      %c0_35 = arith.constant 0 : index
      %c0_36 = arith.constant 0 : index
      %72 = vector.load %arg1[%71, %c2_34, %c0_35, %c0_36] : memref<8x24x24x3xf32, #tpu.memory_space<vmem>>, vector<1x1x24x3xf32>
      %73 = vector.shape_cast %72 : vector<1x1x24x3xf32> to vector<24x3xf32>
      %74 = vector.extract_strided_slice %73 {offsets = [0, 0], sizes = [22, 3], strides = [1, 1]} : vector<24x3xf32> to vector<22x3xf32>
      %75 = vector.extract_strided_slice %73 {offsets = [1, 0], sizes = [22, 3], strides = [1, 1]} : vector<24x3xf32> to vector<22x3xf32>
      %76 = vector.extract_strided_slice %73 {offsets = [2, 0], sizes = [22, 3], strides = [1, 1]} : vector<24x3xf32> to vector<22x3xf32>
      %77 = tpu.concatenate %74, %75, %76 in 1 : vector<22x3xf32>, vector<22x3xf32>, vector<22x3xf32> -> vector<22x9xf32>
      %78 = arith.index_cast %arg16 : i32 to index
      %c3_37 = arith.constant 3 : index
      %c0_38 = arith.constant 0 : index
      %c0_39 = arith.constant 0 : index
      %79 = vector.load %arg1[%78, %c3_37, %c0_38, %c0_39] : memref<8x24x24x3xf32, #tpu.memory_space<vmem>>, vector<1x1x24x3xf32>
      %80 = vector.shape_cast %79 : vector<1x1x24x3xf32> to vector<24x3xf32>
      %81 = vector.extract_strided_slice %80 {offsets = [0, 0], sizes = [22, 3], strides = [1, 1]} : vector<24x3xf32> to vector<22x3xf32>
      %82 = vector.extract_strided_slice %80 {offsets = [1, 0], sizes = [22, 3], strides = [1, 1]} : vector<24x3xf32> to vector<22x3xf32>
      %83 = vector.extract_strided_slice %80 {offsets = [2, 0], sizes = [22, 3], strides = [1, 1]} : vector<24x3xf32> to vector<22x3xf32>
      %84 = tpu.concatenate %81, %82, %83 in 1 : vector<22x3xf32>, vector<22x3xf32>, vector<22x3xf32> -> vector<22x9xf32>
      %85 = arith.index_cast %arg16 : i32 to index
      %c4 = arith.constant 4 : index
      %c0_40 = arith.constant 0 : index
      %c0_41 = arith.constant 0 : index
      %86 = vector.load %arg1[%85, %c4, %c0_40, %c0_41] : memref<8x24x24x3xf32, #tpu.memory_space<vmem>>, vector<1x1x24x3xf32>
      %87 = vector.shape_cast %86 : vector<1x1x24x3xf32> to vector<24x3xf32>
      %88 = vector.extract_strided_slice %87 {offsets = [0, 0], sizes = [22, 3], strides = [1, 1]} : vector<24x3xf32> to vector<22x3xf32>
      %89 = vector.extract_strided_slice %87 {offsets = [1, 0], sizes = [22, 3], strides = [1, 1]} : vector<24x3xf32> to vector<22x3xf32>
      %90 = vector.extract_strided_slice %87 {offsets = [2, 0], sizes = [22, 3], strides = [1, 1]} : vector<24x3xf32> to vector<22x3xf32>
      %91 = tpu.concatenate %88, %89, %90 in 1 : vector<22x3xf32>, vector<22x3xf32>, vector<22x3xf32> -> vector<22x9xf32>
      %92 = tpu.concatenate %77, %84, %91 in 1 : vector<22x9xf32>, vector<22x9xf32>, vector<22x9xf32> -> vector<22x27xf32>
      %93 = arith.truncf %92 : vector<22x27xf32> to vector<22x27xbf16>
      %c0_42 = arith.constant 0 : index
      %c0_43 = arith.constant 0 : index
      %94 = vector.load %arg2[%c0_42, %c0_43] : memref<27x28xbf16, #tpu.memory_space<vmem>>, vector<27x28xbf16>
      %cst_44 = arith.constant dense<0.000000e+00> : vector<22x28xf32>
      %95 = tpu.matmul %93, %94, %cst_44 {dimension_numbers = #tpu.dot_dimension_numbers<[1], [0], [0], [1], [0, 0, 1, 1], [], []>} : vector<22x27xbf16>, vector<27x28xbf16>, vector<22x28xf32> -> vector<22x28xf32>
      %c0_45 = arith.constant 0 : index
      %c0_46 = arith.constant 0 : index
      %96 = vector.load %arg3[%c0_45, %c0_46] : memref<1x28xf32, #tpu.memory_space<vmem>>, vector<1x28xf32>
      %97 = vector.broadcast %96 : vector<1x28xf32> to vector<22x28xf32>
      %98 = arith.addf %95, %97 : vector<22x28xf32>
      %cst_47 = arith.constant 0.000000e+00 : f32
      %99 = vector.broadcast %cst_47 : f32 to vector<22x28xf32>
      %100 = arith.cmpf ogt, %98, %99 : vector<22x28xf32>
      %101 = vector.broadcast %0 : vector<1x1xf32> to vector<22x28xf32>
      %102 = arith.mulf %101, %98 : vector<22x28xf32>
      %103 = arith.select %100, %98, %102 : vector<22x28xi1>, vector<22x28xf32>
      %104 = arith.maximumf %37, %70 : vector<22x28xf32>
      %105 = arith.maximumf %104, %103 : vector<22x28xf32>
      %106 = vector.extract_strided_slice %105 {offsets = [0, 0], sizes = [20, 28], strides = [1, 1]} : vector<22x28xf32> to vector<20x28xf32>
      %107 = vector.extract_strided_slice %105 {offsets = [1, 0], sizes = [20, 28], strides = [1, 1]} : vector<22x28xf32> to vector<20x28xf32>
      %108 = arith.maximumf %106, %107 : vector<20x28xf32>
      %109 = vector.extract_strided_slice %105 {offsets = [2, 0], sizes = [20, 28], strides = [1, 1]} : vector<22x28xf32> to vector<20x28xf32>
      %110 = arith.maximumf %108, %109 : vector<20x28xf32>
      %c0_48 = arith.constant 0 : index
      %c0_49 = arith.constant 0 : index
      %111 = vector.load %arg13[%c0_48, %c0_49] : memref<10x20xf32, #tpu.memory_space<vmem>>, vector<10x20xf32>
      %cst_50 = arith.constant dense<0.000000e+00> : vector<10x28xf32>
      %112 = tpu.matmul %111, %110, %cst_50 {dimension_numbers = #tpu.dot_dimension_numbers<[1], [0], [0], [1], [0, 0, 1, 1], [], []>} : vector<10x20xf32>, vector<20x28xf32>, vector<10x28xf32> -> vector<10x28xf32>
      %113 = arith.index_cast %arg16 : i32 to index
      %c3_51 = arith.constant 3 : index
      %c0_52 = arith.constant 0 : index
      %c0_53 = arith.constant 0 : index
      %114 = vector.load %arg1[%113, %c3_51, %c0_52, %c0_53] : memref<8x24x24x3xf32, #tpu.memory_space<vmem>>, vector<1x1x24x3xf32>
      %115 = vector.shape_cast %114 : vector<1x1x24x3xf32> to vector<24x3xf32>
      %116 = vector.extract_strided_slice %115 {offsets = [0, 0], sizes = [22, 3], strides = [1, 1]} : vector<24x3xf32> to vector<22x3xf32>
      %117 = vector.extract_strided_slice %115 {offsets = [1, 0], sizes = [22, 3], strides = [1, 1]} : vector<24x3xf32> to vector<22x3xf32>
      %118 = vector.extract_strided_slice %115 {offsets = [2, 0], sizes = [22, 3], strides = [1, 1]} : vector<24x3xf32> to vector<22x3xf32>
      %119 = tpu.concatenate %116, %117, %118 in 1 : vector<22x3xf32>, vector<22x3xf32>, vector<22x3xf32> -> vector<22x9xf32>
      %120 = arith.index_cast %arg16 : i32 to index
      %c4_54 = arith.constant 4 : index
      %c0_55 = arith.constant 0 : index
      %c0_56 = arith.constant 0 : index
      %121 = vector.load %arg1[%120, %c4_54, %c0_55, %c0_56] : memref<8x24x24x3xf32, #tpu.memory_space<vmem>>, vector<1x1x24x3xf32>
      %122 = vector.shape_cast %121 : vector<1x1x24x3xf32> to vector<24x3xf32>
      %123 = vector.extract_strided_slice %122 {offsets = [0, 0], sizes = [22, 3], strides = [1, 1]} : vector<24x3xf32> to vector<22x3xf32>
      %124 = vector.extract_strided_slice %122 {offsets = [1, 0], sizes = [22, 3], strides = [1, 1]} : vector<24x3xf32> to vector<22x3xf32>
      %125 = vector.extract_strided_slice %122 {offsets = [2, 0], sizes = [22, 3], strides = [1, 1]} : vector<24x3xf32> to vector<22x3xf32>
      %126 = tpu.concatenate %123, %124, %125 in 1 : vector<22x3xf32>, vector<22x3xf32>, vector<22x3xf32> -> vector<22x9xf32>
      %127 = arith.index_cast %arg16 : i32 to index
      %c5 = arith.constant 5 : index
      %c0_57 = arith.constant 0 : index
      %c0_58 = arith.constant 0 : index
      %128 = vector.load %arg1[%127, %c5, %c0_57, %c0_58] : memref<8x24x24x3xf32, #tpu.memory_space<vmem>>, vector<1x1x24x3xf32>
      %129 = vector.shape_cast %128 : vector<1x1x24x3xf32> to vector<24x3xf32>
      %130 = vector.extract_strided_slice %129 {offsets = [0, 0], sizes = [22, 3], strides = [1, 1]} : vector<24x3xf32> to vector<22x3xf32>
      %131 = vector.extract_strided_slice %129 {offsets = [1, 0], sizes = [22, 3], strides = [1, 1]} : vector<24x3xf32> to vector<22x3xf32>
      %132 = vector.extract_strided_slice %129 {offsets = [2, 0], sizes = [22, 3], strides = [1, 1]} : vector<24x3xf32> to vector<22x3xf32>
      %133 = tpu.concatenate %130, %131, %132 in 1 : vector<22x3xf32>, vector<22x3xf32>, vector<22x3xf32> -> vector<22x9xf32>
      %134 = tpu.concatenate %119, %126, %133 in 1 : vector<22x9xf32>, vector<22x9xf32>, vector<22x9xf32> -> vector<22x27xf32>
      %135 = arith.truncf %134 : vector<22x27xf32> to vector<22x27xbf16>
      %c0_59 = arith.constant 0 : index
      %c0_60 = arith.constant 0 : index
      %136 = vector.load %arg2[%c0_59, %c0_60] : memref<27x28xbf16, #tpu.memory_space<vmem>>, vector<27x28xbf16>
      %cst_61 = arith.constant dense<0.000000e+00> : vector<22x28xf32>
      %137 = tpu.matmul %135, %136, %cst_61 {dimension_numbers = #tpu.dot_dimension_numbers<[1], [0], [0], [1], [0, 0, 1, 1], [], []>} : vector<22x27xbf16>, vector<27x28xbf16>, vector<22x28xf32> -> vector<22x28xf32>
      %c0_62 = arith.constant 0 : index
      %c0_63 = arith.constant 0 : index
      %138 = vector.load %arg3[%c0_62, %c0_63] : memref<1x28xf32, #tpu.memory_space<vmem>>, vector<1x28xf32>
      %139 = vector.broadcast %138 : vector<1x28xf32> to vector<22x28xf32>
      %140 = arith.addf %137, %139 : vector<22x28xf32>
      %cst_64 = arith.constant 0.000000e+00 : f32
      %141 = vector.broadcast %cst_64 : f32 to vector<22x28xf32>
      %142 = arith.cmpf ogt, %140, %141 : vector<22x28xf32>
      %143 = vector.broadcast %0 : vector<1x1xf32> to vector<22x28xf32>
      %144 = arith.mulf %143, %140 : vector<22x28xf32>
      %145 = arith.select %142, %140, %144 : vector<22x28xi1>, vector<22x28xf32>
      %146 = arith.index_cast %arg16 : i32 to index
      %c4_65 = arith.constant 4 : index
      %c0_66 = arith.constant 0 : index
      %c0_67 = arith.constant 0 : index
      %147 = vector.load %arg1[%146, %c4_65, %c0_66, %c0_67] : memref<8x24x24x3xf32, #tpu.memory_space<vmem>>, vector<1x1x24x3xf32>
      %148 = vector.shape_cast %147 : vector<1x1x24x3xf32> to vector<24x3xf32>
      %149 = vector.extract_strided_slice %148 {offsets = [0, 0], sizes = [22, 3], strides = [1, 1]} : vector<24x3xf32> to vector<22x3xf32>
      %150 = vector.extract_strided_slice %148 {offsets = [1, 0], sizes = [22, 3], strides = [1, 1]} : vector<24x3xf32> to vector<22x3xf32>
      %151 = vector.extract_strided_slice %148 {offsets = [2, 0], sizes = [22, 3], strides = [1, 1]} : vector<24x3xf32> to vector<22x3xf32>
      %152 = tpu.concatenate %149, %150, %151 in 1 : vector<22x3xf32>, vector<22x3xf32>, vector<22x3xf32> -> vector<22x9xf32>
      %153 = arith.index_cast %arg16 : i32 to index
      %c5_68 = arith.constant 5 : index
      %c0_69 = arith.constant 0 : index
      %c0_70 = arith.constant 0 : index
      %154 = vector.load %arg1[%153, %c5_68, %c0_69, %c0_70] : memref<8x24x24x3xf32, #tpu.memory_space<vmem>>, vector<1x1x24x3xf32>
      %155 = vector.shape_cast %154 : vector<1x1x24x3xf32> to vector<24x3xf32>
      %156 = vector.extract_strided_slice %155 {offsets = [0, 0], sizes = [22, 3], strides = [1, 1]} : vector<24x3xf32> to vector<22x3xf32>
      %157 = vector.extract_strided_slice %155 {offsets = [1, 0], sizes = [22, 3], strides = [1, 1]} : vector<24x3xf32> to vector<22x3xf32>
      %158 = vector.extract_strided_slice %155 {offsets = [2, 0], sizes = [22, 3], strides = [1, 1]} : vector<24x3xf32> to vector<22x3xf32>
      %159 = tpu.concatenate %156, %157, %158 in 1 : vector<22x3xf32>, vector<22x3xf32>, vector<22x3xf32> -> vector<22x9xf32>
      %160 = arith.index_cast %arg16 : i32 to index
      %c6 = arith.constant 6 : index
      %c0_71 = arith.constant 0 : index
      %c0_72 = arith.constant 0 : index
      %161 = vector.load %arg1[%160, %c6, %c0_71, %c0_72] : memref<8x24x24x3xf32, #tpu.memory_space<vmem>>, vector<1x1x24x3xf32>
      %162 = vector.shape_cast %161 : vector<1x1x24x3xf32> to vector<24x3xf32>
      %163 = vector.extract_strided_slice %162 {offsets = [0, 0], sizes = [22, 3], strides = [1, 1]} : vector<24x3xf32> to vector<22x3xf32>
      %164 = vector.extract_strided_slice %162 {offsets = [1, 0], sizes = [22, 3], strides = [1, 1]} : vector<24x3xf32> to vector<22x3xf32>
      %165 = vector.extract_strided_slice %162 {offsets = [2, 0], sizes = [22, 3], strides = [1, 1]} : vector<24x3xf32> to vector<22x3xf32>
      %166 = tpu.concatenate %163, %164, %165 in 1 : vector<22x3xf32>, vector<22x3xf32>, vector<22x3xf32> -> vector<22x9xf32>
      %167 = tpu.concatenate %152, %159, %166 in 1 : vector<22x9xf32>, vector<22x9xf32>, vector<22x9xf32> -> vector<22x27xf32>
      %168 = arith.truncf %167 : vector<22x27xf32> to vector<22x27xbf16>
      %c0_73 = arith.constant 0 : index
      %c0_74 = arith.constant 0 : index
      %169 = vector.load %arg2[%c0_73, %c0_74] : memref<27x28xbf16, #tpu.memory_space<vmem>>, vector<27x28xbf16>
      %cst_75 = arith.constant dense<0.000000e+00> : vector<22x28xf32>
      %170 = tpu.matmul %168, %169, %cst_75 {dimension_numbers = #tpu.dot_dimension_numbers<[1], [0], [0], [1], [0, 0, 1, 1], [], []>} : vector<22x27xbf16>, vector<27x28xbf16>, vector<22x28xf32> -> vector<22x28xf32>
      %c0_76 = arith.constant 0 : index
      %c0_77 = arith.constant 0 : index
      %171 = vector.load %arg3[%c0_76, %c0_77] : memref<1x28xf32, #tpu.memory_space<vmem>>, vector<1x28xf32>
      %172 = vector.broadcast %171 : vector<1x28xf32> to vector<22x28xf32>
      %173 = arith.addf %170, %172 : vector<22x28xf32>
      %cst_78 = arith.constant 0.000000e+00 : f32
      %174 = vector.broadcast %cst_78 : f32 to vector<22x28xf32>
      %175 = arith.cmpf ogt, %173, %174 : vector<22x28xf32>
      %176 = vector.broadcast %0 : vector<1x1xf32> to vector<22x28xf32>
      %177 = arith.mulf %176, %173 : vector<22x28xf32>
      %178 = arith.select %175, %173, %177 : vector<22x28xi1>, vector<22x28xf32>
      %179 = arith.maximumf %103, %145 : vector<22x28xf32>
      %180 = arith.maximumf %179, %178 : vector<22x28xf32>
      %181 = vector.extract_strided_slice %180 {offsets = [0, 0], sizes = [20, 28], strides = [1, 1]} : vector<22x28xf32> to vector<20x28xf32>
      %182 = vector.extract_strided_slice %180 {offsets = [1, 0], sizes = [20, 28], strides = [1, 1]} : vector<22x28xf32> to vector<20x28xf32>
      %183 = arith.maximumf %181, %182 : vector<20x28xf32>
      %184 = vector.extract_strided_slice %180 {offsets = [2, 0], sizes = [20, 28], strides = [1, 1]} : vector<22x28xf32> to vector<20x28xf32>
      %185 = arith.maximumf %183, %184 : vector<20x28xf32>
      %c0_79 = arith.constant 0 : index
      %c0_80 = arith.constant 0 : index
      %186 = vector.load %arg13[%c0_79, %c0_80] : memref<10x20xf32, #tpu.memory_space<vmem>>, vector<10x20xf32>
      %cst_81 = arith.constant dense<0.000000e+00> : vector<10x28xf32>
      %187 = tpu.matmul %186, %185, %cst_81 {dimension_numbers = #tpu.dot_dimension_numbers<[1], [0], [0], [1], [0, 0, 1, 1], [], []>} : vector<10x20xf32>, vector<20x28xf32>, vector<10x28xf32> -> vector<10x28xf32>
      %188 = arith.index_cast %arg16 : i32 to index
      %c5_82 = arith.constant 5 : index
      %c0_83 = arith.constant 0 : index
      %c0_84 = arith.constant 0 : index
      %189 = vector.load %arg1[%188, %c5_82, %c0_83, %c0_84] : memref<8x24x24x3xf32, #tpu.memory_space<vmem>>, vector<1x1x24x3xf32>
      %190 = vector.shape_cast %189 : vector<1x1x24x3xf32> to vector<24x3xf32>
      %191 = vector.extract_strided_slice %190 {offsets = [0, 0], sizes = [22, 3], strides = [1, 1]} : vector<24x3xf32> to vector<22x3xf32>
      %192 = vector.extract_strided_slice %190 {offsets = [1, 0], sizes = [22, 3], strides = [1, 1]} : vector<24x3xf32> to vector<22x3xf32>
      %193 = vector.extract_strided_slice %190 {offsets = [2, 0], sizes = [22, 3], strides = [1, 1]} : vector<24x3xf32> to vector<22x3xf32>
      %194 = tpu.concatenate %191, %192, %193 in 1 : vector<22x3xf32>, vector<22x3xf32>, vector<22x3xf32> -> vector<22x9xf32>
      %195 = arith.index_cast %arg16 : i32 to index
      %c6_85 = arith.constant 6 : index
      %c0_86 = arith.constant 0 : index
      %c0_87 = arith.constant 0 : index
      %196 = vector.load %arg1[%195, %c6_85, %c0_86, %c0_87] : memref<8x24x24x3xf32, #tpu.memory_space<vmem>>, vector<1x1x24x3xf32>
      %197 = vector.shape_cast %196 : vector<1x1x24x3xf32> to vector<24x3xf32>
      %198 = vector.extract_strided_slice %197 {offsets = [0, 0], sizes = [22, 3], strides = [1, 1]} : vector<24x3xf32> to vector<22x3xf32>
      %199 = vector.extract_strided_slice %197 {offsets = [1, 0], sizes = [22, 3], strides = [1, 1]} : vector<24x3xf32> to vector<22x3xf32>
      %200 = vector.extract_strided_slice %197 {offsets = [2, 0], sizes = [22, 3], strides = [1, 1]} : vector<24x3xf32> to vector<22x3xf32>
      %201 = tpu.concatenate %198, %199, %200 in 1 : vector<22x3xf32>, vector<22x3xf32>, vector<22x3xf32> -> vector<22x9xf32>
      %202 = arith.index_cast %arg16 : i32 to index
      %c7 = arith.constant 7 : index
      %c0_88 = arith.constant 0 : index
      %c0_89 = arith.constant 0 : index
      %203 = vector.load %arg1[%202, %c7, %c0_88, %c0_89] : memref<8x24x24x3xf32, #tpu.memory_space<vmem>>, vector<1x1x24x3xf32>
      %204 = vector.shape_cast %203 : vector<1x1x24x3xf32> to vector<24x3xf32>
      %205 = vector.extract_strided_slice %204 {offsets = [0, 0], sizes = [22, 3], strides = [1, 1]} : vector<24x3xf32> to vector<22x3xf32>
      %206 = vector.extract_strided_slice %204 {offsets = [1, 0], sizes = [22, 3], strides = [1, 1]} : vector<24x3xf32> to vector<22x3xf32>
      %207 = vector.extract_strided_slice %204 {offsets = [2, 0], sizes = [22, 3], strides = [1, 1]} : vector<24x3xf32> to vector<22x3xf32>
      %208 = tpu.concatenate %205, %206, %207 in 1 : vector<22x3xf32>, vector<22x3xf32>, vector<22x3xf32> -> vector<22x9xf32>
      %209 = tpu.concatenate %194, %201, %208 in 1 : vector<22x9xf32>, vector<22x9xf32>, vector<22x9xf32> -> vector<22x27xf32>
      %210 = arith.truncf %209 : vector<22x27xf32> to vector<22x27xbf16>
      %c0_90 = arith.constant 0 : index
      %c0_91 = arith.constant 0 : index
      %211 = vector.load %arg2[%c0_90, %c0_91] : memref<27x28xbf16, #tpu.memory_space<vmem>>, vector<27x28xbf16>
      %cst_92 = arith.constant dense<0.000000e+00> : vector<22x28xf32>
      %212 = tpu.matmul %210, %211, %cst_92 {dimension_numbers = #tpu.dot_dimension_numbers<[1], [0], [0], [1], [0, 0, 1, 1], [], []>} : vector<22x27xbf16>, vector<27x28xbf16>, vector<22x28xf32> -> vector<22x28xf32>
      %c0_93 = arith.constant 0 : index
      %c0_94 = arith.constant 0 : index
      %213 = vector.load %arg3[%c0_93, %c0_94] : memref<1x28xf32, #tpu.memory_space<vmem>>, vector<1x28xf32>
      %214 = vector.broadcast %213 : vector<1x28xf32> to vector<22x28xf32>
      %215 = arith.addf %212, %214 : vector<22x28xf32>
      %cst_95 = arith.constant 0.000000e+00 : f32
      %216 = vector.broadcast %cst_95 : f32 to vector<22x28xf32>
      %217 = arith.cmpf ogt, %215, %216 : vector<22x28xf32>
      %218 = vector.broadcast %0 : vector<1x1xf32> to vector<22x28xf32>
      %219 = arith.mulf %218, %215 : vector<22x28xf32>
      %220 = arith.select %217, %215, %219 : vector<22x28xi1>, vector<22x28xf32>
      %221 = arith.index_cast %arg16 : i32 to index
      %c6_96 = arith.constant 6 : index
      %c0_97 = arith.constant 0 : index
      %c0_98 = arith.constant 0 : index
      %222 = vector.load %arg1[%221, %c6_96, %c0_97, %c0_98] : memref<8x24x24x3xf32, #tpu.memory_space<vmem>>, vector<1x1x24x3xf32>
      %223 = vector.shape_cast %222 : vector<1x1x24x3xf32> to vector<24x3xf32>
      %224 = vector.extract_strided_slice %223 {offsets = [0, 0], sizes = [22, 3], strides = [1, 1]} : vector<24x3xf32> to vector<22x3xf32>
      %225 = vector.extract_strided_slice %223 {offsets = [1, 0], sizes = [22, 3], strides = [1, 1]} : vector<24x3xf32> to vector<22x3xf32>
      %226 = vector.extract_strided_slice %223 {offsets = [2, 0], sizes = [22, 3], strides = [1, 1]} : vector<24x3xf32> to vector<22x3xf32>
      %227 = tpu.concatenate %224, %225, %226 in 1 : vector<22x3xf32>, vector<22x3xf32>, vector<22x3xf32> -> vector<22x9xf32>
      %228 = arith.index_cast %arg16 : i32 to index
      %c7_99 = arith.constant 7 : index
      %c0_100 = arith.constant 0 : index
      %c0_101 = arith.constant 0 : index
      %229 = vector.load %arg1[%228, %c7_99, %c0_100, %c0_101] : memref<8x24x24x3xf32, #tpu.memory_space<vmem>>, vector<1x1x24x3xf32>
      %230 = vector.shape_cast %229 : vector<1x1x24x3xf32> to vector<24x3xf32>
      %231 = vector.extract_strided_slice %230 {offsets = [0, 0], sizes = [22, 3], strides = [1, 1]} : vector<24x3xf32> to vector<22x3xf32>
      %232 = vector.extract_strided_slice %230 {offsets = [1, 0], sizes = [22, 3], strides = [1, 1]} : vector<24x3xf32> to vector<22x3xf32>
      %233 = vector.extract_strided_slice %230 {offsets = [2, 0], sizes = [22, 3], strides = [1, 1]} : vector<24x3xf32> to vector<22x3xf32>
      %234 = tpu.concatenate %231, %232, %233 in 1 : vector<22x3xf32>, vector<22x3xf32>, vector<22x3xf32> -> vector<22x9xf32>
      %235 = arith.index_cast %arg16 : i32 to index
      %c8 = arith.constant 8 : index
      %c0_102 = arith.constant 0 : index
      %c0_103 = arith.constant 0 : index
      %236 = vector.load %arg1[%235, %c8, %c0_102, %c0_103] : memref<8x24x24x3xf32, #tpu.memory_space<vmem>>, vector<1x1x24x3xf32>
      %237 = vector.shape_cast %236 : vector<1x1x24x3xf32> to vector<24x3xf32>
      %238 = vector.extract_strided_slice %237 {offsets = [0, 0], sizes = [22, 3], strides = [1, 1]} : vector<24x3xf32> to vector<22x3xf32>
      %239 = vector.extract_strided_slice %237 {offsets = [1, 0], sizes = [22, 3], strides = [1, 1]} : vector<24x3xf32> to vector<22x3xf32>
      %240 = vector.extract_strided_slice %237 {offsets = [2, 0], sizes = [22, 3], strides = [1, 1]} : vector<24x3xf32> to vector<22x3xf32>
      %241 = tpu.concatenate %238, %239, %240 in 1 : vector<22x3xf32>, vector<22x3xf32>, vector<22x3xf32> -> vector<22x9xf32>
      %242 = tpu.concatenate %227, %234, %241 in 1 : vector<22x9xf32>, vector<22x9xf32>, vector<22x9xf32> -> vector<22x27xf32>
      %243 = arith.truncf %242 : vector<22x27xf32> to vector<22x27xbf16>
      %c0_104 = arith.constant 0 : index
      %c0_105 = arith.constant 0 : index
      %244 = vector.load %arg2[%c0_104, %c0_105] : memref<27x28xbf16, #tpu.memory_space<vmem>>, vector<27x28xbf16>
      %cst_106 = arith.constant dense<0.000000e+00> : vector<22x28xf32>
      %245 = tpu.matmul %243, %244, %cst_106 {dimension_numbers = #tpu.dot_dimension_numbers<[1], [0], [0], [1], [0, 0, 1, 1], [], []>} : vector<22x27xbf16>, vector<27x28xbf16>, vector<22x28xf32> -> vector<22x28xf32>
      %c0_107 = arith.constant 0 : index
      %c0_108 = arith.constant 0 : index
      %246 = vector.load %arg3[%c0_107, %c0_108] : memref<1x28xf32, #tpu.memory_space<vmem>>, vector<1x28xf32>
      %247 = vector.broadcast %246 : vector<1x28xf32> to vector<22x28xf32>
      %248 = arith.addf %245, %247 : vector<22x28xf32>
      %cst_109 = arith.constant 0.000000e+00 : f32
      %249 = vector.broadcast %cst_109 : f32 to vector<22x28xf32>
      %250 = arith.cmpf ogt, %248, %249 : vector<22x28xf32>
      %251 = vector.broadcast %0 : vector<1x1xf32> to vector<22x28xf32>
      %252 = arith.mulf %251, %248 : vector<22x28xf32>
      %253 = arith.select %250, %248, %252 : vector<22x28xi1>, vector<22x28xf32>
      %254 = arith.maximumf %178, %220 : vector<22x28xf32>
      %255 = arith.maximumf %254, %253 : vector<22x28xf32>
      %256 = vector.extract_strided_slice %255 {offsets = [0, 0], sizes = [20, 28], strides = [1, 1]} : vector<22x28xf32> to vector<20x28xf32>
      %257 = vector.extract_strided_slice %255 {offsets = [1, 0], sizes = [20, 28], strides = [1, 1]} : vector<22x28xf32> to vector<20x28xf32>
      %258 = arith.maximumf %256, %257 : vector<20x28xf32>
      %259 = vector.extract_strided_slice %255 {offsets = [2, 0], sizes = [20, 28], strides = [1, 1]} : vector<22x28xf32> to vector<20x28xf32>
      %260 = arith.maximumf %258, %259 : vector<20x28xf32>
      %c0_110 = arith.constant 0 : index
      %c0_111 = arith.constant 0 : index
      %261 = vector.load %arg13[%c0_110, %c0_111] : memref<10x20xf32, #tpu.memory_space<vmem>>, vector<10x20xf32>
      %cst_112 = arith.constant dense<0.000000e+00> : vector<10x28xf32>
      %262 = tpu.matmul %261, %260, %cst_112 {dimension_numbers = #tpu.dot_dimension_numbers<[1], [0], [0], [1], [0, 0, 1, 1], [], []>} : vector<10x20xf32>, vector<20x28xf32>, vector<10x28xf32> -> vector<10x28xf32>
      %263 = arith.index_cast %arg16 : i32 to index
      %c7_113 = arith.constant 7 : index
      %c0_114 = arith.constant 0 : index
      %c0_115 = arith.constant 0 : index
      %264 = vector.load %arg1[%263, %c7_113, %c0_114, %c0_115] : memref<8x24x24x3xf32, #tpu.memory_space<vmem>>, vector<1x1x24x3xf32>
      %265 = vector.shape_cast %264 : vector<1x1x24x3xf32> to vector<24x3xf32>
      %266 = vector.extract_strided_slice %265 {offsets = [0, 0], sizes = [22, 3], strides = [1, 1]} : vector<24x3xf32> to vector<22x3xf32>
      %267 = vector.extract_strided_slice %265 {offsets = [1, 0], sizes = [22, 3], strides = [1, 1]} : vector<24x3xf32> to vector<22x3xf32>
      %268 = vector.extract_strided_slice %265 {offsets = [2, 0], sizes = [22, 3], strides = [1, 1]} : vector<24x3xf32> to vector<22x3xf32>
      %269 = tpu.concatenate %266, %267, %268 in 1 : vector<22x3xf32>, vector<22x3xf32>, vector<22x3xf32> -> vector<22x9xf32>
      %270 = arith.index_cast %arg16 : i32 to index
      %c8_116 = arith.constant 8 : index
      %c0_117 = arith.constant 0 : index
      %c0_118 = arith.constant 0 : index
      %271 = vector.load %arg1[%270, %c8_116, %c0_117, %c0_118] : memref<8x24x24x3xf32, #tpu.memory_space<vmem>>, vector<1x1x24x3xf32>
      %272 = vector.shape_cast %271 : vector<1x1x24x3xf32> to vector<24x3xf32>
      %273 = vector.extract_strided_slice %272 {offsets = [0, 0], sizes = [22, 3], strides = [1, 1]} : vector<24x3xf32> to vector<22x3xf32>
      %274 = vector.extract_strided_slice %272 {offsets = [1, 0], sizes = [22, 3], strides = [1, 1]} : vector<24x3xf32> to vector<22x3xf32>
      %275 = vector.extract_strided_slice %272 {offsets = [2, 0], sizes = [22, 3], strides = [1, 1]} : vector<24x3xf32> to vector<22x3xf32>
      %276 = tpu.concatenate %273, %274, %275 in 1 : vector<22x3xf32>, vector<22x3xf32>, vector<22x3xf32> -> vector<22x9xf32>
      %277 = arith.index_cast %arg16 : i32 to index
      %c9 = arith.constant 9 : index
      %c0_119 = arith.constant 0 : index
      %c0_120 = arith.constant 0 : index
      %278 = vector.load %arg1[%277, %c9, %c0_119, %c0_120] : memref<8x24x24x3xf32, #tpu.memory_space<vmem>>, vector<1x1x24x3xf32>
      %279 = vector.shape_cast %278 : vector<1x1x24x3xf32> to vector<24x3xf32>
      %280 = vector.extract_strided_slice %279 {offsets = [0, 0], sizes = [22, 3], strides = [1, 1]} : vector<24x3xf32> to vector<22x3xf32>
      %281 = vector.extract_strided_slice %279 {offsets = [1, 0], sizes = [22, 3], strides = [1, 1]} : vector<24x3xf32> to vector<22x3xf32>
      %282 = vector.extract_strided_slice %279 {offsets = [2, 0], sizes = [22, 3], strides = [1, 1]} : vector<24x3xf32> to vector<22x3xf32>
      %283 = tpu.concatenate %280, %281, %282 in 1 : vector<22x3xf32>, vector<22x3xf32>, vector<22x3xf32> -> vector<22x9xf32>
      %284 = tpu.concatenate %269, %276, %283 in 1 : vector<22x9xf32>, vector<22x9xf32>, vector<22x9xf32> -> vector<22x27xf32>
      %285 = arith.truncf %284 : vector<22x27xf32> to vector<22x27xbf16>
      %c0_121 = arith.constant 0 : index
      %c0_122 = arith.constant 0 : index
      %286 = vector.load %arg2[%c0_121, %c0_122] : memref<27x28xbf16, #tpu.memory_space<vmem>>, vector<27x28xbf16>
      %cst_123 = arith.constant dense<0.000000e+00> : vector<22x28xf32>
      %287 = tpu.matmul %285, %286, %cst_123 {dimension_numbers = #tpu.dot_dimension_numbers<[1], [0], [0], [1], [0, 0, 1, 1], [], []>} : vector<22x27xbf16>, vector<27x28xbf16>, vector<22x28xf32> -> vector<22x28xf32>
      %c0_124 = arith.constant 0 : index
      %c0_125 = arith.constant 0 : index
      %288 = vector.load %arg3[%c0_124, %c0_125] : memref<1x28xf32, #tpu.memory_space<vmem>>, vector<1x28xf32>
      %289 = vector.broadcast %288 : vector<1x28xf32> to vector<22x28xf32>
      %290 = arith.addf %287, %289 : vector<22x28xf32>
      %cst_126 = arith.constant 0.000000e+00 : f32
      %291 = vector.broadcast %cst_126 : f32 to vector<22x28xf32>
      %292 = arith.cmpf ogt, %290, %291 : vector<22x28xf32>
      %293 = vector.broadcast %0 : vector<1x1xf32> to vector<22x28xf32>
      %294 = arith.mulf %293, %290 : vector<22x28xf32>
      %295 = arith.select %292, %290, %294 : vector<22x28xi1>, vector<22x28xf32>
      %296 = arith.index_cast %arg16 : i32 to index
      %c8_127 = arith.constant 8 : index
      %c0_128 = arith.constant 0 : index
      %c0_129 = arith.constant 0 : index
      %297 = vector.load %arg1[%296, %c8_127, %c0_128, %c0_129] : memref<8x24x24x3xf32, #tpu.memory_space<vmem>>, vector<1x1x24x3xf32>
      %298 = vector.shape_cast %297 : vector<1x1x24x3xf32> to vector<24x3xf32>
      %299 = vector.extract_strided_slice %298 {offsets = [0, 0], sizes = [22, 3], strides = [1, 1]} : vector<24x3xf32> to vector<22x3xf32>
      %300 = vector.extract_strided_slice %298 {offsets = [1, 0], sizes = [22, 3], strides = [1, 1]} : vector<24x3xf32> to vector<22x3xf32>
      %301 = vector.extract_strided_slice %298 {offsets = [2, 0], sizes = [22, 3], strides = [1, 1]} : vector<24x3xf32> to vector<22x3xf32>
      %302 = tpu.concatenate %299, %300, %301 in 1 : vector<22x3xf32>, vector<22x3xf32>, vector<22x3xf32> -> vector<22x9xf32>
      %303 = arith.index_cast %arg16 : i32 to index
      %c9_130 = arith.constant 9 : index
      %c0_131 = arith.constant 0 : index
      %c0_132 = arith.constant 0 : index
      %304 = vector.load %arg1[%303, %c9_130, %c0_131, %c0_132] : memref<8x24x24x3xf32, #tpu.memory_space<vmem>>, vector<1x1x24x3xf32>
      %305 = vector.shape_cast %304 : vector<1x1x24x3xf32> to vector<24x3xf32>
      %306 = vector.extract_strided_slice %305 {offsets = [0, 0], sizes = [22, 3], strides = [1, 1]} : vector<24x3xf32> to vector<22x3xf32>
      %307 = vector.extract_strided_slice %305 {offsets = [1, 0], sizes = [22, 3], strides = [1, 1]} : vector<24x3xf32> to vector<22x3xf32>
      %308 = vector.extract_strided_slice %305 {offsets = [2, 0], sizes = [22, 3], strides = [1, 1]} : vector<24x3xf32> to vector<22x3xf32>
      %309 = tpu.concatenate %306, %307, %308 in 1 : vector<22x3xf32>, vector<22x3xf32>, vector<22x3xf32> -> vector<22x9xf32>
      %310 = arith.index_cast %arg16 : i32 to index
      %c10 = arith.constant 10 : index
      %c0_133 = arith.constant 0 : index
      %c0_134 = arith.constant 0 : index
      %311 = vector.load %arg1[%310, %c10, %c0_133, %c0_134] : memref<8x24x24x3xf32, #tpu.memory_space<vmem>>, vector<1x1x24x3xf32>
      %312 = vector.shape_cast %311 : vector<1x1x24x3xf32> to vector<24x3xf32>
      %313 = vector.extract_strided_slice %312 {offsets = [0, 0], sizes = [22, 3], strides = [1, 1]} : vector<24x3xf32> to vector<22x3xf32>
      %314 = vector.extract_strided_slice %312 {offsets = [1, 0], sizes = [22, 3], strides = [1, 1]} : vector<24x3xf32> to vector<22x3xf32>
      %315 = vector.extract_strided_slice %312 {offsets = [2, 0], sizes = [22, 3], strides = [1, 1]} : vector<24x3xf32> to vector<22x3xf32>
      %316 = tpu.concatenate %313, %314, %315 in 1 : vector<22x3xf32>, vector<22x3xf32>, vector<22x3xf32> -> vector<22x9xf32>
      %317 = tpu.concatenate %302, %309, %316 in 1 : vector<22x9xf32>, vector<22x9xf32>, vector<22x9xf32> -> vector<22x27xf32>
      %318 = arith.truncf %317 : vector<22x27xf32> to vector<22x27xbf16>
      %c0_135 = arith.constant 0 : index
      %c0_136 = arith.constant 0 : index
      %319 = vector.load %arg2[%c0_135, %c0_136] : memref<27x28xbf16, #tpu.memory_space<vmem>>, vector<27x28xbf16>
      %cst_137 = arith.constant dense<0.000000e+00> : vector<22x28xf32>
      %320 = tpu.matmul %318, %319, %cst_137 {dimension_numbers = #tpu.dot_dimension_numbers<[1], [0], [0], [1], [0, 0, 1, 1], [], []>} : vector<22x27xbf16>, vector<27x28xbf16>, vector<22x28xf32> -> vector<22x28xf32>
      %c0_138 = arith.constant 0 : index
      %c0_139 = arith.constant 0 : index
      %321 = vector.load %arg3[%c0_138, %c0_139] : memref<1x28xf32, #tpu.memory_space<vmem>>, vector<1x28xf32>
      %322 = vector.broadcast %321 : vector<1x28xf32> to vector<22x28xf32>
      %323 = arith.addf %320, %322 : vector<22x28xf32>
      %cst_140 = arith.constant 0.000000e+00 : f32
      %324 = vector.broadcast %cst_140 : f32 to vector<22x28xf32>
      %325 = arith.cmpf ogt, %323, %324 : vector<22x28xf32>
      %326 = vector.broadcast %0 : vector<1x1xf32> to vector<22x28xf32>
      %327 = arith.mulf %326, %323 : vector<22x28xf32>
      %328 = arith.select %325, %323, %327 : vector<22x28xi1>, vector<22x28xf32>
      %329 = arith.maximumf %253, %295 : vector<22x28xf32>
      %330 = arith.maximumf %329, %328 : vector<22x28xf32>
      %331 = vector.extract_strided_slice %330 {offsets = [0, 0], sizes = [20, 28], strides = [1, 1]} : vector<22x28xf32> to vector<20x28xf32>
      %332 = vector.extract_strided_slice %330 {offsets = [1, 0], sizes = [20, 28], strides = [1, 1]} : vector<22x28xf32> to vector<20x28xf32>
      %333 = arith.maximumf %331, %332 : vector<20x28xf32>
      %334 = vector.extract_strided_slice %330 {offsets = [2, 0], sizes = [20, 28], strides = [1, 1]} : vector<22x28xf32> to vector<20x28xf32>
      %335 = arith.maximumf %333, %334 : vector<20x28xf32>
      %c0_141 = arith.constant 0 : index
      %c0_142 = arith.constant 0 : index
      %336 = vector.load %arg13[%c0_141, %c0_142] : memref<10x20xf32, #tpu.memory_space<vmem>>, vector<10x20xf32>
      %cst_143 = arith.constant dense<0.000000e+00> : vector<10x28xf32>
      %337 = tpu.matmul %336, %335, %cst_143 {dimension_numbers = #tpu.dot_dimension_numbers<[1], [0], [0], [1], [0, 0, 1, 1], [], []>} : vector<10x20xf32>, vector<20x28xf32>, vector<10x28xf32> -> vector<10x28xf32>
      %338 = arith.index_cast %arg16 : i32 to index
      %c9_144 = arith.constant 9 : index
      %c0_145 = arith.constant 0 : index
      %c0_146 = arith.constant 0 : index
      %339 = vector.load %arg1[%338, %c9_144, %c0_145, %c0_146] : memref<8x24x24x3xf32, #tpu.memory_space<vmem>>, vector<1x1x24x3xf32>
      %340 = vector.shape_cast %339 : vector<1x1x24x3xf32> to vector<24x3xf32>
      %341 = vector.extract_strided_slice %340 {offsets = [0, 0], sizes = [22, 3], strides = [1, 1]} : vector<24x3xf32> to vector<22x3xf32>
      %342 = vector.extract_strided_slice %340 {offsets = [1, 0], sizes = [22, 3], strides = [1, 1]} : vector<24x3xf32> to vector<22x3xf32>
      %343 = vector.extract_strided_slice %340 {offsets = [2, 0], sizes = [22, 3], strides = [1, 1]} : vector<24x3xf32> to vector<22x3xf32>
      %344 = tpu.concatenate %341, %342, %343 in 1 : vector<22x3xf32>, vector<22x3xf32>, vector<22x3xf32> -> vector<22x9xf32>
      %345 = arith.index_cast %arg16 : i32 to index
      %c10_147 = arith.constant 10 : index
      %c0_148 = arith.constant 0 : index
      %c0_149 = arith.constant 0 : index
      %346 = vector.load %arg1[%345, %c10_147, %c0_148, %c0_149] : memref<8x24x24x3xf32, #tpu.memory_space<vmem>>, vector<1x1x24x3xf32>
      %347 = vector.shape_cast %346 : vector<1x1x24x3xf32> to vector<24x3xf32>
      %348 = vector.extract_strided_slice %347 {offsets = [0, 0], sizes = [22, 3], strides = [1, 1]} : vector<24x3xf32> to vector<22x3xf32>
      %349 = vector.extract_strided_slice %347 {offsets = [1, 0], sizes = [22, 3], strides = [1, 1]} : vector<24x3xf32> to vector<22x3xf32>
      %350 = vector.extract_strided_slice %347 {offsets = [2, 0], sizes = [22, 3], strides = [1, 1]} : vector<24x3xf32> to vector<22x3xf32>
      %351 = tpu.concatenate %348, %349, %350 in 1 : vector<22x3xf32>, vector<22x3xf32>, vector<22x3xf32> -> vector<22x9xf32>
      %352 = arith.index_cast %arg16 : i32 to index
      %c11 = arith.constant 11 : index
      %c0_150 = arith.constant 0 : index
      %c0_151 = arith.constant 0 : index
      %353 = vector.load %arg1[%352, %c11, %c0_150, %c0_151] : memref<8x24x24x3xf32, #tpu.memory_space<vmem>>, vector<1x1x24x3xf32>
      %354 = vector.shape_cast %353 : vector<1x1x24x3xf32> to vector<24x3xf32>
      %355 = vector.extract_strided_slice %354 {offsets = [0, 0], sizes = [22, 3], strides = [1, 1]} : vector<24x3xf32> to vector<22x3xf32>
      %356 = vector.extract_strided_slice %354 {offsets = [1, 0], sizes = [22, 3], strides = [1, 1]} : vector<24x3xf32> to vector<22x3xf32>
      %357 = vector.extract_strided_slice %354 {offsets = [2, 0], sizes = [22, 3], strides = [1, 1]} : vector<24x3xf32> to vector<22x3xf32>
      %358 = tpu.concatenate %355, %356, %357 in 1 : vector<22x3xf32>, vector<22x3xf32>, vector<22x3xf32> -> vector<22x9xf32>
      %359 = tpu.concatenate %344, %351, %358 in 1 : vector<22x9xf32>, vector<22x9xf32>, vector<22x9xf32> -> vector<22x27xf32>
      %360 = arith.truncf %359 : vector<22x27xf32> to vector<22x27xbf16>
      %c0_152 = arith.constant 0 : index
      %c0_153 = arith.constant 0 : index
      %361 = vector.load %arg2[%c0_152, %c0_153] : memref<27x28xbf16, #tpu.memory_space<vmem>>, vector<27x28xbf16>
      %cst_154 = arith.constant dense<0.000000e+00> : vector<22x28xf32>
      %362 = tpu.matmul %360, %361, %cst_154 {dimension_numbers = #tpu.dot_dimension_numbers<[1], [0], [0], [1], [0, 0, 1, 1], [], []>} : vector<22x27xbf16>, vector<27x28xbf16>, vector<22x28xf32> -> vector<22x28xf32>
      %c0_155 = arith.constant 0 : index
      %c0_156 = arith.constant 0 : index
      %363 = vector.load %arg3[%c0_155, %c0_156] : memref<1x28xf32, #tpu.memory_space<vmem>>, vector<1x28xf32>
      %364 = vector.broadcast %363 : vector<1x28xf32> to vector<22x28xf32>
      %365 = arith.addf %362, %364 : vector<22x28xf32>
      %cst_157 = arith.constant 0.000000e+00 : f32
      %366 = vector.broadcast %cst_157 : f32 to vector<22x28xf32>
      %367 = arith.cmpf ogt, %365, %366 : vector<22x28xf32>
      %368 = vector.broadcast %0 : vector<1x1xf32> to vector<22x28xf32>
      %369 = arith.mulf %368, %365 : vector<22x28xf32>
      %370 = arith.select %367, %365, %369 : vector<22x28xi1>, vector<22x28xf32>
      %371 = arith.index_cast %arg16 : i32 to index
      %c10_158 = arith.constant 10 : index
      %c0_159 = arith.constant 0 : index
      %c0_160 = arith.constant 0 : index
      %372 = vector.load %arg1[%371, %c10_158, %c0_159, %c0_160] : memref<8x24x24x3xf32, #tpu.memory_space<vmem>>, vector<1x1x24x3xf32>
      %373 = vector.shape_cast %372 : vector<1x1x24x3xf32> to vector<24x3xf32>
      %374 = vector.extract_strided_slice %373 {offsets = [0, 0], sizes = [22, 3], strides = [1, 1]} : vector<24x3xf32> to vector<22x3xf32>
      %375 = vector.extract_strided_slice %373 {offsets = [1, 0], sizes = [22, 3], strides = [1, 1]} : vector<24x3xf32> to vector<22x3xf32>
      %376 = vector.extract_strided_slice %373 {offsets = [2, 0], sizes = [22, 3], strides = [1, 1]} : vector<24x3xf32> to vector<22x3xf32>
      %377 = tpu.concatenate %374, %375, %376 in 1 : vector<22x3xf32>, vector<22x3xf32>, vector<22x3xf32> -> vector<22x9xf32>
      %378 = arith.index_cast %arg16 : i32 to index
      %c11_161 = arith.constant 11 : index
      %c0_162 = arith.constant 0 : index
      %c0_163 = arith.constant 0 : index
      %379 = vector.load %arg1[%378, %c11_161, %c0_162, %c0_163] : memref<8x24x24x3xf32, #tpu.memory_space<vmem>>, vector<1x1x24x3xf32>
      %380 = vector.shape_cast %379 : vector<1x1x24x3xf32> to vector<24x3xf32>
      %381 = vector.extract_strided_slice %380 {offsets = [0, 0], sizes = [22, 3], strides = [1, 1]} : vector<24x3xf32> to vector<22x3xf32>
      %382 = vector.extract_strided_slice %380 {offsets = [1, 0], sizes = [22, 3], strides = [1, 1]} : vector<24x3xf32> to vector<22x3xf32>
      %383 = vector.extract_strided_slice %380 {offsets = [2, 0], sizes = [22, 3], strides = [1, 1]} : vector<24x3xf32> to vector<22x3xf32>
      %384 = tpu.concatenate %381, %382, %383 in 1 : vector<22x3xf32>, vector<22x3xf32>, vector<22x3xf32> -> vector<22x9xf32>
      %385 = arith.index_cast %arg16 : i32 to index
      %c12 = arith.constant 12 : index
      %c0_164 = arith.constant 0 : index
      %c0_165 = arith.constant 0 : index
      %386 = vector.load %arg1[%385, %c12, %c0_164, %c0_165] : memref<8x24x24x3xf32, #tpu.memory_space<vmem>>, vector<1x1x24x3xf32>
      %387 = vector.shape_cast %386 : vector<1x1x24x3xf32> to vector<24x3xf32>
      %388 = vector.extract_strided_slice %387 {offsets = [0, 0], sizes = [22, 3], strides = [1, 1]} : vector<24x3xf32> to vector<22x3xf32>
      %389 = vector.extract_strided_slice %387 {offsets = [1, 0], sizes = [22, 3], strides = [1, 1]} : vector<24x3xf32> to vector<22x3xf32>
      %390 = vector.extract_strided_slice %387 {offsets = [2, 0], sizes = [22, 3], strides = [1, 1]} : vector<24x3xf32> to vector<22x3xf32>
      %391 = tpu.concatenate %388, %389, %390 in 1 : vector<22x3xf32>, vector<22x3xf32>, vector<22x3xf32> -> vector<22x9xf32>
      %392 = tpu.concatenate %377, %384, %391 in 1 : vector<22x9xf32>, vector<22x9xf32>, vector<22x9xf32> -> vector<22x27xf32>
      %393 = arith.truncf %392 : vector<22x27xf32> to vector<22x27xbf16>
      %c0_166 = arith.constant 0 : index
      %c0_167 = arith.constant 0 : index
      %394 = vector.load %arg2[%c0_166, %c0_167] : memref<27x28xbf16, #tpu.memory_space<vmem>>, vector<27x28xbf16>
      %cst_168 = arith.constant dense<0.000000e+00> : vector<22x28xf32>
      %395 = tpu.matmul %393, %394, %cst_168 {dimension_numbers = #tpu.dot_dimension_numbers<[1], [0], [0], [1], [0, 0, 1, 1], [], []>} : vector<22x27xbf16>, vector<27x28xbf16>, vector<22x28xf32> -> vector<22x28xf32>
      %c0_169 = arith.constant 0 : index
      %c0_170 = arith.constant 0 : index
      %396 = vector.load %arg3[%c0_169, %c0_170] : memref<1x28xf32, #tpu.memory_space<vmem>>, vector<1x28xf32>
      %397 = vector.broadcast %396 : vector<1x28xf32> to vector<22x28xf32>
      %398 = arith.addf %395, %397 : vector<22x28xf32>
      %cst_171 = arith.constant 0.000000e+00 : f32
      %399 = vector.broadcast %cst_171 : f32 to vector<22x28xf32>
      %400 = arith.cmpf ogt, %398, %399 : vector<22x28xf32>
      %401 = vector.broadcast %0 : vector<1x1xf32> to vector<22x28xf32>
      %402 = arith.mulf %401, %398 : vector<22x28xf32>
      %403 = arith.select %400, %398, %402 : vector<22x28xi1>, vector<22x28xf32>
      %404 = arith.maximumf %328, %370 : vector<22x28xf32>
      %405 = arith.maximumf %404, %403 : vector<22x28xf32>
      %406 = vector.extract_strided_slice %405 {offsets = [0, 0], sizes = [20, 28], strides = [1, 1]} : vector<22x28xf32> to vector<20x28xf32>
      %407 = vector.extract_strided_slice %405 {offsets = [1, 0], sizes = [20, 28], strides = [1, 1]} : vector<22x28xf32> to vector<20x28xf32>
      %408 = arith.maximumf %406, %407 : vector<20x28xf32>
      %409 = vector.extract_strided_slice %405 {offsets = [2, 0], sizes = [20, 28], strides = [1, 1]} : vector<22x28xf32> to vector<20x28xf32>
      %410 = arith.maximumf %408, %409 : vector<20x28xf32>
      %c0_172 = arith.constant 0 : index
      %c0_173 = arith.constant 0 : index
      %411 = vector.load %arg13[%c0_172, %c0_173] : memref<10x20xf32, #tpu.memory_space<vmem>>, vector<10x20xf32>
      %cst_174 = arith.constant dense<0.000000e+00> : vector<10x28xf32>
      %412 = tpu.matmul %411, %410, %cst_174 {dimension_numbers = #tpu.dot_dimension_numbers<[1], [0], [0], [1], [0, 0, 1, 1], [], []>} : vector<10x20xf32>, vector<20x28xf32>, vector<10x28xf32> -> vector<10x28xf32>
      %413 = arith.index_cast %arg16 : i32 to index
      %c11_175 = arith.constant 11 : index
      %c0_176 = arith.constant 0 : index
      %c0_177 = arith.constant 0 : index
      %414 = vector.load %arg1[%413, %c11_175, %c0_176, %c0_177] : memref<8x24x24x3xf32, #tpu.memory_space<vmem>>, vector<1x1x24x3xf32>
      %415 = vector.shape_cast %414 : vector<1x1x24x3xf32> to vector<24x3xf32>
      %416 = vector.extract_strided_slice %415 {offsets = [0, 0], sizes = [22, 3], strides = [1, 1]} : vector<24x3xf32> to vector<22x3xf32>
      %417 = vector.extract_strided_slice %415 {offsets = [1, 0], sizes = [22, 3], strides = [1, 1]} : vector<24x3xf32> to vector<22x3xf32>
      %418 = vector.extract_strided_slice %415 {offsets = [2, 0], sizes = [22, 3], strides = [1, 1]} : vector<24x3xf32> to vector<22x3xf32>
      %419 = tpu.concatenate %416, %417, %418 in 1 : vector<22x3xf32>, vector<22x3xf32>, vector<22x3xf32> -> vector<22x9xf32>
      %420 = arith.index_cast %arg16 : i32 to index
      %c12_178 = arith.constant 12 : index
      %c0_179 = arith.constant 0 : index
      %c0_180 = arith.constant 0 : index
      %421 = vector.load %arg1[%420, %c12_178, %c0_179, %c0_180] : memref<8x24x24x3xf32, #tpu.memory_space<vmem>>, vector<1x1x24x3xf32>
      %422 = vector.shape_cast %421 : vector<1x1x24x3xf32> to vector<24x3xf32>
      %423 = vector.extract_strided_slice %422 {offsets = [0, 0], sizes = [22, 3], strides = [1, 1]} : vector<24x3xf32> to vector<22x3xf32>
      %424 = vector.extract_strided_slice %422 {offsets = [1, 0], sizes = [22, 3], strides = [1, 1]} : vector<24x3xf32> to vector<22x3xf32>
      %425 = vector.extract_strided_slice %422 {offsets = [2, 0], sizes = [22, 3], strides = [1, 1]} : vector<24x3xf32> to vector<22x3xf32>
      %426 = tpu.concatenate %423, %424, %425 in 1 : vector<22x3xf32>, vector<22x3xf32>, vector<22x3xf32> -> vector<22x9xf32>
      %427 = arith.index_cast %arg16 : i32 to index
      %c13 = arith.constant 13 : index
      %c0_181 = arith.constant 0 : index
      %c0_182 = arith.constant 0 : index
      %428 = vector.load %arg1[%427, %c13, %c0_181, %c0_182] : memref<8x24x24x3xf32, #tpu.memory_space<vmem>>, vector<1x1x24x3xf32>
      %429 = vector.shape_cast %428 : vector<1x1x24x3xf32> to vector<24x3xf32>
      %430 = vector.extract_strided_slice %429 {offsets = [0, 0], sizes = [22, 3], strides = [1, 1]} : vector<24x3xf32> to vector<22x3xf32>
      %431 = vector.extract_strided_slice %429 {offsets = [1, 0], sizes = [22, 3], strides = [1, 1]} : vector<24x3xf32> to vector<22x3xf32>
      %432 = vector.extract_strided_slice %429 {offsets = [2, 0], sizes = [22, 3], strides = [1, 1]} : vector<24x3xf32> to vector<22x3xf32>
      %433 = tpu.concatenate %430, %431, %432 in 1 : vector<22x3xf32>, vector<22x3xf32>, vector<22x3xf32> -> vector<22x9xf32>
      %434 = tpu.concatenate %419, %426, %433 in 1 : vector<22x9xf32>, vector<22x9xf32>, vector<22x9xf32> -> vector<22x27xf32>
      %435 = arith.truncf %434 : vector<22x27xf32> to vector<22x27xbf16>
      %c0_183 = arith.constant 0 : index
      %c0_184 = arith.constant 0 : index
      %436 = vector.load %arg2[%c0_183, %c0_184] : memref<27x28xbf16, #tpu.memory_space<vmem>>, vector<27x28xbf16>
      %cst_185 = arith.constant dense<0.000000e+00> : vector<22x28xf32>
      %437 = tpu.matmul %435, %436, %cst_185 {dimension_numbers = #tpu.dot_dimension_numbers<[1], [0], [0], [1], [0, 0, 1, 1], [], []>} : vector<22x27xbf16>, vector<27x28xbf16>, vector<22x28xf32> -> vector<22x28xf32>
      %c0_186 = arith.constant 0 : index
      %c0_187 = arith.constant 0 : index
      %438 = vector.load %arg3[%c0_186, %c0_187] : memref<1x28xf32, #tpu.memory_space<vmem>>, vector<1x28xf32>
      %439 = vector.broadcast %438 : vector<1x28xf32> to vector<22x28xf32>
      %440 = arith.addf %437, %439 : vector<22x28xf32>
      %cst_188 = arith.constant 0.000000e+00 : f32
      %441 = vector.broadcast %cst_188 : f32 to vector<22x28xf32>
      %442 = arith.cmpf ogt, %440, %441 : vector<22x28xf32>
      %443 = vector.broadcast %0 : vector<1x1xf32> to vector<22x28xf32>
      %444 = arith.mulf %443, %440 : vector<22x28xf32>
      %445 = arith.select %442, %440, %444 : vector<22x28xi1>, vector<22x28xf32>
      %446 = arith.index_cast %arg16 : i32 to index
      %c12_189 = arith.constant 12 : index
      %c0_190 = arith.constant 0 : index
      %c0_191 = arith.constant 0 : index
      %447 = vector.load %arg1[%446, %c12_189, %c0_190, %c0_191] : memref<8x24x24x3xf32, #tpu.memory_space<vmem>>, vector<1x1x24x3xf32>
      %448 = vector.shape_cast %447 : vector<1x1x24x3xf32> to vector<24x3xf32>
      %449 = vector.extract_strided_slice %448 {offsets = [0, 0], sizes = [22, 3], strides = [1, 1]} : vector<24x3xf32> to vector<22x3xf32>
      %450 = vector.extract_strided_slice %448 {offsets = [1, 0], sizes = [22, 3], strides = [1, 1]} : vector<24x3xf32> to vector<22x3xf32>
      %451 = vector.extract_strided_slice %448 {offsets = [2, 0], sizes = [22, 3], strides = [1, 1]} : vector<24x3xf32> to vector<22x3xf32>
      %452 = tpu.concatenate %449, %450, %451 in 1 : vector<22x3xf32>, vector<22x3xf32>, vector<22x3xf32> -> vector<22x9xf32>
      %453 = arith.index_cast %arg16 : i32 to index
      %c13_192 = arith.constant 13 : index
      %c0_193 = arith.constant 0 : index
      %c0_194 = arith.constant 0 : index
      %454 = vector.load %arg1[%453, %c13_192, %c0_193, %c0_194] : memref<8x24x24x3xf32, #tpu.memory_space<vmem>>, vector<1x1x24x3xf32>
      %455 = vector.shape_cast %454 : vector<1x1x24x3xf32> to vector<24x3xf32>
      %456 = vector.extract_strided_slice %455 {offsets = [0, 0], sizes = [22, 3], strides = [1, 1]} : vector<24x3xf32> to vector<22x3xf32>
      %457 = vector.extract_strided_slice %455 {offsets = [1, 0], sizes = [22, 3], strides = [1, 1]} : vector<24x3xf32> to vector<22x3xf32>
      %458 = vector.extract_strided_slice %455 {offsets = [2, 0], sizes = [22, 3], strides = [1, 1]} : vector<24x3xf32> to vector<22x3xf32>
      %459 = tpu.concatenate %456, %457, %458 in 1 : vector<22x3xf32>, vector<22x3xf32>, vector<22x3xf32> -> vector<22x9xf32>
      %460 = arith.index_cast %arg16 : i32 to index
      %c14 = arith.constant 14 : index
      %c0_195 = arith.constant 0 : index
      %c0_196 = arith.constant 0 : index
      %461 = vector.load %arg1[%460, %c14, %c0_195, %c0_196] : memref<8x24x24x3xf32, #tpu.memory_space<vmem>>, vector<1x1x24x3xf32>
      %462 = vector.shape_cast %461 : vector<1x1x24x3xf32> to vector<24x3xf32>
      %463 = vector.extract_strided_slice %462 {offsets = [0, 0], sizes = [22, 3], strides = [1, 1]} : vector<24x3xf32> to vector<22x3xf32>
      %464 = vector.extract_strided_slice %462 {offsets = [1, 0], sizes = [22, 3], strides = [1, 1]} : vector<24x3xf32> to vector<22x3xf32>
      %465 = vector.extract_strided_slice %462 {offsets = [2, 0], sizes = [22, 3], strides = [1, 1]} : vector<24x3xf32> to vector<22x3xf32>
      %466 = tpu.concatenate %463, %464, %465 in 1 : vector<22x3xf32>, vector<22x3xf32>, vector<22x3xf32> -> vector<22x9xf32>
      %467 = tpu.concatenate %452, %459, %466 in 1 : vector<22x9xf32>, vector<22x9xf32>, vector<22x9xf32> -> vector<22x27xf32>
      %468 = arith.truncf %467 : vector<22x27xf32> to vector<22x27xbf16>
      %c0_197 = arith.constant 0 : index
      %c0_198 = arith.constant 0 : index
      %469 = vector.load %arg2[%c0_197, %c0_198] : memref<27x28xbf16, #tpu.memory_space<vmem>>, vector<27x28xbf16>
      %cst_199 = arith.constant dense<0.000000e+00> : vector<22x28xf32>
      %470 = tpu.matmul %468, %469, %cst_199 {dimension_numbers = #tpu.dot_dimension_numbers<[1], [0], [0], [1], [0, 0, 1, 1], [], []>} : vector<22x27xbf16>, vector<27x28xbf16>, vector<22x28xf32> -> vector<22x28xf32>
      %c0_200 = arith.constant 0 : index
      %c0_201 = arith.constant 0 : index
      %471 = vector.load %arg3[%c0_200, %c0_201] : memref<1x28xf32, #tpu.memory_space<vmem>>, vector<1x28xf32>
      %472 = vector.broadcast %471 : vector<1x28xf32> to vector<22x28xf32>
      %473 = arith.addf %470, %472 : vector<22x28xf32>
      %cst_202 = arith.constant 0.000000e+00 : f32
      %474 = vector.broadcast %cst_202 : f32 to vector<22x28xf32>
      %475 = arith.cmpf ogt, %473, %474 : vector<22x28xf32>
      %476 = vector.broadcast %0 : vector<1x1xf32> to vector<22x28xf32>
      %477 = arith.mulf %476, %473 : vector<22x28xf32>
      %478 = arith.select %475, %473, %477 : vector<22x28xi1>, vector<22x28xf32>
      %479 = arith.maximumf %403, %445 : vector<22x28xf32>
      %480 = arith.maximumf %479, %478 : vector<22x28xf32>
      %481 = vector.extract_strided_slice %480 {offsets = [0, 0], sizes = [20, 28], strides = [1, 1]} : vector<22x28xf32> to vector<20x28xf32>
      %482 = vector.extract_strided_slice %480 {offsets = [1, 0], sizes = [20, 28], strides = [1, 1]} : vector<22x28xf32> to vector<20x28xf32>
      %483 = arith.maximumf %481, %482 : vector<20x28xf32>
      %484 = vector.extract_strided_slice %480 {offsets = [2, 0], sizes = [20, 28], strides = [1, 1]} : vector<22x28xf32> to vector<20x28xf32>
      %485 = arith.maximumf %483, %484 : vector<20x28xf32>
      %c0_203 = arith.constant 0 : index
      %c0_204 = arith.constant 0 : index
      %486 = vector.load %arg13[%c0_203, %c0_204] : memref<10x20xf32, #tpu.memory_space<vmem>>, vector<10x20xf32>
      %cst_205 = arith.constant dense<0.000000e+00> : vector<10x28xf32>
      %487 = tpu.matmul %486, %485, %cst_205 {dimension_numbers = #tpu.dot_dimension_numbers<[1], [0], [0], [1], [0, 0, 1, 1], [], []>} : vector<10x20xf32>, vector<20x28xf32>, vector<10x28xf32> -> vector<10x28xf32>
      %488 = arith.index_cast %arg16 : i32 to index
      %c13_206 = arith.constant 13 : index
      %c0_207 = arith.constant 0 : index
      %c0_208 = arith.constant 0 : index
      %489 = vector.load %arg1[%488, %c13_206, %c0_207, %c0_208] : memref<8x24x24x3xf32, #tpu.memory_space<vmem>>, vector<1x1x24x3xf32>
      %490 = vector.shape_cast %489 : vector<1x1x24x3xf32> to vector<24x3xf32>
      %491 = vector.extract_strided_slice %490 {offsets = [0, 0], sizes = [22, 3], strides = [1, 1]} : vector<24x3xf32> to vector<22x3xf32>
      %492 = vector.extract_strided_slice %490 {offsets = [1, 0], sizes = [22, 3], strides = [1, 1]} : vector<24x3xf32> to vector<22x3xf32>
      %493 = vector.extract_strided_slice %490 {offsets = [2, 0], sizes = [22, 3], strides = [1, 1]} : vector<24x3xf32> to vector<22x3xf32>
      %494 = tpu.concatenate %491, %492, %493 in 1 : vector<22x3xf32>, vector<22x3xf32>, vector<22x3xf32> -> vector<22x9xf32>
      %495 = arith.index_cast %arg16 : i32 to index
      %c14_209 = arith.constant 14 : index
      %c0_210 = arith.constant 0 : index
      %c0_211 = arith.constant 0 : index
      %496 = vector.load %arg1[%495, %c14_209, %c0_210, %c0_211] : memref<8x24x24x3xf32, #tpu.memory_space<vmem>>, vector<1x1x24x3xf32>
      %497 = vector.shape_cast %496 : vector<1x1x24x3xf32> to vector<24x3xf32>
      %498 = vector.extract_strided_slice %497 {offsets = [0, 0], sizes = [22, 3], strides = [1, 1]} : vector<24x3xf32> to vector<22x3xf32>
      %499 = vector.extract_strided_slice %497 {offsets = [1, 0], sizes = [22, 3], strides = [1, 1]} : vector<24x3xf32> to vector<22x3xf32>
      %500 = vector.extract_strided_slice %497 {offsets = [2, 0], sizes = [22, 3], strides = [1, 1]} : vector<24x3xf32> to vector<22x3xf32>
      %501 = tpu.concatenate %498, %499, %500 in 1 : vector<22x3xf32>, vector<22x3xf32>, vector<22x3xf32> -> vector<22x9xf32>
      %502 = arith.index_cast %arg16 : i32 to index
      %c15 = arith.constant 15 : index
      %c0_212 = arith.constant 0 : index
      %c0_213 = arith.constant 0 : index
      %503 = vector.load %arg1[%502, %c15, %c0_212, %c0_213] : memref<8x24x24x3xf32, #tpu.memory_space<vmem>>, vector<1x1x24x3xf32>
      %504 = vector.shape_cast %503 : vector<1x1x24x3xf32> to vector<24x3xf32>
      %505 = vector.extract_strided_slice %504 {offsets = [0, 0], sizes = [22, 3], strides = [1, 1]} : vector<24x3xf32> to vector<22x3xf32>
      %506 = vector.extract_strided_slice %504 {offsets = [1, 0], sizes = [22, 3], strides = [1, 1]} : vector<24x3xf32> to vector<22x3xf32>
      %507 = vector.extract_strided_slice %504 {offsets = [2, 0], sizes = [22, 3], strides = [1, 1]} : vector<24x3xf32> to vector<22x3xf32>
      %508 = tpu.concatenate %505, %506, %507 in 1 : vector<22x3xf32>, vector<22x3xf32>, vector<22x3xf32> -> vector<22x9xf32>
      %509 = tpu.concatenate %494, %501, %508 in 1 : vector<22x9xf32>, vector<22x9xf32>, vector<22x9xf32> -> vector<22x27xf32>
      %510 = arith.truncf %509 : vector<22x27xf32> to vector<22x27xbf16>
      %c0_214 = arith.constant 0 : index
      %c0_215 = arith.constant 0 : index
      %511 = vector.load %arg2[%c0_214, %c0_215] : memref<27x28xbf16, #tpu.memory_space<vmem>>, vector<27x28xbf16>
      %cst_216 = arith.constant dense<0.000000e+00> : vector<22x28xf32>
      %512 = tpu.matmul %510, %511, %cst_216 {dimension_numbers = #tpu.dot_dimension_numbers<[1], [0], [0], [1], [0, 0, 1, 1], [], []>} : vector<22x27xbf16>, vector<27x28xbf16>, vector<22x28xf32> -> vector<22x28xf32>
      %c0_217 = arith.constant 0 : index
      %c0_218 = arith.constant 0 : index
      %513 = vector.load %arg3[%c0_217, %c0_218] : memref<1x28xf32, #tpu.memory_space<vmem>>, vector<1x28xf32>
      %514 = vector.broadcast %513 : vector<1x28xf32> to vector<22x28xf32>
      %515 = arith.addf %512, %514 : vector<22x28xf32>
      %cst_219 = arith.constant 0.000000e+00 : f32
      %516 = vector.broadcast %cst_219 : f32 to vector<22x28xf32>
      %517 = arith.cmpf ogt, %515, %516 : vector<22x28xf32>
      %518 = vector.broadcast %0 : vector<1x1xf32> to vector<22x28xf32>
      %519 = arith.mulf %518, %515 : vector<22x28xf32>
      %520 = arith.select %517, %515, %519 : vector<22x28xi1>, vector<22x28xf32>
      %521 = arith.index_cast %arg16 : i32 to index
      %c14_220 = arith.constant 14 : index
      %c0_221 = arith.constant 0 : index
      %c0_222 = arith.constant 0 : index
      %522 = vector.load %arg1[%521, %c14_220, %c0_221, %c0_222] : memref<8x24x24x3xf32, #tpu.memory_space<vmem>>, vector<1x1x24x3xf32>
      %523 = vector.shape_cast %522 : vector<1x1x24x3xf32> to vector<24x3xf32>
      %524 = vector.extract_strided_slice %523 {offsets = [0, 0], sizes = [22, 3], strides = [1, 1]} : vector<24x3xf32> to vector<22x3xf32>
      %525 = vector.extract_strided_slice %523 {offsets = [1, 0], sizes = [22, 3], strides = [1, 1]} : vector<24x3xf32> to vector<22x3xf32>
      %526 = vector.extract_strided_slice %523 {offsets = [2, 0], sizes = [22, 3], strides = [1, 1]} : vector<24x3xf32> to vector<22x3xf32>
      %527 = tpu.concatenate %524, %525, %526 in 1 : vector<22x3xf32>, vector<22x3xf32>, vector<22x3xf32> -> vector<22x9xf32>
      %528 = arith.index_cast %arg16 : i32 to index
      %c15_223 = arith.constant 15 : index
      %c0_224 = arith.constant 0 : index
      %c0_225 = arith.constant 0 : index
      %529 = vector.load %arg1[%528, %c15_223, %c0_224, %c0_225] : memref<8x24x24x3xf32, #tpu.memory_space<vmem>>, vector<1x1x24x3xf32>
      %530 = vector.shape_cast %529 : vector<1x1x24x3xf32> to vector<24x3xf32>
      %531 = vector.extract_strided_slice %530 {offsets = [0, 0], sizes = [22, 3], strides = [1, 1]} : vector<24x3xf32> to vector<22x3xf32>
      %532 = vector.extract_strided_slice %530 {offsets = [1, 0], sizes = [22, 3], strides = [1, 1]} : vector<24x3xf32> to vector<22x3xf32>
      %533 = vector.extract_strided_slice %530 {offsets = [2, 0], sizes = [22, 3], strides = [1, 1]} : vector<24x3xf32> to vector<22x3xf32>
      %534 = tpu.concatenate %531, %532, %533 in 1 : vector<22x3xf32>, vector<22x3xf32>, vector<22x3xf32> -> vector<22x9xf32>
      %535 = arith.index_cast %arg16 : i32 to index
      %c16 = arith.constant 16 : index
      %c0_226 = arith.constant 0 : index
      %c0_227 = arith.constant 0 : index
      %536 = vector.load %arg1[%535, %c16, %c0_226, %c0_227] : memref<8x24x24x3xf32, #tpu.memory_space<vmem>>, vector<1x1x24x3xf32>
      %537 = vector.shape_cast %536 : vector<1x1x24x3xf32> to vector<24x3xf32>
      %538 = vector.extract_strided_slice %537 {offsets = [0, 0], sizes = [22, 3], strides = [1, 1]} : vector<24x3xf32> to vector<22x3xf32>
      %539 = vector.extract_strided_slice %537 {offsets = [1, 0], sizes = [22, 3], strides = [1, 1]} : vector<24x3xf32> to vector<22x3xf32>
      %540 = vector.extract_strided_slice %537 {offsets = [2, 0], sizes = [22, 3], strides = [1, 1]} : vector<24x3xf32> to vector<22x3xf32>
      %541 = tpu.concatenate %538, %539, %540 in 1 : vector<22x3xf32>, vector<22x3xf32>, vector<22x3xf32> -> vector<22x9xf32>
      %542 = tpu.concatenate %527, %534, %541 in 1 : vector<22x9xf32>, vector<22x9xf32>, vector<22x9xf32> -> vector<22x27xf32>
      %543 = arith.truncf %542 : vector<22x27xf32> to vector<22x27xbf16>
      %c0_228 = arith.constant 0 : index
      %c0_229 = arith.constant 0 : index
      %544 = vector.load %arg2[%c0_228, %c0_229] : memref<27x28xbf16, #tpu.memory_space<vmem>>, vector<27x28xbf16>
      %cst_230 = arith.constant dense<0.000000e+00> : vector<22x28xf32>
      %545 = tpu.matmul %543, %544, %cst_230 {dimension_numbers = #tpu.dot_dimension_numbers<[1], [0], [0], [1], [0, 0, 1, 1], [], []>} : vector<22x27xbf16>, vector<27x28xbf16>, vector<22x28xf32> -> vector<22x28xf32>
      %c0_231 = arith.constant 0 : index
      %c0_232 = arith.constant 0 : index
      %546 = vector.load %arg3[%c0_231, %c0_232] : memref<1x28xf32, #tpu.memory_space<vmem>>, vector<1x28xf32>
      %547 = vector.broadcast %546 : vector<1x28xf32> to vector<22x28xf32>
      %548 = arith.addf %545, %547 : vector<22x28xf32>
      %cst_233 = arith.constant 0.000000e+00 : f32
      %549 = vector.broadcast %cst_233 : f32 to vector<22x28xf32>
      %550 = arith.cmpf ogt, %548, %549 : vector<22x28xf32>
      %551 = vector.broadcast %0 : vector<1x1xf32> to vector<22x28xf32>
      %552 = arith.mulf %551, %548 : vector<22x28xf32>
      %553 = arith.select %550, %548, %552 : vector<22x28xi1>, vector<22x28xf32>
      %554 = arith.maximumf %478, %520 : vector<22x28xf32>
      %555 = arith.maximumf %554, %553 : vector<22x28xf32>
      %556 = vector.extract_strided_slice %555 {offsets = [0, 0], sizes = [20, 28], strides = [1, 1]} : vector<22x28xf32> to vector<20x28xf32>
      %557 = vector.extract_strided_slice %555 {offsets = [1, 0], sizes = [20, 28], strides = [1, 1]} : vector<22x28xf32> to vector<20x28xf32>
      %558 = arith.maximumf %556, %557 : vector<20x28xf32>
      %559 = vector.extract_strided_slice %555 {offsets = [2, 0], sizes = [20, 28], strides = [1, 1]} : vector<22x28xf32> to vector<20x28xf32>
      %560 = arith.maximumf %558, %559 : vector<20x28xf32>
      %c0_234 = arith.constant 0 : index
      %c0_235 = arith.constant 0 : index
      %561 = vector.load %arg13[%c0_234, %c0_235] : memref<10x20xf32, #tpu.memory_space<vmem>>, vector<10x20xf32>
      %cst_236 = arith.constant dense<0.000000e+00> : vector<10x28xf32>
      %562 = tpu.matmul %561, %560, %cst_236 {dimension_numbers = #tpu.dot_dimension_numbers<[1], [0], [0], [1], [0, 0, 1, 1], [], []>} : vector<10x20xf32>, vector<20x28xf32>, vector<10x28xf32> -> vector<10x28xf32>
      %563 = arith.index_cast %arg16 : i32 to index
      %c15_237 = arith.constant 15 : index
      %c0_238 = arith.constant 0 : index
      %c0_239 = arith.constant 0 : index
      %564 = vector.load %arg1[%563, %c15_237, %c0_238, %c0_239] : memref<8x24x24x3xf32, #tpu.memory_space<vmem>>, vector<1x1x24x3xf32>
      %565 = vector.shape_cast %564 : vector<1x1x24x3xf32> to vector<24x3xf32>
      %566 = vector.extract_strided_slice %565 {offsets = [0, 0], sizes = [22, 3], strides = [1, 1]} : vector<24x3xf32> to vector<22x3xf32>
      %567 = vector.extract_strided_slice %565 {offsets = [1, 0], sizes = [22, 3], strides = [1, 1]} : vector<24x3xf32> to vector<22x3xf32>
      %568 = vector.extract_strided_slice %565 {offsets = [2, 0], sizes = [22, 3], strides = [1, 1]} : vector<24x3xf32> to vector<22x3xf32>
      %569 = tpu.concatenate %566, %567, %568 in 1 : vector<22x3xf32>, vector<22x3xf32>, vector<22x3xf32> -> vector<22x9xf32>
      %570 = arith.index_cast %arg16 : i32 to index
      %c16_240 = arith.constant 16 : index
      %c0_241 = arith.constant 0 : index
      %c0_242 = arith.constant 0 : index
      %571 = vector.load %arg1[%570, %c16_240, %c0_241, %c0_242] : memref<8x24x24x3xf32, #tpu.memory_space<vmem>>, vector<1x1x24x3xf32>
      %572 = vector.shape_cast %571 : vector<1x1x24x3xf32> to vector<24x3xf32>
      %573 = vector.extract_strided_slice %572 {offsets = [0, 0], sizes = [22, 3], strides = [1, 1]} : vector<24x3xf32> to vector<22x3xf32>
      %574 = vector.extract_strided_slice %572 {offsets = [1, 0], sizes = [22, 3], strides = [1, 1]} : vector<24x3xf32> to vector<22x3xf32>
      %575 = vector.extract_strided_slice %572 {offsets = [2, 0], sizes = [22, 3], strides = [1, 1]} : vector<24x3xf32> to vector<22x3xf32>
      %576 = tpu.concatenate %573, %574, %575 in 1 : vector<22x3xf32>, vector<22x3xf32>, vector<22x3xf32> -> vector<22x9xf32>
      %577 = arith.index_cast %arg16 : i32 to index
      %c17 = arith.constant 17 : index
      %c0_243 = arith.constant 0 : index
      %c0_244 = arith.constant 0 : index
      %578 = vector.load %arg1[%577, %c17, %c0_243, %c0_244] : memref<8x24x24x3xf32, #tpu.memory_space<vmem>>, vector<1x1x24x3xf32>
      %579 = vector.shape_cast %578 : vector<1x1x24x3xf32> to vector<24x3xf32>
      %580 = vector.extract_strided_slice %579 {offsets = [0, 0], sizes = [22, 3], strides = [1, 1]} : vector<24x3xf32> to vector<22x3xf32>
      %581 = vector.extract_strided_slice %579 {offsets = [1, 0], sizes = [22, 3], strides = [1, 1]} : vector<24x3xf32> to vector<22x3xf32>
      %582 = vector.extract_strided_slice %579 {offsets = [2, 0], sizes = [22, 3], strides = [1, 1]} : vector<24x3xf32> to vector<22x3xf32>
      %583 = tpu.concatenate %580, %581, %582 in 1 : vector<22x3xf32>, vector<22x3xf32>, vector<22x3xf32> -> vector<22x9xf32>
      %584 = tpu.concatenate %569, %576, %583 in 1 : vector<22x9xf32>, vector<22x9xf32>, vector<22x9xf32> -> vector<22x27xf32>
      %585 = arith.truncf %584 : vector<22x27xf32> to vector<22x27xbf16>
      %c0_245 = arith.constant 0 : index
      %c0_246 = arith.constant 0 : index
      %586 = vector.load %arg2[%c0_245, %c0_246] : memref<27x28xbf16, #tpu.memory_space<vmem>>, vector<27x28xbf16>
      %cst_247 = arith.constant dense<0.000000e+00> : vector<22x28xf32>
      %587 = tpu.matmul %585, %586, %cst_247 {dimension_numbers = #tpu.dot_dimension_numbers<[1], [0], [0], [1], [0, 0, 1, 1], [], []>} : vector<22x27xbf16>, vector<27x28xbf16>, vector<22x28xf32> -> vector<22x28xf32>
      %c0_248 = arith.constant 0 : index
      %c0_249 = arith.constant 0 : index
      %588 = vector.load %arg3[%c0_248, %c0_249] : memref<1x28xf32, #tpu.memory_space<vmem>>, vector<1x28xf32>
      %589 = vector.broadcast %588 : vector<1x28xf32> to vector<22x28xf32>
      %590 = arith.addf %587, %589 : vector<22x28xf32>
      %cst_250 = arith.constant 0.000000e+00 : f32
      %591 = vector.broadcast %cst_250 : f32 to vector<22x28xf32>
      %592 = arith.cmpf ogt, %590, %591 : vector<22x28xf32>
      %593 = vector.broadcast %0 : vector<1x1xf32> to vector<22x28xf32>
      %594 = arith.mulf %593, %590 : vector<22x28xf32>
      %595 = arith.select %592, %590, %594 : vector<22x28xi1>, vector<22x28xf32>
      %596 = arith.index_cast %arg16 : i32 to index
      %c16_251 = arith.constant 16 : index
      %c0_252 = arith.constant 0 : index
      %c0_253 = arith.constant 0 : index
      %597 = vector.load %arg1[%596, %c16_251, %c0_252, %c0_253] : memref<8x24x24x3xf32, #tpu.memory_space<vmem>>, vector<1x1x24x3xf32>
      %598 = vector.shape_cast %597 : vector<1x1x24x3xf32> to vector<24x3xf32>
      %599 = vector.extract_strided_slice %598 {offsets = [0, 0], sizes = [22, 3], strides = [1, 1]} : vector<24x3xf32> to vector<22x3xf32>
      %600 = vector.extract_strided_slice %598 {offsets = [1, 0], sizes = [22, 3], strides = [1, 1]} : vector<24x3xf32> to vector<22x3xf32>
      %601 = vector.extract_strided_slice %598 {offsets = [2, 0], sizes = [22, 3], strides = [1, 1]} : vector<24x3xf32> to vector<22x3xf32>
      %602 = tpu.concatenate %599, %600, %601 in 1 : vector<22x3xf32>, vector<22x3xf32>, vector<22x3xf32> -> vector<22x9xf32>
      %603 = arith.index_cast %arg16 : i32 to index
      %c17_254 = arith.constant 17 : index
      %c0_255 = arith.constant 0 : index
      %c0_256 = arith.constant 0 : index
      %604 = vector.load %arg1[%603, %c17_254, %c0_255, %c0_256] : memref<8x24x24x3xf32, #tpu.memory_space<vmem>>, vector<1x1x24x3xf32>
      %605 = vector.shape_cast %604 : vector<1x1x24x3xf32> to vector<24x3xf32>
      %606 = vector.extract_strided_slice %605 {offsets = [0, 0], sizes = [22, 3], strides = [1, 1]} : vector<24x3xf32> to vector<22x3xf32>
      %607 = vector.extract_strided_slice %605 {offsets = [1, 0], sizes = [22, 3], strides = [1, 1]} : vector<24x3xf32> to vector<22x3xf32>
      %608 = vector.extract_strided_slice %605 {offsets = [2, 0], sizes = [22, 3], strides = [1, 1]} : vector<24x3xf32> to vector<22x3xf32>
      %609 = tpu.concatenate %606, %607, %608 in 1 : vector<22x3xf32>, vector<22x3xf32>, vector<22x3xf32> -> vector<22x9xf32>
      %610 = arith.index_cast %arg16 : i32 to index
      %c18 = arith.constant 18 : index
      %c0_257 = arith.constant 0 : index
      %c0_258 = arith.constant 0 : index
      %611 = vector.load %arg1[%610, %c18, %c0_257, %c0_258] : memref<8x24x24x3xf32, #tpu.memory_space<vmem>>, vector<1x1x24x3xf32>
      %612 = vector.shape_cast %611 : vector<1x1x24x3xf32> to vector<24x3xf32>
      %613 = vector.extract_strided_slice %612 {offsets = [0, 0], sizes = [22, 3], strides = [1, 1]} : vector<24x3xf32> to vector<22x3xf32>
      %614 = vector.extract_strided_slice %612 {offsets = [1, 0], sizes = [22, 3], strides = [1, 1]} : vector<24x3xf32> to vector<22x3xf32>
      %615 = vector.extract_strided_slice %612 {offsets = [2, 0], sizes = [22, 3], strides = [1, 1]} : vector<24x3xf32> to vector<22x3xf32>
      %616 = tpu.concatenate %613, %614, %615 in 1 : vector<22x3xf32>, vector<22x3xf32>, vector<22x3xf32> -> vector<22x9xf32>
      %617 = tpu.concatenate %602, %609, %616 in 1 : vector<22x9xf32>, vector<22x9xf32>, vector<22x9xf32> -> vector<22x27xf32>
      %618 = arith.truncf %617 : vector<22x27xf32> to vector<22x27xbf16>
      %c0_259 = arith.constant 0 : index
      %c0_260 = arith.constant 0 : index
      %619 = vector.load %arg2[%c0_259, %c0_260] : memref<27x28xbf16, #tpu.memory_space<vmem>>, vector<27x28xbf16>
      %cst_261 = arith.constant dense<0.000000e+00> : vector<22x28xf32>
      %620 = tpu.matmul %618, %619, %cst_261 {dimension_numbers = #tpu.dot_dimension_numbers<[1], [0], [0], [1], [0, 0, 1, 1], [], []>} : vector<22x27xbf16>, vector<27x28xbf16>, vector<22x28xf32> -> vector<22x28xf32>
      %c0_262 = arith.constant 0 : index
      %c0_263 = arith.constant 0 : index
      %621 = vector.load %arg3[%c0_262, %c0_263] : memref<1x28xf32, #tpu.memory_space<vmem>>, vector<1x28xf32>
      %622 = vector.broadcast %621 : vector<1x28xf32> to vector<22x28xf32>
      %623 = arith.addf %620, %622 : vector<22x28xf32>
      %cst_264 = arith.constant 0.000000e+00 : f32
      %624 = vector.broadcast %cst_264 : f32 to vector<22x28xf32>
      %625 = arith.cmpf ogt, %623, %624 : vector<22x28xf32>
      %626 = vector.broadcast %0 : vector<1x1xf32> to vector<22x28xf32>
      %627 = arith.mulf %626, %623 : vector<22x28xf32>
      %628 = arith.select %625, %623, %627 : vector<22x28xi1>, vector<22x28xf32>
      %629 = arith.maximumf %553, %595 : vector<22x28xf32>
      %630 = arith.maximumf %629, %628 : vector<22x28xf32>
      %631 = vector.extract_strided_slice %630 {offsets = [0, 0], sizes = [20, 28], strides = [1, 1]} : vector<22x28xf32> to vector<20x28xf32>
      %632 = vector.extract_strided_slice %630 {offsets = [1, 0], sizes = [20, 28], strides = [1, 1]} : vector<22x28xf32> to vector<20x28xf32>
      %633 = arith.maximumf %631, %632 : vector<20x28xf32>
      %634 = vector.extract_strided_slice %630 {offsets = [2, 0], sizes = [20, 28], strides = [1, 1]} : vector<22x28xf32> to vector<20x28xf32>
      %635 = arith.maximumf %633, %634 : vector<20x28xf32>
      %c0_265 = arith.constant 0 : index
      %c0_266 = arith.constant 0 : index
      %636 = vector.load %arg13[%c0_265, %c0_266] : memref<10x20xf32, #tpu.memory_space<vmem>>, vector<10x20xf32>
      %cst_267 = arith.constant dense<0.000000e+00> : vector<10x28xf32>
      %637 = tpu.matmul %636, %635, %cst_267 {dimension_numbers = #tpu.dot_dimension_numbers<[1], [0], [0], [1], [0, 0, 1, 1], [], []>} : vector<10x20xf32>, vector<20x28xf32>, vector<10x28xf32> -> vector<10x28xf32>
      %638 = arith.index_cast %arg16 : i32 to index
      %c17_268 = arith.constant 17 : index
      %c0_269 = arith.constant 0 : index
      %c0_270 = arith.constant 0 : index
      %639 = vector.load %arg1[%638, %c17_268, %c0_269, %c0_270] : memref<8x24x24x3xf32, #tpu.memory_space<vmem>>, vector<1x1x24x3xf32>
      %640 = vector.shape_cast %639 : vector<1x1x24x3xf32> to vector<24x3xf32>
      %641 = vector.extract_strided_slice %640 {offsets = [0, 0], sizes = [22, 3], strides = [1, 1]} : vector<24x3xf32> to vector<22x3xf32>
      %642 = vector.extract_strided_slice %640 {offsets = [1, 0], sizes = [22, 3], strides = [1, 1]} : vector<24x3xf32> to vector<22x3xf32>
      %643 = vector.extract_strided_slice %640 {offsets = [2, 0], sizes = [22, 3], strides = [1, 1]} : vector<24x3xf32> to vector<22x3xf32>
      %644 = tpu.concatenate %641, %642, %643 in 1 : vector<22x3xf32>, vector<22x3xf32>, vector<22x3xf32> -> vector<22x9xf32>
      %645 = arith.index_cast %arg16 : i32 to index
      %c18_271 = arith.constant 18 : index
      %c0_272 = arith.constant 0 : index
      %c0_273 = arith.constant 0 : index
      %646 = vector.load %arg1[%645, %c18_271, %c0_272, %c0_273] : memref<8x24x24x3xf32, #tpu.memory_space<vmem>>, vector<1x1x24x3xf32>
      %647 = vector.shape_cast %646 : vector<1x1x24x3xf32> to vector<24x3xf32>
      %648 = vector.extract_strided_slice %647 {offsets = [0, 0], sizes = [22, 3], strides = [1, 1]} : vector<24x3xf32> to vector<22x3xf32>
      %649 = vector.extract_strided_slice %647 {offsets = [1, 0], sizes = [22, 3], strides = [1, 1]} : vector<24x3xf32> to vector<22x3xf32>
      %650 = vector.extract_strided_slice %647 {offsets = [2, 0], sizes = [22, 3], strides = [1, 1]} : vector<24x3xf32> to vector<22x3xf32>
      %651 = tpu.concatenate %648, %649, %650 in 1 : vector<22x3xf32>, vector<22x3xf32>, vector<22x3xf32> -> vector<22x9xf32>
      %652 = arith.index_cast %arg16 : i32 to index
      %c19 = arith.constant 19 : index
      %c0_274 = arith.constant 0 : index
      %c0_275 = arith.constant 0 : index
      %653 = vector.load %arg1[%652, %c19, %c0_274, %c0_275] : memref<8x24x24x3xf32, #tpu.memory_space<vmem>>, vector<1x1x24x3xf32>
      %654 = vector.shape_cast %653 : vector<1x1x24x3xf32> to vector<24x3xf32>
      %655 = vector.extract_strided_slice %654 {offsets = [0, 0], sizes = [22, 3], strides = [1, 1]} : vector<24x3xf32> to vector<22x3xf32>
      %656 = vector.extract_strided_slice %654 {offsets = [1, 0], sizes = [22, 3], strides = [1, 1]} : vector<24x3xf32> to vector<22x3xf32>
      %657 = vector.extract_strided_slice %654 {offsets = [2, 0], sizes = [22, 3], strides = [1, 1]} : vector<24x3xf32> to vector<22x3xf32>
      %658 = tpu.concatenate %655, %656, %657 in 1 : vector<22x3xf32>, vector<22x3xf32>, vector<22x3xf32> -> vector<22x9xf32>
      %659 = tpu.concatenate %644, %651, %658 in 1 : vector<22x9xf32>, vector<22x9xf32>, vector<22x9xf32> -> vector<22x27xf32>
      %660 = arith.truncf %659 : vector<22x27xf32> to vector<22x27xbf16>
      %c0_276 = arith.constant 0 : index
      %c0_277 = arith.constant 0 : index
      %661 = vector.load %arg2[%c0_276, %c0_277] : memref<27x28xbf16, #tpu.memory_space<vmem>>, vector<27x28xbf16>
      %cst_278 = arith.constant dense<0.000000e+00> : vector<22x28xf32>
      %662 = tpu.matmul %660, %661, %cst_278 {dimension_numbers = #tpu.dot_dimension_numbers<[1], [0], [0], [1], [0, 0, 1, 1], [], []>} : vector<22x27xbf16>, vector<27x28xbf16>, vector<22x28xf32> -> vector<22x28xf32>
      %c0_279 = arith.constant 0 : index
      %c0_280 = arith.constant 0 : index
      %663 = vector.load %arg3[%c0_279, %c0_280] : memref<1x28xf32, #tpu.memory_space<vmem>>, vector<1x28xf32>
      %664 = vector.broadcast %663 : vector<1x28xf32> to vector<22x28xf32>
      %665 = arith.addf %662, %664 : vector<22x28xf32>
      %cst_281 = arith.constant 0.000000e+00 : f32
      %666 = vector.broadcast %cst_281 : f32 to vector<22x28xf32>
      %667 = arith.cmpf ogt, %665, %666 : vector<22x28xf32>
      %668 = vector.broadcast %0 : vector<1x1xf32> to vector<22x28xf32>
      %669 = arith.mulf %668, %665 : vector<22x28xf32>
      %670 = arith.select %667, %665, %669 : vector<22x28xi1>, vector<22x28xf32>
      %671 = arith.index_cast %arg16 : i32 to index
      %c18_282 = arith.constant 18 : index
      %c0_283 = arith.constant 0 : index
      %c0_284 = arith.constant 0 : index
      %672 = vector.load %arg1[%671, %c18_282, %c0_283, %c0_284] : memref<8x24x24x3xf32, #tpu.memory_space<vmem>>, vector<1x1x24x3xf32>
      %673 = vector.shape_cast %672 : vector<1x1x24x3xf32> to vector<24x3xf32>
      %674 = vector.extract_strided_slice %673 {offsets = [0, 0], sizes = [22, 3], strides = [1, 1]} : vector<24x3xf32> to vector<22x3xf32>
      %675 = vector.extract_strided_slice %673 {offsets = [1, 0], sizes = [22, 3], strides = [1, 1]} : vector<24x3xf32> to vector<22x3xf32>
      %676 = vector.extract_strided_slice %673 {offsets = [2, 0], sizes = [22, 3], strides = [1, 1]} : vector<24x3xf32> to vector<22x3xf32>
      %677 = tpu.concatenate %674, %675, %676 in 1 : vector<22x3xf32>, vector<22x3xf32>, vector<22x3xf32> -> vector<22x9xf32>
      %678 = arith.index_cast %arg16 : i32 to index
      %c19_285 = arith.constant 19 : index
      %c0_286 = arith.constant 0 : index
      %c0_287 = arith.constant 0 : index
      %679 = vector.load %arg1[%678, %c19_285, %c0_286, %c0_287] : memref<8x24x24x3xf32, #tpu.memory_space<vmem>>, vector<1x1x24x3xf32>
      %680 = vector.shape_cast %679 : vector<1x1x24x3xf32> to vector<24x3xf32>
      %681 = vector.extract_strided_slice %680 {offsets = [0, 0], sizes = [22, 3], strides = [1, 1]} : vector<24x3xf32> to vector<22x3xf32>
      %682 = vector.extract_strided_slice %680 {offsets = [1, 0], sizes = [22, 3], strides = [1, 1]} : vector<24x3xf32> to vector<22x3xf32>
      %683 = vector.extract_strided_slice %680 {offsets = [2, 0], sizes = [22, 3], strides = [1, 1]} : vector<24x3xf32> to vector<22x3xf32>
      %684 = tpu.concatenate %681, %682, %683 in 1 : vector<22x3xf32>, vector<22x3xf32>, vector<22x3xf32> -> vector<22x9xf32>
      %685 = arith.index_cast %arg16 : i32 to index
      %c20 = arith.constant 20 : index
      %c0_288 = arith.constant 0 : index
      %c0_289 = arith.constant 0 : index
      %686 = vector.load %arg1[%685, %c20, %c0_288, %c0_289] : memref<8x24x24x3xf32, #tpu.memory_space<vmem>>, vector<1x1x24x3xf32>
      %687 = vector.shape_cast %686 : vector<1x1x24x3xf32> to vector<24x3xf32>
      %688 = vector.extract_strided_slice %687 {offsets = [0, 0], sizes = [22, 3], strides = [1, 1]} : vector<24x3xf32> to vector<22x3xf32>
      %689 = vector.extract_strided_slice %687 {offsets = [1, 0], sizes = [22, 3], strides = [1, 1]} : vector<24x3xf32> to vector<22x3xf32>
      %690 = vector.extract_strided_slice %687 {offsets = [2, 0], sizes = [22, 3], strides = [1, 1]} : vector<24x3xf32> to vector<22x3xf32>
      %691 = tpu.concatenate %688, %689, %690 in 1 : vector<22x3xf32>, vector<22x3xf32>, vector<22x3xf32> -> vector<22x9xf32>
      %692 = tpu.concatenate %677, %684, %691 in 1 : vector<22x9xf32>, vector<22x9xf32>, vector<22x9xf32> -> vector<22x27xf32>
      %693 = arith.truncf %692 : vector<22x27xf32> to vector<22x27xbf16>
      %c0_290 = arith.constant 0 : index
      %c0_291 = arith.constant 0 : index
      %694 = vector.load %arg2[%c0_290, %c0_291] : memref<27x28xbf16, #tpu.memory_space<vmem>>, vector<27x28xbf16>
      %cst_292 = arith.constant dense<0.000000e+00> : vector<22x28xf32>
      %695 = tpu.matmul %693, %694, %cst_292 {dimension_numbers = #tpu.dot_dimension_numbers<[1], [0], [0], [1], [0, 0, 1, 1], [], []>} : vector<22x27xbf16>, vector<27x28xbf16>, vector<22x28xf32> -> vector<22x28xf32>
      %c0_293 = arith.constant 0 : index
      %c0_294 = arith.constant 0 : index
      %696 = vector.load %arg3[%c0_293, %c0_294] : memref<1x28xf32, #tpu.memory_space<vmem>>, vector<1x28xf32>
      %697 = vector.broadcast %696 : vector<1x28xf32> to vector<22x28xf32>
      %698 = arith.addf %695, %697 : vector<22x28xf32>
      %cst_295 = arith.constant 0.000000e+00 : f32
      %699 = vector.broadcast %cst_295 : f32 to vector<22x28xf32>
      %700 = arith.cmpf ogt, %698, %699 : vector<22x28xf32>
      %701 = vector.broadcast %0 : vector<1x1xf32> to vector<22x28xf32>
      %702 = arith.mulf %701, %698 : vector<22x28xf32>
      %703 = arith.select %700, %698, %702 : vector<22x28xi1>, vector<22x28xf32>
      %704 = arith.maximumf %628, %670 : vector<22x28xf32>
      %705 = arith.maximumf %704, %703 : vector<22x28xf32>
      %706 = vector.extract_strided_slice %705 {offsets = [0, 0], sizes = [20, 28], strides = [1, 1]} : vector<22x28xf32> to vector<20x28xf32>
      %707 = vector.extract_strided_slice %705 {offsets = [1, 0], sizes = [20, 28], strides = [1, 1]} : vector<22x28xf32> to vector<20x28xf32>
      %708 = arith.maximumf %706, %707 : vector<20x28xf32>
      %709 = vector.extract_strided_slice %705 {offsets = [2, 0], sizes = [20, 28], strides = [1, 1]} : vector<22x28xf32> to vector<20x28xf32>
      %710 = arith.maximumf %708, %709 : vector<20x28xf32>
      %c0_296 = arith.constant 0 : index
      %c0_297 = arith.constant 0 : index
      %711 = vector.load %arg13[%c0_296, %c0_297] : memref<10x20xf32, #tpu.memory_space<vmem>>, vector<10x20xf32>
      %cst_298 = arith.constant dense<0.000000e+00> : vector<10x28xf32>
      %712 = tpu.matmul %711, %710, %cst_298 {dimension_numbers = #tpu.dot_dimension_numbers<[1], [0], [0], [1], [0, 0, 1, 1], [], []>} : vector<10x20xf32>, vector<20x28xf32>, vector<10x28xf32> -> vector<10x28xf32>
      %713 = arith.index_cast %arg16 : i32 to index
      %c19_299 = arith.constant 19 : index
      %c0_300 = arith.constant 0 : index
      %c0_301 = arith.constant 0 : index
      %714 = vector.load %arg1[%713, %c19_299, %c0_300, %c0_301] : memref<8x24x24x3xf32, #tpu.memory_space<vmem>>, vector<1x1x24x3xf32>
      %715 = vector.shape_cast %714 : vector<1x1x24x3xf32> to vector<24x3xf32>
      %716 = vector.extract_strided_slice %715 {offsets = [0, 0], sizes = [22, 3], strides = [1, 1]} : vector<24x3xf32> to vector<22x3xf32>
      %717 = vector.extract_strided_slice %715 {offsets = [1, 0], sizes = [22, 3], strides = [1, 1]} : vector<24x3xf32> to vector<22x3xf32>
      %718 = vector.extract_strided_slice %715 {offsets = [2, 0], sizes = [22, 3], strides = [1, 1]} : vector<24x3xf32> to vector<22x3xf32>
      %719 = tpu.concatenate %716, %717, %718 in 1 : vector<22x3xf32>, vector<22x3xf32>, vector<22x3xf32> -> vector<22x9xf32>
      %720 = arith.index_cast %arg16 : i32 to index
      %c20_302 = arith.constant 20 : index
      %c0_303 = arith.constant 0 : index
      %c0_304 = arith.constant 0 : index
      %721 = vector.load %arg1[%720, %c20_302, %c0_303, %c0_304] : memref<8x24x24x3xf32, #tpu.memory_space<vmem>>, vector<1x1x24x3xf32>
      %722 = vector.shape_cast %721 : vector<1x1x24x3xf32> to vector<24x3xf32>
      %723 = vector.extract_strided_slice %722 {offsets = [0, 0], sizes = [22, 3], strides = [1, 1]} : vector<24x3xf32> to vector<22x3xf32>
      %724 = vector.extract_strided_slice %722 {offsets = [1, 0], sizes = [22, 3], strides = [1, 1]} : vector<24x3xf32> to vector<22x3xf32>
      %725 = vector.extract_strided_slice %722 {offsets = [2, 0], sizes = [22, 3], strides = [1, 1]} : vector<24x3xf32> to vector<22x3xf32>
      %726 = tpu.concatenate %723, %724, %725 in 1 : vector<22x3xf32>, vector<22x3xf32>, vector<22x3xf32> -> vector<22x9xf32>
      %727 = arith.index_cast %arg16 : i32 to index
      %c21 = arith.constant 21 : index
      %c0_305 = arith.constant 0 : index
      %c0_306 = arith.constant 0 : index
      %728 = vector.load %arg1[%727, %c21, %c0_305, %c0_306] : memref<8x24x24x3xf32, #tpu.memory_space<vmem>>, vector<1x1x24x3xf32>
      %729 = vector.shape_cast %728 : vector<1x1x24x3xf32> to vector<24x3xf32>
      %730 = vector.extract_strided_slice %729 {offsets = [0, 0], sizes = [22, 3], strides = [1, 1]} : vector<24x3xf32> to vector<22x3xf32>
      %731 = vector.extract_strided_slice %729 {offsets = [1, 0], sizes = [22, 3], strides = [1, 1]} : vector<24x3xf32> to vector<22x3xf32>
      %732 = vector.extract_strided_slice %729 {offsets = [2, 0], sizes = [22, 3], strides = [1, 1]} : vector<24x3xf32> to vector<22x3xf32>
      %733 = tpu.concatenate %730, %731, %732 in 1 : vector<22x3xf32>, vector<22x3xf32>, vector<22x3xf32> -> vector<22x9xf32>
      %734 = tpu.concatenate %719, %726, %733 in 1 : vector<22x9xf32>, vector<22x9xf32>, vector<22x9xf32> -> vector<22x27xf32>
      %735 = arith.truncf %734 : vector<22x27xf32> to vector<22x27xbf16>
      %c0_307 = arith.constant 0 : index
      %c0_308 = arith.constant 0 : index
      %736 = vector.load %arg2[%c0_307, %c0_308] : memref<27x28xbf16, #tpu.memory_space<vmem>>, vector<27x28xbf16>
      %cst_309 = arith.constant dense<0.000000e+00> : vector<22x28xf32>
      %737 = tpu.matmul %735, %736, %cst_309 {dimension_numbers = #tpu.dot_dimension_numbers<[1], [0], [0], [1], [0, 0, 1, 1], [], []>} : vector<22x27xbf16>, vector<27x28xbf16>, vector<22x28xf32> -> vector<22x28xf32>
      %c0_310 = arith.constant 0 : index
      %c0_311 = arith.constant 0 : index
      %738 = vector.load %arg3[%c0_310, %c0_311] : memref<1x28xf32, #tpu.memory_space<vmem>>, vector<1x28xf32>
      %739 = vector.broadcast %738 : vector<1x28xf32> to vector<22x28xf32>
      %740 = arith.addf %737, %739 : vector<22x28xf32>
      %cst_312 = arith.constant 0.000000e+00 : f32
      %741 = vector.broadcast %cst_312 : f32 to vector<22x28xf32>
      %742 = arith.cmpf ogt, %740, %741 : vector<22x28xf32>
      %743 = vector.broadcast %0 : vector<1x1xf32> to vector<22x28xf32>
      %744 = arith.mulf %743, %740 : vector<22x28xf32>
      %745 = arith.select %742, %740, %744 : vector<22x28xi1>, vector<22x28xf32>
      %746 = arith.index_cast %arg16 : i32 to index
      %c20_313 = arith.constant 20 : index
      %c0_314 = arith.constant 0 : index
      %c0_315 = arith.constant 0 : index
      %747 = vector.load %arg1[%746, %c20_313, %c0_314, %c0_315] : memref<8x24x24x3xf32, #tpu.memory_space<vmem>>, vector<1x1x24x3xf32>
      %748 = vector.shape_cast %747 : vector<1x1x24x3xf32> to vector<24x3xf32>
      %749 = vector.extract_strided_slice %748 {offsets = [0, 0], sizes = [22, 3], strides = [1, 1]} : vector<24x3xf32> to vector<22x3xf32>
      %750 = vector.extract_strided_slice %748 {offsets = [1, 0], sizes = [22, 3], strides = [1, 1]} : vector<24x3xf32> to vector<22x3xf32>
      %751 = vector.extract_strided_slice %748 {offsets = [2, 0], sizes = [22, 3], strides = [1, 1]} : vector<24x3xf32> to vector<22x3xf32>
      %752 = tpu.concatenate %749, %750, %751 in 1 : vector<22x3xf32>, vector<22x3xf32>, vector<22x3xf32> -> vector<22x9xf32>
      %753 = arith.index_cast %arg16 : i32 to index
      %c21_316 = arith.constant 21 : index
      %c0_317 = arith.constant 0 : index
      %c0_318 = arith.constant 0 : index
      %754 = vector.load %arg1[%753, %c21_316, %c0_317, %c0_318] : memref<8x24x24x3xf32, #tpu.memory_space<vmem>>, vector<1x1x24x3xf32>
      %755 = vector.shape_cast %754 : vector<1x1x24x3xf32> to vector<24x3xf32>
      %756 = vector.extract_strided_slice %755 {offsets = [0, 0], sizes = [22, 3], strides = [1, 1]} : vector<24x3xf32> to vector<22x3xf32>
      %757 = vector.extract_strided_slice %755 {offsets = [1, 0], sizes = [22, 3], strides = [1, 1]} : vector<24x3xf32> to vector<22x3xf32>
      %758 = vector.extract_strided_slice %755 {offsets = [2, 0], sizes = [22, 3], strides = [1, 1]} : vector<24x3xf32> to vector<22x3xf32>
      %759 = tpu.concatenate %756, %757, %758 in 1 : vector<22x3xf32>, vector<22x3xf32>, vector<22x3xf32> -> vector<22x9xf32>
      %760 = arith.index_cast %arg16 : i32 to index
      %c22 = arith.constant 22 : index
      %c0_319 = arith.constant 0 : index
      %c0_320 = arith.constant 0 : index
      %761 = vector.load %arg1[%760, %c22, %c0_319, %c0_320] : memref<8x24x24x3xf32, #tpu.memory_space<vmem>>, vector<1x1x24x3xf32>
      %762 = vector.shape_cast %761 : vector<1x1x24x3xf32> to vector<24x3xf32>
      %763 = vector.extract_strided_slice %762 {offsets = [0, 0], sizes = [22, 3], strides = [1, 1]} : vector<24x3xf32> to vector<22x3xf32>
      %764 = vector.extract_strided_slice %762 {offsets = [1, 0], sizes = [22, 3], strides = [1, 1]} : vector<24x3xf32> to vector<22x3xf32>
      %765 = vector.extract_strided_slice %762 {offsets = [2, 0], sizes = [22, 3], strides = [1, 1]} : vector<24x3xf32> to vector<22x3xf32>
      %766 = tpu.concatenate %763, %764, %765 in 1 : vector<22x3xf32>, vector<22x3xf32>, vector<22x3xf32> -> vector<22x9xf32>
      %767 = tpu.concatenate %752, %759, %766 in 1 : vector<22x9xf32>, vector<22x9xf32>, vector<22x9xf32> -> vector<22x27xf32>
      %768 = arith.truncf %767 : vector<22x27xf32> to vector<22x27xbf16>
      %c0_321 = arith.constant 0 : index
      %c0_322 = arith.constant 0 : index
      %769 = vector.load %arg2[%c0_321, %c0_322] : memref<27x28xbf16, #tpu.memory_space<vmem>>, vector<27x28xbf16>
      %cst_323 = arith.constant dense<0.000000e+00> : vector<22x28xf32>
      %770 = tpu.matmul %768, %769, %cst_323 {dimension_numbers = #tpu.dot_dimension_numbers<[1], [0], [0], [1], [0, 0, 1, 1], [], []>} : vector<22x27xbf16>, vector<27x28xbf16>, vector<22x28xf32> -> vector<22x28xf32>
      %c0_324 = arith.constant 0 : index
      %c0_325 = arith.constant 0 : index
      %771 = vector.load %arg3[%c0_324, %c0_325] : memref<1x28xf32, #tpu.memory_space<vmem>>, vector<1x28xf32>
      %772 = vector.broadcast %771 : vector<1x28xf32> to vector<22x28xf32>
      %773 = arith.addf %770, %772 : vector<22x28xf32>
      %cst_326 = arith.constant 0.000000e+00 : f32
      %774 = vector.broadcast %cst_326 : f32 to vector<22x28xf32>
      %775 = arith.cmpf ogt, %773, %774 : vector<22x28xf32>
      %776 = vector.broadcast %0 : vector<1x1xf32> to vector<22x28xf32>
      %777 = arith.mulf %776, %773 : vector<22x28xf32>
      %778 = arith.select %775, %773, %777 : vector<22x28xi1>, vector<22x28xf32>
      %779 = arith.maximumf %703, %745 : vector<22x28xf32>
      %780 = arith.maximumf %779, %778 : vector<22x28xf32>
      %781 = vector.extract_strided_slice %780 {offsets = [0, 0], sizes = [20, 28], strides = [1, 1]} : vector<22x28xf32> to vector<20x28xf32>
      %782 = vector.extract_strided_slice %780 {offsets = [1, 0], sizes = [20, 28], strides = [1, 1]} : vector<22x28xf32> to vector<20x28xf32>
      %783 = arith.maximumf %781, %782 : vector<20x28xf32>
      %784 = vector.extract_strided_slice %780 {offsets = [2, 0], sizes = [20, 28], strides = [1, 1]} : vector<22x28xf32> to vector<20x28xf32>
      %785 = arith.maximumf %783, %784 : vector<20x28xf32>
      %c0_327 = arith.constant 0 : index
      %c0_328 = arith.constant 0 : index
      %786 = vector.load %arg13[%c0_327, %c0_328] : memref<10x20xf32, #tpu.memory_space<vmem>>, vector<10x20xf32>
      %cst_329 = arith.constant dense<0.000000e+00> : vector<10x28xf32>
      %787 = tpu.matmul %786, %785, %cst_329 {dimension_numbers = #tpu.dot_dimension_numbers<[1], [0], [0], [1], [0, 0, 1, 1], [], []>} : vector<10x20xf32>, vector<20x28xf32>, vector<10x28xf32> -> vector<10x28xf32>
      %788 = vector.extract_strided_slice %112 {offsets = [0, 0], sizes = [8, 28], strides = [1, 1]} : vector<10x28xf32> to vector<8x28xf32>
      %789 = vector.extract_strided_slice %112 {offsets = [1, 0], sizes = [8, 28], strides = [1, 1]} : vector<10x28xf32> to vector<8x28xf32>
      %790 = vector.extract_strided_slice %112 {offsets = [2, 0], sizes = [8, 28], strides = [1, 1]} : vector<10x28xf32> to vector<8x28xf32>
      %791 = tpu.concatenate %788, %789, %790 in 1 : vector<8x28xf32>, vector<8x28xf32>, vector<8x28xf32> -> vector<8x84xf32>
      %792 = vector.extract_strided_slice %187 {offsets = [0, 0], sizes = [8, 28], strides = [1, 1]} : vector<10x28xf32> to vector<8x28xf32>
      %793 = vector.extract_strided_slice %187 {offsets = [1, 0], sizes = [8, 28], strides = [1, 1]} : vector<10x28xf32> to vector<8x28xf32>
      %794 = vector.extract_strided_slice %187 {offsets = [2, 0], sizes = [8, 28], strides = [1, 1]} : vector<10x28xf32> to vector<8x28xf32>
      %795 = tpu.concatenate %792, %793, %794 in 1 : vector<8x28xf32>, vector<8x28xf32>, vector<8x28xf32> -> vector<8x84xf32>
      %796 = vector.extract_strided_slice %262 {offsets = [0, 0], sizes = [8, 28], strides = [1, 1]} : vector<10x28xf32> to vector<8x28xf32>
      %797 = vector.extract_strided_slice %262 {offsets = [1, 0], sizes = [8, 28], strides = [1, 1]} : vector<10x28xf32> to vector<8x28xf32>
      %798 = vector.extract_strided_slice %262 {offsets = [2, 0], sizes = [8, 28], strides = [1, 1]} : vector<10x28xf32> to vector<8x28xf32>
      %799 = tpu.concatenate %796, %797, %798 in 1 : vector<8x28xf32>, vector<8x28xf32>, vector<8x28xf32> -> vector<8x84xf32>
      %800 = vector.extract_strided_slice %337 {offsets = [0, 0], sizes = [8, 28], strides = [1, 1]} : vector<10x28xf32> to vector<8x28xf32>
      %801 = vector.extract_strided_slice %337 {offsets = [1, 0], sizes = [8, 28], strides = [1, 1]} : vector<10x28xf32> to vector<8x28xf32>
      %802 = vector.extract_strided_slice %337 {offsets = [2, 0], sizes = [8, 28], strides = [1, 1]} : vector<10x28xf32> to vector<8x28xf32>
      %803 = tpu.concatenate %800, %801, %802 in 1 : vector<8x28xf32>, vector<8x28xf32>, vector<8x28xf32> -> vector<8x84xf32>
      %804 = vector.extract_strided_slice %412 {offsets = [0, 0], sizes = [8, 28], strides = [1, 1]} : vector<10x28xf32> to vector<8x28xf32>
      %805 = vector.extract_strided_slice %412 {offsets = [1, 0], sizes = [8, 28], strides = [1, 1]} : vector<10x28xf32> to vector<8x28xf32>
      %806 = vector.extract_strided_slice %412 {offsets = [2, 0], sizes = [8, 28], strides = [1, 1]} : vector<10x28xf32> to vector<8x28xf32>
      %807 = tpu.concatenate %804, %805, %806 in 1 : vector<8x28xf32>, vector<8x28xf32>, vector<8x28xf32> -> vector<8x84xf32>
      %808 = vector.extract_strided_slice %487 {offsets = [0, 0], sizes = [8, 28], strides = [1, 1]} : vector<10x28xf32> to vector<8x28xf32>
      %809 = vector.extract_strided_slice %487 {offsets = [1, 0], sizes = [8, 28], strides = [1, 1]} : vector<10x28xf32> to vector<8x28xf32>
      %810 = vector.extract_strided_slice %487 {offsets = [2, 0], sizes = [8, 28], strides = [1, 1]} : vector<10x28xf32> to vector<8x28xf32>
      %811 = tpu.concatenate %808, %809, %810 in 1 : vector<8x28xf32>, vector<8x28xf32>, vector<8x28xf32> -> vector<8x84xf32>
      %812 = vector.extract_strided_slice %562 {offsets = [0, 0], sizes = [8, 28], strides = [1, 1]} : vector<10x28xf32> to vector<8x28xf32>
      %813 = vector.extract_strided_slice %562 {offsets = [1, 0], sizes = [8, 28], strides = [1, 1]} : vector<10x28xf32> to vector<8x28xf32>
      %814 = vector.extract_strided_slice %562 {offsets = [2, 0], sizes = [8, 28], strides = [1, 1]} : vector<10x28xf32> to vector<8x28xf32>
      %815 = tpu.concatenate %812, %813, %814 in 1 : vector<8x28xf32>, vector<8x28xf32>, vector<8x28xf32> -> vector<8x84xf32>
      %816 = vector.extract_strided_slice %637 {offsets = [0, 0], sizes = [8, 28], strides = [1, 1]} : vector<10x28xf32> to vector<8x28xf32>
      %817 = vector.extract_strided_slice %637 {offsets = [1, 0], sizes = [8, 28], strides = [1, 1]} : vector<10x28xf32> to vector<8x28xf32>
      %818 = vector.extract_strided_slice %637 {offsets = [2, 0], sizes = [8, 28], strides = [1, 1]} : vector<10x28xf32> to vector<8x28xf32>
      %819 = tpu.concatenate %816, %817, %818 in 1 : vector<8x28xf32>, vector<8x28xf32>, vector<8x28xf32> -> vector<8x84xf32>
      %820 = vector.extract_strided_slice %712 {offsets = [0, 0], sizes = [8, 28], strides = [1, 1]} : vector<10x28xf32> to vector<8x28xf32>
      %821 = vector.extract_strided_slice %712 {offsets = [1, 0], sizes = [8, 28], strides = [1, 1]} : vector<10x28xf32> to vector<8x28xf32>
      %822 = vector.extract_strided_slice %712 {offsets = [2, 0], sizes = [8, 28], strides = [1, 1]} : vector<10x28xf32> to vector<8x28xf32>
      %823 = tpu.concatenate %820, %821, %822 in 1 : vector<8x28xf32>, vector<8x28xf32>, vector<8x28xf32> -> vector<8x84xf32>
      %824 = vector.extract_strided_slice %787 {offsets = [0, 0], sizes = [8, 28], strides = [1, 1]} : vector<10x28xf32> to vector<8x28xf32>
      %825 = vector.extract_strided_slice %787 {offsets = [1, 0], sizes = [8, 28], strides = [1, 1]} : vector<10x28xf32> to vector<8x28xf32>
      %826 = vector.extract_strided_slice %787 {offsets = [2, 0], sizes = [8, 28], strides = [1, 1]} : vector<10x28xf32> to vector<8x28xf32>
      %827 = tpu.concatenate %824, %825, %826 in 1 : vector<8x28xf32>, vector<8x28xf32>, vector<8x28xf32> -> vector<8x84xf32>
      %828 = tpu.concatenate %791, %795, %799 in 1 : vector<8x84xf32>, vector<8x84xf32>, vector<8x84xf32> -> vector<8x252xf32>
      %829 = tpu.concatenate %795, %799, %803 in 1 : vector<8x84xf32>, vector<8x84xf32>, vector<8x84xf32> -> vector<8x252xf32>
      %830 = tpu.concatenate %799, %803, %807 in 1 : vector<8x84xf32>, vector<8x84xf32>, vector<8x84xf32> -> vector<8x252xf32>
      %831 = tpu.concatenate %803, %807, %811 in 1 : vector<8x84xf32>, vector<8x84xf32>, vector<8x84xf32> -> vector<8x252xf32>
      %832 = tpu.concatenate %807, %811, %815 in 1 : vector<8x84xf32>, vector<8x84xf32>, vector<8x84xf32> -> vector<8x252xf32>
      %833 = tpu.concatenate %811, %815, %819 in 1 : vector<8x84xf32>, vector<8x84xf32>, vector<8x84xf32> -> vector<8x252xf32>
      %834 = tpu.concatenate %815, %819, %823 in 1 : vector<8x84xf32>, vector<8x84xf32>, vector<8x84xf32> -> vector<8x252xf32>
      %835 = tpu.concatenate %819, %823, %827 in 1 : vector<8x84xf32>, vector<8x84xf32>, vector<8x84xf32> -> vector<8x252xf32>
      %836 = tpu.concatenate %828, %829, %830, %831, %832, %833, %834, %835 in 0 : vector<8x252xf32>, vector<8x252xf32>, vector<8x252xf32>, vector<8x252xf32>, vector<8x252xf32>, vector<8x252xf32>, vector<8x252xf32>, vector<8x252xf32> -> vector<64x252xf32>
      %837 = arith.truncf %836 : vector<64x252xf32> to vector<64x252xbf16>
      %c0_330 = arith.constant 0 : index
      %c0_331 = arith.constant 0 : index
      %838 = vector.load %arg4[%c0_330, %c0_331] : memref<252x48xbf16, #tpu.memory_space<vmem>>, vector<252x48xbf16>
      %cst_332 = arith.constant dense<0.000000e+00> : vector<64x48xf32>
      %839 = tpu.matmul %837, %838, %cst_332 {dimension_numbers = #tpu.dot_dimension_numbers<[1], [0], [0], [1], [0, 0, 1, 1], [], []>} : vector<64x252xbf16>, vector<252x48xbf16>, vector<64x48xf32> -> vector<64x48xf32>
      %c0_333 = arith.constant 0 : index
      %c0_334 = arith.constant 0 : index
      %840 = vector.load %arg5[%c0_333, %c0_334] : memref<1x48xf32, #tpu.memory_space<vmem>>, vector<1x48xf32>
      %841 = vector.broadcast %840 : vector<1x48xf32> to vector<64x48xf32>
      %842 = arith.addf %839, %841 : vector<64x48xf32>
      %cst_335 = arith.constant 0.000000e+00 : f32
      %843 = vector.broadcast %cst_335 : f32 to vector<64x48xf32>
      %844 = arith.cmpf ogt, %842, %843 : vector<64x48xf32>
      %845 = vector.broadcast %1 : vector<1x1xf32> to vector<64x48xf32>
      %846 = arith.mulf %845, %842 : vector<64x48xf32>
      %847 = arith.select %844, %842, %846 : vector<64x48xi1>, vector<64x48xf32>
      %848 = vector.extract_strided_slice %847 {offsets = [0, 0], sizes = [8, 48], strides = [1, 1]} : vector<64x48xf32> to vector<8x48xf32>
      %849 = vector.extract_strided_slice %847 {offsets = [8, 0], sizes = [8, 48], strides = [1, 1]} : vector<64x48xf32> to vector<8x48xf32>
      %850 = vector.extract_strided_slice %847 {offsets = [16, 0], sizes = [8, 48], strides = [1, 1]} : vector<64x48xf32> to vector<8x48xf32>
      %851 = vector.extract_strided_slice %847 {offsets = [24, 0], sizes = [8, 48], strides = [1, 1]} : vector<64x48xf32> to vector<8x48xf32>
      %852 = vector.extract_strided_slice %847 {offsets = [32, 0], sizes = [8, 48], strides = [1, 1]} : vector<64x48xf32> to vector<8x48xf32>
      %853 = vector.extract_strided_slice %847 {offsets = [40, 0], sizes = [8, 48], strides = [1, 1]} : vector<64x48xf32> to vector<8x48xf32>
      %854 = vector.extract_strided_slice %847 {offsets = [48, 0], sizes = [8, 48], strides = [1, 1]} : vector<64x48xf32> to vector<8x48xf32>
      %855 = arith.maximumf %848, %849 : vector<8x48xf32>
      %856 = arith.maximumf %855, %850 : vector<8x48xf32>
      %857 = vector.extract_strided_slice %856 {offsets = [0, 0], sizes = [6, 48], strides = [1, 1]} : vector<8x48xf32> to vector<6x48xf32>
      %858 = vector.extract_strided_slice %856 {offsets = [1, 0], sizes = [6, 48], strides = [1, 1]} : vector<8x48xf32> to vector<6x48xf32>
      %859 = arith.maximumf %857, %858 : vector<6x48xf32>
      %860 = vector.extract_strided_slice %856 {offsets = [2, 0], sizes = [6, 48], strides = [1, 1]} : vector<8x48xf32> to vector<6x48xf32>
      %861 = arith.maximumf %859, %860 : vector<6x48xf32>
      %c0_336 = arith.constant 0 : index
      %c0_337 = arith.constant 0 : index
      %862 = vector.load %arg14[%c0_336, %c0_337] : memref<3x6xf32, #tpu.memory_space<vmem>>, vector<3x6xf32>
      %cst_338 = arith.constant dense<0.000000e+00> : vector<3x48xf32>
      %863 = tpu.matmul %862, %861, %cst_338 {dimension_numbers = #tpu.dot_dimension_numbers<[1], [0], [0], [1], [0, 0, 1, 1], [], []>} : vector<3x6xf32>, vector<6x48xf32>, vector<3x48xf32> -> vector<3x48xf32>
      %864 = arith.maximumf %850, %851 : vector<8x48xf32>
      %865 = arith.maximumf %864, %852 : vector<8x48xf32>
      %866 = vector.extract_strided_slice %865 {offsets = [0, 0], sizes = [6, 48], strides = [1, 1]} : vector<8x48xf32> to vector<6x48xf32>
      %867 = vector.extract_strided_slice %865 {offsets = [1, 0], sizes = [6, 48], strides = [1, 1]} : vector<8x48xf32> to vector<6x48xf32>
      %868 = arith.maximumf %866, %867 : vector<6x48xf32>
      %869 = vector.extract_strided_slice %865 {offsets = [2, 0], sizes = [6, 48], strides = [1, 1]} : vector<8x48xf32> to vector<6x48xf32>
      %870 = arith.maximumf %868, %869 : vector<6x48xf32>
      %c0_339 = arith.constant 0 : index
      %c0_340 = arith.constant 0 : index
      %871 = vector.load %arg14[%c0_339, %c0_340] : memref<3x6xf32, #tpu.memory_space<vmem>>, vector<3x6xf32>
      %cst_341 = arith.constant dense<0.000000e+00> : vector<3x48xf32>
      %872 = tpu.matmul %871, %870, %cst_341 {dimension_numbers = #tpu.dot_dimension_numbers<[1], [0], [0], [1], [0, 0, 1, 1], [], []>} : vector<3x6xf32>, vector<6x48xf32>, vector<3x48xf32> -> vector<3x48xf32>
      %873 = arith.maximumf %852, %853 : vector<8x48xf32>
      %874 = arith.maximumf %873, %854 : vector<8x48xf32>
      %875 = vector.extract_strided_slice %874 {offsets = [0, 0], sizes = [6, 48], strides = [1, 1]} : vector<8x48xf32> to vector<6x48xf32>
      %876 = vector.extract_strided_slice %874 {offsets = [1, 0], sizes = [6, 48], strides = [1, 1]} : vector<8x48xf32> to vector<6x48xf32>
      %877 = arith.maximumf %875, %876 : vector<6x48xf32>
      %878 = vector.extract_strided_slice %874 {offsets = [2, 0], sizes = [6, 48], strides = [1, 1]} : vector<8x48xf32> to vector<6x48xf32>
      %879 = arith.maximumf %877, %878 : vector<6x48xf32>
      %c0_342 = arith.constant 0 : index
      %c0_343 = arith.constant 0 : index
      %880 = vector.load %arg14[%c0_342, %c0_343] : memref<3x6xf32, #tpu.memory_space<vmem>>, vector<3x6xf32>
      %cst_344 = arith.constant dense<0.000000e+00> : vector<3x48xf32>
      %881 = tpu.matmul %880, %879, %cst_344 {dimension_numbers = #tpu.dot_dimension_numbers<[1], [0], [0], [1], [0, 0, 1, 1], [], []>} : vector<3x6xf32>, vector<6x48xf32>, vector<3x48xf32> -> vector<3x48xf32>
      %882 = vector.extract_strided_slice %863 {offsets = [0, 0], sizes = [2, 48], strides = [1, 1]} : vector<3x48xf32> to vector<2x48xf32>
      %883 = vector.extract_strided_slice %863 {offsets = [1, 0], sizes = [2, 48], strides = [1, 1]} : vector<3x48xf32> to vector<2x48xf32>
      %884 = tpu.concatenate %882, %883 in 1 : vector<2x48xf32>, vector<2x48xf32> -> vector<2x96xf32>
      %885 = vector.extract_strided_slice %872 {offsets = [0, 0], sizes = [2, 48], strides = [1, 1]} : vector<3x48xf32> to vector<2x48xf32>
      %886 = vector.extract_strided_slice %872 {offsets = [1, 0], sizes = [2, 48], strides = [1, 1]} : vector<3x48xf32> to vector<2x48xf32>
      %887 = tpu.concatenate %885, %886 in 1 : vector<2x48xf32>, vector<2x48xf32> -> vector<2x96xf32>
      %888 = vector.extract_strided_slice %881 {offsets = [0, 0], sizes = [2, 48], strides = [1, 1]} : vector<3x48xf32> to vector<2x48xf32>
      %889 = vector.extract_strided_slice %881 {offsets = [1, 0], sizes = [2, 48], strides = [1, 1]} : vector<3x48xf32> to vector<2x48xf32>
      %890 = tpu.concatenate %888, %889 in 1 : vector<2x48xf32>, vector<2x48xf32> -> vector<2x96xf32>
      %891 = tpu.concatenate %884, %887 in 1 : vector<2x96xf32>, vector<2x96xf32> -> vector<2x192xf32>
      %892 = arith.truncf %891 : vector<2x192xf32> to vector<2x192xbf16>
      %c0_345 = arith.constant 0 : index
      %c0_346 = arith.constant 0 : index
      %893 = vector.load %arg6[%c0_345, %c0_346] : memref<192x64xbf16, #tpu.memory_space<vmem>>, vector<192x64xbf16>
      %cst_347 = arith.constant dense<0.000000e+00> : vector<2x64xf32>
      %894 = tpu.matmul %892, %893, %cst_347 {dimension_numbers = #tpu.dot_dimension_numbers<[1], [0], [0], [1], [0, 0, 1, 1], [], []>} : vector<2x192xbf16>, vector<192x64xbf16>, vector<2x64xf32> -> vector<2x64xf32>
      %c0_348 = arith.constant 0 : index
      %c0_349 = arith.constant 0 : index
      %895 = vector.load %arg7[%c0_348, %c0_349] : memref<1x64xf32, #tpu.memory_space<vmem>>, vector<1x64xf32>
      %896 = vector.broadcast %895 : vector<1x64xf32> to vector<2x64xf32>
      %897 = arith.addf %894, %896 : vector<2x64xf32>
      %cst_350 = arith.constant 0.000000e+00 : f32
      %898 = vector.broadcast %cst_350 : f32 to vector<2x64xf32>
      %899 = arith.cmpf ogt, %897, %898 : vector<2x64xf32>
      %900 = vector.broadcast %2 : vector<1x1xf32> to vector<2x64xf32>
      %901 = arith.mulf %900, %897 : vector<2x64xf32>
      %902 = arith.select %899, %897, %901 : vector<2x64xi1>, vector<2x64xf32>
      %903 = tpu.concatenate %887, %890 in 1 : vector<2x96xf32>, vector<2x96xf32> -> vector<2x192xf32>
      %904 = arith.truncf %903 : vector<2x192xf32> to vector<2x192xbf16>
      %c0_351 = arith.constant 0 : index
      %c0_352 = arith.constant 0 : index
      %905 = vector.load %arg6[%c0_351, %c0_352] : memref<192x64xbf16, #tpu.memory_space<vmem>>, vector<192x64xbf16>
      %cst_353 = arith.constant dense<0.000000e+00> : vector<2x64xf32>
      %906 = tpu.matmul %904, %905, %cst_353 {dimension_numbers = #tpu.dot_dimension_numbers<[1], [0], [0], [1], [0, 0, 1, 1], [], []>} : vector<2x192xbf16>, vector<192x64xbf16>, vector<2x64xf32> -> vector<2x64xf32>
      %c0_354 = arith.constant 0 : index
      %c0_355 = arith.constant 0 : index
      %907 = vector.load %arg7[%c0_354, %c0_355] : memref<1x64xf32, #tpu.memory_space<vmem>>, vector<1x64xf32>
      %908 = vector.broadcast %907 : vector<1x64xf32> to vector<2x64xf32>
      %909 = arith.addf %906, %908 : vector<2x64xf32>
      %cst_356 = arith.constant 0.000000e+00 : f32
      %910 = vector.broadcast %cst_356 : f32 to vector<2x64xf32>
      %911 = arith.cmpf ogt, %909, %910 : vector<2x64xf32>
      %912 = vector.broadcast %2 : vector<1x1xf32> to vector<2x64xf32>
      %913 = arith.mulf %912, %909 : vector<2x64xf32>
      %914 = arith.select %911, %909, %913 : vector<2x64xi1>, vector<2x64xf32>
      %915 = vector.extract_strided_slice %902 {offsets = [0, 0], sizes = [1, 64], strides = [1, 1]} : vector<2x64xf32> to vector<1x64xf32>
      %916 = vector.extract_strided_slice %902 {offsets = [1, 0], sizes = [1, 64], strides = [1, 1]} : vector<2x64xf32> to vector<1x64xf32>
      %917 = vector.extract_strided_slice %914 {offsets = [0, 0], sizes = [1, 64], strides = [1, 1]} : vector<2x64xf32> to vector<1x64xf32>
      %918 = vector.extract_strided_slice %914 {offsets = [1, 0], sizes = [1, 64], strides = [1, 1]} : vector<2x64xf32> to vector<1x64xf32>
      %919 = tpu.concatenate %915, %916, %917, %918 in 1 : vector<1x64xf32>, vector<1x64xf32>, vector<1x64xf32>, vector<1x64xf32> -> vector<1x256xf32>
      %920 = arith.truncf %919 : vector<1x256xf32> to vector<1x256xbf16>
      %c0_357 = arith.constant 0 : index
      %c0_358 = arith.constant 0 : index
      %921 = vector.load %arg8[%c0_357, %c0_358] : memref<256x128xbf16, #tpu.memory_space<vmem>>, vector<256x128xbf16>
      %cst_359 = arith.constant dense<0.000000e+00> : vector<1x128xf32>
      %922 = tpu.matmul %920, %921, %cst_359 {dimension_numbers = #tpu.dot_dimension_numbers<[1], [0], [0], [1], [0, 0, 1, 1], [], []>} : vector<1x256xbf16>, vector<256x128xbf16>, vector<1x128xf32> -> vector<1x128xf32>
      %c0_360 = arith.constant 0 : index
      %c0_361 = arith.constant 0 : index
      %923 = vector.load %arg9[%c0_360, %c0_361] : memref<1x128xf32, #tpu.memory_space<vmem>>, vector<1x128xf32>
      %924 = arith.addf %922, %923 : vector<1x128xf32>
      %cst_362 = arith.constant 0.000000e+00 : f32
      %925 = vector.broadcast %cst_362 : f32 to vector<1x128xf32>
      %926 = arith.cmpf ogt, %924, %925 : vector<1x128xf32>
      %927 = vector.broadcast %3 : vector<1x1xf32> to vector<1x128xf32>
      %928 = arith.mulf %927, %924 : vector<1x128xf32>
      %929 = arith.select %926, %924, %928 : vector<1x128xi1>, vector<1x128xf32>
      %930 = arith.truncf %929 : vector<1x128xf32> to vector<1x128xbf16>
      %c0_363 = arith.constant 0 : index
      %c0_364 = arith.constant 0 : index
      %931 = vector.load %arg10[%c0_363, %c0_364] : memref<128x5xbf16, #tpu.memory_space<vmem>>, vector<128x5xbf16>
      %cst_365 = arith.constant dense<0.000000e+00> : vector<1x5xf32>
      %932 = tpu.matmul %930, %931, %cst_365 {dimension_numbers = #tpu.dot_dimension_numbers<[1], [0], [0], [1], [0, 0, 1, 1], [], []>} : vector<1x128xbf16>, vector<128x5xbf16>, vector<1x5xf32> -> vector<1x5xf32>
      %c0_366 = arith.constant 0 : index
      %c0_367 = arith.constant 0 : index
      %933 = vector.load %arg11[%c0_366, %c0_367] : memref<1x5xf32, #tpu.memory_space<vmem>>, vector<1x5xf32>
      %934 = arith.addf %932, %933 : vector<1x5xf32>
      %935 = vector.extract_strided_slice %934 {offsets = [0, 0], sizes = [1, 1], strides = [1, 1]} : vector<1x5xf32> to vector<1x1xf32>
      %cst_368 = arith.constant 0.000000e+00 : f32
      %936 = vector.broadcast %cst_368 : f32 to vector<1x1xf32>
      %937 = arith.subf %936, %935 : vector<1x1xf32>
      %938 = math.exp %937 : vector<1x1xf32>
      %cst_369 = arith.constant 1.000000e+00 : f32
      %939 = vector.broadcast %cst_369 : f32 to vector<1x1xf32>
      %940 = arith.addf %939, %938 : vector<1x1xf32>
      %cst_370 = arith.constant 1.000000e+00 : f32
      %941 = vector.broadcast %cst_370 : f32 to vector<1x1xf32>
      %942 = arith.divf %941, %940 : vector<1x1xf32>
      %943 = vector.extract_strided_slice %934 {offsets = [0, 1], sizes = [1, 4], strides = [1, 1]} : vector<1x5xf32> to vector<1x4xf32>
      %944 = tpu.concatenate %942, %943 in 1 : vector<1x1xf32>, vector<1x4xf32> -> vector<1x5xf32>
      %945 = arith.index_cast %arg16 : i32 to index
      %c0_371 = arith.constant 0 : index
      %c0_372 = arith.constant 0 : index
      %946 = vector.load %arg15[%945, %c0_371, %c0_372] : memref<8x1x5xf32, #tpu.memory_space<vmem>>, vector<1x1x5xf32>
      %947 = vector.shape_cast %946 : vector<1x1x5xf32> to vector<1x5xf32>
      %948 = vector.shape_cast %944 : vector<1x5xf32> to vector<1x1x5xf32>
      tpu.vector_store %arg15[%945, %c0_371, %c0_372], %948 {strides = array<i32>} : memref<8x1x5xf32, #tpu.memory_space<vmem>>, vector<1x1x5xf32>,
    }
    %c8_i32_4 = arith.constant 8 : i32
    return
  }
  func.func @transform_0(%arg0: i32) -> (i32, i32, i32, i32) {
    %c0_i32 = arith.constant 0 : i32
    %c0_i32_0 = arith.constant 0 : i32
    %c0_i32_1 = arith.constant 0 : i32
    %c0_i32_2 = arith.constant 0 : i32
    return %arg0, %c0_i32, %c0_i32_0, %c0_i32_1 : i32, i32, i32, i32
  }
  func.func @transform_1(%arg0: i32) -> (i32, i32) {
    %c0_i32 = arith.constant 0 : i32
    %c0_i32_0 = arith.constant 0 : i32
    %c0_i32_1 = arith.constant 0 : i32
    return %c0_i32, %c0_i32_0 : i32, i32
  }
  func.func @transform_2(%arg0: i32) -> (i32, i32) {
    %c0_i32 = arith.constant 0 : i32
    %c0_i32_0 = arith.constant 0 : i32
    %c0_i32_1 = arith.constant 0 : i32
    return %c0_i32, %c0_i32_0 : i32, i32
  }
  func.func @transform_3(%arg0: i32) -> (i32, i32) {
    %c0_i32 = arith.constant 0 : i32
    %c0_i32_0 = arith.constant 0 : i32
    %c0_i32_1 = arith.constant 0 : i32
    return %c0_i32, %c0_i32_0 : i32, i32
  }
  func.func @transform_4(%arg0: i32) -> (i32, i32) {
    %c0_i32 = arith.constant 0 : i32
    %c0_i32_0 = arith.constant 0 : i32
    %c0_i32_1 = arith.constant 0 : i32
    return %c0_i32, %c0_i32_0 : i32, i32
  }
  func.func @transform_5(%arg0: i32) -> (i32, i32) {
    %c0_i32 = arith.constant 0 : i32
    %c0_i32_0 = arith.constant 0 : i32
    %c0_i32_1 = arith.constant 0 : i32
    return %c0_i32, %c0_i32_0 : i32, i32
  }
  func.func @transform_6(%arg0: i32) -> (i32, i32) {
    %c0_i32 = arith.constant 0 : i32
    %c0_i32_0 = arith.constant 0 : i32
    %c0_i32_1 = arith.constant 0 : i32
    return %c0_i32, %c0_i32_0 : i32, i32
  }
  func.func @transform_7(%arg0: i32) -> (i32, i32) {
    %c0_i32 = arith.constant 0 : i32
    %c0_i32_0 = arith.constant 0 : i32
    %c0_i32_1 = arith.constant 0 : i32
    return %c0_i32, %c0_i32_0 : i32, i32
  }
  func.func @transform_8(%arg0: i32) -> (i32, i32) {
    %c0_i32 = arith.constant 0 : i32
    %c0_i32_0 = arith.constant 0 : i32
    %c0_i32_1 = arith.constant 0 : i32
    return %c0_i32, %c0_i32_0 : i32, i32
  }
  func.func @transform_9(%arg0: i32) -> (i32, i32) {
    %c0_i32 = arith.constant 0 : i32
    %c0_i32_0 = arith.constant 0 : i32
    %c0_i32_1 = arith.constant 0 : i32
    return %c0_i32, %c0_i32_0 : i32, i32
  }
  func.func @transform_10(%arg0: i32) -> (i32, i32) {
    %c0_i32 = arith.constant 0 : i32
    %c0_i32_0 = arith.constant 0 : i32
    %c0_i32_1 = arith.constant 0 : i32
    return %c0_i32, %c0_i32_0 : i32, i32
  }
  func.func @transform_11(%arg0: i32) -> (i32, i32) {
    %c0_i32 = arith.constant 0 : i32
    %c0_i32_0 = arith.constant 0 : i32
    %c0_i32_1 = arith.constant 0 : i32
    return %c0_i32, %c0_i32_0 : i32, i32
  }
  func.func @transform_12(%arg0: i32) -> (i32, i32) {
    %c0_i32 = arith.constant 0 : i32
    %c0_i32_0 = arith.constant 0 : i32
    %c0_i32_1 = arith.constant 0 : i32
    return %c0_i32, %c0_i32_0 : i32, i32
  }
  func.func @transform_13(%arg0: i32) -> (i32, i32) {
    %c0_i32 = arith.constant 0 : i32
    %c0_i32_0 = arith.constant 0 : i32
    %c0_i32_1 = arith.constant 0 : i32
    return %c0_i32, %c0_i32_0 : i32, i32
  }
  func.func @transform_14(%arg0: i32) -> (i32, i32, i32) {
    %c0_i32 = arith.constant 0 : i32
    %c0_i32_0 = arith.constant 0 : i32
    %c0_i32_1 = arith.constant 0 : i32
    return %arg0, %c0_i32, %c0_i32_0 : i32, i32, i32
  }
}

</mosaic_0001>

<llo_original>
// kernel: rnet_forward.1
$region0: #{rnet_forward.1}
  #allocation0 [shape = 'u32[]', space=smem, size = 0x4, offset = 0x4, fixed_abs, tag = 'smem constant byte address 0x4 - core index']
  #allocation1 [shape = 'u32[8192,128]{1,0:T(1,128)}', space=vmem, size = 0x400000, scoped, tag = 'internal scratch']
  %s0 = inlined_call_operand.vmem [shape: f32[8,24,24,3], index: 0, kind: input, shape index: {}]
  %s1 = inlined_call_operand.vmem [shape: bf16[27,28], index: 1, kind: input, shape index: {}]
  %s2 = inlined_call_operand.vmem [shape: f32[1,28], index: 2, kind: input, shape index: {}]
  %s3 = inlined_call_operand.vmem [shape: bf16[252,48], index: 3, kind: input, shape index: {}]
  %s4 = inlined_call_operand.vmem [shape: f32[1,48], index: 4, kind: input, shape index: {}]
  %s5 = inlined_call_operand.vmem [shape: bf16[192,64], index: 5, kind: input, shape index: {}]
  %s6 = inlined_call_operand.vmem [shape: f32[1,64], index: 6, kind: input, shape index: {}]
  %s7 = inlined_call_operand.vmem [shape: bf16[256,128], index: 7, kind: input, shape index: {}]
  %s8 = inlined_call_operand.vmem [shape: f32[1,128], index: 8, kind: input, shape index: {}]
  %s9 = inlined_call_operand.vmem [shape: bf16[128,5], index: 9, kind: input, shape index: {}]
  %s10 = inlined_call_operand.vmem [shape: f32[1,5], index: 10, kind: input, shape index: {}]
  %s11 = inlined_call_operand.vmem [shape: f32[1,4], index: 11, kind: input, shape index: {}]
  %s12 = inlined_call_operand.vmem [shape: f32[10,20], index: 12, kind: input, shape index: {}]
  %s13 = inlined_call_operand.vmem [shape: f32[3,6], index: 13, kind: input, shape index: {}]
  %s14 = inlined_call_operand.vmem [shape: f32[8,1,5], index: 14, kind: output, shape index: {}]
  %s15 = sld [smem:[#allocation0]]
  $region73: #{rnet_forward.1} parent=0
    _
  %s17 = ssub.s32 1, %s15
  %s18 = scalar_select 0, %s17, %s15
  // Predicated region
  $region2: #{rnet_forward.1} parent=0 // pred_check
    _
  $region3: #{rnet_forward.1} parent=0 // pred_check_branch
    %20 = sbr.rel (0) target = $region5
  $region4: #{rnet_forward.1} parent=0 // pred_region
    _
  $region5: #{rnet_forward.1} parent=0 // pred_fallthru
    _
  // Predicated region
  $region6: #{rnet_forward.1} parent=0 // pred_check
    _
  $region7: #{rnet_forward.1} parent=0 // pred_check_branch
    %22 = sbr.rel (0) target = $region9
  $region8: #{rnet_forward.1} parent=0 // pred_region
    _
  $region9: #{rnet_forward.1} parent=0 // pred_fallthru
    _
  // Predicated region
  $region10: #{rnet_forward.1} parent=0 // pred_check
    _
  $region11: #{rnet_forward.1} parent=0 // pred_check_branch
    %24 = sbr.rel (0) target = $region13
  $region12: #{rnet_forward.1} parent=0 // pred_region
    _
  $region13: #{rnet_forward.1} parent=0 // pred_fallthru
    _
  // Predicated region
  $region14: #{rnet_forward.1} parent=0 // pred_check
    _
  $region15: #{rnet_forward.1} parent=0 // pred_check_branch
    %26 = sbr.rel (0) target = $region17
  $region16: #{rnet_forward.1} parent=0 // pred_region
    _
  $region17: #{rnet_forward.1} parent=0 // pred_fallthru
    _
  // Predicated region
  $region18: #{rnet_forward.1} parent=0 // pred_check
    _
  $region19: #{rnet_forward.1} parent=0 // pred_check_branch
    %28 = sbr.rel (0) target = $region21
  $region20: #{rnet_forward.1} parent=0 // pred_region
    _
  $region21: #{rnet_forward.1} parent=0 // pred_fallthru
    _
  // Predicated region
  $region22: #{rnet_forward.1} parent=0 // pred_check
    _
  $region23: #{rnet_forward.1} parent=0 // pred_check_branch
    %30 = sbr.rel (0) target = $region25
  $region24: #{rnet_forward.1} parent=0 // pred_region
    _
  $region25: #{rnet_forward.1} parent=0 // pred_fallthru
    _
  // Predicated region
  $region26: #{rnet_forward.1} parent=0 // pred_check
    _
  $region27: #{rnet_forward.1} parent=0 // pred_check_branch
    %32 = sbr.rel (0) target = $region29
  $region28: #{rnet_forward.1} parent=0 // pred_region
    _
  $region29: #{rnet_forward.1} parent=0 // pred_fallthru
    _
  // Predicated region
  $region30: #{rnet_forward.1} parent=0 // pred_check
    _
  $region31: #{rnet_forward.1} parent=0 // pred_check_branch
    %34 = sbr.rel (0) target = $region33
  $region32: #{rnet_forward.1} parent=0 // pred_region
    _
  $region33: #{rnet_forward.1} parent=0 // pred_fallthru
    _
  // Predicated region
  $region34: #{rnet_forward.1} parent=0 // pred_check
    _
  $region35: #{rnet_forward.1} parent=0 // pred_check_branch
    %36 = sbr.rel (0) target = $region37
  $region36: #{rnet_forward.1} parent=0 // pred_region
    _
  $region37: #{rnet_forward.1} parent=0 // pred_fallthru
    _
  // Predicated region
  $region38: #{rnet_forward.1} parent=0 // pred_check
    _
  $region39: #{rnet_forward.1} parent=0 // pred_check_branch
    %38 = sbr.rel (0) target = $region41
  $region40: #{rnet_forward.1} parent=0 // pred_region
    _
  $region41: #{rnet_forward.1} parent=0 // pred_fallthru
    _
  // Predicated region
  $region42: #{rnet_forward.1} parent=0 // pred_check
    _
  $region43: #{rnet_forward.1} parent=0 // pred_check_branch
    %40 = sbr.rel (0) target = $region45
  $region44: #{rnet_forward.1} parent=0 // pred_region
    _
  $region45: #{rnet_forward.1} parent=0 // pred_fallthru
    _
  // Predicated region
  $region46: #{rnet_forward.1} parent=0 // pred_check
    _
  $region47: #{rnet_forward.1} parent=0 // pred_check_branch
    %42 = sbr.rel (0) target = $region49
  $region48: #{rnet_forward.1} parent=0 // pred_region
    _
  $region49: #{rnet_forward.1} parent=0 // pred_fallthru
    _
  // Predicated region
  $region50: #{rnet_forward.1} parent=0 // pred_check
    _
  $region51: #{rnet_forward.1} parent=0 // pred_check_branch
    %44 = sbr.rel (0) target = $region53
  $region52: #{rnet_forward.1} parent=0 // pred_region
    _
  $region53: #{rnet_forward.1} parent=0 // pred_fallthru
    _
  // Predicated region
  $region54: #{rnet_forward.1} parent=0 // pred_check
    _
  $region55: #{rnet_forward.1} parent=0 // pred_check_branch
    %46 = sbr.rel (0) target = $region57
  $region56: #{rnet_forward.1} parent=0 // pred_region
    _
  $region57: #{rnet_forward.1} parent=0 // pred_fallthru
    _
  %v48 = vld [vmem:[%s11] sm:$0x1]
  loop: start=0, step=1, limit=8
  $region58: #{rnet_forward.1} parent=0 // loop_pre_header
    _
  $region59: #{rnet_forward.1} parent=0 // loop_header
    %s50 = sphi 0, %s54
    %p51 = scmp.ge.s32.totalorder %s50, 8
  $region60: #{rnet_forward.1} parent=0 // loop_header_branch
    %53 = sbr.rel (%p51) target = $region64
  $region61: #{rnet_forward.1} parent=0 // loop_body
    %s55 = smul.u32 %s50, 576
    %s56 = scalar_lea.vmem %s0, %s55
    %v57 = vld [vmem:[%s56] sm:$0xff]
    %v58 = vld [vmem:[%s56 + $0x8] sm:$0xff]
    %v59 = vld [vmem:[%s56 + $0x10] sm:$0xff]
    %vm63 = vcmask 1046528
    %v64 = vrot.slane %v57, 1
    %v65 = vrot.slane %v58, 1
    %v66 = vsel %vm63, %v64, %v65
    %v67 = vrot.slane %v59, 1
    %v68 = vsel %vm63, %v65, %v67
    %69 = vrot.lane.b32.xlu0 %v66, 3
    %v70 = vpop.permute.xlu0 %69
    %71 = vrot.lane.b32.xlu0 %v68, 3
    %v72 = vpop.permute.xlu0 %71
    %73 = vrot.lane.b32.xlu0 %v67, 3
    %v74 = vpop.permute.xlu0 %73
    %vm78 = vcmask 1045504
    %v79 = vrot.slane %v57, 2
    %v80 = vrot.slane %v58, 2
    %v81 = vsel %vm78, %v79, %v80
    %v82 = vrot.slane %v59, 2
    %v83 = vsel %vm78, %v80, %v82
    %84 = vrot.lane.b32.xlu0 %v81, 6
    %v85 = vpop.permute.xlu0 %84
    %86 = vrot.lane.b32.xlu0 %v83, 6
    %v87 = vpop.permute.xlu0 %86
    %88 = vrot.lane.b32.xlu0 %v82, 6
    %v89 = vpop.permute.xlu0 %88
    %vm93 = vcmask 23552
    %v94 = vsel %vm93, %v57, %v70
    %v95 = vsel %vm93, %v58, %v72
    %v96 = vsel %vm93, %v59, %v74
    %vm97 = vcmask 48128
    %v98 = vsel %vm97, %v94, %v85
    %v99 = vsel %vm97, %v95, %v87
    %v100 = vsel %vm97, %v96, %v89
    %s101 = sadd.s32 24, %s55
    %s102 = scalar_lea.vmem %s0, %s101
    %v103 = vld [vmem:[%s102] sm:$0xff]
    %v104 = vld [vmem:[%s102 + $0x8] sm:$0xff]
    %v105 = vld [vmem:[%s102 + $0x10] sm:$0xff]
    %v109 = vrot.slane %v103, 1
    %v110 = vrot.slane %v104, 1
    %v111 = vsel %vm63, %v109, %v110
    %v112 = vrot.slane %v105, 1
    %v113 = vsel %vm63, %v110, %v112
    %114 = vrot.lane.b32.xlu0 %v111, 3
    %v115 = vpop.permute.xlu0 %114
    %116 = vrot.lane.b32.xlu0 %v113, 3
    %v117 = vpop.permute.xlu0 %116
    %118 = vrot.lane.b32.xlu0 %v112, 3
    %v119 = vpop.permute.xlu0 %118
    %v123 = vrot.slane %v103, 2
    %v124 = vrot.slane %v104, 2
    %v125 = vsel %vm78, %v123, %v124
    %v126 = vrot.slane %v105, 2
    %v127 = vsel %vm78, %v124, %v126
    %128 = vrot.lane.b32.xlu0 %v125, 6
    %v129 = vpop.permute.xlu0 %128
    %130 = vrot.lane.b32.xlu0 %v127, 6
    %v131 = vpop.permute.xlu0 %130
    %132 = vrot.lane.b32.xlu0 %v126, 6
    %v133 = vpop.permute.xlu0 %132
    %v137 = vsel %vm93, %v103, %v115
    %v138 = vsel %vm93, %v104, %v117
    %v139 = vsel %vm93, %v105, %v119
    %v140 = vsel %vm97, %v137, %v129
    %v141 = vsel %vm97, %v138, %v131
    %v142 = vsel %vm97, %v139, %v133
    %s143 = sadd.s32 48, %s55
    %s144 = scalar_lea.vmem %s0, %s143
    %v145 = vld [vmem:[%s144] sm:$0xff]
    %v146 = vld [vmem:[%s144 + $0x8] sm:$0xff]
    %v147 = vld [vmem:[%s144 + $0x10] sm:$0xff]
    %v151 = vrot.slane %v145, 1
    %v152 = vrot.slane %v146, 1
    %v153 = vsel %vm63, %v151, %v152
    %v154 = vrot.slane %v147, 1
    %v155 = vsel %vm63, %v152, %v154
    %156 = vrot.lane.b32.xlu0 %v153, 3
    %v157 = vpop.permute.xlu0 %156
    %158 = vrot.lane.b32.xlu0 %v155, 3
    %v159 = vpop.permute.xlu0 %158
    %160 = vrot.lane.b32.xlu0 %v154, 3
    %v161 = vpop.permute.xlu0 %160
    %v165 = vrot.slane %v145, 2
    %v166 = vrot.slane %v146, 2
    %v167 = vsel %vm78, %v165, %v166
    %v168 = vrot.slane %v147, 2
    %v169 = vsel %vm78, %v166, %v168
    %170 = vrot.lane.b32.xlu0 %v167, 6
    %v171 = vpop.permute.xlu0 %170
    %172 = vrot.lane.b32.xlu0 %v169, 6
    %v173 = vpop.permute.xlu0 %172
    %174 = vrot.lane.b32.xlu0 %v168, 6
    %v175 = vpop.permute.xlu0 %174
    %v179 = vsel %vm93, %v145, %v157
    %v180 = vsel %vm93, %v146, %v159
    %v181 = vsel %vm93, %v147, %v161
    %v182 = vsel %vm97, %v179, %v171
    %v183 = vsel %vm97, %v180, %v173
    %v184 = vsel %vm97, %v181, %v175
    %188 = vrot.lane.b32.xlu0 %v140, 9
    %v189 = vpop.permute.xlu0 %188
    %190 = vrot.lane.b32.xlu0 %v141, 9
    %v191 = vpop.permute.xlu0 %190
    %192 = vrot.lane.b32.xlu0 %v142, 9
    %v193 = vpop.permute.xlu0 %192
    %200 = vrot.lane.b32.xlu0 %v182, 18
    %v201 = vpop.permute.xlu0 %200
    %202 = vrot.lane.b32.xlu0 %v183, 18
    %v203 = vpop.permute.xlu0 %202
    %204 = vrot.lane.b32.xlu0 %v184, 18
    %v205 = vpop.permute.xlu0 %204
    %vm209 = vcmask 72704
    %v210 = vsel %vm209, %v98, %v189
    %v211 = vsel %vm209, %v99, %v191
    %v212 = vsel %vm209, %v100, %v193
    %vm213 = vcmask 146432
    %v214 = vsel %vm213, %v210, %v201
    %v215 = vsel %vm213, %v211, %v203
    %v216 = vsel %vm213, %v212, %v205
    %v217 = vpack.c.bf16 %v215, %v214
    %v218 = vpack.c.bf16 %v216, %v216
    %v219 = vld [vmem:[%s1] sm:$0xf]
    %v220 = vld [vmem:[%s1 + $0x4] sm:$0xf]
    %v221 = vld [vmem:[%s1 + $0x8] sm:$0xf]
    %v222 = vld [vmem:[%s1 + $0xc] sm:$0x3]
    %v223 = vld [vmem:[%s2] sm:$0x1]
    %v225 = vlaneseq
    %v226 = vshrl.u32 %v225, 7
    %v227 = vsub.s32 0, %v226
    %v228 = vrot.slane %v223, %v227
    %v234 = vunpack.c.l.b16 %v219
    %v235 = vunpack.c.l.b16 %v220
    %v236 = vunpack.c.l.b16 %v221
    %v237 = vunpack.c.l.b16 %v222
    %v238 = vpack.c.b16 %v235, %v234
    %v239 = vpack.c.b16 %v237, %v236
    %vm241 = vcmask 220160
    %v243 = vsel %vm241, %v217, 0
    %v246 = vsel %vm241, %v218, 0
    %vm248 = vcmask 1044480
    %v249 = vsel %vm248, 4294967295, 65535
    %v250 = vsel %vm78, %v249, 0
    %v252 = vand.u32 %v239, %v250
    %254 = vmatprep.subr.bf16.mxu0 0
    %255 = vmatpush1.bf16.msra.mxu0 %v238
    %256 = vmatprep.subr.bf16.mxu0 0
    %257 = vmatpush1.bf16.msra.mxu0 %v252
    %258 = vmatprep.subr.bf16.mxu0 0
    %259 = vmatpush1.bf16.msra.mxu0 0
    %260 = vmatprep.subr.bf16.mxu0 0
    %261 = vmatpush1.bf16.msra.mxu0 0
    %262 = vmatprep.subr.bf16.mxu0 0
    %263 = vmatpush1.bf16.msra.mxu0 0
    %264 = vmatprep.subr.bf16.mxu0 0
    %265 = vmatpush1.bf16.msra.mxu0 0
    %266 = vmatprep.subr.bf16.mxu0 0
    %267 = vmatpush1.bf16.msra.mxu0 0
    %268 = vmatprep.subr.bf16.mxu0 0
    %269 = vmatpush1.bf16.msra.mxu0 0
    %270 = vmatprep.subr.bf16.mxu0 0
    %271 = vmatpush1.bf16.msra.mxu0 0
    %272 = vmatprep.subr.bf16.mxu0 0
    %273 = vmatpush1.bf16.msra.mxu0 0
    %274 = vmatprep.subr.bf16.mxu0 0
    %275 = vmatpush1.bf16.msra.mxu0 0
    %276 = vmatprep.subr.bf16.mxu0 0
    %277 = vmatpush1.bf16.msra.mxu0 0
    %278 = vmatprep.subr.bf16.mxu0 0
    %279 = vmatpush1.bf16.msra.mxu0 0
    %280 = vmatprep.subr.bf16.mxu0 0
    %281 = vmatpush1.bf16.msra.mxu0 0
    %282 = vmatprep.subr.bf16.mxu0 0
    %283 = vmatpush1.bf16.msra.mxu0 0
    %284 = vmatprep.subr.bf16.mxu0 0
    %285 = vmatpush1.bf16.msra.mxu0 0
    %286 = vmatprep.mubr.bf16.mxu0 0
    %287 = vmatmul.mubr.bf16.gmra.mrb[0].mxu0 %v243
    %v288 = vpop.f32.mrb[0].mxu0
    %v289 = vadd.f32 %v228, %v288
    %v290 = vpop.f32.mrb[0].mxu0
    %v291 = vpop.f32.mrb[0].mxu0
    %v292 = vadd.f32 %v228, %v291
    %v293 = vpop.f32.mrb[0].mxu0
    %294 = vmatprep.mubr.bf16.mxu0 0
    %295 = vmatmul.mubr.bf16.gmra.mrb[0].mxu0 %v246
    %v296 = vpop.f32.mrb[0].mxu0
    %v297 = vadd.f32 %v228, %v296
    %v298 = vpop.f32.mrb[0].mxu0
    %v299 = vpop.f32.mrb[0].mxu0
    %v300 = vpop.f32.mrb[0].mxu0
    %301 = vdwg.mxu0
    %vm302 = vcmp.gt.f32.partialorder %v289, 0.0
    %vm303 = vcmp.gt.f32.partialorder %v292, 0.0
    %vm304 = vcmp.gt.f32.partialorder %v297, 0.0
    %v306 = vlaneseq
    %v307 = vshrl.u32 %v306, 7
    %v308 = vsub.s32 0, %v307
    %v309 = vrot.slane %v48, %v308
    %310 = vset.pattern.permute.xlu0 0
    %311 = vperm.xlu0 %310, %v309
    %v312 = vpop.permute.xlu0 %311
    %v314 = vmul.f32 %v312, %v289
    %v315 = vmul.f32 %v312, %v292
    %v316 = vmul.f32 %v312, %v297
    %v317 = vsel %vm302, %v289, %v314
    %v318 = vsel %vm303, %v292, %v315
    %v319 = vsel %vm304, %v297, %v316
    %s320 = sadd.s32 72, %s55
    %s321 = scalar_lea.vmem %s0, %s320
    %v322 = vld [vmem:[%s321] sm:$0xff]
    %v323 = vld [vmem:[%s321 + $0x8] sm:$0xff]
    %v324 = vld [vmem:[%s321 + $0x10] sm:$0xff]
    %v328 = vrot.slane %v322, 1
    %v329 = vrot.slane %v323, 1
    %v330 = vsel %vm63, %v328, %v329
    %v331 = vrot.slane %v324, 1
    %v332 = vsel %vm63, %v329, %v331
    %333 = vrot.lane.b32.xlu0 %v330, 3
    %v334 = vpop.permute.xlu0 %333
    %335 = vrot.lane.b32.xlu0 %v332, 3
    %v336 = vpop.permute.xlu0 %335
    %337 = vrot.lane.b32.xlu0 %v331, 3
    %v338 = vpop.permute.xlu0 %337
    %v342 = vrot.slane %v322, 2
    %v343 = vrot.slane %v323, 2
    %v344 = vsel %vm78, %v342, %v343
    %v345 = vrot.slane %v324, 2
    %v346 = vsel %vm78, %v343, %v345
    %347 = vrot.lane.b32.xlu0 %v344, 6
    %v348 = vpop.permute.xlu0 %347
    %349 = vrot.lane.b32.xlu0 %v346, 6
    %v350 = vpop.permute.xlu0 %349
    %351 = vrot.lane.b32.xlu0 %v345, 6
    %v352 = vpop.permute.xlu0 %351
    %v356 = vsel %vm93, %v322, %v334
    %v357 = vsel %vm93, %v323, %v336
    %v358 = vsel %vm93, %v324, %v338
    %v359 = vsel %vm97, %v356, %v348
    %v360 = vsel %vm97, %v357, %v350
    %v361 = vsel %vm97, %v358, %v352
    %362 = vrot.lane.b32.xlu0 %v182, 9
    %v363 = vpop.permute.xlu0 %362
    %364 = vrot.lane.b32.xlu0 %v183, 9
    %v365 = vpop.permute.xlu0 %364
    %366 = vrot.lane.b32.xlu0 %v184, 9
    %v367 = vpop.permute.xlu0 %366
    %374 = vrot.lane.b32.xlu0 %v359, 18
    %v375 = vpop.permute.xlu0 %374
    %376 = vrot.lane.b32.xlu0 %v360, 18
    %v377 = vpop.permute.xlu0 %376
    %378 = vrot.lane.b32.xlu0 %v361, 18
    %v379 = vpop.permute.xlu0 %378
    %v383 = vsel %vm209, %v140, %v363
    %v384 = vsel %vm209, %v141, %v365
    %v385 = vsel %vm209, %v142, %v367
    %v386 = vsel %vm213, %v383, %v375
    %v387 = vsel %vm213, %v384, %v377
    %v388 = vsel %vm213, %v385, %v379
    %v389 = vpack.c.bf16 %v387, %v386
    %v390 = vpack.c.bf16 %v388, %v388
    %v392 = vsel %vm241, %v389, 0
    %v395 = vsel %vm241, %v390, 0
    %397 = vmatprep.subr.bf16.mxu0 0
    %398 = vmatpush1.bf16.msra.mxu0 %v238
    %399 = vmatprep.subr.bf16.mxu0 0
    %400 = vmatpush1.bf16.msra.mxu0 %v252
    %401 = vmatprep.subr.bf16.mxu0 0
    %402 = vmatpush1.bf16.msra.mxu0 0
    %403 = vmatprep.subr.bf16.mxu0 0
    %404 = vmatpush1.bf16.msra.mxu0 0
    %405 = vmatprep.subr.bf16.mxu0 0
    %406 = vmatpush1.bf16.msra.mxu0 0
    %407 = vmatprep.subr.bf16.mxu0 0
    %408 = vmatpush1.bf16.msra.mxu0 0
    %409 = vmatprep.subr.bf16.mxu0 0
    %410 = vmatpush1.bf16.msra.mxu0 0
    %411 = vmatprep.subr.bf16.mxu0 0
    %412 = vmatpush1.bf16.msra.mxu0 0
    %413 = vmatprep.subr.bf16.mxu0 0
    %414 = vmatpush1.bf16.msra.mxu0 0
    %415 = vmatprep.subr.bf16.mxu0 0
    %416 = vmatpush1.bf16.msra.mxu0 0
    %417 = vmatprep.subr.bf16.mxu0 0
    %418 = vmatpush1.bf16.msra.mxu0 0
    %419 = vmatprep.subr.bf16.mxu0 0
    %420 = vmatpush1.bf16.msra.mxu0 0
    %421 = vmatprep.subr.bf16.mxu0 0
    %422 = vmatpush1.bf16.msra.mxu0 0
    %423 = vmatprep.subr.bf16.mxu0 0
    %424 = vmatpush1.bf16.msra.mxu0 0
    %425 = vmatprep.subr.bf16.mxu0 0
    %426 = vmatpush1.bf16.msra.mxu0 0
    %427 = vmatprep.subr.bf16.mxu0 0
    %428 = vmatpush1.bf16.msra.mxu0 0
    %429 = vmatprep.mubr.bf16.mxu0 0
    %430 = vmatmul.mubr.bf16.gmra.mrb[0].mxu0 %v392
    %v431 = vpop.f32.mrb[0].mxu0
    %v432 = vadd.f32 %v228, %v431
    %v433 = vpop.f32.mrb[0].mxu0
    %v434 = vpop.f32.mrb[0].mxu0
    %v435 = vadd.f32 %v228, %v434
    %v436 = vpop.f32.mrb[0].mxu0
    %437 = vmatprep.mubr.bf16.mxu0 0
    %438 = vmatmul.mubr.bf16.gmra.mrb[0].mxu0 %v395
    %v439 = vpop.f32.mrb[0].mxu0
    %v440 = vadd.f32 %v228, %v439
    %v441 = vpop.f32.mrb[0].mxu0
    %v442 = vpop.f32.mrb[0].mxu0
    %v443 = vpop.f32.mrb[0].mxu0
    %444 = vdwg.mxu0
    %vm445 = vcmp.gt.f32.partialorder %v432, 0.0
    %vm446 = vcmp.gt.f32.partialorder %v435, 0.0
    %vm447 = vcmp.gt.f32.partialorder %v440, 0.0
    %v448 = vmul.f32 %v312, %v432
    %v449 = vmul.f32 %v312, %v435
    %v450 = vmul.f32 %v312, %v440
    %v451 = vsel %vm445, %v432, %v448
    %v452 = vsel %vm446, %v435, %v449
    %v453 = vsel %vm447, %v440, %v450
    %s454 = sadd.s32 96, %s55
    %s455 = scalar_lea.vmem %s0, %s454
    %v456 = vld [vmem:[%s455] sm:$0xff]
    %v457 = vld [vmem:[%s455 + $0x8] sm:$0xff]
    %v458 = vld [vmem:[%s455 + $0x10] sm:$0xff]
    %v462 = vrot.slane %v456, 1
    %v463 = vrot.slane %v457, 1
    %v464 = vsel %vm63, %v462, %v463
    %v465 = vrot.slane %v458, 1
    %v466 = vsel %vm63, %v463, %v465
    %467 = vrot.lane.b32.xlu0 %v464, 3
    %v468 = vpop.permute.xlu0 %467
    %469 = vrot.lane.b32.xlu0 %v466, 3
    %v470 = vpop.permute.xlu0 %469
    %471 = vrot.lane.b32.xlu0 %v465, 3
    %v472 = vpop.permute.xlu0 %471
    %v476 = vrot.slane %v456, 2
    %v477 = vrot.slane %v457, 2
    %v478 = vsel %vm78, %v476, %v477
    %v479 = vrot.slane %v458, 2
    %v480 = vsel %vm78, %v477, %v479
    %481 = vrot.lane.b32.xlu0 %v478, 6
    %v482 = vpop.permute.xlu0 %481
    %483 = vrot.lane.b32.xlu0 %v480, 6
    %v484 = vpop.permute.xlu0 %483
    %485 = vrot.lane.b32.xlu0 %v479, 6
    %v486 = vpop.permute.xlu0 %485
    %v490 = vsel %vm93, %v456, %v468
    %v491 = vsel %vm93, %v457, %v470
    %v492 = vsel %vm93, %v458, %v472
    %v493 = vsel %vm97, %v490, %v482
    %v494 = vsel %vm97, %v491, %v484
    %v495 = vsel %vm97, %v492, %v486
    %496 = vrot.lane.b32.xlu0 %v359, 9
    %v497 = vpop.permute.xlu0 %496
    %498 = vrot.lane.b32.xlu0 %v360, 9
    %v499 = vpop.permute.xlu0 %498
    %500 = vrot.lane.b32.xlu0 %v361, 9
    %v501 = vpop.permute.xlu0 %500
    %508 = vrot.lane.b32.xlu0 %v493, 18
    %v509 = vpop.permute.xlu0 %508
    %510 = vrot.lane.b32.xlu0 %v494, 18
    %v511 = vpop.permute.xlu0 %510
    %512 = vrot.lane.b32.xlu0 %v495, 18
    %v513 = vpop.permute.xlu0 %512
    %v517 = vsel %vm209, %v182, %v497
    %v518 = vsel %vm209, %v183, %v499
    %v519 = vsel %vm209, %v184, %v501
    %v520 = vsel %vm213, %v517, %v509
    %v521 = vsel %vm213, %v518, %v511
    %v522 = vsel %vm213, %v519, %v513
    %v523 = vpack.c.bf16 %v521, %v520
    %v524 = vpack.c.bf16 %v522, %v522
    %v526 = vsel %vm241, %v523, 0
    %v529 = vsel %vm241, %v524, 0
    %531 = vmatprep.subr.bf16.mxu0 0
    %532 = vmatpush1.bf16.msra.mxu0 %v238
    %533 = vmatprep.subr.bf16.mxu0 0
    %534 = vmatpush1.bf16.msra.mxu0 %v252
    %535 = vmatprep.subr.bf16.mxu0 0
    %536 = vmatpush1.bf16.msra.mxu0 0
    %537 = vmatprep.subr.bf16.mxu0 0
    %538 = vmatpush1.bf16.msra.mxu0 0
    %539 = vmatprep.subr.bf16.mxu0 0
    %540 = vmatpush1.bf16.msra.mxu0 0
    %541 = vmatprep.subr.bf16.mxu0 0
    %542 = vmatpush1.bf16.msra.mxu0 0
    %543 = vmatprep.subr.bf16.mxu0 0
    %544 = vmatpush1.bf16.msra.mxu0 0
    %545 = vmatprep.subr.bf16.mxu0 0
    %546 = vmatpush1.bf16.msra.mxu0 0
    %547 = vmatprep.subr.bf16.mxu0 0
    %548 = vmatpush1.bf16.msra.mxu0 0
    %549 = vmatprep.subr.bf16.mxu0 0
    %550 = vmatpush1.bf16.msra.mxu0 0
    %551 = vmatprep.subr.bf16.mxu0 0
    %552 = vmatpush1.bf16.msra.mxu0 0
    %553 = vmatprep.subr.bf16.mxu0 0
    %554 = vmatpush1.bf16.msra.mxu0 0
    %555 = vmatprep.subr.bf16.mxu0 0
    %556 = vmatpush1.bf16.msra.mxu0 0
    %557 = vmatprep.subr.bf16.mxu0 0
    %558 = vmatpush1.bf16.msra.mxu0 0
    %559 = vmatprep.subr.bf16.mxu0 0
    %560 = vmatpush1.bf16.msra.mxu0 0
    %561 = vmatprep.subr.bf16.mxu0 0
    %562 = vmatpush1.bf16.msra.mxu0 0
    %563 = vmatprep.mubr.bf16.mxu0 0
    %564 = vmatmul.mubr.bf16.gmra.mrb[0].mxu0 %v526
    %v565 = vpop.f32.mrb[0].mxu0
    %v566 = vadd.f32 %v228, %v565
    %v567 = vpop.f32.mrb[0].mxu0
    %v568 = vpop.f32.mrb[0].mxu0
    %v569 = vadd.f32 %v228, %v568
    %v570 = vpop.f32.mrb[0].mxu0
    %571 = vmatprep.mubr.bf16.mxu0 0
    %572 = vmatmul.mubr.bf16.gmra.mrb[0].mxu0 %v529
    %v573 = vpop.f32.mrb[0].mxu0
    %v574 = vadd.f32 %v228, %v573
    %v575 = vpop.f32.mrb[0].mxu0
    %v576 = vpop.f32.mrb[0].mxu0
    %v577 = vpop.f32.mrb[0].mxu0
    %578 = vdwg.mxu0
    %vm579 = vcmp.gt.f32.partialorder %v566, 0.0
    %vm580 = vcmp.gt.f32.partialorder %v569, 0.0
    %vm581 = vcmp.gt.f32.partialorder %v574, 0.0
    %v582 = vmul.f32 %v312, %v566
    %v583 = vmul.f32 %v312, %v569
    %v584 = vmul.f32 %v312, %v574
    %v585 = vsel %vm579, %v566, %v582
    %v586 = vsel %vm580, %v569, %v583
    %v587 = vsel %vm581, %v574, %v584
    %v588 = vmax.f32 %v317, %v451
    %v589 = vmax.f32 %v318, %v452
    %v590 = vmax.f32 %v319, %v453
    %v591 = vmax.f32 %v588, %v585
    %v592 = vmax.f32 %v589, %v586
    %v593 = vmax.f32 %v590, %v587
    %v597 = vrot.slane %v591, 1
    %v598 = vrot.slane %v592, 1
    %v599 = vsel %vm63, %v597, %v598
    %v600 = vrot.slane %v593, 1
    %v601 = vsel %vm63, %v598, %v600
    %v605 = vmax.f32 %v591, %v599
    %v606 = vmax.f32 %v592, %v601
    %v607 = vmax.f32 %v593, %v600
    %v608 = vrot.slane %v591, 2
    %v609 = vrot.slane %v592, 2
    %v610 = vsel %vm78, %v608, %v609
    %v611 = vrot.slane %v593, 2
    %v612 = vsel %vm78, %v609, %v611
    %v616 = vmax.f32 %v605, %v610
    %v617 = vmax.f32 %v606, %v612
    %v618 = vmax.f32 %v607, %v611
    %v619 = vld [vmem:[%s12] sm:$0xff]
    %v620 = vld [vmem:[%s12 + $0x8] sm:$0x3]
    %vm621 = vcmask 162816
    %v623 = vsel %vm621, %v619, 0
    %v626 = vsel %vm621, %v620, 0
    %vm628 = vcmask 1043456
    %v630 = vsel %vm628, %v618, 0
    %632 = vmatprep.subr.mxu0 0.0
    %633 = vmatpush1.msra.mxu0 %v616
    %634 = vmatprep.subr.mxu0 0.0
    %635 = vmatpush1.msra.mxu0 %v617
    %636 = vmatprep.subr.mxu0 0.0
    %637 = vmatpush1.msra.mxu0 %v630
    %638 = vmatprep.subr.mxu0 0.0
    %639 = vmatpush1.msra.mxu0 0.0
    %640 = vmatprep.subr.mxu0 0.0
    %641 = vmatpush1.msra.mxu0 0.0
    %642 = vmatprep.subr.mxu0 0.0
    %643 = vmatpush1.msra.mxu0 0.0
    %644 = vmatprep.subr.mxu0 0.0
    %645 = vmatpush1.msra.mxu0 0.0
    %646 = vmatprep.subr.mxu0 0.0
    %647 = vmatpush1.msra.mxu0 0.0
    %648 = vmatprep.subr.mxu0 0.0
    %649 = vmatpush1.msra.mxu0 0.0
    %650 = vmatprep.subr.mxu0 0.0
    %651 = vmatpush1.msra.mxu0 0.0
    %652 = vmatprep.subr.mxu0 0.0
    %653 = vmatpush1.msra.mxu0 0.0
    %654 = vmatprep.subr.mxu0 0.0
    %655 = vmatpush1.msra.mxu0 0.0
    %656 = vmatprep.subr.mxu0 0.0
    %657 = vmatpush1.msra.mxu0 0.0
    %658 = vmatprep.subr.mxu0 0.0
    %659 = vmatpush1.msra.mxu0 0.0
    %660 = vmatprep.subr.mxu0 0.0
    %661 = vmatpush1.msra.mxu0 0.0
    %662 = vmatprep.subr.mxu0 0.0
    %663 = vmatpush1.msra.mxu0 0.0
    %664 = vmatprep.subr.mxu0 0.0
    %665 = vmatpush1.msra.mxu0 0.0
    %666 = vmatprep.subr.mxu0 0.0
    %667 = vmatpush1.msra.mxu0 0.0
    %668 = vmatprep.subr.mxu0 0.0
    %669 = vmatpush1.msra.mxu0 0.0
    %670 = vmatprep.subr.mxu0 0.0
    %671 = vmatpush1.msra.mxu0 0.0
    %672 = vmatprep.subr.mxu0 0.0
    %673 = vmatpush1.msra.mxu0 0.0
    %674 = vmatprep.subr.mxu0 0.0
    %675 = vmatpush1.msra.mxu0 0.0
    %676 = vmatprep.subr.mxu0 0.0
    %677 = vmatpush1.msra.mxu0 0.0
    %678 = vmatprep.subr.mxu0 0.0
    %679 = vmatpush1.msra.mxu0 0.0
    %680 = vmatprep.subr.mxu0 0.0
    %681 = vmatpush1.msra.mxu0 0.0
    %682 = vmatprep.subr.mxu0 0.0
    %683 = vmatpush1.msra.mxu0 0.0
    %684 = vmatprep.subr.mxu0 0.0
    %685 = vmatpush1.msra.mxu0 0.0
    %686 = vmatprep.subr.mxu0 0.0
    %687 = vmatpush1.msra.mxu0 0.0
    %688 = vmatprep.subr.mxu0 0.0
    %689 = vmatpush1.msra.mxu0 0.0
    %690 = vmatprep.subr.mxu0 0.0
    %691 = vmatpush1.msra.mxu0 0.0
    %692 = vmatprep.subr.mxu0 0.0
    %693 = vmatpush1.msra.mxu0 0.0
    %694 = vmatprep.subr.mxu0 0.0
    %695 = vmatpush1.msra.mxu0 0.0
    %696 = vmatprep.mubr.f32.mxu0 0.0
    %697 = vmatmul.mubr.f32.gmra.mrb[0].mxu0 %v623
    %v698 = vpop.f32.mrb[0].mxu0
    %v699 = vadd.f32 0.0, %v698
    %v700 = vpop.f32.mrb[0].mxu0
    %701 = vmatprep.mubr.f32.mxu0 0.0
    %702 = vmatmul.mubr.f32.gmra.mrb[0].mxu0 %v626
    %v703 = vpop.f32.mrb[0].mxu0
    %v704 = vadd.f32 0.0, %v703
    %v705 = vpop.f32.mrb[0].mxu0
    %706 = vdwg.mxu0
    %s707 = sadd.s32 120, %s55
    %s708 = scalar_lea.vmem %s0, %s707
    %v709 = vld [vmem:[%s708] sm:$0xff]
    %v710 = vld [vmem:[%s708 + $0x8] sm:$0xff]
    %v711 = vld [vmem:[%s708 + $0x10] sm:$0xff]
    %v715 = vrot.slane %v709, 1
    %v716 = vrot.slane %v710, 1
    %v717 = vsel %vm63, %v715, %v716
    %v718 = vrot.slane %v711, 1
    %v719 = vsel %vm63, %v716, %v718
    %720 = vrot.lane.b32.xlu0 %v717, 3
    %v721 = vpop.permute.xlu0 %720
    %722 = vrot.lane.b32.xlu0 %v719, 3
    %v723 = vpop.permute.xlu0 %722
    %724 = vrot.lane.b32.xlu0 %v718, 3
    %v725 = vpop.permute.xlu0 %724
    %v729 = vrot.slane %v709, 2
    %v730 = vrot.slane %v710, 2
    %v731 = vsel %vm78, %v729, %v730
    %v732 = vrot.slane %v711, 2
    %v733 = vsel %vm78, %v730, %v732
    %734 = vrot.lane.b32.xlu0 %v731, 6
    %v735 = vpop.permute.xlu0 %734
    %736 = vrot.lane.b32.xlu0 %v733, 6
    %v737 = vpop.permute.xlu0 %736
    %738 = vrot.lane.b32.xlu0 %v732, 6
    %v739 = vpop.permute.xlu0 %738
    %v743 = vsel %vm93, %v709, %v721
    %v744 = vsel %vm93, %v710, %v723
    %v745 = vsel %vm93, %v711, %v725
    %v746 = vsel %vm97, %v743, %v735
    %v747 = vsel %vm97, %v744, %v737
    %v748 = vsel %vm97, %v745, %v739
    %749 = vrot.lane.b32.xlu0 %v493, 9
    %v750 = vpop.permute.xlu0 %749
    %751 = vrot.lane.b32.xlu0 %v494, 9
    %v752 = vpop.permute.xlu0 %751
    %753 = vrot.lane.b32.xlu0 %v495, 9
    %v754 = vpop.permute.xlu0 %753
    %761 = vrot.lane.b32.xlu0 %v746, 18
    %v762 = vpop.permute.xlu0 %761
    %763 = vrot.lane.b32.xlu0 %v747, 18
    %v764 = vpop.permute.xlu0 %763
    %765 = vrot.lane.b32.xlu0 %v748, 18
    %v766 = vpop.permute.xlu0 %765
    %v770 = vsel %vm209, %v359, %v750
    %v771 = vsel %vm209, %v360, %v752
    %v772 = vsel %vm209, %v361, %v754
    %v773 = vsel %vm213, %v770, %v762
    %v774 = vsel %vm213, %v771, %v764
    %v775 = vsel %vm213, %v772, %v766
    %v776 = vpack.c.bf16 %v774, %v773
    %v777 = vpack.c.bf16 %v775, %v775
    %v779 = vsel %vm241, %v776, 0
    %v782 = vsel %vm241, %v777, 0
    %784 = vmatprep.subr.bf16.mxu0 0
    %785 = vmatpush1.bf16.msra.mxu0 %v238
    %786 = vmatprep.subr.bf16.mxu0 0
    %787 = vmatpush1.bf16.msra.mxu0 %v252
    %788 = vmatprep.subr.bf16.mxu0 0
    %789 = vmatpush1.bf16.msra.mxu0 0
    %790 = vmatprep.subr.bf16.mxu0 0
    %791 = vmatpush1.bf16.msra.mxu0 0
    %792 = vmatprep.subr.bf16.mxu0 0
    %793 = vmatpush1.bf16.msra.mxu0 0
    %794 = vmatprep.subr.bf16.mxu0 0
    %795 = vmatpush1.bf16.msra.mxu0 0
    %796 = vmatprep.subr.bf16.mxu0 0
    %797 = vmatpush1.bf16.msra.mxu0 0
    %798 = vmatprep.subr.bf16.mxu0 0
    %799 = vmatpush1.bf16.msra.mxu0 0
    %800 = vmatprep.subr.bf16.mxu0 0
    %801 = vmatpush1.bf16.msra.mxu0 0
    %802 = vmatprep.subr.bf16.mxu0 0
    %803 = vmatpush1.bf16.msra.mxu0 0
    %804 = vmatprep.subr.bf16.mxu0 0
    %805 = vmatpush1.bf16.msra.mxu0 0
    %806 = vmatprep.subr.bf16.mxu0 0
    %807 = vmatpush1.bf16.msra.mxu0 0
    %808 = vmatprep.subr.bf16.mxu0 0
    %809 = vmatpush1.bf16.msra.mxu0 0
    %810 = vmatprep.subr.bf16.mxu0 0
    %811 = vmatpush1.bf16.msra.mxu0 0
    %812 = vmatprep.subr.bf16.mxu0 0
    %813 = vmatpush1.bf16.msra.mxu0 0
    %814 = vmatprep.subr.bf16.mxu0 0
    %815 = vmatpush1.bf16.msra.mxu0 0
    %816 = vmatprep.mubr.bf16.mxu0 0
    %817 = vmatmul.mubr.bf16.gmra.mrb[0].mxu0 %v779
    %v818 = vpop.f32.mrb[0].mxu0
    %v819 = vadd.f32 %v228, %v818
    %v820 = vpop.f32.mrb[0].mxu0
    %v821 = vpop.f32.mrb[0].mxu0
    %v822 = vadd.f32 %v228, %v821
    %v823 = vpop.f32.mrb[0].mxu0
    %824 = vmatprep.mubr.bf16.mxu0 0
    %825 = vmatmul.mubr.bf16.gmra.mrb[0].mxu0 %v782
    %v826 = vpop.f32.mrb[0].mxu0
    %v827 = vadd.f32 %v228, %v826
    %v828 = vpop.f32.mrb[0].mxu0
    %v829 = vpop.f32.mrb[0].mxu0
    %v830 = vpop.f32.mrb[0].mxu0
    %831 = vdwg.mxu0
    %vm832 = vcmp.gt.f32.partialorder %v819, 0.0
    %vm833 = vcmp.gt.f32.partialorder %v822, 0.0
    %vm834 = vcmp.gt.f32.partialorder %v827, 0.0
    %v835 = vmul.f32 %v312, %v819
    %v836 = vmul.f32 %v312, %v822
    %v837 = vmul.f32 %v312, %v827
    %v838 = vsel %vm832, %v819, %v835
    %v839 = vsel %vm833, %v822, %v836
    %v840 = vsel %vm834, %v827, %v837
    %s841 = sadd.s32 144, %s55
    %s842 = scalar_lea.vmem %s0, %s841
    %v843 = vld [vmem:[%s842] sm:$0xff]
    %v844 = vld [vmem:[%s842 + $0x8] sm:$0xff]
    %v845 = vld [vmem:[%s842 + $0x10] sm:$0xff]
    %v849 = vrot.slane %v843, 1
    %v850 = vrot.slane %v844, 1
    %v851 = vsel %vm63, %v849, %v850
    %v852 = vrot.slane %v845, 1
    %v853 = vsel %vm63, %v850, %v852
    %854 = vrot.lane.b32.xlu0 %v851, 3
    %v855 = vpop.permute.xlu0 %854
    %856 = vrot.lane.b32.xlu0 %v853, 3
    %v857 = vpop.permute.xlu0 %856
    %858 = vrot.lane.b32.xlu0 %v852, 3
    %v859 = vpop.permute.xlu0 %858
    %v863 = vrot.slane %v843, 2
    %v864 = vrot.slane %v844, 2
    %v865 = vsel %vm78, %v863, %v864
    %v866 = vrot.slane %v845, 2
    %v867 = vsel %vm78, %v864, %v866
    %868 = vrot.lane.b32.xlu0 %v865, 6
    %v869 = vpop.permute.xlu0 %868
    %870 = vrot.lane.b32.xlu0 %v867, 6
    %v871 = vpop.permute.xlu0 %870
    %872 = vrot.lane.b32.xlu0 %v866, 6
    %v873 = vpop.permute.xlu0 %872
    %v877 = vsel %vm93, %v843, %v855
    %v878 = vsel %vm93, %v844, %v857
    %v879 = vsel %vm93, %v845, %v859
    %v880 = vsel %vm97, %v877, %v869
    %v881 = vsel %vm97, %v878, %v871
    %v882 = vsel %vm97, %v879, %v873
    %883 = vrot.lane.b32.xlu0 %v746, 9
    %v884 = vpop.permute.xlu0 %883
    %885 = vrot.lane.b32.xlu0 %v747, 9
    %v886 = vpop.permute.xlu0 %885
    %887 = vrot.lane.b32.xlu0 %v748, 9
    %v888 = vpop.permute.xlu0 %887
    %895 = vrot.lane.b32.xlu0 %v880, 18
    %v896 = vpop.permute.xlu0 %895
    %897 = vrot.lane.b32.xlu0 %v881, 18
    %v898 = vpop.permute.xlu0 %897
    %899 = vrot.lane.b32.xlu0 %v882, 18
    %v900 = vpop.permute.xlu0 %899
    %v904 = vsel %vm209, %v493, %v884
    %v905 = vsel %vm209, %v494, %v886
    %v906 = vsel %vm209, %v495, %v888
    %v907 = vsel %vm213, %v904, %v896
    %v908 = vsel %vm213, %v905, %v898
    %v909 = vsel %vm213, %v906, %v900
    %v910 = vpack.c.bf16 %v908, %v907
    %v911 = vpack.c.bf16 %v909, %v909
    %v913 = vsel %vm241, %v910, 0
    %v916 = vsel %vm241, %v911, 0
    %918 = vmatprep.subr.bf16.mxu0 0
    %919 = vmatpush1.bf16.msra.mxu0 %v238
    %920 = vmatprep.subr.bf16.mxu0 0
    %921 = vmatpush1.bf16.msra.mxu0 %v252
    %922 = vmatprep.subr.bf16.mxu0 0
    %923 = vmatpush1.bf16.msra.mxu0 0
    %924 = vmatprep.subr.bf16.mxu0 0
    %925 = vmatpush1.bf16.msra.mxu0 0
    %926 = vmatprep.subr.bf16.mxu0 0
    %927 = vmatpush1.bf16.msra.mxu0 0
    %928 = vmatprep.subr.bf16.mxu0 0
    %929 = vmatpush1.bf16.msra.mxu0 0
    %930 = vmatprep.subr.bf16.mxu0 0
    %931 = vmatpush1.bf16.msra.mxu0 0
    %932 = vmatprep.subr.bf16.mxu0 0
    %933 = vmatpush1.bf16.msra.mxu0 0
    %934 = vmatprep.subr.bf16.mxu0 0
    %935 = vmatpush1.bf16.msra.mxu0 0
    %936 = vmatprep.subr.bf16.mxu0 0
    %937 = vmatpush1.bf16.msra.mxu0 0
    %938 = vmatprep.subr.bf16.mxu0 0
    %939 = vmatpush1.bf16.msra.mxu0 0
    %940 = vmatprep.subr.bf16.mxu0 0
    %941 = vmatpush1.bf16.msra.mxu0 0
    %942 = vmatprep.subr.bf16.mxu0 0
    %943 = vmatpush1.bf16.msra.mxu0 0
    %944 = vmatprep.subr.bf16.mxu0 0
    %945 = vmatpush1.bf16.msra.mxu0 0
    %946 = vmatprep.subr.bf16.mxu0 0
    %947 = vmatpush1.bf16.msra.mxu0 0
    %948 = vmatprep.subr.bf16.mxu0 0
    %949 = vmatpush1.bf16.msra.mxu0 0
    %950 = vmatprep.mubr.bf16.mxu0 0
    %951 = vmatmul.mubr.bf16.gmra.mrb[0].mxu0 %v913
    %v952 = vpop.f32.mrb[0].mxu0
    %v953 = vadd.f32 %v228, %v952
    %v954 = vpop.f32.mrb[0].mxu0
    %v955 = vpop.f32.mrb[0].mxu0
    %v956 = vadd.f32 %v228, %v955
    %v957 = vpop.f32.mrb[0].mxu0
    %958 = vmatprep.mubr.bf16.mxu0 0
    %959 = vmatmul.mubr.bf16.gmra.mrb[0].mxu0 %v916
    %v960 = vpop.f32.mrb[0].mxu0
    %v961 = vadd.f32 %v228, %v960
    %v962 = vpop.f32.mrb[0].mxu0
    %v963 = vpop.f32.mrb[0].mxu0
    %v964 = vpop.f32.mrb[0].mxu0
    %965 = vdwg.mxu0
    %vm966 = vcmp.gt.f32.partialorder %v953, 0.0
    %vm967 = vcmp.gt.f32.partialorder %v956, 0.0
    %vm968 = vcmp.gt.f32.partialorder %v961, 0.0
    %v969 = vmul.f32 %v312, %v953
    %v970 = vmul.f32 %v312, %v956
    %v971 = vmul.f32 %v312, %v961
    %v972 = vsel %vm966, %v953, %v969
    %v973 = vsel %vm967, %v956, %v970
    %v974 = vsel %vm968, %v961, %v971
    %v975 = vmax.f32 %v585, %v838
    %v976 = vmax.f32 %v586, %v839
    %v977 = vmax.f32 %v587, %v840
    %v978 = vmax.f32 %v975, %v972
    %v979 = vmax.f32 %v976, %v973
    %v980 = vmax.f32 %v977, %v974
    %v984 = vrot.slane %v978, 1
    %v985 = vrot.slane %v979, 1
    %v986 = vsel %vm63, %v984, %v985
    %v987 = vrot.slane %v980, 1
    %v988 = vsel %vm63, %v985, %v987
    %v992 = vmax.f32 %v978, %v986
    %v993 = vmax.f32 %v979, %v988
    %v994 = vmax.f32 %v980, %v987
    %v995 = vrot.slane %v978, 2
    %v996 = vrot.slane %v979, 2
    %v997 = vsel %vm78, %v995, %v996
    %v998 = vrot.slane %v980, 2
    %v999 = vsel %vm78, %v996, %v998
    %v1003 = vmax.f32 %v992, %v997
    %v1004 = vmax.f32 %v993, %v999
    %v1005 = vmax.f32 %v994, %v998
    %v1007 = vsel %vm628, %v1005, 0
    %1009 = vmatprep.subr.mxu0 0.0
    %1010 = vmatpush1.msra.mxu0 %v1003
    %1011 = vmatprep.subr.mxu0 0.0
    %1012 = vmatpush1.msra.mxu0 %v1004
    %1013 = vmatprep.subr.mxu0 0.0
    %1014 = vmatpush1.msra.mxu0 %v1007
    %1015 = vmatprep.subr.mxu0 0.0
    %1016 = vmatpush1.msra.mxu0 0.0
    %1017 = vmatprep.subr.mxu0 0.0
    %1018 = vmatpush1.msra.mxu0 0.0
    %1019 = vmatprep.subr.mxu0 0.0
    %1020 = vmatpush1.msra.mxu0 0.0
    %1021 = vmatprep.subr.mxu0 0.0
    %1022 = vmatpush1.msra.mxu0 0.0
    %1023 = vmatprep.subr.mxu0 0.0
    %1024 = vmatpush1.msra.mxu0 0.0
    %1025 = vmatprep.subr.mxu0 0.0
    %1026 = vmatpush1.msra.mxu0 0.0
    %1027 = vmatprep.subr.mxu0 0.0
    %1028 = vmatpush1.msra.mxu0 0.0
    %1029 = vmatprep.subr.mxu0 0.0
    %1030 = vmatpush1.msra.mxu0 0.0
    %1031 = vmatprep.subr.mxu0 0.0
    %1032 = vmatpush1.msra.mxu0 0.0
    %1033 = vmatprep.subr.mxu0 0.0
    %1034 = vmatpush1.msra.mxu0 0.0
    %1035 = vmatprep.subr.mxu0 0.0
    %1036 = vmatpush1.msra.mxu0 0.0
    %1037 = vmatprep.subr.mxu0 0.0
    %1038 = vmatpush1.msra.mxu0 0.0
    %1039 = vmatprep.subr.mxu0 0.0
    %1040 = vmatpush1.msra.mxu0 0.0
    %1041 = vmatprep.subr.mxu0 0.0
    %1042 = vmatpush1.msra.mxu0 0.0
    %1043 = vmatprep.subr.mxu0 0.0
    %1044 = vmatpush1.msra.mxu0 0.0
    %1045 = vmatprep.subr.mxu0 0.0
    %1046 = vmatpush1.msra.mxu0 0.0
    %1047 = vmatprep.subr.mxu0 0.0
    %1048 = vmatpush1.msra.mxu0 0.0
    %1049 = vmatprep.subr.mxu0 0.0
    %1050 = vmatpush1.msra.mxu0 0.0
    %1051 = vmatprep.subr.mxu0 0.0
    %1052 = vmatpush1.msra.mxu0 0.0
    %1053 = vmatprep.subr.mxu0 0.0
    %1054 = vmatpush1.msra.mxu0 0.0
    %1055 = vmatprep.subr.mxu0 0.0
    %1056 = vmatpush1.msra.mxu0 0.0
    %1057 = vmatprep.subr.mxu0 0.0
    %1058 = vmatpush1.msra.mxu0 0.0
    %1059 = vmatprep.subr.mxu0 0.0
    %1060 = vmatpush1.msra.mxu0 0.0
    %1061 = vmatprep.subr.mxu0 0.0
    %1062 = vmatpush1.msra.mxu0 0.0
    %1063 = vmatprep.subr.mxu0 0.0
    %1064 = vmatpush1.msra.mxu0 0.0
    %1065 = vmatprep.subr.mxu0 0.0
    %1066 = vmatpush1.msra.mxu0 0.0
    %1067 = vmatprep.subr.mxu0 0.0
    %1068 = vmatpush1.msra.mxu0 0.0
    %1069 = vmatprep.subr.mxu0 0.0
    %1070 = vmatpush1.msra.mxu0 0.0
    %1071 = vmatprep.subr.mxu0 0.0
    %1072 = vmatpush1.msra.mxu0 0.0
    %1073 = vmatprep.mubr.f32.mxu0 0.0
    %1074 = vmatmul.mubr.f32.gmra.mrb[0].mxu0 %v623
    %v1075 = vpop.f32.mrb[0].mxu0
    %v1076 = vadd.f32 0.0, %v1075
    %v1077 = vpop.f32.mrb[0].mxu0
    %1078 = vmatprep.mubr.f32.mxu0 0.0
    %1079 = vmatmul.mubr.f32.gmra.mrb[0].mxu0 %v626
    %v1080 = vpop.f32.mrb[0].mxu0
    %v1081 = vadd.f32 0.0, %v1080
    %v1082 = vpop.f32.mrb[0].mxu0
    %1083 = vdwg.mxu0
    %s1084 = sadd.s32 168, %s55
    %s1085 = scalar_lea.vmem %s0, %s1084
    %v1086 = vld [vmem:[%s1085] sm:$0xff]
    %v1087 = vld [vmem:[%s1085 + $0x8] sm:$0xff]
    %v1088 = vld [vmem:[%s1085 + $0x10] sm:$0xff]
    %v1092 = vrot.slane %v1086, 1
    %v1093 = vrot.slane %v1087, 1
    %v1094 = vsel %vm63, %v1092, %v1093
    %v1095 = vrot.slane %v1088, 1
    %v1096 = vsel %vm63, %v1093, %v1095
    %1097 = vrot.lane.b32.xlu0 %v1094, 3
    %v1098 = vpop.permute.xlu0 %1097
    %1099 = vrot.lane.b32.xlu0 %v1096, 3
    %v1100 = vpop.permute.xlu0 %1099
    %1101 = vrot.lane.b32.xlu0 %v1095, 3
    %v1102 = vpop.permute.xlu0 %1101
    %v1106 = vrot.slane %v1086, 2
    %v1107 = vrot.slane %v1087, 2
    %v1108 = vsel %vm78, %v1106, %v1107
    %v1109 = vrot.slane %v1088, 2
    %v1110 = vsel %vm78, %v1107, %v1109
    %1111 = vrot.lane.b32.xlu0 %v1108, 6
    %v1112 = vpop.permute.xlu0 %1111
    %1113 = vrot.lane.b32.xlu0 %v1110, 6
    %v1114 = vpop.permute.xlu0 %1113
    %1115 = vrot.lane.b32.xlu0 %v1109, 6
    %v1116 = vpop.permute.xlu0 %1115
    %v1120 = vsel %vm93, %v1086, %v1098
    %v1121 = vsel %vm93, %v1087, %v1100
    %v1122 = vsel %vm93, %v1088, %v1102
    %v1123 = vsel %vm97, %v1120, %v1112
    %v1124 = vsel %vm97, %v1121, %v1114
    %v1125 = vsel %vm97, %v1122, %v1116
    %1126 = vrot.lane.b32.xlu0 %v880, 9
    %v1127 = vpop.permute.xlu0 %1126
    %1128 = vrot.lane.b32.xlu0 %v881, 9
    %v1129 = vpop.permute.xlu0 %1128
    %1130 = vrot.lane.b32.xlu0 %v882, 9
    %v1131 = vpop.permute.xlu0 %1130
    %1138 = vrot.lane.b32.xlu0 %v1123, 18
    %v1139 = vpop.permute.xlu0 %1138
    %1140 = vrot.lane.b32.xlu0 %v1124, 18
    %v1141 = vpop.permute.xlu0 %1140
    %1142 = vrot.lane.b32.xlu0 %v1125, 18
    %v1143 = vpop.permute.xlu0 %1142
    %v1147 = vsel %vm209, %v746, %v1127
    %v1148 = vsel %vm209, %v747, %v1129
    %v1149 = vsel %vm209, %v748, %v1131
    %v1150 = vsel %vm213, %v1147, %v1139
    %v1151 = vsel %vm213, %v1148, %v1141
    %v1152 = vsel %vm213, %v1149, %v1143
    %v1153 = vpack.c.bf16 %v1151, %v1150
    %v1154 = vpack.c.bf16 %v1152, %v1152
    %v1156 = vsel %vm241, %v1153, 0
    %v1159 = vsel %vm241, %v1154, 0
    %1161 = vmatprep.subr.bf16.mxu0 0
    %1162 = vmatpush1.bf16.msra.mxu0 %v238
    %1163 = vmatprep.subr.bf16.mxu0 0
    %1164 = vmatpush1.bf16.msra.mxu0 %v252
    %1165 = vmatprep.subr.bf16.mxu0 0
    %1166 = vmatpush1.bf16.msra.mxu0 0
    %1167 = vmatprep.subr.bf16.mxu0 0
    %1168 = vmatpush1.bf16.msra.mxu0 0
    %1169 = vmatprep.subr.bf16.mxu0 0
    %1170 = vmatpush1.bf16.msra.mxu0 0
    %1171 = vmatprep.subr.bf16.mxu0 0
    %1172 = vmatpush1.bf16.msra.mxu0 0
    %1173 = vmatprep.subr.bf16.mxu0 0
    %1174 = vmatpush1.bf16.msra.mxu0 0
    %1175 = vmatprep.subr.bf16.mxu0 0
    %1176 = vmatpush1.bf16.msra.mxu0 0
    %1177 = vmatprep.subr.bf16.mxu0 0
    %1178 = vmatpush1.bf16.msra.mxu0 0
    %1179 = vmatprep.subr.bf16.mxu0 0
    %1180 = vmatpush1.bf16.msra.mxu0 0
    %1181 = vmatprep.subr.bf16.mxu0 0
    %1182 = vmatpush1.bf16.msra.mxu0 0
    %1183 = vmatprep.subr.bf16.mxu0 0
    %1184 = vmatpush1.bf16.msra.mxu0 0
    %1185 = vmatprep.subr.bf16.mxu0 0
    %1186 = vmatpush1.bf16.msra.mxu0 0
    %1187 = vmatprep.subr.bf16.mxu0 0
    %1188 = vmatpush1.bf16.msra.mxu0 0
    %1189 = vmatprep.subr.bf16.mxu0 0
    %1190 = vmatpush1.bf16.msra.mxu0 0
    %1191 = vmatprep.subr.bf16.mxu0 0
    %1192 = vmatpush1.bf16.msra.mxu0 0
    %1193 = vmatprep.mubr.bf16.mxu0 0
    %1194 = vmatmul.mubr.bf16.gmra.mrb[0].mxu0 %v1156
    %v1195 = vpop.f32.mrb[0].mxu0
    %v1196 = vadd.f32 %v228, %v1195
    %v1197 = vpop.f32.mrb[0].mxu0
    %v1198 = vpop.f32.mrb[0].mxu0
    %v1199 = vadd.f32 %v228, %v1198
    %v1200 = vpop.f32.mrb[0].mxu0
    %1201 = vmatprep.mubr.bf16.mxu0 0
    %1202 = vmatmul.mubr.bf16.gmra.mrb[0].mxu0 %v1159
    %v1203 = vpop.f32.mrb[0].mxu0
    %v1204 = vadd.f32 %v228, %v1203
    %v1205 = vpop.f32.mrb[0].mxu0
    %v1206 = vpop.f32.mrb[0].mxu0
    %v1207 = vpop.f32.mrb[0].mxu0
    %1208 = vdwg.mxu0
    %vm1209 = vcmp.gt.f32.partialorder %v1196, 0.0
    %vm1210 = vcmp.gt.f32.partialorder %v1199, 0.0
    %vm1211 = vcmp.gt.f32.partialorder %v1204, 0.0
    %v1212 = vmul.f32 %v312, %v1196
    %v1213 = vmul.f32 %v312, %v1199
    %v1214 = vmul.f32 %v312, %v1204
    %v1215 = vsel %vm1209, %v1196, %v1212
    %v1216 = vsel %vm1210, %v1199, %v1213
    %v1217 = vsel %vm1211, %v1204, %v1214
    %s1218 = sadd.s32 192, %s55
    %s1219 = scalar_lea.vmem %s0, %s1218
    %v1220 = vld [vmem:[%s1219] sm:$0xff]
    %v1221 = vld [vmem:[%s1219 + $0x8] sm:$0xff]
    %v1222 = vld [vmem:[%s1219 + $0x10] sm:$0xff]
    %v1226 = vrot.slane %v1220, 1
    %v1227 = vrot.slane %v1221, 1
    %v1228 = vsel %vm63, %v1226, %v1227
    %v1229 = vrot.slane %v1222, 1
    %v1230 = vsel %vm63, %v1227, %v1229
    %1231 = vrot.lane.b32.xlu0 %v1228, 3
    %v1232 = vpop.permute.xlu0 %1231
    %1233 = vrot.lane.b32.xlu0 %v1230, 3
    %v1234 = vpop.permute.xlu0 %1233
    %1235 = vrot.lane.b32.xlu0 %v1229, 3
    %v1236 = vpop.permute.xlu0 %1235
    %v1240 = vrot.slane %v1220, 2
    %v1241 = vrot.slane %v1221, 2
    %v1242 = vsel %vm78, %v1240, %v1241
    %v1243 = vrot.slane %v1222, 2
    %v1244 = vsel %vm78, %v1241, %v1243
    %1245 = vrot.lane.b32.xlu0 %v1242, 6
    %v1246 = vpop.permute.xlu0 %1245
    %1247 = vrot.lane.b32.xlu0 %v1244, 6
    %v1248 = vpop.permute.xlu0 %1247
    %1249 = vrot.lane.b32.xlu0 %v1243, 6
    %v1250 = vpop.permute.xlu0 %1249
    %v1254 = vsel %vm93, %v1220, %v1232
    %v1255 = vsel %vm93, %v1221, %v1234
    %v1256 = vsel %vm93, %v1222, %v1236
    %v1257 = vsel %vm97, %v1254, %v1246
    %v1258 = vsel %vm97, %v1255, %v1248
    %v1259 = vsel %vm97, %v1256, %v1250
    %1260 = vrot.lane.b32.xlu0 %v1123, 9
    %v1261 = vpop.permute.xlu0 %1260
    %1262 = vrot.lane.b32.xlu0 %v1124, 9
    %v1263 = vpop.permute.xlu0 %1262
    %1264 = vrot.lane.b32.xlu0 %v1125, 9
    %v1265 = vpop.permute.xlu0 %1264
    %1272 = vrot.lane.b32.xlu0 %v1257, 18
    %v1273 = vpop.permute.xlu0 %1272
    %1274 = vrot.lane.b32.xlu0 %v1258, 18
    %v1275 = vpop.permute.xlu0 %1274
    %1276 = vrot.lane.b32.xlu0 %v1259, 18
    %v1277 = vpop.permute.xlu0 %1276
    %v1281 = vsel %vm209, %v880, %v1261
    %v1282 = vsel %vm209, %v881, %v1263
    %v1283 = vsel %vm209, %v882, %v1265
    %v1284 = vsel %vm213, %v1281, %v1273
    %v1285 = vsel %vm213, %v1282, %v1275
    %v1286 = vsel %vm213, %v1283, %v1277
    %v1287 = vpack.c.bf16 %v1285, %v1284
    %v1288 = vpack.c.bf16 %v1286, %v1286
    %v1290 = vsel %vm241, %v1287, 0
    %v1293 = vsel %vm241, %v1288, 0
    %1295 = vmatprep.subr.bf16.mxu0 0
    %1296 = vmatpush1.bf16.msra.mxu0 %v238
    %1297 = vmatprep.subr.bf16.mxu0 0
    %1298 = vmatpush1.bf16.msra.mxu0 %v252
    %1299 = vmatprep.subr.bf16.mxu0 0
    %1300 = vmatpush1.bf16.msra.mxu0 0
    %1301 = vmatprep.subr.bf16.mxu0 0
    %1302 = vmatpush1.bf16.msra.mxu0 0
    %1303 = vmatprep.subr.bf16.mxu0 0
    %1304 = vmatpush1.bf16.msra.mxu0 0
    %1305 = vmatprep.subr.bf16.mxu0 0
    %1306 = vmatpush1.bf16.msra.mxu0 0
    %1307 = vmatprep.subr.bf16.mxu0 0
    %1308 = vmatpush1.bf16.msra.mxu0 0
    %1309 = vmatprep.subr.bf16.mxu0 0
    %1310 = vmatpush1.bf16.msra.mxu0 0
    %1311 = vmatprep.subr.bf16.mxu0 0
    %1312 = vmatpush1.bf16.msra.mxu0 0
    %1313 = vmatprep.subr.bf16.mxu0 0
    %1314 = vmatpush1.bf16.msra.mxu0 0
    %1315 = vmatprep.subr.bf16.mxu0 0
    %1316 = vmatpush1.bf16.msra.mxu0 0
    %1317 = vmatprep.subr.bf16.mxu0 0
    %1318 = vmatpush1.bf16.msra.mxu0 0
    %1319 = vmatprep.subr.bf16.mxu0 0
    %1320 = vmatpush1.bf16.msra.mxu0 0
    %1321 = vmatprep.subr.bf16.mxu0 0
    %1322 = vmatpush1.bf16.msra.mxu0 0
    %1323 = vmatprep.subr.bf16.mxu0 0
    %1324 = vmatpush1.bf16.msra.mxu0 0
    %1325 = vmatprep.subr.bf16.mxu0 0
    %1326 = vmatpush1.bf16.msra.mxu0 0
    %1327 = vmatprep.mubr.bf16.mxu0 0
    %1328 = vmatmul.mubr.bf16.gmra.mrb[0].mxu0 %v1290
    %v1329 = vpop.f32.mrb[0].mxu0
    %v1330 = vadd.f32 %v228, %v1329
    %v1331 = vpop.f32.mrb[0].mxu0
    %v1332 = vpop.f32.mrb[0].mxu0
    %v1333 = vadd.f32 %v228, %v1332
    %v1334 = vpop.f32.mrb[0].mxu0
    %1335 = vmatprep.mubr.bf16.mxu0 0
    %1336 = vmatmul.mubr.bf16.gmra.mrb[0].mxu0 %v1293
    %v1337 = vpop.f32.mrb[0].mxu0
    %v1338 = vadd.f32 %v228, %v1337
    %v1339 = vpop.f32.mrb[0].mxu0
    %v1340 = vpop.f32.mrb[0].mxu0
    %v1341 = vpop.f32.mrb[0].mxu0
    %1342 = vdwg.mxu0
    %vm1343 = vcmp.gt.f32.partialorder %v1330, 0.0
    %vm1344 = vcmp.gt.f32.partialorder %v1333, 0.0
    %vm1345 = vcmp.gt.f32.partialorder %v1338, 0.0
    %v1346 = vmul.f32 %v312, %v1330
    %v1347 = vmul.f32 %v312, %v1333
    %v1348 = vmul.f32 %v312, %v1338
    %v1349 = vsel %vm1343, %v1330, %v1346
    %v1350 = vsel %vm1344, %v1333, %v1347
    %v1351 = vsel %vm1345, %v1338, %v1348
    %v1352 = vmax.f32 %v972, %v1215
    %v1353 = vmax.f32 %v973, %v1216
    %v1354 = vmax.f32 %v974, %v1217
    %v1355 = vmax.f32 %v1352, %v1349
    %v1356 = vmax.f32 %v1353, %v1350
    %v1357 = vmax.f32 %v1354, %v1351
    %v1361 = vrot.slane %v1355, 1
    %v1362 = vrot.slane %v1356, 1
    %v1363 = vsel %vm63, %v1361, %v1362
    %v1364 = vrot.slane %v1357, 1
    %v1365 = vsel %vm63, %v1362, %v1364
    %v1369 = vmax.f32 %v1355, %v1363
    %v1370 = vmax.f32 %v1356, %v1365
    %v1371 = vmax.f32 %v1357, %v1364
    %v1372 = vrot.slane %v1355, 2
    %v1373 = vrot.slane %v1356, 2
    %v1374 = vsel %vm78, %v1372, %v1373
    %v1375 = vrot.slane %v1357, 2
    %v1376 = vsel %vm78, %v1373, %v1375
    %v1380 = vmax.f32 %v1369, %v1374
    %v1381 = vmax.f32 %v1370, %v1376
    %v1382 = vmax.f32 %v1371, %v1375
    %v1384 = vsel %vm628, %v1382, 0
    %1386 = vmatprep.subr.mxu0 0.0
    %1387 = vmatpush1.msra.mxu0 %v1380
    %1388 = vmatprep.subr.mxu0 0.0
    %1389 = vmatpush1.msra.mxu0 %v1381
    %1390 = vmatprep.subr.mxu0 0.0
    %1391 = vmatpush1.msra.mxu0 %v1384
    %1392 = vmatprep.subr.mxu0 0.0
    %1393 = vmatpush1.msra.mxu0 0.0
    %1394 = vmatprep.subr.mxu0 0.0
    %1395 = vmatpush1.msra.mxu0 0.0
    %1396 = vmatprep.subr.mxu0 0.0
    %1397 = vmatpush1.msra.mxu0 0.0
    %1398 = vmatprep.subr.mxu0 0.0
    %1399 = vmatpush1.msra.mxu0 0.0
    %1400 = vmatprep.subr.mxu0 0.0
    %1401 = vmatpush1.msra.mxu0 0.0
    %1402 = vmatprep.subr.mxu0 0.0
    %1403 = vmatpush1.msra.mxu0 0.0
    %1404 = vmatprep.subr.mxu0 0.0
    %1405 = vmatpush1.msra.mxu0 0.0
    %1406 = vmatprep.subr.mxu0 0.0
    %1407 = vmatpush1.msra.mxu0 0.0
    %1408 = vmatprep.subr.mxu0 0.0
    %1409 = vmatpush1.msra.mxu0 0.0
    %1410 = vmatprep.subr.mxu0 0.0
    %1411 = vmatpush1.msra.mxu0 0.0
    %1412 = vmatprep.subr.mxu0 0.0
    %1413 = vmatpush1.msra.mxu0 0.0
    %1414 = vmatprep.subr.mxu0 0.0
    %1415 = vmatpush1.msra.mxu0 0.0
    %1416 = vmatprep.subr.mxu0 0.0
    %1417 = vmatpush1.msra.mxu0 0.0
    %1418 = vmatprep.subr.mxu0 0.0
    %1419 = vmatpush1.msra.mxu0 0.0
    %1420 = vmatprep.subr.mxu0 0.0
    %1421 = vmatpush1.msra.mxu0 0.0
    %1422 = vmatprep.subr.mxu0 0.0
    %1423 = vmatpush1.msra.mxu0 0.0
    %1424 = vmatprep.subr.mxu0 0.0
    %1425 = vmatpush1.msra.mxu0 0.0
    %1426 = vmatprep.subr.mxu0 0.0
    %1427 = vmatpush1.msra.mxu0 0.0
    %1428 = vmatprep.subr.mxu0 0.0
    %1429 = vmatpush1.msra.mxu0 0.0
    %1430 = vmatprep.subr.mxu0 0.0
    %1431 = vmatpush1.msra.mxu0 0.0
    %1432 = vmatprep.subr.mxu0 0.0
    %1433 = vmatpush1.msra.mxu0 0.0
    %1434 = vmatprep.subr.mxu0 0.0
    %1435 = vmatpush1.msra.mxu0 0.0
    %1436 = vmatprep.subr.mxu0 0.0
    %1437 = vmatpush1.msra.mxu0 0.0
    %1438 = vmatprep.subr.mxu0 0.0
    %1439 = vmatpush1.msra.mxu0 0.0
    %1440 = vmatprep.subr.mxu0 0.0
    %1441 = vmatpush1.msra.mxu0 0.0
    %1442 = vmatprep.subr.mxu0 0.0
    %1443 = vmatpush1.msra.mxu0 0.0
    %1444 = vmatprep.subr.mxu0 0.0
    %1445 = vmatpush1.msra.mxu0 0.0
    %1446 = vmatprep.subr.mxu0 0.0
    %1447 = vmatpush1.msra.mxu0 0.0
    %1448 = vmatprep.subr.mxu0 0.0
    %1449 = vmatpush1.msra.mxu0 0.0
    %1450 = vmatprep.mubr.f32.mxu0 0.0
    %1451 = vmatmul.mubr.f32.gmra.mrb[0].mxu0 %v623
    %v1452 = vpop.f32.mrb[0].mxu0
    %v1453 = vadd.f32 0.0, %v1452
    %v1454 = vpop.f32.mrb[0].mxu0
    %1455 = vmatprep.mubr.f32.mxu0 0.0
    %1456 = vmatmul.mubr.f32.gmra.mrb[0].mxu0 %v626
    %v1457 = vpop.f32.mrb[0].mxu0
    %v1458 = vadd.f32 0.0, %v1457
    %v1459 = vpop.f32.mrb[0].mxu0
    %1460 = vdwg.mxu0
    %s1461 = sadd.s32 216, %s55
    %s1462 = scalar_lea.vmem %s0, %s1461
    %v1463 = vld [vmem:[%s1462] sm:$0xff]
    %v1464 = vld [vmem:[%s1462 + $0x8] sm:$0xff]
    %v1465 = vld [vmem:[%s1462 + $0x10] sm:$0xff]
    %v1469 = vrot.slane %v1463, 1
    %v1470 = vrot.slane %v1464, 1
    %v1471 = vsel %vm63, %v1469, %v1470
    %v1472 = vrot.slane %v1465, 1
    %v1473 = vsel %vm63, %v1470, %v1472
    %1474 = vrot.lane.b32.xlu0 %v1471, 3
    %v1475 = vpop.permute.xlu0 %1474
    %1476 = vrot.lane.b32.xlu0 %v1473, 3
    %v1477 = vpop.permute.xlu0 %1476
    %1478 = vrot.lane.b32.xlu0 %v1472, 3
    %v1479 = vpop.permute.xlu0 %1478
    %v1483 = vrot.slane %v1463, 2
    %v1484 = vrot.slane %v1464, 2
    %v1485 = vsel %vm78, %v1483, %v1484
    %v1486 = vrot.slane %v1465, 2
    %v1487 = vsel %vm78, %v1484, %v1486
    %1488 = vrot.lane.b32.xlu0 %v1485, 6
    %v1489 = vpop.permute.xlu0 %1488
    %1490 = vrot.lane.b32.xlu0 %v1487, 6
    %v1491 = vpop.permute.xlu0 %1490
    %1492 = vrot.lane.b32.xlu0 %v1486, 6
    %v1493 = vpop.permute.xlu0 %1492
    %v1497 = vsel %vm93, %v1463, %v1475
    %v1498 = vsel %vm93, %v1464, %v1477
    %v1499 = vsel %vm93, %v1465, %v1479
    %v1500 = vsel %vm97, %v1497, %v1489
    %v1501 = vsel %vm97, %v1498, %v1491
    %v1502 = vsel %vm97, %v1499, %v1493
    %1503 = vrot.lane.b32.xlu0 %v1257, 9
    %v1504 = vpop.permute.xlu0 %1503
    %1505 = vrot.lane.b32.xlu0 %v1258, 9
    %v1506 = vpop.permute.xlu0 %1505
    %1507 = vrot.lane.b32.xlu0 %v1259, 9
    %v1508 = vpop.permute.xlu0 %1507
    %1515 = vrot.lane.b32.xlu0 %v1500, 18
    %v1516 = vpop.permute.xlu0 %1515
    %1517 = vrot.lane.b32.xlu0 %v1501, 18
    %v1518 = vpop.permute.xlu0 %1517
    %1519 = vrot.lane.b32.xlu0 %v1502, 18
    %v1520 = vpop.permute.xlu0 %1519
    %v1524 = vsel %vm209, %v1123, %v1504
    %v1525 = vsel %vm209, %v1124, %v1506
    %v1526 = vsel %vm209, %v1125, %v1508
    %v1527 = vsel %vm213, %v1524, %v1516
    %v1528 = vsel %vm213, %v1525, %v1518
    %v1529 = vsel %vm213, %v1526, %v1520
    %v1530 = vpack.c.bf16 %v1528, %v1527
    %v1531 = vpack.c.bf16 %v1529, %v1529
    %v1533 = vsel %vm241, %v1530, 0
    %v1536 = vsel %vm241, %v1531, 0
    %1538 = vmatprep.subr.bf16.mxu0 0
    %1539 = vmatpush1.bf16.msra.mxu0 %v238
    %1540 = vmatprep.subr.bf16.mxu0 0
    %1541 = vmatpush1.bf16.msra.mxu0 %v252
    %1542 = vmatprep.subr.bf16.mxu0 0
    %1543 = vmatpush1.bf16.msra.mxu0 0
    %1544 = vmatprep.subr.bf16.mxu0 0
    %1545 = vmatpush1.bf16.msra.mxu0 0
    %1546 = vmatprep.subr.bf16.mxu0 0
    %1547 = vmatpush1.bf16.msra.mxu0 0
    %1548 = vmatprep.subr.bf16.mxu0 0
    %1549 = vmatpush1.bf16.msra.mxu0 0
    %1550 = vmatprep.subr.bf16.mxu0 0
    %1551 = vmatpush1.bf16.msra.mxu0 0
    %1552 = vmatprep.subr.bf16.mxu0 0
    %1553 = vmatpush1.bf16.msra.mxu0 0
    %1554 = vmatprep.subr.bf16.mxu0 0
    %1555 = vmatpush1.bf16.msra.mxu0 0
    %1556 = vmatprep.subr.bf16.mxu0 0
    %1557 = vmatpush1.bf16.msra.mxu0 0
    %1558 = vmatprep.subr.bf16.mxu0 0
    %1559 = vmatpush1.bf16.msra.mxu0 0
    %1560 = vmatprep.subr.bf16.mxu0 0
    %1561 = vmatpush1.bf16.msra.mxu0 0
    %1562 = vmatprep.subr.bf16.mxu0 0
    %1563 = vmatpush1.bf16.msra.mxu0 0
    %1564 = vmatprep.subr.bf16.mxu0 0
    %1565 = vmatpush1.bf16.msra.mxu0 0
    %1566 = vmatprep.subr.bf16.mxu0 0
    %1567 = vmatpush1.bf16.msra.mxu0 0
    %1568 = vmatprep.subr.bf16.mxu0 0
    %1569 = vmatpush1.bf16.msra.mxu0 0
    %1570 = vmatprep.mubr.bf16.mxu0 0
    %1571 = vmatmul.mubr.bf16.gmra.mrb[0].mxu0 %v1533
    %v1572 = vpop.f32.mrb[0].mxu0
    %v1573 = vadd.f32 %v228, %v1572
    %v1574 = vpop.f32.mrb[0].mxu0
    %v1575 = vpop.f32.mrb[0].mxu0
    %v1576 = vadd.f32 %v228, %v1575
    %v1577 = vpop.f32.mrb[0].mxu0
    %1578 = vmatprep.mubr.bf16.mxu0 0
    %1579 = vmatmul.mubr.bf16.gmra.mrb[0].mxu0 %v1536
    %v1580 = vpop.f32.mrb[0].mxu0
    %v1581 = vadd.f32 %v228, %v1580
    %v1582 = vpop.f32.mrb[0].mxu0
    %v1583 = vpop.f32.mrb[0].mxu0
    %v1584 = vpop.f32.mrb[0].mxu0
    %1585 = vdwg.mxu0
    %vm1586 = vcmp.gt.f32.partialorder %v1573, 0.0
    %vm1587 = vcmp.gt.f32.partialorder %v1576, 0.0
    %vm1588 = vcmp.gt.f32.partialorder %v1581, 0.0
    %v1589 = vmul.f32 %v312, %v1573
    %v1590 = vmul.f32 %v312, %v1576
    %v1591 = vmul.f32 %v312, %v1581
    %v1592 = vsel %vm1586, %v1573, %v1589
    %v1593 = vsel %vm1587, %v1576, %v1590
    %v1594 = vsel %vm1588, %v1581, %v1591
    %s1595 = sadd.s32 240, %s55
    %s1596 = scalar_lea.vmem %s0, %s1595
    %v1597 = vld [vmem:[%s1596] sm:$0xff]
    %v1598 = vld [vmem:[%s1596 + $0x8] sm:$0xff]
    %v1599 = vld [vmem:[%s1596 + $0x10] sm:$0xff]
    %v1603 = vrot.slane %v1597, 1
    %v1604 = vrot.slane %v1598, 1
    %v1605 = vsel %vm63, %v1603, %v1604
    %v1606 = vrot.slane %v1599, 1
    %v1607 = vsel %vm63, %v1604, %v1606
    %1608 = vrot.lane.b32.xlu0 %v1605, 3
    %v1609 = vpop.permute.xlu0 %1608
    %1610 = vrot.lane.b32.xlu0 %v1607, 3
    %v1611 = vpop.permute.xlu0 %1610
    %1612 = vrot.lane.b32.xlu0 %v1606, 3
    %v1613 = vpop.permute.xlu0 %1612
    %v1617 = vrot.slane %v1597, 2
    %v1618 = vrot.slane %v1598, 2
    %v1619 = vsel %vm78, %v1617, %v1618
    %v1620 = vrot.slane %v1599, 2
    %v1621 = vsel %vm78, %v1618, %v1620
    %1622 = vrot.lane.b32.xlu0 %v1619, 6
    %v1623 = vpop.permute.xlu0 %1622
    %1624 = vrot.lane.b32.xlu0 %v1621, 6
    %v1625 = vpop.permute.xlu0 %1624
    %1626 = vrot.lane.b32.xlu0 %v1620, 6
    %v1627 = vpop.permute.xlu0 %1626
    %v1631 = vsel %vm93, %v1597, %v1609
    %v1632 = vsel %vm93, %v1598, %v1611
    %v1633 = vsel %vm93, %v1599, %v1613
    %v1634 = vsel %vm97, %v1631, %v1623
    %v1635 = vsel %vm97, %v1632, %v1625
    %v1636 = vsel %vm97, %v1633, %v1627
    %1637 = vrot.lane.b32.xlu0 %v1500, 9
    %v1638 = vpop.permute.xlu0 %1637
    %1639 = vrot.lane.b32.xlu0 %v1501, 9
    %v1640 = vpop.permute.xlu0 %1639
    %1641 = vrot.lane.b32.xlu0 %v1502, 9
    %v1642 = vpop.permute.xlu0 %1641
    %1649 = vrot.lane.b32.xlu0 %v1634, 18
    %v1650 = vpop.permute.xlu0 %1649
    %1651 = vrot.lane.b32.xlu0 %v1635, 18
    %v1652 = vpop.permute.xlu0 %1651
    %1653 = vrot.lane.b32.xlu0 %v1636, 18
    %v1654 = vpop.permute.xlu0 %1653
    %v1658 = vsel %vm209, %v1257, %v1638
    %v1659 = vsel %vm209, %v1258, %v1640
    %v1660 = vsel %vm209, %v1259, %v1642
    %v1661 = vsel %vm213, %v1658, %v1650
    %v1662 = vsel %vm213, %v1659, %v1652
    %v1663 = vsel %vm213, %v1660, %v1654
    %v1664 = vpack.c.bf16 %v1662, %v1661
    %v1665 = vpack.c.bf16 %v1663, %v1663
    %v1667 = vsel %vm241, %v1664, 0
    %v1670 = vsel %vm241, %v1665, 0
    %1672 = vmatprep.subr.bf16.mxu0 0
    %1673 = vmatpush1.bf16.msra.mxu0 %v238
    %1674 = vmatprep.subr.bf16.mxu0 0
    %1675 = vmatpush1.bf16.msra.mxu0 %v252
    %1676 = vmatprep.subr.bf16.mxu0 0
    %1677 = vmatpush1.bf16.msra.mxu0 0
    %1678 = vmatprep.subr.bf16.mxu0 0
    %1679 = vmatpush1.bf16.msra.mxu0 0
    %1680 = vmatprep.subr.bf16.mxu0 0
    %1681 = vmatpush1.bf16.msra.mxu0 0
    %1682 = vmatprep.subr.bf16.mxu0 0
    %1683 = vmatpush1.bf16.msra.mxu0 0
    %1684 = vmatprep.subr.bf16.mxu0 0
    %1685 = vmatpush1.bf16.msra.mxu0 0
    %1686 = vmatprep.subr.bf16.mxu0 0
    %1687 = vmatpush1.bf16.msra.mxu0 0
    %1688 = vmatprep.subr.bf16.mxu0 0
    %1689 = vmatpush1.bf16.msra.mxu0 0
    %1690 = vmatprep.subr.bf16.mxu0 0
    %1691 = vmatpush1.bf16.msra.mxu0 0
    %1692 = vmatprep.subr.bf16.mxu0 0
    %1693 = vmatpush1.bf16.msra.mxu0 0
    %1694 = vmatprep.subr.bf16.mxu0 0
    %1695 = vmatpush1.bf16.msra.mxu0 0
    %1696 = vmatprep.subr.bf16.mxu0 0
    %1697 = vmatpush1.bf16.msra.mxu0 0
    %1698 = vmatprep.subr.bf16.mxu0 0
    %1699 = vmatpush1.bf16.msra.mxu0 0
    %1700 = vmatprep.subr.bf16.mxu0 0
    %1701 = vmatpush1.bf16.msra.mxu0 0
    %1702 = vmatprep.subr.bf16.mxu0 0
    %1703 = vmatpush1.bf16.msra.mxu0 0
    %1704 = vmatprep.mubr.bf16.mxu0 0
    %1705 = vmatmul.mubr.bf16.gmra.mrb[0].mxu0 %v1667
    %v1706 = vpop.f32.mrb[0].mxu0
    %v1707 = vadd.f32 %v228, %v1706
    %v1708 = vpop.f32.mrb[0].mxu0
    %v1709 = vpop.f32.mrb[0].mxu0
    %v1710 = vadd.f32 %v228, %v1709
    %v1711 = vpop.f32.mrb[0].mxu0
    %1712 = vmatprep.mubr.bf16.mxu0 0
    %1713 = vmatmul.mubr.bf16.gmra.mrb[0].mxu0 %v1670
    %v1714 = vpop.f32.mrb[0].mxu0
    %v1715 = vadd.f32 %v228, %v1714
    %v1716 = vpop.f32.mrb[0].mxu0
    %v1717 = vpop.f32.mrb[0].mxu0
    %v1718 = vpop.f32.mrb[0].mxu0
    %1719 = vdwg.mxu0
    %vm1720 = vcmp.gt.f32.partialorder %v1707, 0.0
    %vm1721 = vcmp.gt.f32.partialorder %v1710, 0.0
    %vm1722 = vcmp.gt.f32.partialorder %v1715, 0.0
    %v1723 = vmul.f32 %v312, %v1707
    %v1724 = vmul.f32 %v312, %v1710
    %v1725 = vmul.f32 %v312, %v1715
    %v1726 = vsel %vm1720, %v1707, %v1723
    %v1727 = vsel %vm1721, %v1710, %v1724
    %v1728 = vsel %vm1722, %v1715, %v1725
    %v1729 = vmax.f32 %v1349, %v1592
    %v1730 = vmax.f32 %v1350, %v1593
    %v1731 = vmax.f32 %v1351, %v1594
    %v1732 = vmax.f32 %v1729, %v1726
    %v1733 = vmax.f32 %v1730, %v1727
    %v1734 = vmax.f32 %v1731, %v1728
    %v1738 = vrot.slane %v1732, 1
    %v1739 = vrot.slane %v1733, 1
    %v1740 = vsel %vm63, %v1738, %v1739
    %v1741 = vrot.slane %v1734, 1
    %v1742 = vsel %vm63, %v1739, %v1741
    %v1746 = vmax.f32 %v1732, %v1740
    %v1747 = vmax.f32 %v1733, %v1742
    %v1748 = vmax.f32 %v1734, %v1741
    %v1749 = vrot.slane %v1732, 2
    %v1750 = vrot.slane %v1733, 2
    %v1751 = vsel %vm78, %v1749, %v1750
    %v1752 = vrot.slane %v1734, 2
    %v1753 = vsel %vm78, %v1750, %v1752
    %v1757 = vmax.f32 %v1746, %v1751
    %v1758 = vmax.f32 %v1747, %v1753
    %v1759 = vmax.f32 %v1748, %v1752
    %v1761 = vsel %vm628, %v1759, 0
    %1763 = vmatprep.subr.mxu0 0.0
    %1764 = vmatpush1.msra.mxu0 %v1757
    %1765 = vmatprep.subr.mxu0 0.0
    %1766 = vmatpush1.msra.mxu0 %v1758
    %1767 = vmatprep.subr.mxu0 0.0
    %1768 = vmatpush1.msra.mxu0 %v1761
    %1769 = vmatprep.subr.mxu0 0.0
    %1770 = vmatpush1.msra.mxu0 0.0
    %1771 = vmatprep.subr.mxu0 0.0
    %1772 = vmatpush1.msra.mxu0 0.0
    %1773 = vmatprep.subr.mxu0 0.0
    %1774 = vmatpush1.msra.mxu0 0.0
    %1775 = vmatprep.subr.mxu0 0.0
    %1776 = vmatpush1.msra.mxu0 0.0
    %1777 = vmatprep.subr.mxu0 0.0
    %1778 = vmatpush1.msra.mxu0 0.0
    %1779 = vmatprep.subr.mxu0 0.0
    %1780 = vmatpush1.msra.mxu0 0.0
    %1781 = vmatprep.subr.mxu0 0.0
    %1782 = vmatpush1.msra.mxu0 0.0
    %1783 = vmatprep.subr.mxu0 0.0
    %1784 = vmatpush1.msra.mxu0 0.0
    %1785 = vmatprep.subr.mxu0 0.0
    %1786 = vmatpush1.msra.mxu0 0.0
    %1787 = vmatprep.subr.mxu0 0.0
    %1788 = vmatpush1.msra.mxu0 0.0
    %1789 = vmatprep.subr.mxu0 0.0
    %1790 = vmatpush1.msra.mxu0 0.0
    %1791 = vmatprep.subr.mxu0 0.0
    %1792 = vmatpush1.msra.mxu0 0.0
    %1793 = vmatprep.subr.mxu0 0.0
    %1794 = vmatpush1.msra.mxu0 0.0
    %1795 = vmatprep.subr.mxu0 0.0
    %1796 = vmatpush1.msra.mxu0 0.0
    %1797 = vmatprep.subr.mxu0 0.0
    %1798 = vmatpush1.msra.mxu0 0.0
    %1799 = vmatprep.subr.mxu0 0.0
    %1800 = vmatpush1.msra.mxu0 0.0
    %1801 = vmatprep.subr.mxu0 0.0
    %1802 = vmatpush1.msra.mxu0 0.0
    %1803 = vmatprep.subr.mxu0 0.0
    %1804 = vmatpush1.msra.mxu0 0.0
    %1805 = vmatprep.subr.mxu0 0.0
    %1806 = vmatpush1.msra.mxu0 0.0
    %1807 = vmatprep.subr.mxu0 0.0
    %1808 = vmatpush1.msra.mxu0 0.0
    %1809 = vmatprep.subr.mxu0 0.0
    %1810 = vmatpush1.msra.mxu0 0.0
    %1811 = vmatprep.subr.mxu0 0.0
    %1812 = vmatpush1.msra.mxu0 0.0
    %1813 = vmatprep.subr.mxu0 0.0
    %1814 = vmatpush1.msra.mxu0 0.0
    %1815 = vmatprep.subr.mxu0 0.0
    %1816 = vmatpush1.msra.mxu0 0.0
    %1817 = vmatprep.subr.mxu0 0.0
    %1818 = vmatpush1.msra.mxu0 0.0
    %1819 = vmatprep.subr.mxu0 0.0
    %1820 = vmatpush1.msra.mxu0 0.0
    %1821 = vmatprep.subr.mxu0 0.0
    %1822 = vmatpush1.msra.mxu0 0.0
    %1823 = vmatprep.subr.mxu0 0.0
    %1824 = vmatpush1.msra.mxu0 0.0
    %1825 = vmatprep.subr.mxu0 0.0
    %1826 = vmatpush1.msra.mxu0 0.0
    %1827 = vmatprep.mubr.f32.mxu0 0.0
    %1828 = vmatmul.mubr.f32.gmra.mrb[0].mxu0 %v623
    %v1829 = vpop.f32.mrb[0].mxu0
    %v1830 = vadd.f32 0.0, %v1829
    %v1831 = vpop.f32.mrb[0].mxu0
    %1832 = vmatprep.mubr.f32.mxu0 0.0
    %1833 = vmatmul.mubr.f32.gmra.mrb[0].mxu0 %v626
    %v1834 = vpop.f32.mrb[0].mxu0
    %v1835 = vadd.f32 0.0, %v1834
    %v1836 = vpop.f32.mrb[0].mxu0
    %1837 = vdwg.mxu0
    %s1838 = sadd.s32 264, %s55
    %s1839 = scalar_lea.vmem %s0, %s1838
    %v1840 = vld [vmem:[%s1839] sm:$0xff]
    %v1841 = vld [vmem:[%s1839 + $0x8] sm:$0xff]
    %v1842 = vld [vmem:[%s1839 + $0x10] sm:$0xff]
    %v1846 = vrot.slane %v1840, 1
    %v1847 = vrot.slane %v1841, 1
    %v1848 = vsel %vm63, %v1846, %v1847
    %v1849 = vrot.slane %v1842, 1
    %v1850 = vsel %vm63, %v1847, %v1849
    %1851 = vrot.lane.b32.xlu0 %v1848, 3
    %v1852 = vpop.permute.xlu0 %1851
    %1853 = vrot.lane.b32.xlu0 %v1850, 3
    %v1854 = vpop.permute.xlu0 %1853
    %1855 = vrot.lane.b32.xlu0 %v1849, 3
    %v1856 = vpop.permute.xlu0 %1855
    %v1860 = vrot.slane %v1840, 2
    %v1861 = vrot.slane %v1841, 2
    %v1862 = vsel %vm78, %v1860, %v1861
    %v1863 = vrot.slane %v1842, 2
    %v1864 = vsel %vm78, %v1861, %v1863
    %1865 = vrot.lane.b32.xlu0 %v1862, 6
    %v1866 = vpop.permute.xlu0 %1865
    %1867 = vrot.lane.b32.xlu0 %v1864, 6
    %v1868 = vpop.permute.xlu0 %1867
    %1869 = vrot.lane.b32.xlu0 %v1863, 6
    %v1870 = vpop.permute.xlu0 %1869
    %v1874 = vsel %vm93, %v1840, %v1852
    %v1875 = vsel %vm93, %v1841, %v1854
    %v1876 = vsel %vm93, %v1842, %v1856
    %v1877 = vsel %vm97, %v1874, %v1866
    %v1878 = vsel %vm97, %v1875, %v1868
    %v1879 = vsel %vm97, %v1876, %v1870
    %1880 = vrot.lane.b32.xlu0 %v1634, 9
    %v1881 = vpop.permute.xlu0 %1880
    %1882 = vrot.lane.b32.xlu0 %v1635, 9
    %v1883 = vpop.permute.xlu0 %1882
    %1884 = vrot.lane.b32.xlu0 %v1636, 9
    %v1885 = vpop.permute.xlu0 %1884
    %1892 = vrot.lane.b32.xlu0 %v1877, 18
    %v1893 = vpop.permute.xlu0 %1892
    %1894 = vrot.lane.b32.xlu0 %v1878, 18
    %v1895 = vpop.permute.xlu0 %1894
    %1896 = vrot.lane.b32.xlu0 %v1879, 18
    %v1897 = vpop.permute.xlu0 %1896
    %v1901 = vsel %vm209, %v1500, %v1881
    %v1902 = vsel %vm209, %v1501, %v1883
    %v1903 = vsel %vm209, %v1502, %v1885
    %v1904 = vsel %vm213, %v1901, %v1893
    %v1905 = vsel %vm213, %v1902, %v1895
    %v1906 = vsel %vm213, %v1903, %v1897
    %v1907 = vpack.c.bf16 %v1905, %v1904
    %v1908 = vpack.c.bf16 %v1906, %v1906
    %v1910 = vsel %vm241, %v1907, 0
    %v1913 = vsel %vm241, %v1908, 0
    %1915 = vmatprep.subr.bf16.mxu0 0
    %1916 = vmatpush1.bf16.msra.mxu0 %v238
    %1917 = vmatprep.subr.bf16.mxu0 0
    %1918 = vmatpush1.bf16.msra.mxu0 %v252
    %1919 = vmatprep.subr.bf16.mxu0 0
    %1920 = vmatpush1.bf16.msra.mxu0 0
    %1921 = vmatprep.subr.bf16.mxu0 0
    %1922 = vmatpush1.bf16.msra.mxu0 0
    %1923 = vmatprep.subr.bf16.mxu0 0
    %1924 = vmatpush1.bf16.msra.mxu0 0
    %1925 = vmatprep.subr.bf16.mxu0 0
    %1926 = vmatpush1.bf16.msra.mxu0 0
    %1927 = vmatprep.subr.bf16.mxu0 0
    %1928 = vmatpush1.bf16.msra.mxu0 0
    %1929 = vmatprep.subr.bf16.mxu0 0
    %1930 = vmatpush1.bf16.msra.mxu0 0
    %1931 = vmatprep.subr.bf16.mxu0 0
    %1932 = vmatpush1.bf16.msra.mxu0 0
    %1933 = vmatprep.subr.bf16.mxu0 0
    %1934 = vmatpush1.bf16.msra.mxu0 0
    %1935 = vmatprep.subr.bf16.mxu0 0
    %1936 = vmatpush1.bf16.msra.mxu0 0
    %1937 = vmatprep.subr.bf16.mxu0 0
    %1938 = vmatpush1.bf16.msra.mxu0 0
    %1939 = vmatprep.subr.bf16.mxu0 0
    %1940 = vmatpush1.bf16.msra.mxu0 0
    %1941 = vmatprep.subr.bf16.mxu0 0
    %1942 = vmatpush1.bf16.msra.mxu0 0
    %1943 = vmatprep.subr.bf16.mxu0 0
    %1944 = vmatpush1.bf16.msra.mxu0 0
    %1945 = vmatprep.subr.bf16.mxu0 0
    %1946 = vmatpush1.bf16.msra.mxu0 0
    %1947 = vmatprep.mubr.bf16.mxu0 0
    %1948 = vmatmul.mubr.bf16.gmra.mrb[0].mxu0 %v1910
    %v1949 = vpop.f32.mrb[0].mxu0
    %v1950 = vadd.f32 %v228, %v1949
    %v1951 = vpop.f32.mrb[0].mxu0
    %v1952 = vpop.f32.mrb[0].mxu0
    %v1953 = vadd.f32 %v228, %v1952
    %v1954 = vpop.f32.mrb[0].mxu0
    %1955 = vmatprep.mubr.bf16.mxu0 0
    %1956 = vmatmul.mubr.bf16.gmra.mrb[0].mxu0 %v1913
    %v1957 = vpop.f32.mrb[0].mxu0
    %v1958 = vadd.f32 %v228, %v1957
    %v1959 = vpop.f32.mrb[0].mxu0
    %v1960 = vpop.f32.mrb[0].mxu0
    %v1961 = vpop.f32.mrb[0].mxu0
    %1962 = vdwg.mxu0
    %vm1963 = vcmp.gt.f32.partialorder %v1950, 0.0
    %vm1964 = vcmp.gt.f32.partialorder %v1953, 0.0
    %vm1965 = vcmp.gt.f32.partialorder %v1958, 0.0
    %v1966 = vmul.f32 %v312, %v1950
    %v1967 = vmul.f32 %v312, %v1953
    %v1968 = vmul.f32 %v312, %v1958
    %v1969 = vsel %vm1963, %v1950, %v1966
    %v1970 = vsel %vm1964, %v1953, %v1967
    %v1971 = vsel %vm1965, %v1958, %v1968
    %s1972 = sadd.s32 288, %s55
    %s1973 = scalar_lea.vmem %s0, %s1972
    %v1974 = vld [vmem:[%s1973] sm:$0xff]
    %v1975 = vld [vmem:[%s1973 + $0x8] sm:$0xff]
    %v1976 = vld [vmem:[%s1973 + $0x10] sm:$0xff]
    %v1980 = vrot.slane %v1974, 1
    %v1981 = vrot.slane %v1975, 1
    %v1982 = vsel %vm63, %v1980, %v1981
    %v1983 = vrot.slane %v1976, 1
    %v1984 = vsel %vm63, %v1981, %v1983
    %1985 = vrot.lane.b32.xlu0 %v1982, 3
    %v1986 = vpop.permute.xlu0 %1985
    %1987 = vrot.lane.b32.xlu0 %v1984, 3
    %v1988 = vpop.permute.xlu0 %1987
    %1989 = vrot.lane.b32.xlu0 %v1983, 3
    %v1990 = vpop.permute.xlu0 %1989
    %v1994 = vrot.slane %v1974, 2
    %v1995 = vrot.slane %v1975, 2
    %v1996 = vsel %vm78, %v1994, %v1995
    %v1997 = vrot.slane %v1976, 2
    %v1998 = vsel %vm78, %v1995, %v1997
    %1999 = vrot.lane.b32.xlu0 %v1996, 6
    %v2000 = vpop.permute.xlu0 %1999
    %2001 = vrot.lane.b32.xlu0 %v1998, 6
    %v2002 = vpop.permute.xlu0 %2001
    %2003 = vrot.lane.b32.xlu0 %v1997, 6
    %v2004 = vpop.permute.xlu0 %2003
    %v2008 = vsel %vm93, %v1974, %v1986
    %v2009 = vsel %vm93, %v1975, %v1988
    %v2010 = vsel %vm93, %v1976, %v1990
    %v2011 = vsel %vm97, %v2008, %v2000
    %v2012 = vsel %vm97, %v2009, %v2002
    %v2013 = vsel %vm97, %v2010, %v2004
    %2014 = vrot.lane.b32.xlu0 %v1877, 9
    %v2015 = vpop.permute.xlu0 %2014
    %2016 = vrot.lane.b32.xlu0 %v1878, 9
    %v2017 = vpop.permute.xlu0 %2016
    %2018 = vrot.lane.b32.xlu0 %v1879, 9
    %v2019 = vpop.permute.xlu0 %2018
    %2026 = vrot.lane.b32.xlu0 %v2011, 18
    %v2027 = vpop.permute.xlu0 %2026
    %2028 = vrot.lane.b32.xlu0 %v2012, 18
    %v2029 = vpop.permute.xlu0 %2028
    %2030 = vrot.lane.b32.xlu0 %v2013, 18
    %v2031 = vpop.permute.xlu0 %2030
    %v2035 = vsel %vm209, %v1634, %v2015
    %v2036 = vsel %vm209, %v1635, %v2017
    %v2037 = vsel %vm209, %v1636, %v2019
    %v2038 = vsel %vm213, %v2035, %v2027
    %v2039 = vsel %vm213, %v2036, %v2029
    %v2040 = vsel %vm213, %v2037, %v2031
    %v2041 = vpack.c.bf16 %v2039, %v2038
    %v2042 = vpack.c.bf16 %v2040, %v2040
    %v2044 = vsel %vm241, %v2041, 0
    %v2047 = vsel %vm241, %v2042, 0
    %2049 = vmatprep.subr.bf16.mxu0 0
    %2050 = vmatpush1.bf16.msra.mxu0 %v238
    %2051 = vmatprep.subr.bf16.mxu0 0
    %2052 = vmatpush1.bf16.msra.mxu0 %v252
    %2053 = vmatprep.subr.bf16.mxu0 0
    %2054 = vmatpush1.bf16.msra.mxu0 0
    %2055 = vmatprep.subr.bf16.mxu0 0
    %2056 = vmatpush1.bf16.msra.mxu0 0
    %2057 = vmatprep.subr.bf16.mxu0 0
    %2058 = vmatpush1.bf16.msra.mxu0 0
    %2059 = vmatprep.subr.bf16.mxu0 0
    %2060 = vmatpush1.bf16.msra.mxu0 0
    %2061 = vmatprep.subr.bf16.mxu0 0
    %2062 = vmatpush1.bf16.msra.mxu0 0
    %2063 = vmatprep.subr.bf16.mxu0 0
    %2064 = vmatpush1.bf16.msra.mxu0 0
    %2065 = vmatprep.subr.bf16.mxu0 0
    %2066 = vmatpush1.bf16.msra.mxu0 0
    %2067 = vmatprep.subr.bf16.mxu0 0
    %2068 = vmatpush1.bf16.msra.mxu0 0
    %2069 = vmatprep.subr.bf16.mxu0 0
    %2070 = vmatpush1.bf16.msra.mxu0 0
    %2071 = vmatprep.subr.bf16.mxu0 0
    %2072 = vmatpush1.bf16.msra.mxu0 0
    %2073 = vmatprep.subr.bf16.mxu0 0
    %2074 = vmatpush1.bf16.msra.mxu0 0
    %2075 = vmatprep.subr.bf16.mxu0 0
    %2076 = vmatpush1.bf16.msra.mxu0 0
    %2077 = vmatprep.subr.bf16.mxu0 0
    %2078 = vmatpush1.bf16.msra.mxu0 0
    %2079 = vmatprep.subr.bf16.mxu0 0
    %2080 = vmatpush1.bf16.msra.mxu0 0
    %2081 = vmatprep.mubr.bf16.mxu0 0
    %2082 = vmatmul.mubr.bf16.gmra.mrb[0].mxu0 %v2044
    %v2083 = vpop.f32.mrb[0].mxu0
    %v2084 = vadd.f32 %v228, %v2083
    %v2085 = vpop.f32.mrb[0].mxu0
    %v2086 = vpop.f32.mrb[0].mxu0
    %v2087 = vadd.f32 %v228, %v2086
    %v2088 = vpop.f32.mrb[0].mxu0
    %2089 = vmatprep.mubr.bf16.mxu0 0
    %2090 = vmatmul.mubr.bf16.gmra.mrb[0].mxu0 %v2047
    %v2091 = vpop.f32.mrb[0].mxu0
    %v2092 = vadd.f32 %v228, %v2091
    %v2093 = vpop.f32.mrb[0].mxu0
    %v2094 = vpop.f32.mrb[0].mxu0
    %v2095 = vpop.f32.mrb[0].mxu0
    %2096 = vdwg.mxu0
    %vm2097 = vcmp.gt.f32.partialorder %v2084, 0.0
    %vm2098 = vcmp.gt.f32.partialorder %v2087, 0.0
    %vm2099 = vcmp.gt.f32.partialorder %v2092, 0.0
    %v2100 = vmul.f32 %v312, %v2084
    %v2101 = vmul.f32 %v312, %v2087
    %v2102 = vmul.f32 %v312, %v2092
    %v2103 = vsel %vm2097, %v2084, %v2100
    %v2104 = vsel %vm2098, %v2087, %v2101
    %v2105 = vsel %vm2099, %v2092, %v2102
    %v2106 = vmax.f32 %v1726, %v1969
    %v2107 = vmax.f32 %v1727, %v1970
    %v2108 = vmax.f32 %v1728, %v1971
    %v2109 = vmax.f32 %v2106, %v2103
    %v2110 = vmax.f32 %v2107, %v2104
    %v2111 = vmax.f32 %v2108, %v2105
    %v2115 = vrot.slane %v2109, 1
    %v2116 = vrot.slane %v2110, 1
    %v2117 = vsel %vm63, %v2115, %v2116
    %v2118 = vrot.slane %v2111, 1
    %v2119 = vsel %vm63, %v2116, %v2118
    %v2123 = vmax.f32 %v2109, %v2117
    %v2124 = vmax.f32 %v2110, %v2119
    %v2125 = vmax.f32 %v2111, %v2118
    %v2126 = vrot.slane %v2109, 2
    %v2127 = vrot.slane %v2110, 2
    %v2128 = vsel %vm78, %v2126, %v2127
    %v2129 = vrot.slane %v2111, 2
    %v2130 = vsel %vm78, %v2127, %v2129
    %v2134 = vmax.f32 %v2123, %v2128
    %v2135 = vmax.f32 %v2124, %v2130
    %v2136 = vmax.f32 %v2125, %v2129
    %v2138 = vsel %vm628, %v2136, 0
    %2140 = vmatprep.subr.mxu0 0.0
    %2141 = vmatpush1.msra.mxu0 %v2134
    %2142 = vmatprep.subr.mxu0 0.0
    %2143 = vmatpush1.msra.mxu0 %v2135
    %2144 = vmatprep.subr.mxu0 0.0
    %2145 = vmatpush1.msra.mxu0 %v2138
    %2146 = vmatprep.subr.mxu0 0.0
    %2147 = vmatpush1.msra.mxu0 0.0
    %2148 = vmatprep.subr.mxu0 0.0
    %2149 = vmatpush1.msra.mxu0 0.0
    %2150 = vmatprep.subr.mxu0 0.0
    %2151 = vmatpush1.msra.mxu0 0.0
    %2152 = vmatprep.subr.mxu0 0.0
    %2153 = vmatpush1.msra.mxu0 0.0
    %2154 = vmatprep.subr.mxu0 0.0
    %2155 = vmatpush1.msra.mxu0 0.0
    %2156 = vmatprep.subr.mxu0 0.0
    %2157 = vmatpush1.msra.mxu0 0.0
    %2158 = vmatprep.subr.mxu0 0.0
    %2159 = vmatpush1.msra.mxu0 0.0
    %2160 = vmatprep.subr.mxu0 0.0
    %2161 = vmatpush1.msra.mxu0 0.0
    %2162 = vmatprep.subr.mxu0 0.0
    %2163 = vmatpush1.msra.mxu0 0.0
    %2164 = vmatprep.subr.mxu0 0.0
    %2165 = vmatpush1.msra.mxu0 0.0
    %2166 = vmatprep.subr.mxu0 0.0
    %2167 = vmatpush1.msra.mxu0 0.0
    %2168 = vmatprep.subr.mxu0 0.0
    %2169 = vmatpush1.msra.mxu0 0.0
    %2170 = vmatprep.subr.mxu0 0.0
    %2171 = vmatpush1.msra.mxu0 0.0
    %2172 = vmatprep.subr.mxu0 0.0
    %2173 = vmatpush1.msra.mxu0 0.0
    %2174 = vmatprep.subr.mxu0 0.0
    %2175 = vmatpush1.msra.mxu0 0.0
    %2176 = vmatprep.subr.mxu0 0.0
    %2177 = vmatpush1.msra.mxu0 0.0
    %2178 = vmatprep.subr.mxu0 0.0
    %2179 = vmatpush1.msra.mxu0 0.0
    %2180 = vmatprep.subr.mxu0 0.0
    %2181 = vmatpush1.msra.mxu0 0.0
    %2182 = vmatprep.subr.mxu0 0.0
    %2183 = vmatpush1.msra.mxu0 0.0
    %2184 = vmatprep.subr.mxu0 0.0
    %2185 = vmatpush1.msra.mxu0 0.0
    %2186 = vmatprep.subr.mxu0 0.0
    %2187 = vmatpush1.msra.mxu0 0.0
    %2188 = vmatprep.subr.mxu0 0.0
    %2189 = vmatpush1.msra.mxu0 0.0
    %2190 = vmatprep.subr.mxu0 0.0
    %2191 = vmatpush1.msra.mxu0 0.0
    %2192 = vmatprep.subr.mxu0 0.0
    %2193 = vmatpush1.msra.mxu0 0.0
    %2194 = vmatprep.subr.mxu0 0.0
    %2195 = vmatpush1.msra.mxu0 0.0
    %2196 = vmatprep.subr.mxu0 0.0
    %2197 = vmatpush1.msra.mxu0 0.0
    %2198 = vmatprep.subr.mxu0 0.0
    %2199 = vmatpush1.msra.mxu0 0.0
    %2200 = vmatprep.subr.mxu0 0.0
    %2201 = vmatpush1.msra.mxu0 0.0
    %2202 = vmatprep.subr.mxu0 0.0
    %2203 = vmatpush1.msra.mxu0 0.0
    %2204 = vmatprep.mubr.f32.mxu0 0.0
    %2205 = vmatmul.mubr.f32.gmra.mrb[0].mxu0 %v623
    %v2206 = vpop.f32.mrb[0].mxu0
    %v2207 = vadd.f32 0.0, %v2206
    %v2208 = vpop.f32.mrb[0].mxu0
    %2209 = vmatprep.mubr.f32.mxu0 0.0
    %2210 = vmatmul.mubr.f32.gmra.mrb[0].mxu0 %v626
    %v2211 = vpop.f32.mrb[0].mxu0
    %v2212 = vadd.f32 0.0, %v2211
    %v2213 = vpop.f32.mrb[0].mxu0
    %2214 = vdwg.mxu0
    %s2215 = sadd.s32 312, %s55
    %s2216 = scalar_lea.vmem %s0, %s2215
    %v2217 = vld [vmem:[%s2216] sm:$0xff]
    %v2218 = vld [vmem:[%s2216 + $0x8] sm:$0xff]
    %v2219 = vld [vmem:[%s2216 + $0x10] sm:$0xff]
    %v2223 = vrot.slane %v2217, 1
    %v2224 = vrot.slane %v2218, 1
    %v2225 = vsel %vm63, %v2223, %v2224
    %v2226 = vrot.slane %v2219, 1
    %v2227 = vsel %vm63, %v2224, %v2226
    %2228 = vrot.lane.b32.xlu0 %v2225, 3
    %v2229 = vpop.permute.xlu0 %2228
    %2230 = vrot.lane.b32.xlu0 %v2227, 3
    %v2231 = vpop.permute.xlu0 %2230
    %2232 = vrot.lane.b32.xlu0 %v2226, 3
    %v2233 = vpop.permute.xlu0 %2232
    %v2237 = vrot.slane %v2217, 2
    %v2238 = vrot.slane %v2218, 2
    %v2239 = vsel %vm78, %v2237, %v2238
    %v2240 = vrot.slane %v2219, 2
    %v2241 = vsel %vm78, %v2238, %v2240
    %2242 = vrot.lane.b32.xlu0 %v2239, 6
    %v2243 = vpop.permute.xlu0 %2242
    %2244 = vrot.lane.b32.xlu0 %v2241, 6
    %v2245 = vpop.permute.xlu0 %2244
    %2246 = vrot.lane.b32.xlu0 %v2240, 6
    %v2247 = vpop.permute.xlu0 %2246
    %v2251 = vsel %vm93, %v2217, %v2229
    %v2252 = vsel %vm93, %v2218, %v2231
    %v2253 = vsel %vm93, %v2219, %v2233
    %v2254 = vsel %vm97, %v2251, %v2243
    %v2255 = vsel %vm97, %v2252, %v2245
    %v2256 = vsel %vm97, %v2253, %v2247
    %2257 = vrot.lane.b32.xlu0 %v2011, 9
    %v2258 = vpop.permute.xlu0 %2257
    %2259 = vrot.lane.b32.xlu0 %v2012, 9
    %v2260 = vpop.permute.xlu0 %2259
    %2261 = vrot.lane.b32.xlu0 %v2013, 9
    %v2262 = vpop.permute.xlu0 %2261
    %2269 = vrot.lane.b32.xlu0 %v2254, 18
    %v2270 = vpop.permute.xlu0 %2269
    %2271 = vrot.lane.b32.xlu0 %v2255, 18
    %v2272 = vpop.permute.xlu0 %2271
    %2273 = vrot.lane.b32.xlu0 %v2256, 18
    %v2274 = vpop.permute.xlu0 %2273
    %v2278 = vsel %vm209, %v1877, %v2258
    %v2279 = vsel %vm209, %v1878, %v2260
    %v2280 = vsel %vm209, %v1879, %v2262
    %v2281 = vsel %vm213, %v2278, %v2270
    %v2282 = vsel %vm213, %v2279, %v2272
    %v2283 = vsel %vm213, %v2280, %v2274
    %v2284 = vpack.c.bf16 %v2282, %v2281
    %v2285 = vpack.c.bf16 %v2283, %v2283
    %v2287 = vsel %vm241, %v2284, 0
    %v2290 = vsel %vm241, %v2285, 0
    %2292 = vmatprep.subr.bf16.mxu0 0
    %2293 = vmatpush1.bf16.msra.mxu0 %v238
    %2294 = vmatprep.subr.bf16.mxu0 0
    %2295 = vmatpush1.bf16.msra.mxu0 %v252
    %2296 = vmatprep.subr.bf16.mxu0 0
    %2297 = vmatpush1.bf16.msra.mxu0 0
    %2298 = vmatprep.subr.bf16.mxu0 0
    %2299 = vmatpush1.bf16.msra.mxu0 0
    %2300 = vmatprep.subr.bf16.mxu0 0
    %2301 = vmatpush1.bf16.msra.mxu0 0
    %2302 = vmatprep.subr.bf16.mxu0 0
    %2303 = vmatpush1.bf16.msra.mxu0 0
    %2304 = vmatprep.subr.bf16.mxu0 0
    %2305 = vmatpush1.bf16.msra.mxu0 0
    %2306 = vmatprep.subr.bf16.mxu0 0
    %2307 = vmatpush1.bf16.msra.mxu0 0
    %2308 = vmatprep.subr.bf16.mxu0 0
    %2309 = vmatpush1.bf16.msra.mxu0 0
    %2310 = vmatprep.subr.bf16.mxu0 0
    %2311 = vmatpush1.bf16.msra.mxu0 0
    %2312 = vmatprep.subr.bf16.mxu0 0
    %2313 = vmatpush1.bf16.msra.mxu0 0
    %2314 = vmatprep.subr.bf16.mxu0 0
    %2315 = vmatpush1.bf16.msra.mxu0 0
    %2316 = vmatprep.subr.bf16.mxu0 0
    %2317 = vmatpush1.bf16.msra.mxu0 0
    %2318 = vmatprep.subr.bf16.mxu0 0
    %2319 = vmatpush1.bf16.msra.mxu0 0
    %2320 = vmatprep.subr.bf16.mxu0 0
    %2321 = vmatpush1.bf16.msra.mxu0 0
    %2322 = vmatprep.subr.bf16.mxu0 0
    %2323 = vmatpush1.bf16.msra.mxu0 0
    %2324 = vmatprep.mubr.bf16.mxu0 0
    %2325 = vmatmul.mubr.bf16.gmra.mrb[0].mxu0 %v2287
    %v2326 = vpop.f32.mrb[0].mxu0
    %v2327 = vadd.f32 %v228, %v2326
    %v2328 = vpop.f32.mrb[0].mxu0
    %v2329 = vpop.f32.mrb[0].mxu0
    %v2330 = vadd.f32 %v228, %v2329
    %v2331 = vpop.f32.mrb[0].mxu0
    %2332 = vmatprep.mubr.bf16.mxu0 0
    %2333 = vmatmul.mubr.bf16.gmra.mrb[0].mxu0 %v2290
    %v2334 = vpop.f32.mrb[0].mxu0
    %v2335 = vadd.f32 %v228, %v2334
    %v2336 = vpop.f32.mrb[0].mxu0
    %v2337 = vpop.f32.mrb[0].mxu0
    %v2338 = vpop.f32.mrb[0].mxu0
    %2339 = vdwg.mxu0
    %vm2340 = vcmp.gt.f32.partialorder %v2327, 0.0
    %vm2341 = vcmp.gt.f32.partialorder %v2330, 0.0
    %vm2342 = vcmp.gt.f32.partialorder %v2335, 0.0
    %v2343 = vmul.f32 %v312, %v2327
    %v2344 = vmul.f32 %v312, %v2330
    %v2345 = vmul.f32 %v312, %v2335
    %v2346 = vsel %vm2340, %v2327, %v2343
    %v2347 = vsel %vm2341, %v2330, %v2344
    %v2348 = vsel %vm2342, %v2335, %v2345
    %s2349 = sadd.s32 336, %s55
    %s2350 = scalar_lea.vmem %s0, %s2349
    %v2351 = vld [vmem:[%s2350] sm:$0xff]
    %v2352 = vld [vmem:[%s2350 + $0x8] sm:$0xff]
    %v2353 = vld [vmem:[%s2350 + $0x10] sm:$0xff]
    %v2357 = vrot.slane %v2351, 1
    %v2358 = vrot.slane %v2352, 1
    %v2359 = vsel %vm63, %v2357, %v2358
    %v2360 = vrot.slane %v2353, 1
    %v2361 = vsel %vm63, %v2358, %v2360
    %2362 = vrot.lane.b32.xlu0 %v2359, 3
    %v2363 = vpop.permute.xlu0 %2362
    %2364 = vrot.lane.b32.xlu0 %v2361, 3
    %v2365 = vpop.permute.xlu0 %2364
    %2366 = vrot.lane.b32.xlu0 %v2360, 3
    %v2367 = vpop.permute.xlu0 %2366
    %v2371 = vrot.slane %v2351, 2
    %v2372 = vrot.slane %v2352, 2
    %v2373 = vsel %vm78, %v2371, %v2372
    %v2374 = vrot.slane %v2353, 2
    %v2375 = vsel %vm78, %v2372, %v2374
    %2376 = vrot.lane.b32.xlu0 %v2373, 6
    %v2377 = vpop.permute.xlu0 %2376
    %2378 = vrot.lane.b32.xlu0 %v2375, 6
    %v2379 = vpop.permute.xlu0 %2378
    %2380 = vrot.lane.b32.xlu0 %v2374, 6
    %v2381 = vpop.permute.xlu0 %2380
    %v2385 = vsel %vm93, %v2351, %v2363
    %v2386 = vsel %vm93, %v2352, %v2365
    %v2387 = vsel %vm93, %v2353, %v2367
    %v2388 = vsel %vm97, %v2385, %v2377
    %v2389 = vsel %vm97, %v2386, %v2379
    %v2390 = vsel %vm97, %v2387, %v2381
    %2391 = vrot.lane.b32.xlu0 %v2254, 9
    %v2392 = vpop.permute.xlu0 %2391
    %2393 = vrot.lane.b32.xlu0 %v2255, 9
    %v2394 = vpop.permute.xlu0 %2393
    %2395 = vrot.lane.b32.xlu0 %v2256, 9
    %v2396 = vpop.permute.xlu0 %2395
    %2403 = vrot.lane.b32.xlu0 %v2388, 18
    %v2404 = vpop.permute.xlu0 %2403
    %2405 = vrot.lane.b32.xlu0 %v2389, 18
    %v2406 = vpop.permute.xlu0 %2405
    %2407 = vrot.lane.b32.xlu0 %v2390, 18
    %v2408 = vpop.permute.xlu0 %2407
    %v2412 = vsel %vm209, %v2011, %v2392
    %v2413 = vsel %vm209, %v2012, %v2394
    %v2414 = vsel %vm209, %v2013, %v2396
    %v2415 = vsel %vm213, %v2412, %v2404
    %v2416 = vsel %vm213, %v2413, %v2406
    %v2417 = vsel %vm213, %v2414, %v2408
    %v2418 = vpack.c.bf16 %v2416, %v2415
    %v2419 = vpack.c.bf16 %v2417, %v2417
    %v2421 = vsel %vm241, %v2418, 0
    %v2424 = vsel %vm241, %v2419, 0
    %2426 = vmatprep.subr.bf16.mxu0 0
    %2427 = vmatpush1.bf16.msra.mxu0 %v238
    %2428 = vmatprep.subr.bf16.mxu0 0
    %2429 = vmatpush1.bf16.msra.mxu0 %v252
    %2430 = vmatprep.subr.bf16.mxu0 0
    %2431 = vmatpush1.bf16.msra.mxu0 0
    %2432 = vmatprep.subr.bf16.mxu0 0
    %2433 = vmatpush1.bf16.msra.mxu0 0
    %2434 = vmatprep.subr.bf16.mxu0 0
    %2435 = vmatpush1.bf16.msra.mxu0 0
    %2436 = vmatprep.subr.bf16.mxu0 0
    %2437 = vmatpush1.bf16.msra.mxu0 0
    %2438 = vmatprep.subr.bf16.mxu0 0
    %2439 = vmatpush1.bf16.msra.mxu0 0
    %2440 = vmatprep.subr.bf16.mxu0 0
    %2441 = vmatpush1.bf16.msra.mxu0 0
    %2442 = vmatprep.subr.bf16.mxu0 0
    %2443 = vmatpush1.bf16.msra.mxu0 0
    %2444 = vmatprep.subr.bf16.mxu0 0
    %2445 = vmatpush1.bf16.msra.mxu0 0
    %2446 = vmatprep.subr.bf16.mxu0 0
    %2447 = vmatpush1.bf16.msra.mxu0 0
    %2448 = vmatprep.subr.bf16.mxu0 0
    %2449 = vmatpush1.bf16.msra.mxu0 0
    %2450 = vmatprep.subr.bf16.mxu0 0
    %2451 = vmatpush1.bf16.msra.mxu0 0
    %2452 = vmatprep.subr.bf16.mxu0 0
    %2453 = vmatpush1.bf16.msra.mxu0 0
    %2454 = vmatprep.subr.bf16.mxu0 0
    %2455 = vmatpush1.bf16.msra.mxu0 0
    %2456 = vmatprep.subr.bf16.mxu0 0
    %2457 = vmatpush1.bf16.msra.mxu0 0
    %2458 = vmatprep.mubr.bf16.mxu0 0
    %2459 = vmatmul.mubr.bf16.gmra.mrb[0].mxu0 %v2421
    %v2460 = vpop.f32.mrb[0].mxu0
    %v2461 = vadd.f32 %v228, %v2460
    %v2462 = vpop.f32.mrb[0].mxu0
    %v2463 = vpop.f32.mrb[0].mxu0
    %v2464 = vadd.f32 %v228, %v2463
    %v2465 = vpop.f32.mrb[0].mxu0
    %2466 = vmatprep.mubr.bf16.mxu0 0
    %2467 = vmatmul.mubr.bf16.gmra.mrb[0].mxu0 %v2424
    %v2468 = vpop.f32.mrb[0].mxu0
    %v2469 = vadd.f32 %v228, %v2468
    %v2470 = vpop.f32.mrb[0].mxu0
    %v2471 = vpop.f32.mrb[0].mxu0
    %v2472 = vpop.f32.mrb[0].mxu0
    %2473 = vdwg.mxu0
    %vm2474 = vcmp.gt.f32.partialorder %v2461, 0.0
    %vm2475 = vcmp.gt.f32.partialorder %v2464, 0.0
    %vm2476 = vcmp.gt.f32.partialorder %v2469, 0.0
    %v2477 = vmul.f32 %v312, %v2461
    %v2478 = vmul.f32 %v312, %v2464
    %v2479 = vmul.f32 %v312, %v2469
    %v2480 = vsel %vm2474, %v2461, %v2477
    %v2481 = vsel %vm2475, %v2464, %v2478
    %v2482 = vsel %vm2476, %v2469, %v2479
    %v2483 = vmax.f32 %v2103, %v2346
    %v2484 = vmax.f32 %v2104, %v2347
    %v2485 = vmax.f32 %v2105, %v2348
    %v2486 = vmax.f32 %v2483, %v2480
    %v2487 = vmax.f32 %v2484, %v2481
    %v2488 = vmax.f32 %v2485, %v2482
    %v2492 = vrot.slane %v2486, 1
    %v2493 = vrot.slane %v2487, 1
    %v2494 = vsel %vm63, %v2492, %v2493
    %v2495 = vrot.slane %v2488, 1
    %v2496 = vsel %vm63, %v2493, %v2495
    %v2500 = vmax.f32 %v2486, %v2494
    %v2501 = vmax.f32 %v2487, %v2496
    %v2502 = vmax.f32 %v2488, %v2495
    %v2503 = vrot.slane %v2486, 2
    %v2504 = vrot.slane %v2487, 2
    %v2505 = vsel %vm78, %v2503, %v2504
    %v2506 = vrot.slane %v2488, 2
    %v2507 = vsel %vm78, %v2504, %v2506
    %v2511 = vmax.f32 %v2500, %v2505
    %v2512 = vmax.f32 %v2501, %v2507
    %v2513 = vmax.f32 %v2502, %v2506
    %v2515 = vsel %vm628, %v2513, 0
    %2517 = vmatprep.subr.mxu0 0.0
    %2518 = vmatpush1.msra.mxu0 %v2511
    %2519 = vmatprep.subr.mxu0 0.0
    %2520 = vmatpush1.msra.mxu0 %v2512
    %2521 = vmatprep.subr.mxu0 0.0
    %2522 = vmatpush1.msra.mxu0 %v2515
    %2523 = vmatprep.subr.mxu0 0.0
    %2524 = vmatpush1.msra.mxu0 0.0
    %2525 = vmatprep.subr.mxu0 0.0
    %2526 = vmatpush1.msra.mxu0 0.0
    %2527 = vmatprep.subr.mxu0 0.0
    %2528 = vmatpush1.msra.mxu0 0.0
    %2529 = vmatprep.subr.mxu0 0.0
    %2530 = vmatpush1.msra.mxu0 0.0
    %2531 = vmatprep.subr.mxu0 0.0
    %2532 = vmatpush1.msra.mxu0 0.0
    %2533 = vmatprep.subr.mxu0 0.0
    %2534 = vmatpush1.msra.mxu0 0.0
    %2535 = vmatprep.subr.mxu0 0.0
    %2536 = vmatpush1.msra.mxu0 0.0
    %2537 = vmatprep.subr.mxu0 0.0
    %2538 = vmatpush1.msra.mxu0 0.0
    %2539 = vmatprep.subr.mxu0 0.0
    %2540 = vmatpush1.msra.mxu0 0.0
    %2541 = vmatprep.subr.mxu0 0.0
    %2542 = vmatpush1.msra.mxu0 0.0
    %2543 = vmatprep.subr.mxu0 0.0
    %2544 = vmatpush1.msra.mxu0 0.0
    %2545 = vmatprep.subr.mxu0 0.0
    %2546 = vmatpush1.msra.mxu0 0.0
    %2547 = vmatprep.subr.mxu0 0.0
    %2548 = vmatpush1.msra.mxu0 0.0
    %2549 = vmatprep.subr.mxu0 0.0
    %2550 = vmatpush1.msra.mxu0 0.0
    %2551 = vmatprep.subr.mxu0 0.0
    %2552 = vmatpush1.msra.mxu0 0.0
    %2553 = vmatprep.subr.mxu0 0.0
    %2554 = vmatpush1.msra.mxu0 0.0
    %2555 = vmatprep.subr.mxu0 0.0
    %2556 = vmatpush1.msra.mxu0 0.0
    %2557 = vmatprep.subr.mxu0 0.0
    %2558 = vmatpush1.msra.mxu0 0.0
    %2559 = vmatprep.subr.mxu0 0.0
    %2560 = vmatpush1.msra.mxu0 0.0
    %2561 = vmatprep.subr.mxu0 0.0
    %2562 = vmatpush1.msra.mxu0 0.0
    %2563 = vmatprep.subr.mxu0 0.0
    %2564 = vmatpush1.msra.mxu0 0.0
    %2565 = vmatprep.subr.mxu0 0.0
    %2566 = vmatpush1.msra.mxu0 0.0
    %2567 = vmatprep.subr.mxu0 0.0
    %2568 = vmatpush1.msra.mxu0 0.0
    %2569 = vmatprep.subr.mxu0 0.0
    %2570 = vmatpush1.msra.mxu0 0.0
    %2571 = vmatprep.subr.mxu0 0.0
    %2572 = vmatpush1.msra.mxu0 0.0
    %2573 = vmatprep.subr.mxu0 0.0
    %2574 = vmatpush1.msra.mxu0 0.0
    %2575 = vmatprep.subr.mxu0 0.0
    %2576 = vmatpush1.msra.mxu0 0.0
    %2577 = vmatprep.subr.mxu0 0.0
    %2578 = vmatpush1.msra.mxu0 0.0
    %2579 = vmatprep.subr.mxu0 0.0
    %2580 = vmatpush1.msra.mxu0 0.0
    %2581 = vmatprep.mubr.f32.mxu0 0.0
    %2582 = vmatmul.mubr.f32.gmra.mrb[0].mxu0 %v623
    %v2583 = vpop.f32.mrb[0].mxu0
    %v2584 = vadd.f32 0.0, %v2583
    %v2585 = vpop.f32.mrb[0].mxu0
    %2586 = vmatprep.mubr.f32.mxu0 0.0
    %2587 = vmatmul.mubr.f32.gmra.mrb[0].mxu0 %v626
    %v2588 = vpop.f32.mrb[0].mxu0
    %v2589 = vadd.f32 0.0, %v2588
    %v2590 = vpop.f32.mrb[0].mxu0
    %2591 = vdwg.mxu0
    %s2592 = sadd.s32 360, %s55
    %s2593 = scalar_lea.vmem %s0, %s2592
    %v2594 = vld [vmem:[%s2593] sm:$0xff]
    %v2595 = vld [vmem:[%s2593 + $0x8] sm:$0xff]
    %v2596 = vld [vmem:[%s2593 + $0x10] sm:$0xff]
    %v2600 = vrot.slane %v2594, 1
    %v2601 = vrot.slane %v2595, 1
    %v2602 = vsel %vm63, %v2600, %v2601
    %v2603 = vrot.slane %v2596, 1
    %v2604 = vsel %vm63, %v2601, %v2603
    %2605 = vrot.lane.b32.xlu0 %v2602, 3
    %v2606 = vpop.permute.xlu0 %2605
    %2607 = vrot.lane.b32.xlu0 %v2604, 3
    %v2608 = vpop.permute.xlu0 %2607
    %2609 = vrot.lane.b32.xlu0 %v2603, 3
    %v2610 = vpop.permute.xlu0 %2609
    %v2614 = vrot.slane %v2594, 2
    %v2615 = vrot.slane %v2595, 2
    %v2616 = vsel %vm78, %v2614, %v2615
    %v2617 = vrot.slane %v2596, 2
    %v2618 = vsel %vm78, %v2615, %v2617
    %2619 = vrot.lane.b32.xlu0 %v2616, 6
    %v2620 = vpop.permute.xlu0 %2619
    %2621 = vrot.lane.b32.xlu0 %v2618, 6
    %v2622 = vpop.permute.xlu0 %2621
    %2623 = vrot.lane.b32.xlu0 %v2617, 6
    %v2624 = vpop.permute.xlu0 %2623
    %v2628 = vsel %vm93, %v2594, %v2606
    %v2629 = vsel %vm93, %v2595, %v2608
    %v2630 = vsel %vm93, %v2596, %v2610
    %v2631 = vsel %vm97, %v2628, %v2620
    %v2632 = vsel %vm97, %v2629, %v2622
    %v2633 = vsel %vm97, %v2630, %v2624
    %2634 = vrot.lane.b32.xlu0 %v2388, 9
    %v2635 = vpop.permute.xlu0 %2634
    %2636 = vrot.lane.b32.xlu0 %v2389, 9
    %v2637 = vpop.permute.xlu0 %2636
    %2638 = vrot.lane.b32.xlu0 %v2390, 9
    %v2639 = vpop.permute.xlu0 %2638
    %2646 = vrot.lane.b32.xlu0 %v2631, 18
    %v2647 = vpop.permute.xlu0 %2646
    %2648 = vrot.lane.b32.xlu0 %v2632, 18
    %v2649 = vpop.permute.xlu0 %2648
    %2650 = vrot.lane.b32.xlu0 %v2633, 18
    %v2651 = vpop.permute.xlu0 %2650
    %v2655 = vsel %vm209, %v2254, %v2635
    %v2656 = vsel %vm209, %v2255, %v2637
    %v2657 = vsel %vm209, %v2256, %v2639
    %v2658 = vsel %vm213, %v2655, %v2647
    %v2659 = vsel %vm213, %v2656, %v2649
    %v2660 = vsel %vm213, %v2657, %v2651
    %v2661 = vpack.c.bf16 %v2659, %v2658
    %v2662 = vpack.c.bf16 %v2660, %v2660
    %v2664 = vsel %vm241, %v2661, 0
    %v2667 = vsel %vm241, %v2662, 0
    %2669 = vmatprep.subr.bf16.mxu0 0
    %2670 = vmatpush1.bf16.msra.mxu0 %v238
    %2671 = vmatprep.subr.bf16.mxu0 0
    %2672 = vmatpush1.bf16.msra.mxu0 %v252
    %2673 = vmatprep.subr.bf16.mxu0 0
    %2674 = vmatpush1.bf16.msra.mxu0 0
    %2675 = vmatprep.subr.bf16.mxu0 0
    %2676 = vmatpush1.bf16.msra.mxu0 0
    %2677 = vmatprep.subr.bf16.mxu0 0
    %2678 = vmatpush1.bf16.msra.mxu0 0
    %2679 = vmatprep.subr.bf16.mxu0 0
    %2680 = vmatpush1.bf16.msra.mxu0 0
    %2681 = vmatprep.subr.bf16.mxu0 0
    %2682 = vmatpush1.bf16.msra.mxu0 0
    %2683 = vmatprep.subr.bf16.mxu0 0
    %2684 = vmatpush1.bf16.msra.mxu0 0
    %2685 = vmatprep.subr.bf16.mxu0 0
    %2686 = vmatpush1.bf16.msra.mxu0 0
    %2687 = vmatprep.subr.bf16.mxu0 0
    %2688 = vmatpush1.bf16.msra.mxu0 0
    %2689 = vmatprep.subr.bf16.mxu0 0
    %2690 = vmatpush1.bf16.msra.mxu0 0
    %2691 = vmatprep.subr.bf16.mxu0 0
    %2692 = vmatpush1.bf16.msra.mxu0 0
    %2693 = vmatprep.subr.bf16.mxu0 0
    %2694 = vmatpush1.bf16.msra.mxu0 0
    %2695 = vmatprep.subr.bf16.mxu0 0
    %2696 = vmatpush1.bf16.msra.mxu0 0
    %2697 = vmatprep.subr.bf16.mxu0 0
    %2698 = vmatpush1.bf16.msra.mxu0 0
    %2699 = vmatprep.subr.bf16.mxu0 0
    %2700 = vmatpush1.bf16.msra.mxu0 0
    %2701 = vmatprep.mubr.bf16.mxu0 0
    %2702 = vmatmul.mubr.bf16.gmra.mrb[0].mxu0 %v2664
    %v2703 = vpop.f32.mrb[0].mxu0
    %v2704 = vadd.f32 %v228, %v2703
    %v2705 = vpop.f32.mrb[0].mxu0
    %v2706 = vpop.f32.mrb[0].mxu0
    %v2707 = vadd.f32 %v228, %v2706
    %v2708 = vpop.f32.mrb[0].mxu0
    %2709 = vmatprep.mubr.bf16.mxu0 0
    %2710 = vmatmul.mubr.bf16.gmra.mrb[0].mxu0 %v2667
    %v2711 = vpop.f32.mrb[0].mxu0
    %v2712 = vadd.f32 %v228, %v2711
    %v2713 = vpop.f32.mrb[0].mxu0
    %v2714 = vpop.f32.mrb[0].mxu0
    %v2715 = vpop.f32.mrb[0].mxu0
    %2716 = vdwg.mxu0
    %vm2717 = vcmp.gt.f32.partialorder %v2704, 0.0
    %vm2718 = vcmp.gt.f32.partialorder %v2707, 0.0
    %vm2719 = vcmp.gt.f32.partialorder %v2712, 0.0
    %v2720 = vmul.f32 %v312, %v2704
    %v2721 = vmul.f32 %v312, %v2707
    %v2722 = vmul.f32 %v312, %v2712
    %v2723 = vsel %vm2717, %v2704, %v2720
    %v2724 = vsel %vm2718, %v2707, %v2721
    %v2725 = vsel %vm2719, %v2712, %v2722
    %s2726 = sadd.s32 384, %s55
    %s2727 = scalar_lea.vmem %s0, %s2726
    %v2728 = vld [vmem:[%s2727] sm:$0xff]
    %v2729 = vld [vmem:[%s2727 + $0x8] sm:$0xff]
    %v2730 = vld [vmem:[%s2727 + $0x10] sm:$0xff]
    %v2734 = vrot.slane %v2728, 1
    %v2735 = vrot.slane %v2729, 1
    %v2736 = vsel %vm63, %v2734, %v2735
    %v2737 = vrot.slane %v2730, 1
    %v2738 = vsel %vm63, %v2735, %v2737
    %2739 = vrot.lane.b32.xlu0 %v2736, 3
    %v2740 = vpop.permute.xlu0 %2739
    %2741 = vrot.lane.b32.xlu0 %v2738, 3
    %v2742 = vpop.permute.xlu0 %2741
    %2743 = vrot.lane.b32.xlu0 %v2737, 3
    %v2744 = vpop.permute.xlu0 %2743
    %v2748 = vrot.slane %v2728, 2
    %v2749 = vrot.slane %v2729, 2
    %v2750 = vsel %vm78, %v2748, %v2749
    %v2751 = vrot.slane %v2730, 2
    %v2752 = vsel %vm78, %v2749, %v2751
    %2753 = vrot.lane.b32.xlu0 %v2750, 6
    %v2754 = vpop.permute.xlu0 %2753
    %2755 = vrot.lane.b32.xlu0 %v2752, 6
    %v2756 = vpop.permute.xlu0 %2755
    %2757 = vrot.lane.b32.xlu0 %v2751, 6
    %v2758 = vpop.permute.xlu0 %2757
    %v2762 = vsel %vm93, %v2728, %v2740
    %v2763 = vsel %vm93, %v2729, %v2742
    %v2764 = vsel %vm93, %v2730, %v2744
    %v2765 = vsel %vm97, %v2762, %v2754
    %v2766 = vsel %vm97, %v2763, %v2756
    %v2767 = vsel %vm97, %v2764, %v2758
    %2768 = vrot.lane.b32.xlu0 %v2631, 9
    %v2769 = vpop.permute.xlu0 %2768
    %2770 = vrot.lane.b32.xlu0 %v2632, 9
    %v2771 = vpop.permute.xlu0 %2770
    %2772 = vrot.lane.b32.xlu0 %v2633, 9
    %v2773 = vpop.permute.xlu0 %2772
    %2780 = vrot.lane.b32.xlu0 %v2765, 18
    %v2781 = vpop.permute.xlu0 %2780
    %2782 = vrot.lane.b32.xlu0 %v2766, 18
    %v2783 = vpop.permute.xlu0 %2782
    %2784 = vrot.lane.b32.xlu0 %v2767, 18
    %v2785 = vpop.permute.xlu0 %2784
    %v2789 = vsel %vm209, %v2388, %v2769
    %v2790 = vsel %vm209, %v2389, %v2771
    %v2791 = vsel %vm209, %v2390, %v2773
    %v2792 = vsel %vm213, %v2789, %v2781
    %v2793 = vsel %vm213, %v2790, %v2783
    %v2794 = vsel %vm213, %v2791, %v2785
    %v2795 = vpack.c.bf16 %v2793, %v2792
    %v2796 = vpack.c.bf16 %v2794, %v2794
    %v2798 = vsel %vm241, %v2795, 0
    %v2801 = vsel %vm241, %v2796, 0
    %2803 = vmatprep.subr.bf16.mxu0 0
    %2804 = vmatpush1.bf16.msra.mxu0 %v238
    %2805 = vmatprep.subr.bf16.mxu0 0
    %2806 = vmatpush1.bf16.msra.mxu0 %v252
    %2807 = vmatprep.subr.bf16.mxu0 0
    %2808 = vmatpush1.bf16.msra.mxu0 0
    %2809 = vmatprep.subr.bf16.mxu0 0
    %2810 = vmatpush1.bf16.msra.mxu0 0
    %2811 = vmatprep.subr.bf16.mxu0 0
    %2812 = vmatpush1.bf16.msra.mxu0 0
    %2813 = vmatprep.subr.bf16.mxu0 0
    %2814 = vmatpush1.bf16.msra.mxu0 0
    %2815 = vmatprep.subr.bf16.mxu0 0
    %2816 = vmatpush1.bf16.msra.mxu0 0
    %2817 = vmatprep.subr.bf16.mxu0 0
    %2818 = vmatpush1.bf16.msra.mxu0 0
    %2819 = vmatprep.subr.bf16.mxu0 0
    %2820 = vmatpush1.bf16.msra.mxu0 0
    %2821 = vmatprep.subr.bf16.mxu0 0
    %2822 = vmatpush1.bf16.msra.mxu0 0
    %2823 = vmatprep.subr.bf16.mxu0 0
    %2824 = vmatpush1.bf16.msra.mxu0 0
    %2825 = vmatprep.subr.bf16.mxu0 0
    %2826 = vmatpush1.bf16.msra.mxu0 0
    %2827 = vmatprep.subr.bf16.mxu0 0
    %2828 = vmatpush1.bf16.msra.mxu0 0
    %2829 = vmatprep.subr.bf16.mxu0 0
    %2830 = vmatpush1.bf16.msra.mxu0 0
    %2831 = vmatprep.subr.bf16.mxu0 0
    %2832 = vmatpush1.bf16.msra.mxu0 0
    %2833 = vmatprep.subr.bf16.mxu0 0
    %2834 = vmatpush1.bf16.msra.mxu0 0
    %2835 = vmatprep.mubr.bf16.mxu0 0
    %2836 = vmatmul.mubr.bf16.gmra.mrb[0].mxu0 %v2798
    %v2837 = vpop.f32.mrb[0].mxu0
    %v2838 = vadd.f32 %v228, %v2837
    %v2839 = vpop.f32.mrb[0].mxu0
    %v2840 = vpop.f32.mrb[0].mxu0
    %v2841 = vadd.f32 %v228, %v2840
    %v2842 = vpop.f32.mrb[0].mxu0
    %2843 = vmatprep.mubr.bf16.mxu0 0
    %2844 = vmatmul.mubr.bf16.gmra.mrb[0].mxu0 %v2801
    %v2845 = vpop.f32.mrb[0].mxu0
    %v2846 = vadd.f32 %v228, %v2845
    %v2847 = vpop.f32.mrb[0].mxu0
    %v2848 = vpop.f32.mrb[0].mxu0
    %v2849 = vpop.f32.mrb[0].mxu0
    %2850 = vdwg.mxu0
    %vm2851 = vcmp.gt.f32.partialorder %v2838, 0.0
    %vm2852 = vcmp.gt.f32.partialorder %v2841, 0.0
    %vm2853 = vcmp.gt.f32.partialorder %v2846, 0.0
    %v2854 = vmul.f32 %v312, %v2838
    %v2855 = vmul.f32 %v312, %v2841
    %v2856 = vmul.f32 %v312, %v2846
    %v2857 = vsel %vm2851, %v2838, %v2854
    %v2858 = vsel %vm2852, %v2841, %v2855
    %v2859 = vsel %vm2853, %v2846, %v2856
    %v2860 = vmax.f32 %v2480, %v2723
    %v2861 = vmax.f32 %v2481, %v2724
    %v2862 = vmax.f32 %v2482, %v2725
    %v2863 = vmax.f32 %v2860, %v2857
    %v2864 = vmax.f32 %v2861, %v2858
    %v2865 = vmax.f32 %v2862, %v2859
    %v2869 = vrot.slane %v2863, 1
    %v2870 = vrot.slane %v2864, 1
    %v2871 = vsel %vm63, %v2869, %v2870
    %v2872 = vrot.slane %v2865, 1
    %v2873 = vsel %vm63, %v2870, %v2872
    %v2877 = vmax.f32 %v2863, %v2871
    %v2878 = vmax.f32 %v2864, %v2873
    %v2879 = vmax.f32 %v2865, %v2872
    %v2880 = vrot.slane %v2863, 2
    %v2881 = vrot.slane %v2864, 2
    %v2882 = vsel %vm78, %v2880, %v2881
    %v2883 = vrot.slane %v2865, 2
    %v2884 = vsel %vm78, %v2881, %v2883
    %v2888 = vmax.f32 %v2877, %v2882
    %v2889 = vmax.f32 %v2878, %v2884
    %v2890 = vmax.f32 %v2879, %v2883
    %v2892 = vsel %vm628, %v2890, 0
    %2894 = vmatprep.subr.mxu0 0.0
    %2895 = vmatpush1.msra.mxu0 %v2888
    %2896 = vmatprep.subr.mxu0 0.0
    %2897 = vmatpush1.msra.mxu0 %v2889
    %2898 = vmatprep.subr.mxu0 0.0
    %2899 = vmatpush1.msra.mxu0 %v2892
    %2900 = vmatprep.subr.mxu0 0.0
    %2901 = vmatpush1.msra.mxu0 0.0
    %2902 = vmatprep.subr.mxu0 0.0
    %2903 = vmatpush1.msra.mxu0 0.0
    %2904 = vmatprep.subr.mxu0 0.0
    %2905 = vmatpush1.msra.mxu0 0.0
    %2906 = vmatprep.subr.mxu0 0.0
    %2907 = vmatpush1.msra.mxu0 0.0
    %2908 = vmatprep.subr.mxu0 0.0
    %2909 = vmatpush1.msra.mxu0 0.0
    %2910 = vmatprep.subr.mxu0 0.0
    %2911 = vmatpush1.msra.mxu0 0.0
    %2912 = vmatprep.subr.mxu0 0.0
    %2913 = vmatpush1.msra.mxu0 0.0
    %2914 = vmatprep.subr.mxu0 0.0
    %2915 = vmatpush1.msra.mxu0 0.0
    %2916 = vmatprep.subr.mxu0 0.0
    %2917 = vmatpush1.msra.mxu0 0.0
    %2918 = vmatprep.subr.mxu0 0.0
    %2919 = vmatpush1.msra.mxu0 0.0
    %2920 = vmatprep.subr.mxu0 0.0
    %2921 = vmatpush1.msra.mxu0 0.0
    %2922 = vmatprep.subr.mxu0 0.0
    %2923 = vmatpush1.msra.mxu0 0.0
    %2924 = vmatprep.subr.mxu0 0.0
    %2925 = vmatpush1.msra.mxu0 0.0
    %2926 = vmatprep.subr.mxu0 0.0
    %2927 = vmatpush1.msra.mxu0 0.0
    %2928 = vmatprep.subr.mxu0 0.0
    %2929 = vmatpush1.msra.mxu0 0.0
    %2930 = vmatprep.subr.mxu0 0.0
    %2931 = vmatpush1.msra.mxu0 0.0
    %2932 = vmatprep.subr.mxu0 0.0
    %2933 = vmatpush1.msra.mxu0 0.0
    %2934 = vmatprep.subr.mxu0 0.0
    %2935 = vmatpush1.msra.mxu0 0.0
    %2936 = vmatprep.subr.mxu0 0.0
    %2937 = vmatpush1.msra.mxu0 0.0
    %2938 = vmatprep.subr.mxu0 0.0
    %2939 = vmatpush1.msra.mxu0 0.0
    %2940 = vmatprep.subr.mxu0 0.0
    %2941 = vmatpush1.msra.mxu0 0.0
    %2942 = vmatprep.subr.mxu0 0.0
    %2943 = vmatpush1.msra.mxu0 0.0
    %2944 = vmatprep.subr.mxu0 0.0
    %2945 = vmatpush1.msra.mxu0 0.0
    %2946 = vmatprep.subr.mxu0 0.0
    %2947 = vmatpush1.msra.mxu0 0.0
    %2948 = vmatprep.subr.mxu0 0.0
    %2949 = vmatpush1.msra.mxu0 0.0
    %2950 = vmatprep.subr.mxu0 0.0
    %2951 = vmatpush1.msra.mxu0 0.0
    %2952 = vmatprep.subr.mxu0 0.0
    %2953 = vmatpush1.msra.mxu0 0.0
    %2954 = vmatprep.subr.mxu0 0.0
    %2955 = vmatpush1.msra.mxu0 0.0
    %2956 = vmatprep.subr.mxu0 0.0
    %2957 = vmatpush1.msra.mxu0 0.0
    %2958 = vmatprep.mubr.f32.mxu0 0.0
    %2959 = vmatmul.mubr.f32.gmra.mrb[0].mxu0 %v623
    %v2960 = vpop.f32.mrb[0].mxu0
    %v2961 = vadd.f32 0.0, %v2960
    %v2962 = vpop.f32.mrb[0].mxu0
    %2963 = vmatprep.mubr.f32.mxu0 0.0
    %2964 = vmatmul.mubr.f32.gmra.mrb[0].mxu0 %v626
    %v2965 = vpop.f32.mrb[0].mxu0
    %v2966 = vadd.f32 0.0, %v2965
    %v2967 = vpop.f32.mrb[0].mxu0
    %2968 = vdwg.mxu0
    %s2969 = sadd.s32 408, %s55
    %s2970 = scalar_lea.vmem %s0, %s2969
    %v2971 = vld [vmem:[%s2970] sm:$0xff]
    %v2972 = vld [vmem:[%s2970 + $0x8] sm:$0xff]
    %v2973 = vld [vmem:[%s2970 + $0x10] sm:$0xff]
    %v2977 = vrot.slane %v2971, 1
    %v2978 = vrot.slane %v2972, 1
    %v2979 = vsel %vm63, %v2977, %v2978
    %v2980 = vrot.slane %v2973, 1
    %v2981 = vsel %vm63, %v2978, %v2980
    %2982 = vrot.lane.b32.xlu0 %v2979, 3
    %v2983 = vpop.permute.xlu0 %2982
    %2984 = vrot.lane.b32.xlu0 %v2981, 3
    %v2985 = vpop.permute.xlu0 %2984
    %2986 = vrot.lane.b32.xlu0 %v2980, 3
    %v2987 = vpop.permute.xlu0 %2986
    %v2991 = vrot.slane %v2971, 2
    %v2992 = vrot.slane %v2972, 2
    %v2993 = vsel %vm78, %v2991, %v2992
    %v2994 = vrot.slane %v2973, 2
    %v2995 = vsel %vm78, %v2992, %v2994
    %2996 = vrot.lane.b32.xlu0 %v2993, 6
    %v2997 = vpop.permute.xlu0 %2996
    %2998 = vrot.lane.b32.xlu0 %v2995, 6
    %v2999 = vpop.permute.xlu0 %2998
    %3000 = vrot.lane.b32.xlu0 %v2994, 6
    %v3001 = vpop.permute.xlu0 %3000
    %v3005 = vsel %vm93, %v2971, %v2983
    %v3006 = vsel %vm93, %v2972, %v2985
    %v3007 = vsel %vm93, %v2973, %v2987
    %v3008 = vsel %vm97, %v3005, %v2997
    %v3009 = vsel %vm97, %v3006, %v2999
    %v3010 = vsel %vm97, %v3007, %v3001
    %3011 = vrot.lane.b32.xlu0 %v2765, 9
    %v3012 = vpop.permute.xlu0 %3011
    %3013 = vrot.lane.b32.xlu0 %v2766, 9
    %v3014 = vpop.permute.xlu0 %3013
    %3015 = vrot.lane.b32.xlu0 %v2767, 9
    %v3016 = vpop.permute.xlu0 %3015
    %3023 = vrot.lane.b32.xlu0 %v3008, 18
    %v3024 = vpop.permute.xlu0 %3023
    %3025 = vrot.lane.b32.xlu0 %v3009, 18
    %v3026 = vpop.permute.xlu0 %3025
    %3027 = vrot.lane.b32.xlu0 %v3010, 18
    %v3028 = vpop.permute.xlu0 %3027
    %v3032 = vsel %vm209, %v2631, %v3012
    %v3033 = vsel %vm209, %v2632, %v3014
    %v3034 = vsel %vm209, %v2633, %v3016
    %v3035 = vsel %vm213, %v3032, %v3024
    %v3036 = vsel %vm213, %v3033, %v3026
    %v3037 = vsel %vm213, %v3034, %v3028
    %v3038 = vpack.c.bf16 %v3036, %v3035
    %v3039 = vpack.c.bf16 %v3037, %v3037
    %v3041 = vsel %vm241, %v3038, 0
    %v3044 = vsel %vm241, %v3039, 0
    %3046 = vmatprep.subr.bf16.mxu0 0
    %3047 = vmatpush1.bf16.msra.mxu0 %v238
    %3048 = vmatprep.subr.bf16.mxu0 0
    %3049 = vmatpush1.bf16.msra.mxu0 %v252
    %3050 = vmatprep.subr.bf16.mxu0 0
    %3051 = vmatpush1.bf16.msra.mxu0 0
    %3052 = vmatprep.subr.bf16.mxu0 0
    %3053 = vmatpush1.bf16.msra.mxu0 0
    %3054 = vmatprep.subr.bf16.mxu0 0
    %3055 = vmatpush1.bf16.msra.mxu0 0
    %3056 = vmatprep.subr.bf16.mxu0 0
    %3057 = vmatpush1.bf16.msra.mxu0 0
    %3058 = vmatprep.subr.bf16.mxu0 0
    %3059 = vmatpush1.bf16.msra.mxu0 0
    %3060 = vmatprep.subr.bf16.mxu0 0
    %3061 = vmatpush1.bf16.msra.mxu0 0
    %3062 = vmatprep.subr.bf16.mxu0 0
    %3063 = vmatpush1.bf16.msra.mxu0 0
    %3064 = vmatprep.subr.bf16.mxu0 0
    %3065 = vmatpush1.bf16.msra.mxu0 0
    %3066 = vmatprep.subr.bf16.mxu0 0
    %3067 = vmatpush1.bf16.msra.mxu0 0
    %3068 = vmatprep.subr.bf16.mxu0 0
    %3069 = vmatpush1.bf16.msra.mxu0 0
    %3070 = vmatprep.subr.bf16.mxu0 0
    %3071 = vmatpush1.bf16.msra.mxu0 0
    %3072 = vmatprep.subr.bf16.mxu0 0
    %3073 = vmatpush1.bf16.msra.mxu0 0
    %3074 = vmatprep.subr.bf16.mxu0 0
    %3075 = vmatpush1.bf16.msra.mxu0 0
    %3076 = vmatprep.subr.bf16.mxu0 0
    %3077 = vmatpush1.bf16.msra.mxu0 0
    %3078 = vmatprep.mubr.bf16.mxu0 0
    %3079 = vmatmul.mubr.bf16.gmra.mrb[0].mxu0 %v3041
    %v3080 = vpop.f32.mrb[0].mxu0
    %v3081 = vadd.f32 %v228, %v3080
    %v3082 = vpop.f32.mrb[0].mxu0
    %v3083 = vpop.f32.mrb[0].mxu0
    %v3084 = vadd.f32 %v228, %v3083
    %v3085 = vpop.f32.mrb[0].mxu0
    %3086 = vmatprep.mubr.bf16.mxu0 0
    %3087 = vmatmul.mubr.bf16.gmra.mrb[0].mxu0 %v3044
    %v3088 = vpop.f32.mrb[0].mxu0
    %v3089 = vadd.f32 %v228, %v3088
    %v3090 = vpop.f32.mrb[0].mxu0
    %v3091 = vpop.f32.mrb[0].mxu0
    %v3092 = vpop.f32.mrb[0].mxu0
    %3093 = vdwg.mxu0
    %vm3094 = vcmp.gt.f32.partialorder %v3081, 0.0
    %vm3095 = vcmp.gt.f32.partialorder %v3084, 0.0
    %vm3096 = vcmp.gt.f32.partialorder %v3089, 0.0
    %v3097 = vmul.f32 %v312, %v3081
    %v3098 = vmul.f32 %v312, %v3084
    %v3099 = vmul.f32 %v312, %v3089
    %v3100 = vsel %vm3094, %v3081, %v3097
    %v3101 = vsel %vm3095, %v3084, %v3098
    %v3102 = vsel %vm3096, %v3089, %v3099
    %s3103 = sadd.s32 432, %s55
    %s3104 = scalar_lea.vmem %s0, %s3103
    %v3105 = vld [vmem:[%s3104] sm:$0xff]
    %v3106 = vld [vmem:[%s3104 + $0x8] sm:$0xff]
    %v3107 = vld [vmem:[%s3104 + $0x10] sm:$0xff]
    %v3111 = vrot.slane %v3105, 1
    %v3112 = vrot.slane %v3106, 1
    %v3113 = vsel %vm63, %v3111, %v3112
    %v3114 = vrot.slane %v3107, 1
    %v3115 = vsel %vm63, %v3112, %v3114
    %3116 = vrot.lane.b32.xlu0 %v3113, 3
    %v3117 = vpop.permute.xlu0 %3116
    %3118 = vrot.lane.b32.xlu0 %v3115, 3
    %v3119 = vpop.permute.xlu0 %3118
    %3120 = vrot.lane.b32.xlu0 %v3114, 3
    %v3121 = vpop.permute.xlu0 %3120
    %v3125 = vrot.slane %v3105, 2
    %v3126 = vrot.slane %v3106, 2
    %v3127 = vsel %vm78, %v3125, %v3126
    %v3128 = vrot.slane %v3107, 2
    %v3129 = vsel %vm78, %v3126, %v3128
    %3130 = vrot.lane.b32.xlu0 %v3127, 6
    %v3131 = vpop.permute.xlu0 %3130
    %3132 = vrot.lane.b32.xlu0 %v3129, 6
    %v3133 = vpop.permute.xlu0 %3132
    %3134 = vrot.lane.b32.xlu0 %v3128, 6
    %v3135 = vpop.permute.xlu0 %3134
    %v3139 = vsel %vm93, %v3105, %v3117
    %v3140 = vsel %vm93, %v3106, %v3119
    %v3141 = vsel %vm93, %v3107, %v3121
    %v3142 = vsel %vm97, %v3139, %v3131
    %v3143 = vsel %vm97, %v3140, %v3133
    %v3144 = vsel %vm97, %v3141, %v3135
    %3145 = vrot.lane.b32.xlu0 %v3008, 9
    %v3146 = vpop.permute.xlu0 %3145
    %3147 = vrot.lane.b32.xlu0 %v3009, 9
    %v3148 = vpop.permute.xlu0 %3147
    %3149 = vrot.lane.b32.xlu0 %v3010, 9
    %v3150 = vpop.permute.xlu0 %3149
    %3157 = vrot.lane.b32.xlu0 %v3142, 18
    %v3158 = vpop.permute.xlu0 %3157
    %3159 = vrot.lane.b32.xlu0 %v3143, 18
    %v3160 = vpop.permute.xlu0 %3159
    %3161 = vrot.lane.b32.xlu0 %v3144, 18
    %v3162 = vpop.permute.xlu0 %3161
    %v3166 = vsel %vm209, %v2765, %v3146
    %v3167 = vsel %vm209, %v2766, %v3148
    %v3168 = vsel %vm209, %v2767, %v3150
    %v3169 = vsel %vm213, %v3166, %v3158
    %v3170 = vsel %vm213, %v3167, %v3160
    %v3171 = vsel %vm213, %v3168, %v3162
    %v3172 = vpack.c.bf16 %v3170, %v3169
    %v3173 = vpack.c.bf16 %v3171, %v3171
    %v3175 = vsel %vm241, %v3172, 0
    %v3178 = vsel %vm241, %v3173, 0
    %3180 = vmatprep.subr.bf16.mxu0 0
    %3181 = vmatpush1.bf16.msra.mxu0 %v238
    %3182 = vmatprep.subr.bf16.mxu0 0
    %3183 = vmatpush1.bf16.msra.mxu0 %v252
    %3184 = vmatprep.subr.bf16.mxu0 0
    %3185 = vmatpush1.bf16.msra.mxu0 0
    %3186 = vmatprep.subr.bf16.mxu0 0
    %3187 = vmatpush1.bf16.msra.mxu0 0
    %3188 = vmatprep.subr.bf16.mxu0 0
    %3189 = vmatpush1.bf16.msra.mxu0 0
    %3190 = vmatprep.subr.bf16.mxu0 0
    %3191 = vmatpush1.bf16.msra.mxu0 0
    %3192 = vmatprep.subr.bf16.mxu0 0
    %3193 = vmatpush1.bf16.msra.mxu0 0
    %3194 = vmatprep.subr.bf16.mxu0 0
    %3195 = vmatpush1.bf16.msra.mxu0 0
    %3196 = vmatprep.subr.bf16.mxu0 0
    %3197 = vmatpush1.bf16.msra.mxu0 0
    %3198 = vmatprep.subr.bf16.mxu0 0
    %3199 = vmatpush1.bf16.msra.mxu0 0
    %3200 = vmatprep.subr.bf16.mxu0 0
    %3201 = vmatpush1.bf16.msra.mxu0 0
    %3202 = vmatprep.subr.bf16.mxu0 0
    %3203 = vmatpush1.bf16.msra.mxu0 0
    %3204 = vmatprep.subr.bf16.mxu0 0
    %3205 = vmatpush1.bf16.msra.mxu0 0
    %3206 = vmatprep.subr.bf16.mxu0 0
    %3207 = vmatpush1.bf16.msra.mxu0 0
    %3208 = vmatprep.subr.bf16.mxu0 0
    %3209 = vmatpush1.bf16.msra.mxu0 0
    %3210 = vmatprep.subr.bf16.mxu0 0
    %3211 = vmatpush1.bf16.msra.mxu0 0
    %3212 = vmatprep.mubr.bf16.mxu0 0
    %3213 = vmatmul.mubr.bf16.gmra.mrb[0].mxu0 %v3175
    %v3214 = vpop.f32.mrb[0].mxu0
    %v3215 = vadd.f32 %v228, %v3214
    %v3216 = vpop.f32.mrb[0].mxu0
    %v3217 = vpop.f32.mrb[0].mxu0
    %v3218 = vadd.f32 %v228, %v3217
    %v3219 = vpop.f32.mrb[0].mxu0
    %3220 = vmatprep.mubr.bf16.mxu0 0
    %3221 = vmatmul.mubr.bf16.gmra.mrb[0].mxu0 %v3178
    %v3222 = vpop.f32.mrb[0].mxu0
    %v3223 = vadd.f32 %v228, %v3222
    %v3224 = vpop.f32.mrb[0].mxu0
    %v3225 = vpop.f32.mrb[0].mxu0
    %v3226 = vpop.f32.mrb[0].mxu0
    %3227 = vdwg.mxu0
    %vm3228 = vcmp.gt.f32.partialorder %v3215, 0.0
    %vm3229 = vcmp.gt.f32.partialorder %v3218, 0.0
    %vm3230 = vcmp.gt.f32.partialorder %v3223, 0.0
    %v3231 = vmul.f32 %v312, %v3215
    %v3232 = vmul.f32 %v312, %v3218
    %v3233 = vmul.f32 %v312, %v3223
    %v3234 = vsel %vm3228, %v3215, %v3231
    %v3235 = vsel %vm3229, %v3218, %v3232
    %v3236 = vsel %vm3230, %v3223, %v3233
    %v3237 = vmax.f32 %v2857, %v3100
    %v3238 = vmax.f32 %v2858, %v3101
    %v3239 = vmax.f32 %v2859, %v3102
    %v3240 = vmax.f32 %v3237, %v3234
    %v3241 = vmax.f32 %v3238, %v3235
    %v3242 = vmax.f32 %v3239, %v3236
    %v3246 = vrot.slane %v3240, 1
    %v3247 = vrot.slane %v3241, 1
    %v3248 = vsel %vm63, %v3246, %v3247
    %v3249 = vrot.slane %v3242, 1
    %v3250 = vsel %vm63, %v3247, %v3249
    %v3254 = vmax.f32 %v3240, %v3248
    %v3255 = vmax.f32 %v3241, %v3250
    %v3256 = vmax.f32 %v3242, %v3249
    %v3257 = vrot.slane %v3240, 2
    %v3258 = vrot.slane %v3241, 2
    %v3259 = vsel %vm78, %v3257, %v3258
    %v3260 = vrot.slane %v3242, 2
    %v3261 = vsel %vm78, %v3258, %v3260
    %v3265 = vmax.f32 %v3254, %v3259
    %v3266 = vmax.f32 %v3255, %v3261
    %v3267 = vmax.f32 %v3256, %v3260
    %v3269 = vsel %vm628, %v3267, 0
    %3271 = vmatprep.subr.mxu0 0.0
    %3272 = vmatpush1.msra.mxu0 %v3265
    %3273 = vmatprep.subr.mxu0 0.0
    %3274 = vmatpush1.msra.mxu0 %v3266
    %3275 = vmatprep.subr.mxu0 0.0
    %3276 = vmatpush1.msra.mxu0 %v3269
    %3277 = vmatprep.subr.mxu0 0.0
    %3278 = vmatpush1.msra.mxu0 0.0
    %3279 = vmatprep.subr.mxu0 0.0
    %3280 = vmatpush1.msra.mxu0 0.0
    %3281 = vmatprep.subr.mxu0 0.0
    %3282 = vmatpush1.msra.mxu0 0.0
    %3283 = vmatprep.subr.mxu0 0.0
    %3284 = vmatpush1.msra.mxu0 0.0
    %3285 = vmatprep.subr.mxu0 0.0
    %3286 = vmatpush1.msra.mxu0 0.0
    %3287 = vmatprep.subr.mxu0 0.0
    %3288 = vmatpush1.msra.mxu0 0.0
    %3289 = vmatprep.subr.mxu0 0.0
    %3290 = vmatpush1.msra.mxu0 0.0
    %3291 = vmatprep.subr.mxu0 0.0
    %3292 = vmatpush1.msra.mxu0 0.0
    %3293 = vmatprep.subr.mxu0 0.0
    %3294 = vmatpush1.msra.mxu0 0.0
    %3295 = vmatprep.subr.mxu0 0.0
    %3296 = vmatpush1.msra.mxu0 0.0
    %3297 = vmatprep.subr.mxu0 0.0
    %3298 = vmatpush1.msra.mxu0 0.0
    %3299 = vmatprep.subr.mxu0 0.0
    %3300 = vmatpush1.msra.mxu0 0.0
    %3301 = vmatprep.subr.mxu0 0.0
    %3302 = vmatpush1.msra.mxu0 0.0
    %3303 = vmatprep.subr.mxu0 0.0
    %3304 = vmatpush1.msra.mxu0 0.0
    %3305 = vmatprep.subr.mxu0 0.0
    %3306 = vmatpush1.msra.mxu0 0.0
    %3307 = vmatprep.subr.mxu0 0.0
    %3308 = vmatpush1.msra.mxu0 0.0
    %3309 = vmatprep.subr.mxu0 0.0
    %3310 = vmatpush1.msra.mxu0 0.0
    %3311 = vmatprep.subr.mxu0 0.0
    %3312 = vmatpush1.msra.mxu0 0.0
    %3313 = vmatprep.subr.mxu0 0.0
    %3314 = vmatpush1.msra.mxu0 0.0
    %3315 = vmatprep.subr.mxu0 0.0
    %3316 = vmatpush1.msra.mxu0 0.0
    %3317 = vmatprep.subr.mxu0 0.0
    %3318 = vmatpush1.msra.mxu0 0.0
    %3319 = vmatprep.subr.mxu0 0.0
    %3320 = vmatpush1.msra.mxu0 0.0
    %3321 = vmatprep.subr.mxu0 0.0
    %3322 = vmatpush1.msra.mxu0 0.0
    %3323 = vmatprep.subr.mxu0 0.0
    %3324 = vmatpush1.msra.mxu0 0.0
    %3325 = vmatprep.subr.mxu0 0.0
    %3326 = vmatpush1.msra.mxu0 0.0
    %3327 = vmatprep.subr.mxu0 0.0
    %3328 = vmatpush1.msra.mxu0 0.0
    %3329 = vmatprep.subr.mxu0 0.0
    %3330 = vmatpush1.msra.mxu0 0.0
    %3331 = vmatprep.subr.mxu0 0.0
    %3332 = vmatpush1.msra.mxu0 0.0
    %3333 = vmatprep.subr.mxu0 0.0
    %3334 = vmatpush1.msra.mxu0 0.0
    %3335 = vmatprep.mubr.f32.mxu0 0.0
    %3336 = vmatmul.mubr.f32.gmra.mrb[0].mxu0 %v623
    %v3337 = vpop.f32.mrb[0].mxu0
    %v3338 = vadd.f32 0.0, %v3337
    %v3339 = vpop.f32.mrb[0].mxu0
    %3340 = vmatprep.mubr.f32.mxu0 0.0
    %3341 = vmatmul.mubr.f32.gmra.mrb[0].mxu0 %v626
    %v3342 = vpop.f32.mrb[0].mxu0
    %v3343 = vadd.f32 0.0, %v3342
    %v3344 = vpop.f32.mrb[0].mxu0
    %3345 = vdwg.mxu0
    %s3346 = sadd.s32 456, %s55
    %s3347 = scalar_lea.vmem %s0, %s3346
    %v3348 = vld [vmem:[%s3347] sm:$0xff]
    %v3349 = vld [vmem:[%s3347 + $0x8] sm:$0xff]
    %v3350 = vld [vmem:[%s3347 + $0x10] sm:$0xff]
    %v3354 = vrot.slane %v3348, 1
    %v3355 = vrot.slane %v3349, 1
    %v3356 = vsel %vm63, %v3354, %v3355
    %v3357 = vrot.slane %v3350, 1
    %v3358 = vsel %vm63, %v3355, %v3357
    %3359 = vrot.lane.b32.xlu0 %v3356, 3
    %v3360 = vpop.permute.xlu0 %3359
    %3361 = vrot.lane.b32.xlu0 %v3358, 3
    %v3362 = vpop.permute.xlu0 %3361
    %3363 = vrot.lane.b32.xlu0 %v3357, 3
    %v3364 = vpop.permute.xlu0 %3363
    %v3368 = vrot.slane %v3348, 2
    %v3369 = vrot.slane %v3349, 2
    %v3370 = vsel %vm78, %v3368, %v3369
    %v3371 = vrot.slane %v3350, 2
    %v3372 = vsel %vm78, %v3369, %v3371
    %3373 = vrot.lane.b32.xlu0 %v3370, 6
    %v3374 = vpop.permute.xlu0 %3373
    %3375 = vrot.lane.b32.xlu0 %v3372, 6
    %v3376 = vpop.permute.xlu0 %3375
    %3377 = vrot.lane.b32.xlu0 %v3371, 6
    %v3378 = vpop.permute.xlu0 %3377
    %v3382 = vsel %vm93, %v3348, %v3360
    %v3383 = vsel %vm93, %v3349, %v3362
    %v3384 = vsel %vm93, %v3350, %v3364
    %v3385 = vsel %vm97, %v3382, %v3374
    %v3386 = vsel %vm97, %v3383, %v3376
    %v3387 = vsel %vm97, %v3384, %v3378
    %3388 = vrot.lane.b32.xlu0 %v3142, 9
    %v3389 = vpop.permute.xlu0 %3388
    %3390 = vrot.lane.b32.xlu0 %v3143, 9
    %v3391 = vpop.permute.xlu0 %3390
    %3392 = vrot.lane.b32.xlu0 %v3144, 9
    %v3393 = vpop.permute.xlu0 %3392
    %3400 = vrot.lane.b32.xlu0 %v3385, 18
    %v3401 = vpop.permute.xlu0 %3400
    %3402 = vrot.lane.b32.xlu0 %v3386, 18
    %v3403 = vpop.permute.xlu0 %3402
    %3404 = vrot.lane.b32.xlu0 %v3387, 18
    %v3405 = vpop.permute.xlu0 %3404
    %v3409 = vsel %vm209, %v3008, %v3389
    %v3410 = vsel %vm209, %v3009, %v3391
    %v3411 = vsel %vm209, %v3010, %v3393
    %v3412 = vsel %vm213, %v3409, %v3401
    %v3413 = vsel %vm213, %v3410, %v3403
    %v3414 = vsel %vm213, %v3411, %v3405
    %v3415 = vpack.c.bf16 %v3413, %v3412
    %v3416 = vpack.c.bf16 %v3414, %v3414
    %v3418 = vsel %vm241, %v3415, 0
    %v3421 = vsel %vm241, %v3416, 0
    %3423 = vmatprep.subr.bf16.mxu0 0
    %3424 = vmatpush1.bf16.msra.mxu0 %v238
    %3425 = vmatprep.subr.bf16.mxu0 0
    %3426 = vmatpush1.bf16.msra.mxu0 %v252
    %3427 = vmatprep.subr.bf16.mxu0 0
    %3428 = vmatpush1.bf16.msra.mxu0 0
    %3429 = vmatprep.subr.bf16.mxu0 0
    %3430 = vmatpush1.bf16.msra.mxu0 0
    %3431 = vmatprep.subr.bf16.mxu0 0
    %3432 = vmatpush1.bf16.msra.mxu0 0
    %3433 = vmatprep.subr.bf16.mxu0 0
    %3434 = vmatpush1.bf16.msra.mxu0 0
    %3435 = vmatprep.subr.bf16.mxu0 0
    %3436 = vmatpush1.bf16.msra.mxu0 0
    %3437 = vmatprep.subr.bf16.mxu0 0
    %3438 = vmatpush1.bf16.msra.mxu0 0
    %3439 = vmatprep.subr.bf16.mxu0 0
    %3440 = vmatpush1.bf16.msra.mxu0 0
    %3441 = vmatprep.subr.bf16.mxu0 0
    %3442 = vmatpush1.bf16.msra.mxu0 0
    %3443 = vmatprep.subr.bf16.mxu0 0
    %3444 = vmatpush1.bf16.msra.mxu0 0
    %3445 = vmatprep.subr.bf16.mxu0 0
    %3446 = vmatpush1.bf16.msra.mxu0 0
    %3447 = vmatprep.subr.bf16.mxu0 0
    %3448 = vmatpush1.bf16.msra.mxu0 0
    %3449 = vmatprep.subr.bf16.mxu0 0
    %3450 = vmatpush1.bf16.msra.mxu0 0
    %3451 = vmatprep.subr.bf16.mxu0 0
    %3452 = vmatpush1.bf16.msra.mxu0 0
    %3453 = vmatprep.subr.bf16.mxu0 0
    %3454 = vmatpush1.bf16.msra.mxu0 0
    %3455 = vmatprep.mubr.bf16.mxu0 0
    %3456 = vmatmul.mubr.bf16.gmra.mrb[0].mxu0 %v3418
    %v3457 = vpop.f32.mrb[0].mxu0
    %v3458 = vadd.f32 %v228, %v3457
    %v3459 = vpop.f32.mrb[0].mxu0
    %v3460 = vpop.f32.mrb[0].mxu0
    %v3461 = vadd.f32 %v228, %v3460
    %v3462 = vpop.f32.mrb[0].mxu0
    %3463 = vmatprep.mubr.bf16.mxu0 0
    %3464 = vmatmul.mubr.bf16.gmra.mrb[0].mxu0 %v3421
    %v3465 = vpop.f32.mrb[0].mxu0
    %v3466 = vadd.f32 %v228, %v3465
    %v3467 = vpop.f32.mrb[0].mxu0
    %v3468 = vpop.f32.mrb[0].mxu0
    %v3469 = vpop.f32.mrb[0].mxu0
    %3470 = vdwg.mxu0
    %vm3471 = vcmp.gt.f32.partialorder %v3458, 0.0
    %vm3472 = vcmp.gt.f32.partialorder %v3461, 0.0
    %vm3473 = vcmp.gt.f32.partialorder %v3466, 0.0
    %v3474 = vmul.f32 %v312, %v3458
    %v3475 = vmul.f32 %v312, %v3461
    %v3476 = vmul.f32 %v312, %v3466
    %v3477 = vsel %vm3471, %v3458, %v3474
    %v3478 = vsel %vm3472, %v3461, %v3475
    %v3479 = vsel %vm3473, %v3466, %v3476
    %s3480 = sadd.s32 480, %s55
    %s3481 = scalar_lea.vmem %s0, %s3480
    %v3482 = vld [vmem:[%s3481] sm:$0xff]
    %v3483 = vld [vmem:[%s3481 + $0x8] sm:$0xff]
    %v3484 = vld [vmem:[%s3481 + $0x10] sm:$0xff]
    %v3488 = vrot.slane %v3482, 1
    %v3489 = vrot.slane %v3483, 1
    %v3490 = vsel %vm63, %v3488, %v3489
    %v3491 = vrot.slane %v3484, 1
    %v3492 = vsel %vm63, %v3489, %v3491
    %3493 = vrot.lane.b32.xlu0 %v3490, 3
    %v3494 = vpop.permute.xlu0 %3493
    %3495 = vrot.lane.b32.xlu0 %v3492, 3
    %v3496 = vpop.permute.xlu0 %3495
    %3497 = vrot.lane.b32.xlu0 %v3491, 3
    %v3498 = vpop.permute.xlu0 %3497
    %v3502 = vrot.slane %v3482, 2
    %v3503 = vrot.slane %v3483, 2
    %v3504 = vsel %vm78, %v3502, %v3503
    %v3505 = vrot.slane %v3484, 2
    %v3506 = vsel %vm78, %v3503, %v3505
    %3507 = vrot.lane.b32.xlu0 %v3504, 6
    %v3508 = vpop.permute.xlu0 %3507
    %3509 = vrot.lane.b32.xlu0 %v3506, 6
    %v3510 = vpop.permute.xlu0 %3509
    %3511 = vrot.lane.b32.xlu0 %v3505, 6
    %v3512 = vpop.permute.xlu0 %3511
    %v3516 = vsel %vm93, %v3482, %v3494
    %v3517 = vsel %vm93, %v3483, %v3496
    %v3518 = vsel %vm93, %v3484, %v3498
    %v3519 = vsel %vm97, %v3516, %v3508
    %v3520 = vsel %vm97, %v3517, %v3510
    %v3521 = vsel %vm97, %v3518, %v3512
    %3522 = vrot.lane.b32.xlu0 %v3385, 9
    %v3523 = vpop.permute.xlu0 %3522
    %3524 = vrot.lane.b32.xlu0 %v3386, 9
    %v3525 = vpop.permute.xlu0 %3524
    %3526 = vrot.lane.b32.xlu0 %v3387, 9
    %v3527 = vpop.permute.xlu0 %3526
    %3534 = vrot.lane.b32.xlu0 %v3519, 18
    %v3535 = vpop.permute.xlu0 %3534
    %3536 = vrot.lane.b32.xlu0 %v3520, 18
    %v3537 = vpop.permute.xlu0 %3536
    %3538 = vrot.lane.b32.xlu0 %v3521, 18
    %v3539 = vpop.permute.xlu0 %3538
    %v3543 = vsel %vm209, %v3142, %v3523
    %v3544 = vsel %vm209, %v3143, %v3525
    %v3545 = vsel %vm209, %v3144, %v3527
    %v3546 = vsel %vm213, %v3543, %v3535
    %v3547 = vsel %vm213, %v3544, %v3537
    %v3548 = vsel %vm213, %v3545, %v3539
    %v3549 = vpack.c.bf16 %v3547, %v3546
    %v3550 = vpack.c.bf16 %v3548, %v3548
    %v3552 = vsel %vm241, %v3549, 0
    %v3555 = vsel %vm241, %v3550, 0
    %3557 = vmatprep.subr.bf16.mxu0 0
    %3558 = vmatpush1.bf16.msra.mxu0 %v238
    %3559 = vmatprep.subr.bf16.mxu0 0
    %3560 = vmatpush1.bf16.msra.mxu0 %v252
    %3561 = vmatprep.subr.bf16.mxu0 0
    %3562 = vmatpush1.bf16.msra.mxu0 0
    %3563 = vmatprep.subr.bf16.mxu0 0
    %3564 = vmatpush1.bf16.msra.mxu0 0
    %3565 = vmatprep.subr.bf16.mxu0 0
    %3566 = vmatpush1.bf16.msra.mxu0 0
    %3567 = vmatprep.subr.bf16.mxu0 0
    %3568 = vmatpush1.bf16.msra.mxu0 0
    %3569 = vmatprep.subr.bf16.mxu0 0
    %3570 = vmatpush1.bf16.msra.mxu0 0
    %3571 = vmatprep.subr.bf16.mxu0 0
    %3572 = vmatpush1.bf16.msra.mxu0 0
    %3573 = vmatprep.subr.bf16.mxu0 0
    %3574 = vmatpush1.bf16.msra.mxu0 0
    %3575 = vmatprep.subr.bf16.mxu0 0
    %3576 = vmatpush1.bf16.msra.mxu0 0
    %3577 = vmatprep.subr.bf16.mxu0 0
    %3578 = vmatpush1.bf16.msra.mxu0 0
    %3579 = vmatprep.subr.bf16.mxu0 0
    %3580 = vmatpush1.bf16.msra.mxu0 0
    %3581 = vmatprep.subr.bf16.mxu0 0
    %3582 = vmatpush1.bf16.msra.mxu0 0
    %3583 = vmatprep.subr.bf16.mxu0 0
    %3584 = vmatpush1.bf16.msra.mxu0 0
    %3585 = vmatprep.subr.bf16.mxu0 0
    %3586 = vmatpush1.bf16.msra.mxu0 0
    %3587 = vmatprep.subr.bf16.mxu0 0
    %3588 = vmatpush1.bf16.msra.mxu0 0
    %3589 = vmatprep.mubr.bf16.mxu0 0
    %3590 = vmatmul.mubr.bf16.gmra.mrb[0].mxu0 %v3552
    %v3591 = vpop.f32.mrb[0].mxu0
    %v3592 = vadd.f32 %v228, %v3591
    %v3593 = vpop.f32.mrb[0].mxu0
    %v3594 = vpop.f32.mrb[0].mxu0
    %v3595 = vadd.f32 %v228, %v3594
    %v3596 = vpop.f32.mrb[0].mxu0
    %3597 = vmatprep.mubr.bf16.mxu0 0
    %3598 = vmatmul.mubr.bf16.gmra.mrb[0].mxu0 %v3555
    %v3599 = vpop.f32.mrb[0].mxu0
    %v3600 = vadd.f32 %v228, %v3599
    %v3601 = vpop.f32.mrb[0].mxu0
    %v3602 = vpop.f32.mrb[0].mxu0
    %v3603 = vpop.f32.mrb[0].mxu0
    %3604 = vdwg.mxu0
    %vm3605 = vcmp.gt.f32.partialorder %v3592, 0.0
    %vm3606 = vcmp.gt.f32.partialorder %v3595, 0.0
    %vm3607 = vcmp.gt.f32.partialorder %v3600, 0.0
    %v3608 = vmul.f32 %v312, %v3592
    %v3609 = vmul.f32 %v312, %v3595
    %v3610 = vmul.f32 %v312, %v3600
    %v3611 = vsel %vm3605, %v3592, %v3608
    %v3612 = vsel %vm3606, %v3595, %v3609
    %v3613 = vsel %vm3607, %v3600, %v3610
    %v3614 = vmax.f32 %v3234, %v3477
    %v3615 = vmax.f32 %v3235, %v3478
    %v3616 = vmax.f32 %v3236, %v3479
    %v3617 = vmax.f32 %v3614, %v3611
    %v3618 = vmax.f32 %v3615, %v3612
    %v3619 = vmax.f32 %v3616, %v3613
    %v3623 = vrot.slane %v3617, 1
    %v3624 = vrot.slane %v3618, 1
    %v3625 = vsel %vm63, %v3623, %v3624
    %v3626 = vrot.slane %v3619, 1
    %v3627 = vsel %vm63, %v3624, %v3626
    %v3631 = vmax.f32 %v3617, %v3625
    %v3632 = vmax.f32 %v3618, %v3627
    %v3633 = vmax.f32 %v3619, %v3626
    %v3634 = vrot.slane %v3617, 2
    %v3635 = vrot.slane %v3618, 2
    %v3636 = vsel %vm78, %v3634, %v3635
    %v3637 = vrot.slane %v3619, 2
    %v3638 = vsel %vm78, %v3635, %v3637
    %v3642 = vmax.f32 %v3631, %v3636
    %v3643 = vmax.f32 %v3632, %v3638
    %v3644 = vmax.f32 %v3633, %v3637
    %v3646 = vsel %vm628, %v3644, 0
    %3648 = vmatprep.subr.mxu0 0.0
    %3649 = vmatpush1.msra.mxu0 %v3642
    %3650 = vmatprep.subr.mxu0 0.0
    %3651 = vmatpush1.msra.mxu0 %v3643
    %3652 = vmatprep.subr.mxu0 0.0
    %3653 = vmatpush1.msra.mxu0 %v3646
    %3654 = vmatprep.subr.mxu0 0.0
    %3655 = vmatpush1.msra.mxu0 0.0
    %3656 = vmatprep.subr.mxu0 0.0
    %3657 = vmatpush1.msra.mxu0 0.0
    %3658 = vmatprep.subr.mxu0 0.0
    %3659 = vmatpush1.msra.mxu0 0.0
    %3660 = vmatprep.subr.mxu0 0.0
    %3661 = vmatpush1.msra.mxu0 0.0
    %3662 = vmatprep.subr.mxu0 0.0
    %3663 = vmatpush1.msra.mxu0 0.0
    %3664 = vmatprep.subr.mxu0 0.0
    %3665 = vmatpush1.msra.mxu0 0.0
    %3666 = vmatprep.subr.mxu0 0.0
    %3667 = vmatpush1.msra.mxu0 0.0
    %3668 = vmatprep.subr.mxu0 0.0
    %3669 = vmatpush1.msra.mxu0 0.0
    %3670 = vmatprep.subr.mxu0 0.0
    %3671 = vmatpush1.msra.mxu0 0.0
    %3672 = vmatprep.subr.mxu0 0.0
    %3673 = vmatpush1.msra.mxu0 0.0
    %3674 = vmatprep.subr.mxu0 0.0
    %3675 = vmatpush1.msra.mxu0 0.0
    %3676 = vmatprep.subr.mxu0 0.0
    %3677 = vmatpush1.msra.mxu0 0.0
    %3678 = vmatprep.subr.mxu0 0.0
    %3679 = vmatpush1.msra.mxu0 0.0
    %3680 = vmatprep.subr.mxu0 0.0
    %3681 = vmatpush1.msra.mxu0 0.0
    %3682 = vmatprep.subr.mxu0 0.0
    %3683 = vmatpush1.msra.mxu0 0.0
    %3684 = vmatprep.subr.mxu0 0.0
    %3685 = vmatpush1.msra.mxu0 0.0
    %3686 = vmatprep.subr.mxu0 0.0
    %3687 = vmatpush1.msra.mxu0 0.0
    %3688 = vmatprep.subr.mxu0 0.0
    %3689 = vmatpush1.msra.mxu0 0.0
    %3690 = vmatprep.subr.mxu0 0.0
    %3691 = vmatpush1.msra.mxu0 0.0
    %3692 = vmatprep.subr.mxu0 0.0
    %3693 = vmatpush1.msra.mxu0 0.0
    %3694 = vmatprep.subr.mxu0 0.0
    %3695 = vmatpush1.msra.mxu0 0.0
    %3696 = vmatprep.subr.mxu0 0.0
    %3697 = vmatpush1.msra.mxu0 0.0
    %3698 = vmatprep.subr.mxu0 0.0
    %3699 = vmatpush1.msra.mxu0 0.0
    %3700 = vmatprep.subr.mxu0 0.0
    %3701 = vmatpush1.msra.mxu0 0.0
    %3702 = vmatprep.subr.mxu0 0.0
    %3703 = vmatpush1.msra.mxu0 0.0
    %3704 = vmatprep.subr.mxu0 0.0
    %3705 = vmatpush1.msra.mxu0 0.0
    %3706 = vmatprep.subr.mxu0 0.0
    %3707 = vmatpush1.msra.mxu0 0.0
    %3708 = vmatprep.subr.mxu0 0.0
    %3709 = vmatpush1.msra.mxu0 0.0
    %3710 = vmatprep.subr.mxu0 0.0
    %3711 = vmatpush1.msra.mxu0 0.0
    %3712 = vmatprep.mubr.f32.mxu0 0.0
    %3713 = vmatmul.mubr.f32.gmra.mrb[0].mxu0 %v623
    %v3714 = vpop.f32.mrb[0].mxu0
    %v3715 = vadd.f32 0.0, %v3714
    %v3716 = vpop.f32.mrb[0].mxu0
    %3717 = vmatprep.mubr.f32.mxu0 0.0
    %3718 = vmatmul.mubr.f32.gmra.mrb[0].mxu0 %v626
    %v3719 = vpop.f32.mrb[0].mxu0
    %v3720 = vadd.f32 0.0, %v3719
    %v3721 = vpop.f32.mrb[0].mxu0
    %3722 = vdwg.mxu0
    %s3723 = sadd.s32 504, %s55
    %s3724 = scalar_lea.vmem %s0, %s3723
    %v3725 = vld [vmem:[%s3724] sm:$0xff]
    %v3726 = vld [vmem:[%s3724 + $0x8] sm:$0xff]
    %v3727 = vld [vmem:[%s3724 + $0x10] sm:$0xff]
    %v3731 = vrot.slane %v3725, 1
    %v3732 = vrot.slane %v3726, 1
    %v3733 = vsel %vm63, %v3731, %v3732
    %v3734 = vrot.slane %v3727, 1
    %v3735 = vsel %vm63, %v3732, %v3734
    %3736 = vrot.lane.b32.xlu0 %v3733, 3
    %v3737 = vpop.permute.xlu0 %3736
    %3738 = vrot.lane.b32.xlu0 %v3735, 3
    %v3739 = vpop.permute.xlu0 %3738
    %3740 = vrot.lane.b32.xlu0 %v3734, 3
    %v3741 = vpop.permute.xlu0 %3740
    %v3745 = vrot.slane %v3725, 2
    %v3746 = vrot.slane %v3726, 2
    %v3747 = vsel %vm78, %v3745, %v3746
    %v3748 = vrot.slane %v3727, 2
    %v3749 = vsel %vm78, %v3746, %v3748
    %3750 = vrot.lane.b32.xlu0 %v3747, 6
    %v3751 = vpop.permute.xlu0 %3750
    %3752 = vrot.lane.b32.xlu0 %v3749, 6
    %v3753 = vpop.permute.xlu0 %3752
    %3754 = vrot.lane.b32.xlu0 %v3748, 6
    %v3755 = vpop.permute.xlu0 %3754
    %v3759 = vsel %vm93, %v3725, %v3737
    %v3760 = vsel %vm93, %v3726, %v3739
    %v3761 = vsel %vm93, %v3727, %v3741
    %v3762 = vsel %vm97, %v3759, %v3751
    %v3763 = vsel %vm97, %v3760, %v3753
    %v3764 = vsel %vm97, %v3761, %v3755
    %3765 = vrot.lane.b32.xlu0 %v3519, 9
    %v3766 = vpop.permute.xlu0 %3765
    %3767 = vrot.lane.b32.xlu0 %v3520, 9
    %v3768 = vpop.permute.xlu0 %3767
    %3769 = vrot.lane.b32.xlu0 %v3521, 9
    %v3770 = vpop.permute.xlu0 %3769
    %3777 = vrot.lane.b32.xlu0 %v3762, 18
    %v3778 = vpop.permute.xlu0 %3777
    %3779 = vrot.lane.b32.xlu0 %v3763, 18
    %v3780 = vpop.permute.xlu0 %3779
    %3781 = vrot.lane.b32.xlu0 %v3764, 18
    %v3782 = vpop.permute.xlu0 %3781
    %v3786 = vsel %vm209, %v3385, %v3766
    %v3787 = vsel %vm209, %v3386, %v3768
    %v3788 = vsel %vm209, %v3387, %v3770
    %v3789 = vsel %vm213, %v3786, %v3778
    %v3790 = vsel %vm213, %v3787, %v3780
    %v3791 = vsel %vm213, %v3788, %v3782
    %v3792 = vpack.c.bf16 %v3790, %v3789
    %v3793 = vpack.c.bf16 %v3791, %v3791
    %v3795 = vsel %vm241, %v3792, 0
    %v3798 = vsel %vm241, %v3793, 0
    %3800 = vmatprep.subr.bf16.mxu0 0
    %3801 = vmatpush1.bf16.msra.mxu0 %v238
    %3802 = vmatprep.subr.bf16.mxu0 0
    %3803 = vmatpush1.bf16.msra.mxu0 %v252
    %3804 = vmatprep.subr.bf16.mxu0 0
    %3805 = vmatpush1.bf16.msra.mxu0 0
    %3806 = vmatprep.subr.bf16.mxu0 0
    %3807 = vmatpush1.bf16.msra.mxu0 0
    %3808 = vmatprep.subr.bf16.mxu0 0
    %3809 = vmatpush1.bf16.msra.mxu0 0
    %3810 = vmatprep.subr.bf16.mxu0 0
    %3811 = vmatpush1.bf16.msra.mxu0 0
    %3812 = vmatprep.subr.bf16.mxu0 0
    %3813 = vmatpush1.bf16.msra.mxu0 0
    %3814 = vmatprep.subr.bf16.mxu0 0
    %3815 = vmatpush1.bf16.msra.mxu0 0
    %3816 = vmatprep.subr.bf16.mxu0 0
    %3817 = vmatpush1.bf16.msra.mxu0 0
    %3818 = vmatprep.subr.bf16.mxu0 0
    %3819 = vmatpush1.bf16.msra.mxu0 0
    %3820 = vmatprep.subr.bf16.mxu0 0
    %3821 = vmatpush1.bf16.msra.mxu0 0
    %3822 = vmatprep.subr.bf16.mxu0 0
    %3823 = vmatpush1.bf16.msra.mxu0 0
    %3824 = vmatprep.subr.bf16.mxu0 0
    %3825 = vmatpush1.bf16.msra.mxu0 0
    %3826 = vmatprep.subr.bf16.mxu0 0
    %3827 = vmatpush1.bf16.msra.mxu0 0
    %3828 = vmatprep.subr.bf16.mxu0 0
    %3829 = vmatpush1.bf16.msra.mxu0 0
    %3830 = vmatprep.subr.bf16.mxu0 0
    %3831 = vmatpush1.bf16.msra.mxu0 0
    %3832 = vmatprep.mubr.bf16.mxu0 0
    %3833 = vmatmul.mubr.bf16.gmra.mrb[0].mxu0 %v3795
    %v3834 = vpop.f32.mrb[0].mxu0
    %v3835 = vadd.f32 %v228, %v3834
    %v3836 = vpop.f32.mrb[0].mxu0
    %v3837 = vpop.f32.mrb[0].mxu0
    %v3838 = vadd.f32 %v228, %v3837
    %v3839 = vpop.f32.mrb[0].mxu0
    %3840 = vmatprep.mubr.bf16.mxu0 0
    %3841 = vmatmul.mubr.bf16.gmra.mrb[0].mxu0 %v3798
    %v3842 = vpop.f32.mrb[0].mxu0
    %v3843 = vadd.f32 %v228, %v3842
    %v3844 = vpop.f32.mrb[0].mxu0
    %v3845 = vpop.f32.mrb[0].mxu0
    %v3846 = vpop.f32.mrb[0].mxu0
    %3847 = vdwg.mxu0
    %vm3848 = vcmp.gt.f32.partialorder %v3835, 0.0
    %vm3849 = vcmp.gt.f32.partialorder %v3838, 0.0
    %vm3850 = vcmp.gt.f32.partialorder %v3843, 0.0
    %v3851 = vmul.f32 %v312, %v3835
    %v3852 = vmul.f32 %v312, %v3838
    %v3853 = vmul.f32 %v312, %v3843
    %v3854 = vsel %vm3848, %v3835, %v3851
    %v3855 = vsel %vm3849, %v3838, %v3852
    %v3856 = vsel %vm3850, %v3843, %v3853
    %s3857 = sadd.s32 528, %s55
    %s3858 = scalar_lea.vmem %s0, %s3857
    %v3859 = vld [vmem:[%s3858] sm:$0xff]
    %v3860 = vld [vmem:[%s3858 + $0x8] sm:$0xff]
    %v3861 = vld [vmem:[%s3858 + $0x10] sm:$0xff]
    %v3865 = vrot.slane %v3859, 1
    %v3866 = vrot.slane %v3860, 1
    %v3867 = vsel %vm63, %v3865, %v3866
    %v3868 = vrot.slane %v3861, 1
    %v3869 = vsel %vm63, %v3866, %v3868
    %3870 = vrot.lane.b32.xlu0 %v3867, 3
    %v3871 = vpop.permute.xlu0 %3870
    %3872 = vrot.lane.b32.xlu0 %v3869, 3
    %v3873 = vpop.permute.xlu0 %3872
    %3874 = vrot.lane.b32.xlu0 %v3868, 3
    %v3875 = vpop.permute.xlu0 %3874
    %v3879 = vrot.slane %v3859, 2
    %v3880 = vrot.slane %v3860, 2
    %v3881 = vsel %vm78, %v3879, %v3880
    %v3882 = vrot.slane %v3861, 2
    %v3883 = vsel %vm78, %v3880, %v3882
    %3884 = vrot.lane.b32.xlu0 %v3881, 6
    %v3885 = vpop.permute.xlu0 %3884
    %3886 = vrot.lane.b32.xlu0 %v3883, 6
    %v3887 = vpop.permute.xlu0 %3886
    %3888 = vrot.lane.b32.xlu0 %v3882, 6
    %v3889 = vpop.permute.xlu0 %3888
    %v3893 = vsel %vm93, %v3859, %v3871
    %v3894 = vsel %vm93, %v3860, %v3873
    %v3895 = vsel %vm93, %v3861, %v3875
    %v3896 = vsel %vm97, %v3893, %v3885
    %v3897 = vsel %vm97, %v3894, %v3887
    %v3898 = vsel %vm97, %v3895, %v3889
    %3899 = vrot.lane.b32.xlu0 %v3762, 9
    %v3900 = vpop.permute.xlu0 %3899
    %3901 = vrot.lane.b32.xlu0 %v3763, 9
    %v3902 = vpop.permute.xlu0 %3901
    %3903 = vrot.lane.b32.xlu0 %v3764, 9
    %v3904 = vpop.permute.xlu0 %3903
    %3911 = vrot.lane.b32.xlu0 %v3896, 18
    %v3912 = vpop.permute.xlu0 %3911
    %3913 = vrot.lane.b32.xlu0 %v3897, 18
    %v3914 = vpop.permute.xlu0 %3913
    %3915 = vrot.lane.b32.xlu0 %v3898, 18
    %v3916 = vpop.permute.xlu0 %3915
    %v3920 = vsel %vm209, %v3519, %v3900
    %v3921 = vsel %vm209, %v3520, %v3902
    %v3922 = vsel %vm209, %v3521, %v3904
    %v3923 = vsel %vm213, %v3920, %v3912
    %v3924 = vsel %vm213, %v3921, %v3914
    %v3925 = vsel %vm213, %v3922, %v3916
    %v3926 = vpack.c.bf16 %v3924, %v3923
    %v3927 = vpack.c.bf16 %v3925, %v3925
    %v3929 = vsel %vm241, %v3926, 0
    %v3932 = vsel %vm241, %v3927, 0
    %3934 = vmatprep.subr.bf16.mxu0 0
    %3935 = vmatpush1.bf16.msra.mxu0 %v238
    %3936 = vmatprep.subr.bf16.mxu0 0
    %3937 = vmatpush1.bf16.msra.mxu0 %v252
    %3938 = vmatprep.subr.bf16.mxu0 0
    %3939 = vmatpush1.bf16.msra.mxu0 0
    %3940 = vmatprep.subr.bf16.mxu0 0
    %3941 = vmatpush1.bf16.msra.mxu0 0
    %3942 = vmatprep.subr.bf16.mxu0 0
    %3943 = vmatpush1.bf16.msra.mxu0 0
    %3944 = vmatprep.subr.bf16.mxu0 0
    %3945 = vmatpush1.bf16.msra.mxu0 0
    %3946 = vmatprep.subr.bf16.mxu0 0
    %3947 = vmatpush1.bf16.msra.mxu0 0
    %3948 = vmatprep.subr.bf16.mxu0 0
    %3949 = vmatpush1.bf16.msra.mxu0 0
    %3950 = vmatprep.subr.bf16.mxu0 0
    %3951 = vmatpush1.bf16.msra.mxu0 0
    %3952 = vmatprep.subr.bf16.mxu0 0
    %3953 = vmatpush1.bf16.msra.mxu0 0
    %3954 = vmatprep.subr.bf16.mxu0 0
    %3955 = vmatpush1.bf16.msra.mxu0 0
    %3956 = vmatprep.subr.bf16.mxu0 0
    %3957 = vmatpush1.bf16.msra.mxu0 0
    %3958 = vmatprep.subr.bf16.mxu0 0
    %3959 = vmatpush1.bf16.msra.mxu0 0
    %3960 = vmatprep.subr.bf16.mxu0 0
    %3961 = vmatpush1.bf16.msra.mxu0 0
    %3962 = vmatprep.subr.bf16.mxu0 0
    %3963 = vmatpush1.bf16.msra.mxu0 0
    %3964 = vmatprep.subr.bf16.mxu0 0
    %3965 = vmatpush1.bf16.msra.mxu0 0
    %3966 = vmatprep.mubr.bf16.mxu0 0
    %3967 = vmatmul.mubr.bf16.gmra.mrb[0].mxu0 %v3929
    %v3968 = vpop.f32.mrb[0].mxu0
    %v3969 = vadd.f32 %v228, %v3968
    %v3970 = vpop.f32.mrb[0].mxu0
    %v3971 = vpop.f32.mrb[0].mxu0
    %v3972 = vadd.f32 %v228, %v3971
    %v3973 = vpop.f32.mrb[0].mxu0
    %3974 = vmatprep.mubr.bf16.mxu0 0
    %3975 = vmatmul.mubr.bf16.gmra.mrb[0].mxu0 %v3932
    %v3976 = vpop.f32.mrb[0].mxu0
    %v3977 = vadd.f32 %v228, %v3976
    %v3978 = vpop.f32.mrb[0].mxu0
    %v3979 = vpop.f32.mrb[0].mxu0
    %v3980 = vpop.f32.mrb[0].mxu0
    %3981 = vdwg.mxu0
    %vm3982 = vcmp.gt.f32.partialorder %v3969, 0.0
    %vm3983 = vcmp.gt.f32.partialorder %v3972, 0.0
    %vm3984 = vcmp.gt.f32.partialorder %v3977, 0.0
    %v3985 = vmul.f32 %v312, %v3969
    %v3986 = vmul.f32 %v312, %v3972
    %v3987 = vmul.f32 %v312, %v3977
    %v3988 = vsel %vm3982, %v3969, %v3985
    %v3989 = vsel %vm3983, %v3972, %v3986
    %v3990 = vsel %vm3984, %v3977, %v3987
    %v3991 = vmax.f32 %v3611, %v3854
    %v3992 = vmax.f32 %v3612, %v3855
    %v3993 = vmax.f32 %v3613, %v3856
    %v3994 = vmax.f32 %v3991, %v3988
    %v3995 = vmax.f32 %v3992, %v3989
    %v3996 = vmax.f32 %v3993, %v3990
    %v4000 = vrot.slane %v3994, 1
    %v4001 = vrot.slane %v3995, 1
    %v4002 = vsel %vm63, %v4000, %v4001
    %v4003 = vrot.slane %v3996, 1
    %v4004 = vsel %vm63, %v4001, %v4003
    %v4008 = vmax.f32 %v3994, %v4002
    %v4009 = vmax.f32 %v3995, %v4004
    %v4010 = vmax.f32 %v3996, %v4003
    %v4011 = vrot.slane %v3994, 2
    %v4012 = vrot.slane %v3995, 2
    %v4013 = vsel %vm78, %v4011, %v4012
    %v4014 = vrot.slane %v3996, 2
    %v4015 = vsel %vm78, %v4012, %v4014
    %v4019 = vmax.f32 %v4008, %v4013
    %v4020 = vmax.f32 %v4009, %v4015
    %v4021 = vmax.f32 %v4010, %v4014
    %v4023 = vsel %vm628, %v4021, 0
    %4025 = vmatprep.subr.mxu0 0.0
    %4026 = vmatpush1.msra.mxu0 %v4019
    %4027 = vmatprep.subr.mxu0 0.0
    %4028 = vmatpush1.msra.mxu0 %v4020
    %4029 = vmatprep.subr.mxu0 0.0
    %4030 = vmatpush1.msra.mxu0 %v4023
    %4031 = vmatprep.subr.mxu0 0.0
    %4032 = vmatpush1.msra.mxu0 0.0
    %4033 = vmatprep.subr.mxu0 0.0
    %4034 = vmatpush1.msra.mxu0 0.0
    %4035 = vmatprep.subr.mxu0 0.0
    %4036 = vmatpush1.msra.mxu0 0.0
    %4037 = vmatprep.subr.mxu0 0.0
    %4038 = vmatpush1.msra.mxu0 0.0
    %4039 = vmatprep.subr.mxu0 0.0
    %4040 = vmatpush1.msra.mxu0 0.0
    %4041 = vmatprep.subr.mxu0 0.0
    %4042 = vmatpush1.msra.mxu0 0.0
    %4043 = vmatprep.subr.mxu0 0.0
    %4044 = vmatpush1.msra.mxu0 0.0
    %4045 = vmatprep.subr.mxu0 0.0
    %4046 = vmatpush1.msra.mxu0 0.0
    %4047 = vmatprep.subr.mxu0 0.0
    %4048 = vmatpush1.msra.mxu0 0.0
    %4049 = vmatprep.subr.mxu0 0.0
    %4050 = vmatpush1.msra.mxu0 0.0
    %4051 = vmatprep.subr.mxu0 0.0
    %4052 = vmatpush1.msra.mxu0 0.0
    %4053 = vmatprep.subr.mxu0 0.0
    %4054 = vmatpush1.msra.mxu0 0.0
    %4055 = vmatprep.subr.mxu0 0.0
    %4056 = vmatpush1.msra.mxu0 0.0
    %4057 = vmatprep.subr.mxu0 0.0
    %4058 = vmatpush1.msra.mxu0 0.0
    %4059 = vmatprep.subr.mxu0 0.0
    %4060 = vmatpush1.msra.mxu0 0.0
    %4061 = vmatprep.subr.mxu0 0.0
    %4062 = vmatpush1.msra.mxu0 0.0
    %4063 = vmatprep.subr.mxu0 0.0
    %4064 = vmatpush1.msra.mxu0 0.0
    %4065 = vmatprep.subr.mxu0 0.0
    %4066 = vmatpush1.msra.mxu0 0.0
    %4067 = vmatprep.subr.mxu0 0.0
    %4068 = vmatpush1.msra.mxu0 0.0
    %4069 = vmatprep.subr.mxu0 0.0
    %4070 = vmatpush1.msra.mxu0 0.0
    %4071 = vmatprep.subr.mxu0 0.0
    %4072 = vmatpush1.msra.mxu0 0.0
    %4073 = vmatprep.subr.mxu0 0.0
    %4074 = vmatpush1.msra.mxu0 0.0
    %4075 = vmatprep.subr.mxu0 0.0
    %4076 = vmatpush1.msra.mxu0 0.0
    %4077 = vmatprep.subr.mxu0 0.0
    %4078 = vmatpush1.msra.mxu0 0.0
    %4079 = vmatprep.subr.mxu0 0.0
    %4080 = vmatpush1.msra.mxu0 0.0
    %4081 = vmatprep.subr.mxu0 0.0
    %4082 = vmatpush1.msra.mxu0 0.0
    %4083 = vmatprep.subr.mxu0 0.0
    %4084 = vmatpush1.msra.mxu0 0.0
    %4085 = vmatprep.subr.mxu0 0.0
    %4086 = vmatpush1.msra.mxu0 0.0
    %4087 = vmatprep.subr.mxu0 0.0
    %4088 = vmatpush1.msra.mxu0 0.0
    %4089 = vmatprep.mubr.f32.mxu0 0.0
    %4090 = vmatmul.mubr.f32.gmra.mrb[0].mxu0 %v623
    %v4091 = vpop.f32.mrb[0].mxu0
    %v4092 = vadd.f32 0.0, %v4091
    %v4093 = vpop.f32.mrb[0].mxu0
    %4094 = vmatprep.mubr.f32.mxu0 0.0
    %4095 = vmatmul.mubr.f32.gmra.mrb[0].mxu0 %v626
    %v4096 = vpop.f32.mrb[0].mxu0
    %v4097 = vadd.f32 0.0, %v4096
    %v4098 = vpop.f32.mrb[0].mxu0
    %4099 = vdwg.mxu0
    %v4102 = vrot.slane %v699, 1
    %v4103 = vrot.slane %v704, 1
    %v4104 = vsel %vm63, %v4102, %v4103
    %4105 = vrot.lane.b32.xlu0 %v4104, 28
    %v4106 = vpop.permute.xlu0 %4105
    %v4108 = vrot.slane %v699, 2
    %v4109 = vrot.slane %v704, 2
    %v4110 = vsel %vm78, %v4108, %v4109
    %4111 = vrot.lane.b32.xlu0 %v4110, 56
    %v4112 = vpop.permute.xlu0 %4111
    %vm4114 = vcmask 228352
    %v4115 = vsel %vm4114, %v699, %v4106
    %vm4116 = vcmask 457728
    %v4117 = vsel %vm4116, %v4115, %v4112
    %v4120 = vrot.slane %v1076, 1
    %v4121 = vrot.slane %v1081, 1
    %v4122 = vsel %vm63, %v4120, %v4121
    %4123 = vrot.lane.b32.xlu0 %v4122, 28
    %v4124 = vpop.permute.xlu0 %4123
    %v4126 = vrot.slane %v1076, 2
    %v4127 = vrot.slane %v1081, 2
    %v4128 = vsel %vm78, %v4126, %v4127
    %4129 = vrot.lane.b32.xlu0 %v4128, 56
    %v4130 = vpop.permute.xlu0 %4129
    %v4132 = vsel %vm4114, %v1076, %v4124
    %v4133 = vsel %vm4116, %v4132, %v4130
    %v4136 = vrot.slane %v1453, 1
    %v4137 = vrot.slane %v1458, 1
    %v4138 = vsel %vm63, %v4136, %v4137
    %4139 = vrot.lane.b32.xlu0 %v4138, 28
    %v4140 = vpop.permute.xlu0 %4139
    %v4142 = vrot.slane %v1453, 2
    %v4143 = vrot.slane %v1458, 2
    %v4144 = vsel %vm78, %v4142, %v4143
    %4145 = vrot.lane.b32.xlu0 %v4144, 56
    %v4146 = vpop.permute.xlu0 %4145
    %v4148 = vsel %vm4114, %v1453, %v4140
    %v4149 = vsel %vm4116, %v4148, %v4146
    %v4152 = vrot.slane %v1830, 1
    %v4153 = vrot.slane %v1835, 1
    %v4154 = vsel %vm63, %v4152, %v4153
    %4155 = vrot.lane.b32.xlu0 %v4154, 28
    %v4156 = vpop.permute.xlu0 %4155
    %v4158 = vrot.slane %v1830, 2
    %v4159 = vrot.slane %v1835, 2
    %v4160 = vsel %vm78, %v4158, %v4159
    %4161 = vrot.lane.b32.xlu0 %v4160, 56
    %v4162 = vpop.permute.xlu0 %4161
    %v4164 = vsel %vm4114, %v1830, %v4156
    %v4165 = vsel %vm4116, %v4164, %v4162
    %v4168 = vrot.slane %v2207, 1
    %v4169 = vrot.slane %v2212, 1
    %v4170 = vsel %vm63, %v4168, %v4169
    %4171 = vrot.lane.b32.xlu0 %v4170, 28
    %v4172 = vpop.permute.xlu0 %4171
    %v4174 = vrot.slane %v2207, 2
    %v4175 = vrot.slane %v2212, 2
    %v4176 = vsel %vm78, %v4174, %v4175
    %4177 = vrot.lane.b32.xlu0 %v4176, 56
    %v4178 = vpop.permute.xlu0 %4177
    %v4180 = vsel %vm4114, %v2207, %v4172
    %v4181 = vsel %vm4116, %v4180, %v4178
    %v4184 = vrot.slane %v2584, 1
    %v4185 = vrot.slane %v2589, 1
    %v4186 = vsel %vm63, %v4184, %v4185
    %4187 = vrot.lane.b32.xlu0 %v4186, 28
    %v4188 = vpop.permute.xlu0 %4187
    %v4190 = vrot.slane %v2584, 2
    %v4191 = vrot.slane %v2589, 2
    %v4192 = vsel %vm78, %v4190, %v4191
    %4193 = vrot.lane.b32.xlu0 %v4192, 56
    %v4194 = vpop.permute.xlu0 %4193
    %v4196 = vsel %vm4114, %v2584, %v4188
    %v4197 = vsel %vm4116, %v4196, %v4194
    %v4200 = vrot.slane %v2961, 1
    %v4201 = vrot.slane %v2966, 1
    %v4202 = vsel %vm63, %v4200, %v4201
    %4203 = vrot.lane.b32.xlu0 %v4202, 28
    %v4204 = vpop.permute.xlu0 %4203
    %v4206 = vrot.slane %v2961, 2
    %v4207 = vrot.slane %v2966, 2
    %v4208 = vsel %vm78, %v4206, %v4207
    %4209 = vrot.lane.b32.xlu0 %v4208, 56
    %v4210 = vpop.permute.xlu0 %4209
    %v4212 = vsel %vm4114, %v2961, %v4204
    %v4213 = vsel %vm4116, %v4212, %v4210
    %v4216 = vrot.slane %v3338, 1
    %v4217 = vrot.slane %v3343, 1
    %v4218 = vsel %vm63, %v4216, %v4217
    %4219 = vrot.lane.b32.xlu0 %v4218, 28
    %v4220 = vpop.permute.xlu0 %4219
    %v4222 = vrot.slane %v3338, 2
    %v4223 = vrot.slane %v3343, 2
    %v4224 = vsel %vm78, %v4222, %v4223
    %4225 = vrot.lane.b32.xlu0 %v4224, 56
    %v4226 = vpop.permute.xlu0 %4225
    %v4228 = vsel %vm4114, %v3338, %v4220
    %v4229 = vsel %vm4116, %v4228, %v4226
    %v4232 = vrot.slane %v3715, 1
    %v4233 = vrot.slane %v3720, 1
    %v4234 = vsel %vm63, %v4232, %v4233
    %4235 = vrot.lane.b32.xlu0 %v4234, 28
    %v4236 = vpop.permute.xlu0 %4235
    %v4238 = vrot.slane %v3715, 2
    %v4239 = vrot.slane %v3720, 2
    %v4240 = vsel %vm78, %v4238, %v4239
    %4241 = vrot.lane.b32.xlu0 %v4240, 56
    %v4242 = vpop.permute.xlu0 %4241
    %v4244 = vsel %vm4114, %v3715, %v4236
    %v4245 = vsel %vm4116, %v4244, %v4242
    %v4248 = vrot.slane %v4092, 1
    %v4249 = vrot.slane %v4097, 1
    %v4250 = vsel %vm63, %v4248, %v4249
    %4251 = vrot.lane.b32.xlu0 %v4250, 28
    %v4252 = vpop.permute.xlu0 %4251
    %v4254 = vrot.slane %v4092, 2
    %v4255 = vrot.slane %v4097, 2
    %v4256 = vsel %vm78, %v4254, %v4255
    %4257 = vrot.lane.b32.xlu0 %v4256, 56
    %v4258 = vpop.permute.xlu0 %4257
    %v4260 = vsel %vm4114, %v4092, %v4252
    %v4261 = vsel %vm4116, %v4260, %v4258
    %4263 = vrot.lane.b32.xlu0 %v4133, 84
    %v4264 = vpop.permute.xlu0 %4263
    %4267 = vrot.lane.b32.xlu0 %v4149, 40
    %v4268 = vpop.permute.xlu0 %4267
    %vm4270 = vcmask 687104
    %v4271 = vsel %vm4270, %v4117, %v4264
    %vm4272 = vcmask 326656
    %v4273 = vsel %vm4272, %v4264, %v4268
    %4274 = vrot.lane.b32.xlu0 %v4149, 84
    %v4275 = vpop.permute.xlu0 %4274
    %4278 = vrot.lane.b32.xlu0 %v4165, 40
    %v4279 = vpop.permute.xlu0 %4278
    %v4281 = vsel %vm4270, %v4133, %v4275
    %v4282 = vsel %vm4272, %v4275, %v4279
    %4283 = vrot.lane.b32.xlu0 %v4165, 84
    %v4284 = vpop.permute.xlu0 %4283
    %4287 = vrot.lane.b32.xlu0 %v4181, 40
    %v4288 = vpop.permute.xlu0 %4287
    %v4290 = vsel %vm4270, %v4149, %v4284
    %v4291 = vsel %vm4272, %v4284, %v4288
    %4292 = vrot.lane.b32.xlu0 %v4181, 84
    %v4293 = vpop.permute.xlu0 %4292
    %4296 = vrot.lane.b32.xlu0 %v4197, 40
    %v4297 = vpop.permute.xlu0 %4296
    %v4299 = vsel %vm4270, %v4165, %v4293
    %v4300 = vsel %vm4272, %v4293, %v4297
    %4301 = vrot.lane.b32.xlu0 %v4197, 84
    %v4302 = vpop.permute.xlu0 %4301
    %4305 = vrot.lane.b32.xlu0 %v4213, 40
    %v4306 = vpop.permute.xlu0 %4305
    %v4308 = vsel %vm4270, %v4181, %v4302
    %v4309 = vsel %vm4272, %v4302, %v4306
    %4310 = vrot.lane.b32.xlu0 %v4213, 84
    %v4311 = vpop.permute.xlu0 %4310
    %4314 = vrot.lane.b32.xlu0 %v4229, 40
    %v4315 = vpop.permute.xlu0 %4314
    %v4317 = vsel %vm4270, %v4197, %v4311
    %v4318 = vsel %vm4272, %v4311, %v4315
    %4319 = vrot.lane.b32.xlu0 %v4229, 84
    %v4320 = vpop.permute.xlu0 %4319
    %4323 = vrot.lane.b32.xlu0 %v4245, 40
    %v4324 = vpop.permute.xlu0 %4323
    %v4326 = vsel %vm4270, %v4213, %v4320
    %v4327 = vsel %vm4272, %v4320, %v4324
    %4328 = vrot.lane.b32.xlu0 %v4245, 84
    %v4329 = vpop.permute.xlu0 %4328
    %4332 = vrot.lane.b32.xlu0 %v4261, 40
    %v4333 = vpop.permute.xlu0 %4332
    %v4335 = vsel %vm4270, %v4229, %v4329
    %v4336 = vsel %vm4272, %v4329, %v4333
    %v4337 = vpack.c.bf16 %v4281, %v4271
    %v4338 = vpack.c.bf16 %v4282, %v4273
    %v4339 = vpack.c.bf16 %v4299, %v4290
    %v4340 = vpack.c.bf16 %v4300, %v4291
    %v4341 = vpack.c.bf16 %v4317, %v4308
    %v4342 = vpack.c.bf16 %v4318, %v4309
    %v4343 = vpack.c.bf16 %v4335, %v4326
    %v4344 = vpack.c.bf16 %v4336, %v4327
    %v4345 = vld [vmem:[%s3] sm:$0xf]
    %v4346 = vld [vmem:[%s3 + $0x4] sm:$0xf]
    %v4347 = vld [vmem:[%s3 + $0x8] sm:$0xf]
    %v4348 = vld [vmem:[%s3 + $0xc] sm:$0xf]
    %v4349 = vld [vmem:[%s3 + $0x10] sm:$0xf]
    %v4350 = vld [vmem:[%s3 + $0x14] sm:$0xf]
    %v4351 = vld [vmem:[%s3 + $0x18] sm:$0xf]
    %v4352 = vld [vmem:[%s3 + $0x1c] sm:$0xf]
    %v4353 = vld [vmem:[%s3 + $0x20] sm:$0xf]
    %v4354 = vld [vmem:[%s3 + $0x24] sm:$0xf]
    %v4355 = vld [vmem:[%s3 + $0x28] sm:$0xf]
    %v4356 = vld [vmem:[%s3 + $0x2c] sm:$0xf]
    %v4357 = vld [vmem:[%s3 + $0x30] sm:$0xf]
    %v4358 = vld [vmem:[%s3 + $0x34] sm:$0xf]
    %v4359 = vld [vmem:[%s3 + $0x38] sm:$0xf]
    %v4360 = vld [vmem:[%s3 + $0x3c] sm:$0xf]
    %v4361 = vld [vmem:[%s3 + $0x40] sm:$0xf]
    %v4362 = vld [vmem:[%s3 + $0x44] sm:$0xf]
    %v4363 = vld [vmem:[%s3 + $0x48] sm:$0xf]
    %v4364 = vld [vmem:[%s3 + $0x4c] sm:$0xf]
    %v4365 = vld [vmem:[%s3 + $0x50] sm:$0xf]
    %v4366 = vld [vmem:[%s3 + $0x54] sm:$0xf]
    %v4367 = vld [vmem:[%s3 + $0x58] sm:$0xf]
    %v4368 = vld [vmem:[%s3 + $0x5c] sm:$0xf]
    %v4369 = vld [vmem:[%s3 + $0x60] sm:$0xf]
    %v4370 = vld [vmem:[%s3 + $0x64] sm:$0xf]
    %v4371 = vld [vmem:[%s3 + $0x68] sm:$0xf]
    %v4372 = vld [vmem:[%s3 + $0x6c] sm:$0xf]
    %v4373 = vld [vmem:[%s3 + $0x70] sm:$0xf]
    %v4374 = vld [vmem:[%s3 + $0x74] sm:$0xf]
    %v4375 = vld [vmem:[%s3 + $0x78] sm:$0xf]
    %v4376 = vld [vmem:[%s3 + $0x7c] sm:$0x3]
    %v4377 = vld [vmem:[%s4] sm:$0x1]
    %v4379 = vlaneseq
    %v4380 = vshrl.u32 %v4379, 7
    %v4381 = vsub.s32 0, %v4380
    %v4382 = vrot.slane %v4377, %v4381
    %v4416 = vunpack.c.l.b16 %v4345
    %v4417 = vunpack.c.l.b16 %v4346
    %v4418 = vunpack.c.l.b16 %v4347
    %v4419 = vunpack.c.l.b16 %v4348
    %v4420 = vunpack.c.l.b16 %v4349
    %v4421 = vunpack.c.l.b16 %v4350
    %v4422 = vunpack.c.l.b16 %v4351
    %v4423 = vunpack.c.l.b16 %v4352
    %v4424 = vunpack.c.l.b16 %v4353
    %v4425 = vunpack.c.l.b16 %v4354
    %v4426 = vunpack.c.l.b16 %v4355
    %v4427 = vunpack.c.l.b16 %v4356
    %v4428 = vunpack.c.l.b16 %v4357
    %v4429 = vunpack.c.l.b16 %v4358
    %v4430 = vunpack.c.l.b16 %v4359
    %v4431 = vunpack.c.l.b16 %v4360
    %v4432 = vunpack.c.l.b16 %v4361
    %v4433 = vunpack.c.l.b16 %v4362
    %v4434 = vunpack.c.l.b16 %v4363
    %v4435 = vunpack.c.l.b16 %v4364
    %v4436 = vunpack.c.l.b16 %v4365
    %v4437 = vunpack.c.l.b16 %v4366
    %v4438 = vunpack.c.l.b16 %v4367
    %v4439 = vunpack.c.l.b16 %v4368
    %v4440 = vunpack.c.l.b16 %v4369
    %v4441 = vunpack.c.l.b16 %v4370
    %v4442 = vunpack.c.l.b16 %v4371
    %v4443 = vunpack.c.l.b16 %v4372
    %v4444 = vunpack.c.l.b16 %v4373
    %v4445 = vunpack.c.l.b16 %v4374
    %v4446 = vunpack.c.l.b16 %v4375
    %v4447 = vunpack.c.l.b16 %v4376
    %v4448 = vpack.c.b16 %v4417, %v4416
    %v4449 = vpack.c.b16 %v4419, %v4418
    %v4450 = vpack.c.b16 %v4421, %v4420
    %v4451 = vpack.c.b16 %v4423, %v4422
    %v4452 = vpack.c.b16 %v4425, %v4424
    %v4453 = vpack.c.b16 %v4427, %v4426
    %v4454 = vpack.c.b16 %v4429, %v4428
    %v4455 = vpack.c.b16 %v4431, %v4430
    %v4456 = vpack.c.b16 %v4433, %v4432
    %v4457 = vpack.c.b16 %v4435, %v4434
    %v4458 = vpack.c.b16 %v4437, %v4436
    %v4459 = vpack.c.b16 %v4439, %v4438
    %v4460 = vpack.c.b16 %v4441, %v4440
    %v4461 = vpack.c.b16 %v4443, %v4442
    %v4462 = vpack.c.b16 %v4445, %v4444
    %v4463 = vpack.c.b16 %v4447, %v4446
    %vm4479 = vcmask 1014784
    %v4481 = vsel %vm4479, %v4338, 0
    %v4484 = vsel %vm4479, %v4340, 0
    %v4487 = vsel %vm4479, %v4342, 0
    %v4490 = vsel %vm4479, %v4344, 0
    %v4493 = vsel %vm78, %v4463, 0
    %4495 = vmatprep.subr.bf16.mxu0 0
    %4496 = vmatpush1.bf16.msra.mxu0 %v4448
    %4497 = vmatprep.subr.bf16.mxu0 0
    %4498 = vmatpush1.bf16.msra.mxu0 %v4449
    %4499 = vmatprep.subr.bf16.mxu0 0
    %4500 = vmatpush1.bf16.msra.mxu0 %v4450
    %4501 = vmatprep.subr.bf16.mxu0 0
    %4502 = vmatpush1.bf16.msra.mxu0 %v4451
    %4503 = vmatprep.subr.bf16.mxu0 0
    %4504 = vmatpush1.bf16.msra.mxu0 %v4452
    %4505 = vmatprep.subr.bf16.mxu0 0
    %4506 = vmatpush1.bf16.msra.mxu0 %v4453
    %4507 = vmatprep.subr.bf16.mxu0 0
    %4508 = vmatpush1.bf16.msra.mxu0 %v4454
    %4509 = vmatprep.subr.bf16.mxu0 0
    %4510 = vmatpush1.bf16.msra.mxu0 %v4455
    %4511 = vmatprep.subr.bf16.mxu0 0
    %4512 = vmatpush1.bf16.msra.mxu0 %v4456
    %4513 = vmatprep.subr.bf16.mxu0 0
    %4514 = vmatpush1.bf16.msra.mxu0 %v4457
    %4515 = vmatprep.subr.bf16.mxu0 0
    %4516 = vmatpush1.bf16.msra.mxu0 %v4458
    %4517 = vmatprep.subr.bf16.mxu0 0
    %4518 = vmatpush1.bf16.msra.mxu0 %v4459
    %4519 = vmatprep.subr.bf16.mxu0 0
    %4520 = vmatpush1.bf16.msra.mxu0 %v4460
    %4521 = vmatprep.subr.bf16.mxu0 0
    %4522 = vmatpush1.bf16.msra.mxu0 %v4461
    %4523 = vmatprep.subr.bf16.mxu0 0
    %4524 = vmatpush1.bf16.msra.mxu0 %v4462
    %4525 = vmatprep.subr.bf16.mxu0 0
    %4526 = vmatpush1.bf16.msra.mxu0 %v4493
    %4527 = vmatprep.mubr.bf16.mxu0 %v4481
    %4528 = vmatmul.mubr.bf16.gmra.mrb[0].mxu0 %v4337
    %v4529 = vpop.f32.mrb[0].mxu0
    %v4530 = vadd.f32 %v4382, %v4529
    %v4531 = vpop.f32.mrb[0].mxu0
    %v4532 = vpop.f32.mrb[0].mxu0
    %v4533 = vadd.f32 %v4382, %v4532
    %v4534 = vpop.f32.mrb[0].mxu0
    %4535 = vmatprep.mubr.bf16.mxu0 %v4484
    %4536 = vmatmul.mubr.bf16.gmra.mrb[0].mxu0 %v4339
    %v4537 = vpop.f32.mrb[0].mxu0
    %v4538 = vadd.f32 %v4382, %v4537
    %v4539 = vpop.f32.mrb[0].mxu0
    %v4540 = vpop.f32.mrb[0].mxu0
    %v4541 = vadd.f32 %v4382, %v4540
    %v4542 = vpop.f32.mrb[0].mxu0
    %4543 = vmatprep.mubr.bf16.mxu0 %v4487
    %4544 = vmatmul.mubr.bf16.gmra.mrb[0].mxu0 %v4341
    %v4545 = vpop.f32.mrb[0].mxu0
    %v4546 = vadd.f32 %v4382, %v4545
    %v4547 = vpop.f32.mrb[0].mxu0
    %v4548 = vpop.f32.mrb[0].mxu0
    %v4549 = vadd.f32 %v4382, %v4548
    %v4550 = vpop.f32.mrb[0].mxu0
    %4551 = vmatprep.mubr.bf16.mxu0 %v4490
    %4552 = vmatmul.mubr.bf16.gmra.mrb[0].mxu0 %v4343
    %v4553 = vpop.f32.mrb[0].mxu0
    %v4554 = vadd.f32 %v4382, %v4553
    %v4555 = vpop.f32.mrb[0].mxu0
    %v4556 = vpop.f32.mrb[0].mxu0
    %v4557 = vpop.f32.mrb[0].mxu0
    %4558 = vdwg.mxu0
    %vm4559 = vcmp.gt.f32.partialorder %v4530, 0.0
    %vm4560 = vcmp.gt.f32.partialorder %v4533, 0.0
    %vm4561 = vcmp.gt.f32.partialorder %v4538, 0.0
    %vm4562 = vcmp.gt.f32.partialorder %v4541, 0.0
    %vm4563 = vcmp.gt.f32.partialorder %v4546, 0.0
    %vm4564 = vcmp.gt.f32.partialorder %v4549, 0.0
    %vm4565 = vcmp.gt.f32.partialorder %v4554, 0.0
    %4566 = vset.pattern.permute.xlu0 1
    %4567 = vperm.xlu0 %4566, %v309
    %v4568 = vpop.permute.xlu0 %4567
    %v4570 = vmul.f32 %v4568, %v4530
    %v4571 = vmul.f32 %v4568, %v4533
    %v4572 = vmul.f32 %v4568, %v4538
    %v4573 = vmul.f32 %v4568, %v4541
    %v4574 = vmul.f32 %v4568, %v4546
    %v4575 = vmul.f32 %v4568, %v4549
    %v4576 = vmul.f32 %v4568, %v4554
    %v4577 = vsel %vm4559, %v4530, %v4570
    %v4578 = vsel %vm4560, %v4533, %v4571
    %v4579 = vsel %vm4561, %v4538, %v4572
    %v4580 = vsel %vm4562, %v4541, %v4573
    %v4581 = vsel %vm4563, %v4546, %v4574
    %v4582 = vsel %vm4564, %v4549, %v4575
    %v4583 = vsel %vm4565, %v4554, %v4576
    %v4584 = vmax.f32 %v4577, %v4578
    %v4585 = vmax.f32 %v4584, %v4579
    %v4587 = vrot.slane %v4585, 1
    %v4589 = vmax.f32 %v4585, %v4587
    %v4590 = vrot.slane %v4585, 2
    %v4592 = vmax.f32 %v4589, %v4590
    %v4593 = vld [vmem:[%s13] sm:$0x7]
    %v4595 = vsel %vm97, %v4593, 0
    %v4598 = vsel %vm78, %v4592, 0
    %4600 = vmatprep.subr.mxu0 0.0
    %4601 = vmatpush1.msra.mxu0 %v4598
    %4602 = vmatprep.subr.mxu0 0.0
    %4603 = vmatpush1.msra.mxu0 0.0
    %4604 = vmatprep.subr.mxu0 0.0
    %4605 = vmatpush1.msra.mxu0 0.0
    %4606 = vmatprep.subr.mxu0 0.0
    %4607 = vmatpush1.msra.mxu0 0.0
    %4608 = vmatprep.subr.mxu0 0.0
    %4609 = vmatpush1.msra.mxu0 0.0
    %4610 = vmatprep.subr.mxu0 0.0
    %4611 = vmatpush1.msra.mxu0 0.0
    %4612 = vmatprep.subr.mxu0 0.0
    %4613 = vmatpush1.msra.mxu0 0.0
    %4614 = vmatprep.subr.mxu0 0.0
    %4615 = vmatpush1.msra.mxu0 0.0
    %4616 = vmatprep.subr.mxu0 0.0
    %4617 = vmatpush1.msra.mxu0 0.0
    %4618 = vmatprep.subr.mxu0 0.0
    %4619 = vmatpush1.msra.mxu0 0.0
    %4620 = vmatprep.subr.mxu0 0.0
    %4621 = vmatpush1.msra.mxu0 0.0
    %4622 = vmatprep.subr.mxu0 0.0
    %4623 = vmatpush1.msra.mxu0 0.0
    %4624 = vmatprep.subr.mxu0 0.0
    %4625 = vmatpush1.msra.mxu0 0.0
    %4626 = vmatprep.subr.mxu0 0.0
    %4627 = vmatpush1.msra.mxu0 0.0
    %4628 = vmatprep.subr.mxu0 0.0
    %4629 = vmatpush1.msra.mxu0 0.0
    %4630 = vmatprep.subr.mxu0 0.0
    %4631 = vmatpush1.msra.mxu0 0.0
    %4632 = vmatprep.subr.mxu0 0.0
    %4633 = vmatpush1.msra.mxu0 0.0
    %4634 = vmatprep.subr.mxu0 0.0
    %4635 = vmatpush1.msra.mxu0 0.0
    %4636 = vmatprep.subr.mxu0 0.0
    %4637 = vmatpush1.msra.mxu0 0.0
    %4638 = vmatprep.subr.mxu0 0.0
    %4639 = vmatpush1.msra.mxu0 0.0
    %4640 = vmatprep.subr.mxu0 0.0
    %4641 = vmatpush1.msra.mxu0 0.0
    %4642 = vmatprep.subr.mxu0 0.0
    %4643 = vmatpush1.msra.mxu0 0.0
    %4644 = vmatprep.subr.mxu0 0.0
    %4645 = vmatpush1.msra.mxu0 0.0
    %4646 = vmatprep.subr.mxu0 0.0
    %4647 = vmatpush1.msra.mxu0 0.0
    %4648 = vmatprep.subr.mxu0 0.0
    %4649 = vmatpush1.msra.mxu0 0.0
    %4650 = vmatprep.subr.mxu0 0.0
    %4651 = vmatpush1.msra.mxu0 0.0
    %4652 = vmatprep.subr.mxu0 0.0
    %4653 = vmatpush1.msra.mxu0 0.0
    %4654 = vmatprep.subr.mxu0 0.0
    %4655 = vmatpush1.msra.mxu0 0.0
    %4656 = vmatprep.subr.mxu0 0.0
    %4657 = vmatpush1.msra.mxu0 0.0
    %4658 = vmatprep.subr.mxu0 0.0
    %4659 = vmatpush1.msra.mxu0 0.0
    %4660 = vmatprep.subr.mxu0 0.0
    %4661 = vmatpush1.msra.mxu0 0.0
    %4662 = vmatprep.subr.mxu0 0.0
    %4663 = vmatpush1.msra.mxu0 0.0
    %4664 = vmatprep.mubr.f32.mxu0 0.0
    %4665 = vmatmul.mubr.f32.gmra.mrb[0].mxu0 %v4595
    %v4666 = vpop.f32.mrb[0].mxu0
    %v4667 = vadd.f32 0.0, %v4666
    %v4668 = vpop.f32.mrb[0].mxu0
    %4669 = vdwg.mxu0
    %v4670 = vmax.f32 %v4579, %v4580
    %v4671 = vmax.f32 %v4670, %v4581
    %v4673 = vrot.slane %v4671, 1
    %v4675 = vmax.f32 %v4671, %v4673
    %v4676 = vrot.slane %v4671, 2
    %v4678 = vmax.f32 %v4675, %v4676
    %v4680 = vsel %vm78, %v4678, 0
    %4682 = vmatprep.subr.mxu0 0.0
    %4683 = vmatpush1.msra.mxu0 %v4680
    %4684 = vmatprep.subr.mxu0 0.0
    %4685 = vmatpush1.msra.mxu0 0.0
    %4686 = vmatprep.subr.mxu0 0.0
    %4687 = vmatpush1.msra.mxu0 0.0
    %4688 = vmatprep.subr.mxu0 0.0
    %4689 = vmatpush1.msra.mxu0 0.0
    %4690 = vmatprep.subr.mxu0 0.0
    %4691 = vmatpush1.msra.mxu0 0.0
    %4692 = vmatprep.subr.mxu0 0.0
    %4693 = vmatpush1.msra.mxu0 0.0
    %4694 = vmatprep.subr.mxu0 0.0
    %4695 = vmatpush1.msra.mxu0 0.0
    %4696 = vmatprep.subr.mxu0 0.0
    %4697 = vmatpush1.msra.mxu0 0.0
    %4698 = vmatprep.subr.mxu0 0.0
    %4699 = vmatpush1.msra.mxu0 0.0
    %4700 = vmatprep.subr.mxu0 0.0
    %4701 = vmatpush1.msra.mxu0 0.0
    %4702 = vmatprep.subr.mxu0 0.0
    %4703 = vmatpush1.msra.mxu0 0.0
    %4704 = vmatprep.subr.mxu0 0.0
    %4705 = vmatpush1.msra.mxu0 0.0
    %4706 = vmatprep.subr.mxu0 0.0
    %4707 = vmatpush1.msra.mxu0 0.0
    %4708 = vmatprep.subr.mxu0 0.0
    %4709 = vmatpush1.msra.mxu0 0.0
    %4710 = vmatprep.subr.mxu0 0.0
    %4711 = vmatpush1.msra.mxu0 0.0
    %4712 = vmatprep.subr.mxu0 0.0
    %4713 = vmatpush1.msra.mxu0 0.0
    %4714 = vmatprep.subr.mxu0 0.0
    %4715 = vmatpush1.msra.mxu0 0.0
    %4716 = vmatprep.subr.mxu0 0.0
    %4717 = vmatpush1.msra.mxu0 0.0
    %4718 = vmatprep.subr.mxu0 0.0
    %4719 = vmatpush1.msra.mxu0 0.0
    %4720 = vmatprep.subr.mxu0 0.0
    %4721 = vmatpush1.msra.mxu0 0.0
    %4722 = vmatprep.subr.mxu0 0.0
    %4723 = vmatpush1.msra.mxu0 0.0
    %4724 = vmatprep.subr.mxu0 0.0
    %4725 = vmatpush1.msra.mxu0 0.0
    %4726 = vmatprep.subr.mxu0 0.0
    %4727 = vmatpush1.msra.mxu0 0.0
    %4728 = vmatprep.subr.mxu0 0.0
    %4729 = vmatpush1.msra.mxu0 0.0
    %4730 = vmatprep.subr.mxu0 0.0
    %4731 = vmatpush1.msra.mxu0 0.0
    %4732 = vmatprep.subr.mxu0 0.0
    %4733 = vmatpush1.msra.mxu0 0.0
    %4734 = vmatprep.subr.mxu0 0.0
    %4735 = vmatpush1.msra.mxu0 0.0
    %4736 = vmatprep.subr.mxu0 0.0
    %4737 = vmatpush1.msra.mxu0 0.0
    %4738 = vmatprep.subr.mxu0 0.0
    %4739 = vmatpush1.msra.mxu0 0.0
    %4740 = vmatprep.subr.mxu0 0.0
    %4741 = vmatpush1.msra.mxu0 0.0
    %4742 = vmatprep.subr.mxu0 0.0
    %4743 = vmatpush1.msra.mxu0 0.0
    %4744 = vmatprep.subr.mxu0 0.0
    %4745 = vmatpush1.msra.mxu0 0.0
    %4746 = vmatprep.mubr.f32.mxu0 0.0
    %4747 = vmatmul.mubr.f32.gmra.mrb[0].mxu0 %v4595
    %v4748 = vpop.f32.mrb[0].mxu0
    %v4749 = vadd.f32 0.0, %v4748
    %v4750 = vpop.f32.mrb[0].mxu0
    %4751 = vdwg.mxu0
    %v4752 = vmax.f32 %v4581, %v4582
    %v4753 = vmax.f32 %v4752, %v4583
    %v4755 = vrot.slane %v4753, 1
    %v4757 = vmax.f32 %v4753, %v4755
    %v4758 = vrot.slane %v4753, 2
    %v4760 = vmax.f32 %v4757, %v4758
    %v4762 = vsel %vm78, %v4760, 0
    %4764 = vmatprep.subr.mxu0 0.0
    %4765 = vmatpush1.msra.mxu0 %v4762
    %4766 = vmatprep.subr.mxu0 0.0
    %4767 = vmatpush1.msra.mxu0 0.0
    %4768 = vmatprep.subr.mxu0 0.0
    %4769 = vmatpush1.msra.mxu0 0.0
    %4770 = vmatprep.subr.mxu0 0.0
    %4771 = vmatpush1.msra.mxu0 0.0
    %4772 = vmatprep.subr.mxu0 0.0
    %4773 = vmatpush1.msra.mxu0 0.0
    %4774 = vmatprep.subr.mxu0 0.0
    %4775 = vmatpush1.msra.mxu0 0.0
    %4776 = vmatprep.subr.mxu0 0.0
    %4777 = vmatpush1.msra.mxu0 0.0
    %4778 = vmatprep.subr.mxu0 0.0
    %4779 = vmatpush1.msra.mxu0 0.0
    %4780 = vmatprep.subr.mxu0 0.0
    %4781 = vmatpush1.msra.mxu0 0.0
    %4782 = vmatprep.subr.mxu0 0.0
    %4783 = vmatpush1.msra.mxu0 0.0
    %4784 = vmatprep.subr.mxu0 0.0
    %4785 = vmatpush1.msra.mxu0 0.0
    %4786 = vmatprep.subr.mxu0 0.0
    %4787 = vmatpush1.msra.mxu0 0.0
    %4788 = vmatprep.subr.mxu0 0.0
    %4789 = vmatpush1.msra.mxu0 0.0
    %4790 = vmatprep.subr.mxu0 0.0
    %4791 = vmatpush1.msra.mxu0 0.0
    %4792 = vmatprep.subr.mxu0 0.0
    %4793 = vmatpush1.msra.mxu0 0.0
    %4794 = vmatprep.subr.mxu0 0.0
    %4795 = vmatpush1.msra.mxu0 0.0
    %4796 = vmatprep.subr.mxu0 0.0
    %4797 = vmatpush1.msra.mxu0 0.0
    %4798 = vmatprep.subr.mxu0 0.0
    %4799 = vmatpush1.msra.mxu0 0.0
    %4800 = vmatprep.subr.mxu0 0.0
    %4801 = vmatpush1.msra.mxu0 0.0
    %4802 = vmatprep.subr.mxu0 0.0
    %4803 = vmatpush1.msra.mxu0 0.0
    %4804 = vmatprep.subr.mxu0 0.0
    %4805 = vmatpush1.msra.mxu0 0.0
    %4806 = vmatprep.subr.mxu0 0.0
    %4807 = vmatpush1.msra.mxu0 0.0
    %4808 = vmatprep.subr.mxu0 0.0
    %4809 = vmatpush1.msra.mxu0 0.0
    %4810 = vmatprep.subr.mxu0 0.0
    %4811 = vmatpush1.msra.mxu0 0.0
    %4812 = vmatprep.subr.mxu0 0.0
    %4813 = vmatpush1.msra.mxu0 0.0
    %4814 = vmatprep.subr.mxu0 0.0
    %4815 = vmatpush1.msra.mxu0 0.0
    %4816 = vmatprep.subr.mxu0 0.0
    %4817 = vmatpush1.msra.mxu0 0.0
    %4818 = vmatprep.subr.mxu0 0.0
    %4819 = vmatpush1.msra.mxu0 0.0
    %4820 = vmatprep.subr.mxu0 0.0
    %4821 = vmatpush1.msra.mxu0 0.0
    %4822 = vmatprep.subr.mxu0 0.0
    %4823 = vmatpush1.msra.mxu0 0.0
    %4824 = vmatprep.subr.mxu0 0.0
    %4825 = vmatpush1.msra.mxu0 0.0
    %4826 = vmatprep.subr.mxu0 0.0
    %4827 = vmatpush1.msra.mxu0 0.0
    %4828 = vmatprep.mubr.f32.mxu0 0.0
    %4829 = vmatmul.mubr.f32.gmra.mrb[0].mxu0 %v4595
    %v4830 = vpop.f32.mrb[0].mxu0
    %v4831 = vadd.f32 0.0, %v4830
    %v4832 = vpop.f32.mrb[0].mxu0
    %4833 = vdwg.mxu0
    %v4835 = vrot.slane %v4667, 1
    %4836 = vrot.lane.b32.xlu0 %v4835, 48
    %v4837 = vpop.permute.xlu0 %4836
    %vm4839 = vcmask 392192
    %v4840 = vsel %vm4839, %v4667, %v4837
    %v4842 = vrot.slane %v4749, 1
    %4843 = vrot.lane.b32.xlu0 %v4842, 48
    %v4844 = vpop.permute.xlu0 %4843
    %v4846 = vsel %vm4839, %v4749, %v4844
    %v4848 = vrot.slane %v4831, 1
    %4849 = vrot.lane.b32.xlu0 %v4848, 48
    %v4850 = vpop.permute.xlu0 %4849
    %v4852 = vsel %vm4839, %v4831, %v4850
    %4854 = vrot.lane.b32.xlu0 %v4846, 96
    %v4855 = vpop.permute.xlu0 %4854
    %vm4857 = vcmask 785408
    %v4858 = vsel %vm4857, %v4840, %v4855
    %v4859 = vpack.c.bf16 %v4858, %v4858
    %v4860 = vpack.c.bf16 %v4855, %v4855
    %v4861 = vld [vmem:[%s5] sm:$0xf]
    %v4862 = vld [vmem:[%s5 + $0x4] sm:$0xf]
    %v4863 = vld [vmem:[%s5 + $0x8] sm:$0xf]
    %v4864 = vld [vmem:[%s5 + $0xc] sm:$0xf]
    %v4865 = vld [vmem:[%s5 + $0x10] sm:$0xf]
    %v4866 = vld [vmem:[%s5 + $0x14] sm:$0xf]
    %v4867 = vld [vmem:[%s5 + $0x18] sm:$0xf]
    %v4868 = vld [vmem:[%s5 + $0x1c] sm:$0xf]
    %v4869 = vld [vmem:[%s5 + $0x20] sm:$0xf]
    %v4870 = vld [vmem:[%s5 + $0x24] sm:$0xf]
    %v4871 = vld [vmem:[%s5 + $0x28] sm:$0xf]
    %v4872 = vld [vmem:[%s5 + $0x2c] sm:$0xf]
    %v4873 = vld [vmem:[%s5 + $0x30] sm:$0xf]
    %v4874 = vld [vmem:[%s5 + $0x34] sm:$0xf]
    %v4875 = vld [vmem:[%s5 + $0x38] sm:$0xf]
    %v4876 = vld [vmem:[%s5 + $0x3c] sm:$0xf]
    %v4877 = vld [vmem:[%s5 + $0x40] sm:$0xf]
    %v4878 = vld [vmem:[%s5 + $0x44] sm:$0xf]
    %v4879 = vld [vmem:[%s5 + $0x48] sm:$0xf]
    %v4880 = vld [vmem:[%s5 + $0x4c] sm:$0xf]
    %v4881 = vld [vmem:[%s5 + $0x50] sm:$0xf]
    %v4882 = vld [vmem:[%s5 + $0x54] sm:$0xf]
    %v4883 = vld [vmem:[%s5 + $0x58] sm:$0xf]
    %v4884 = vld [vmem:[%s5 + $0x5c] sm:$0xf]
    %v4885 = vld [vmem:[%s6] sm:$0x1]
    %v4887 = vlaneseq
    %v4888 = vshrl.u32 %v4887, 7
    %v4889 = vsub.s32 0, %v4888
    %v4890 = vrot.slane %v4885, %v4889
    %v4916 = vunpack.c.l.b16 %v4861
    %v4917 = vunpack.c.l.b16 %v4862
    %v4918 = vunpack.c.l.b16 %v4863
    %v4919 = vunpack.c.l.b16 %v4864
    %v4920 = vunpack.c.l.b16 %v4865
    %v4921 = vunpack.c.l.b16 %v4866
    %v4922 = vunpack.c.l.b16 %v4867
    %v4923 = vunpack.c.l.b16 %v4868
    %v4924 = vunpack.c.l.b16 %v4869
    %v4925 = vunpack.c.l.b16 %v4870
    %v4926 = vunpack.c.l.b16 %v4871
    %v4927 = vunpack.c.l.b16 %v4872
    %v4928 = vunpack.c.l.b16 %v4873
    %v4929 = vunpack.c.l.b16 %v4874
    %v4930 = vunpack.c.l.b16 %v4875
    %v4931 = vunpack.c.l.b16 %v4876
    %v4932 = vunpack.c.l.b16 %v4877
    %v4933 = vunpack.c.l.b16 %v4878
    %v4934 = vunpack.c.l.b16 %v4879
    %v4935 = vunpack.c.l.b16 %v4880
    %v4936 = vunpack.c.l.b16 %v4881
    %v4937 = vunpack.c.l.b16 %v4882
    %v4938 = vunpack.c.l.b16 %v4883
    %v4939 = vunpack.c.l.b16 %v4884
    %v4940 = vpack.c.b16 %v4917, %v4916
    %v4941 = vpack.c.b16 %v4919, %v4918
    %v4942 = vpack.c.b16 %v4921, %v4920
    %v4943 = vpack.c.b16 %v4923, %v4922
    %v4944 = vpack.c.b16 %v4925, %v4924
    %v4945 = vpack.c.b16 %v4927, %v4926
    %v4946 = vpack.c.b16 %v4929, %v4928
    %v4947 = vpack.c.b16 %v4931, %v4930
    %v4948 = vpack.c.b16 %v4933, %v4932
    %v4949 = vpack.c.b16 %v4935, %v4934
    %v4950 = vpack.c.b16 %v4937, %v4936
    %v4951 = vpack.c.b16 %v4939, %v4938
    %vm4964 = vcmask 523264
    %v4966 = vsel %vm4964, %v4860, 0
    %4968 = vmatprep.subr.bf16.mxu0 0
    %4969 = vmatpush1.bf16.msra.mxu0 %v4940
    %4970 = vmatprep.subr.bf16.mxu0 0
    %4971 = vmatpush1.bf16.msra.mxu0 %v4941
    %4972 = vmatprep.subr.bf16.mxu0 0
    %4973 = vmatpush1.bf16.msra.mxu0 %v4942
    %4974 = vmatprep.subr.bf16.mxu0 0
    %4975 = vmatpush1.bf16.msra.mxu0 %v4943
    %4976 = vmatprep.subr.bf16.mxu0 0
    %4977 = vmatpush1.bf16.msra.mxu0 %v4944
    %4978 = vmatprep.subr.bf16.mxu0 0
    %4979 = vmatpush1.bf16.msra.mxu0 %v4945
    %4980 = vmatprep.subr.bf16.mxu0 0
    %4981 = vmatpush1.bf16.msra.mxu0 %v4946
    %4982 = vmatprep.subr.bf16.mxu0 0
    %4983 = vmatpush1.bf16.msra.mxu0 %v4947
    %4984 = vmatprep.subr.bf16.mxu0 0
    %4985 = vmatpush1.bf16.msra.mxu0 %v4948
    %4986 = vmatprep.subr.bf16.mxu0 0
    %4987 = vmatpush1.bf16.msra.mxu0 %v4949
    %4988 = vmatprep.subr.bf16.mxu0 0
    %4989 = vmatpush1.bf16.msra.mxu0 %v4950
    %4990 = vmatprep.subr.bf16.mxu0 0
    %4991 = vmatpush1.bf16.msra.mxu0 %v4951
    %4992 = vmatprep.subr.bf16.mxu0 0
    %4993 = vmatpush1.bf16.msra.mxu0 0
    %4994 = vmatprep.subr.bf16.mxu0 0
    %4995 = vmatpush1.bf16.msra.mxu0 0
    %4996 = vmatprep.subr.bf16.mxu0 0
    %4997 = vmatpush1.bf16.msra.mxu0 0
    %4998 = vmatprep.subr.bf16.mxu0 0
    %4999 = vmatpush1.bf16.msra.mxu0 0
    %5000 = vmatprep.mubr.bf16.mxu0 %v4966
    %5001 = vmatmul.mubr.bf16.gmra.mrb[0].mxu0 %v4859
    %v5002 = vpop.f32.mrb[0].mxu0
    %v5003 = vadd.f32 %v4890, %v5002
    %v5004 = vpop.f32.mrb[0].mxu0
    %v5005 = vpop.f32.mrb[0].mxu0
    %v5006 = vpop.f32.mrb[0].mxu0
    %5007 = vdwg.mxu0
    %vm5008 = vcmp.gt.f32.partialorder %v5003, 0.0
    %5009 = vset.pattern.permute.xlu0 2
    %5010 = vperm.xlu0 %5009, %v309
    %v5011 = vpop.permute.xlu0 %5010
    %v5013 = vmul.f32 %v5011, %v5003
    %v5014 = vsel %vm5008, %v5003, %v5013
    %5016 = vrot.lane.b32.xlu0 %v4852, 96
    %v5017 = vpop.permute.xlu0 %5016
    %v5019 = vsel %vm4857, %v4846, %v5017
    %v5020 = vpack.c.bf16 %v5019, %v5019
    %v5021 = vpack.c.bf16 %v5017, %v5017
    %v5023 = vsel %vm4964, %v5021, 0
    %5025 = vmatprep.subr.bf16.mxu0 0
    %5026 = vmatpush1.bf16.msra.mxu0 %v4940
    %5027 = vmatprep.subr.bf16.mxu0 0
    %5028 = vmatpush1.bf16.msra.mxu0 %v4941
    %5029 = vmatprep.subr.bf16.mxu0 0
    %5030 = vmatpush1.bf16.msra.mxu0 %v4942
    %5031 = vmatprep.subr.bf16.mxu0 0
    %5032 = vmatpush1.bf16.msra.mxu0 %v4943
    %5033 = vmatprep.subr.bf16.mxu0 0
    %5034 = vmatpush1.bf16.msra.mxu0 %v4944
    %5035 = vmatprep.subr.bf16.mxu0 0
    %5036 = vmatpush1.bf16.msra.mxu0 %v4945
    %5037 = vmatprep.subr.bf16.mxu0 0
    %5038 = vmatpush1.bf16.msra.mxu0 %v4946
    %5039 = vmatprep.subr.bf16.mxu0 0
    %5040 = vmatpush1.bf16.msra.mxu0 %v4947
    %5041 = vmatprep.subr.bf16.mxu0 0
    %5042 = vmatpush1.bf16.msra.mxu0 %v4948
    %5043 = vmatprep.subr.bf16.mxu0 0
    %5044 = vmatpush1.bf16.msra.mxu0 %v4949
    %5045 = vmatprep.subr.bf16.mxu0 0
    %5046 = vmatpush1.bf16.msra.mxu0 %v4950
    %5047 = vmatprep.subr.bf16.mxu0 0
    %5048 = vmatpush1.bf16.msra.mxu0 %v4951
    %5049 = vmatprep.subr.bf16.mxu0 0
    %5050 = vmatpush1.bf16.msra.mxu0 0
    %5051 = vmatprep.subr.bf16.mxu0 0
    %5052 = vmatpush1.bf16.msra.mxu0 0
    %5053 = vmatprep.subr.bf16.mxu0 0
    %5054 = vmatpush1.bf16.msra.mxu0 0
    %5055 = vmatprep.subr.bf16.mxu0 0
    %5056 = vmatpush1.bf16.msra.mxu0 0
    %5057 = vmatprep.mubr.bf16.mxu0 %v5023
    %5058 = vmatmul.mubr.bf16.gmra.mrb[0].mxu0 %v5020
    %v5059 = vpop.f32.mrb[0].mxu0
    %v5060 = vadd.f32 %v4890, %v5059
    %v5061 = vpop.f32.mrb[0].mxu0
    %v5062 = vpop.f32.mrb[0].mxu0
    %v5063 = vpop.f32.mrb[0].mxu0
    %5064 = vdwg.mxu0
    %vm5065 = vcmp.gt.f32.partialorder %v5060, 0.0
    %v5066 = vmul.f32 %v5011, %v5060
    %v5067 = vsel %vm5065, %v5060, %v5066
    %v5069 = vrot.slane %v5014, 1
    %5070 = vrot.lane.b32.xlu0 %v5069, 64
    %v5071 = vpop.permute.xlu0 %5070
    %v5074 = vrot.slane %v5067, 1
    %5075 = vrot.lane.b32.xlu0 %v5074, 64
    %v5076 = vpop.permute.xlu0 %5075
    %v5078 = vsel %vm4964, %v5014, %v5071
    %v5079 = vsel %vm4964, %v5067, %v5076
    %v5080 = vpack.c.bf16 %v5078, %v5078
    %v5081 = vpack.c.bf16 %v5079, %v5079
    %v5082 = vld [vmem:[%s7] sm:$0xf]
    %v5083 = vld [vmem:[%s7 + $0x4] sm:$0xf]
    %v5084 = vld [vmem:[%s7 + $0x8] sm:$0xf]
    %v5085 = vld [vmem:[%s7 + $0xc] sm:$0xf]
    %v5086 = vld [vmem:[%s7 + $0x10] sm:$0xf]
    %v5087 = vld [vmem:[%s7 + $0x14] sm:$0xf]
    %v5088 = vld [vmem:[%s7 + $0x18] sm:$0xf]
    %v5089 = vld [vmem:[%s7 + $0x1c] sm:$0xf]
    %v5090 = vld [vmem:[%s7 + $0x20] sm:$0xf]
    %v5091 = vld [vmem:[%s7 + $0x24] sm:$0xf]
    %v5092 = vld [vmem:[%s7 + $0x28] sm:$0xf]
    %v5093 = vld [vmem:[%s7 + $0x2c] sm:$0xf]
    %v5094 = vld [vmem:[%s7 + $0x30] sm:$0xf]
    %v5095 = vld [vmem:[%s7 + $0x34] sm:$0xf]
    %v5096 = vld [vmem:[%s7 + $0x38] sm:$0xf]
    %v5097 = vld [vmem:[%s7 + $0x3c] sm:$0xf]
    %v5098 = vld [vmem:[%s7 + $0x40] sm:$0xf]
    %v5099 = vld [vmem:[%s7 + $0x44] sm:$0xf]
    %v5100 = vld [vmem:[%s7 + $0x48] sm:$0xf]
    %v5101 = vld [vmem:[%s7 + $0x4c] sm:$0xf]
    %v5102 = vld [vmem:[%s7 + $0x50] sm:$0xf]
    %v5103 = vld [vmem:[%s7 + $0x54] sm:$0xf]
    %v5104 = vld [vmem:[%s7 + $0x58] sm:$0xf]
    %v5105 = vld [vmem:[%s7 + $0x5c] sm:$0xf]
    %v5106 = vld [vmem:[%s7 + $0x60] sm:$0xf]
    %v5107 = vld [vmem:[%s7 + $0x64] sm:$0xf]
    %v5108 = vld [vmem:[%s7 + $0x68] sm:$0xf]
    %v5109 = vld [vmem:[%s7 + $0x6c] sm:$0xf]
    %v5110 = vld [vmem:[%s7 + $0x70] sm:$0xf]
    %v5111 = vld [vmem:[%s7 + $0x74] sm:$0xf]
    %v5112 = vld [vmem:[%s7 + $0x78] sm:$0xf]
    %v5113 = vld [vmem:[%s7 + $0x7c] sm:$0xf]
    %v5114 = vld [vmem:[%s8] sm:$0x1]
    %v5147 = vunpack.c.l.b16 %v5082
    %v5148 = vunpack.c.l.b16 %v5083
    %v5149 = vunpack.c.l.b16 %v5084
    %v5150 = vunpack.c.l.b16 %v5085
    %v5151 = vunpack.c.l.b16 %v5086
    %v5152 = vunpack.c.l.b16 %v5087
    %v5153 = vunpack.c.l.b16 %v5088
    %v5154 = vunpack.c.l.b16 %v5089
    %v5155 = vunpack.c.l.b16 %v5090
    %v5156 = vunpack.c.l.b16 %v5091
    %v5157 = vunpack.c.l.b16 %v5092
    %v5158 = vunpack.c.l.b16 %v5093
    %v5159 = vunpack.c.l.b16 %v5094
    %v5160 = vunpack.c.l.b16 %v5095
    %v5161 = vunpack.c.l.b16 %v5096
    %v5162 = vunpack.c.l.b16 %v5097
    %v5163 = vunpack.c.l.b16 %v5098
    %v5164 = vunpack.c.l.b16 %v5099
    %v5165 = vunpack.c.l.b16 %v5100
    %v5166 = vunpack.c.l.b16 %v5101
    %v5167 = vunpack.c.l.b16 %v5102
    %v5168 = vunpack.c.l.b16 %v5103
    %v5169 = vunpack.c.l.b16 %v5104
    %v5170 = vunpack.c.l.b16 %v5105
    %v5171 = vunpack.c.l.b16 %v5106
    %v5172 = vunpack.c.l.b16 %v5107
    %v5173 = vunpack.c.l.b16 %v5108
    %v5174 = vunpack.c.l.b16 %v5109
    %v5175 = vunpack.c.l.b16 %v5110
    %v5176 = vunpack.c.l.b16 %v5111
    %v5177 = vunpack.c.l.b16 %v5112
    %v5178 = vunpack.c.l.b16 %v5113
    %v5179 = vpack.c.b16 %v5148, %v5147
    %v5180 = vpack.c.b16 %v5150, %v5149
    %v5181 = vpack.c.b16 %v5152, %v5151
    %v5182 = vpack.c.b16 %v5154, %v5153
    %v5183 = vpack.c.b16 %v5156, %v5155
    %v5184 = vpack.c.b16 %v5158, %v5157
    %v5185 = vpack.c.b16 %v5160, %v5159
    %v5186 = vpack.c.b16 %v5162, %v5161
    %v5187 = vpack.c.b16 %v5164, %v5163
    %v5188 = vpack.c.b16 %v5166, %v5165
    %v5189 = vpack.c.b16 %v5168, %v5167
    %v5190 = vpack.c.b16 %v5170, %v5169
    %v5191 = vpack.c.b16 %v5172, %v5171
    %v5192 = vpack.c.b16 %v5174, %v5173
    %v5193 = vpack.c.b16 %v5176, %v5175
    %v5194 = vpack.c.b16 %v5178, %v5177
    %5211 = vmatprep.subr.bf16.mxu0 0
    %5212 = vmatpush1.bf16.msra.mxu0 %v5179
    %5213 = vmatprep.subr.bf16.mxu0 0
    %5214 = vmatpush1.bf16.msra.mxu0 %v5180
    %5215 = vmatprep.subr.bf16.mxu0 0
    %5216 = vmatpush1.bf16.msra.mxu0 %v5181
    %5217 = vmatprep.subr.bf16.mxu0 0
    %5218 = vmatpush1.bf16.msra.mxu0 %v5182
    %5219 = vmatprep.subr.bf16.mxu0 0
    %5220 = vmatpush1.bf16.msra.mxu0 %v5183
    %5221 = vmatprep.subr.bf16.mxu0 0
    %5222 = vmatpush1.bf16.msra.mxu0 %v5184
    %5223 = vmatprep.subr.bf16.mxu0 0
    %5224 = vmatpush1.bf16.msra.mxu0 %v5185
    %5225 = vmatprep.subr.bf16.mxu0 0
    %5226 = vmatpush1.bf16.msra.mxu0 %v5186
    %5227 = vmatprep.subr.bf16.mxu0 0
    %5228 = vmatpush1.bf16.msra.mxu0 %v5187
    %5229 = vmatprep.subr.bf16.mxu0 0
    %5230 = vmatpush1.bf16.msra.mxu0 %v5188
    %5231 = vmatprep.subr.bf16.mxu0 0
    %5232 = vmatpush1.bf16.msra.mxu0 %v5189
    %5233 = vmatprep.subr.bf16.mxu0 0
    %5234 = vmatpush1.bf16.msra.mxu0 %v5190
    %5235 = vmatprep.subr.bf16.mxu0 0
    %5236 = vmatpush1.bf16.msra.mxu0 %v5191
    %5237 = vmatprep.subr.bf16.mxu0 0
    %5238 = vmatpush1.bf16.msra.mxu0 %v5192
    %5239 = vmatprep.subr.bf16.mxu0 0
    %5240 = vmatpush1.bf16.msra.mxu0 %v5193
    %5241 = vmatprep.subr.bf16.mxu0 0
    %5242 = vmatpush1.bf16.msra.mxu0 %v5194
    %5243 = vmatprep.mubr.bf16.mxu0 %v5081
    %5244 = vmatmul.mubr.bf16.gmra.mrb[0].mxu0 %v5080
    %v5245 = vpop.f32.mrb[0].mxu0
    %v5246 = vadd.f32 %v5114, %v5245
    %v5247 = vpop.f32.mrb[0].mxu0
    %v5248 = vpop.f32.mrb[0].mxu0
    %v5249 = vpop.f32.mrb[0].mxu0
    %5250 = vdwg.mxu0
    %vm5251 = vcmp.gt.f32.partialorder %v5246, 0.0
    %5252 = vset.pattern.permute.xlu0 3
    %5253 = vperm.xlu0 %5252, %v48
    %v5254 = vpop.permute.xlu0 %5253
    %v5256 = vlaneseq
    %v5257 = vshrl.u32 %v5256, 7
    %v5258 = vsub.s32 0, %v5257
    %v5259 = vrot.slane %v5254, %v5258
    %v5260 = vmul.f32 %v5259, %v5246
    %v5261 = vsel %vm5251, %v5246, %v5260
    %v5262 = vpack.c.bf16 %v5261, %v5261
    %v5263 = vld [vmem:[%s9] sm:$0xf]
    %v5264 = vld [vmem:[%s9 + $0x4] sm:$0xf]
    %v5265 = vld [vmem:[%s9 + $0x8] sm:$0xf]
    %v5266 = vld [vmem:[%s9 + $0xc] sm:$0xf]
    %v5267 = vld [vmem:[%s9 + $0x10] sm:$0xf]
    %v5268 = vld [vmem:[%s9 + $0x14] sm:$0xf]
    %v5269 = vld [vmem:[%s9 + $0x18] sm:$0xf]
    %v5270 = vld [vmem:[%s9 + $0x1c] sm:$0xf]
    %v5271 = vld [vmem:[%s9 + $0x20] sm:$0xf]
    %v5272 = vld [vmem:[%s9 + $0x24] sm:$0xf]
    %v5273 = vld [vmem:[%s9 + $0x28] sm:$0xf]
    %v5274 = vld [vmem:[%s9 + $0x2c] sm:$0xf]
    %v5275 = vld [vmem:[%s9 + $0x30] sm:$0xf]
    %v5276 = vld [vmem:[%s9 + $0x34] sm:$0xf]
    %v5277 = vld [vmem:[%s9 + $0x38] sm:$0xf]
    %v5278 = vld [vmem:[%s9 + $0x3c] sm:$0xf]
    %v5279 = vld [vmem:[%s10] sm:$0x1]
    %v5296 = vunpack.c.l.b16 %v5263
    %v5297 = vunpack.c.l.b16 %v5264
    %v5298 = vunpack.c.l.b16 %v5265
    %v5299 = vunpack.c.l.b16 %v5266
    %v5300 = vunpack.c.l.b16 %v5267
    %v5301 = vunpack.c.l.b16 %v5268
    %v5302 = vunpack.c.l.b16 %v5269
    %v5303 = vunpack.c.l.b16 %v5270
    %v5304 = vunpack.c.l.b16 %v5271
    %v5305 = vunpack.c.l.b16 %v5272
    %v5306 = vunpack.c.l.b16 %v5273
    %v5307 = vunpack.c.l.b16 %v5274
    %v5308 = vunpack.c.l.b16 %v5275
    %v5309 = vunpack.c.l.b16 %v5276
    %v5310 = vunpack.c.l.b16 %v5277
    %v5311 = vunpack.c.l.b16 %v5278
    %v5312 = vpack.c.b16 %v5297, %v5296
    %v5313 = vpack.c.b16 %v5299, %v5298
    %v5314 = vpack.c.b16 %v5301, %v5300
    %v5315 = vpack.c.b16 %v5303, %v5302
    %v5316 = vpack.c.b16 %v5305, %v5304
    %v5317 = vpack.c.b16 %v5307, %v5306
    %v5318 = vpack.c.b16 %v5309, %v5308
    %v5319 = vpack.c.b16 %v5311, %v5310
    %5328 = vmatprep.subr.bf16.mxu0 0
    %5329 = vmatpush1.bf16.msra.mxu0 %v5312
    %5330 = vmatprep.subr.bf16.mxu0 0
    %5331 = vmatpush1.bf16.msra.mxu0 %v5313
    %5332 = vmatprep.subr.bf16.mxu0 0
    %5333 = vmatpush1.bf16.msra.mxu0 %v5314
    %5334 = vmatprep.subr.bf16.mxu0 0
    %5335 = vmatpush1.bf16.msra.mxu0 %v5315
    %5336 = vmatprep.subr.bf16.mxu0 0
    %5337 = vmatpush1.bf16.msra.mxu0 %v5316
    %5338 = vmatprep.subr.bf16.mxu0 0
    %5339 = vmatpush1.bf16.msra.mxu0 %v5317
    %5340 = vmatprep.subr.bf16.mxu0 0
    %5341 = vmatpush1.bf16.msra.mxu0 %v5318
    %5342 = vmatprep.subr.bf16.mxu0 0
    %5343 = vmatpush1.bf16.msra.mxu0 %v5319
    %5344 = vmatprep.subr.bf16.mxu0 0
    %5345 = vmatpush1.bf16.msra.mxu0 0
    %5346 = vmatprep.subr.bf16.mxu0 0
    %5347 = vmatpush1.bf16.msra.mxu0 0
    %5348 = vmatprep.subr.bf16.mxu0 0
    %5349 = vmatpush1.bf16.msra.mxu0 0
    %5350 = vmatprep.subr.bf16.mxu0 0
    %5351 = vmatpush1.bf16.msra.mxu0 0
    %5352 = vmatprep.subr.bf16.mxu0 0
    %5353 = vmatpush1.bf16.msra.mxu0 0
    %5354 = vmatprep.subr.bf16.mxu0 0
    %5355 = vmatpush1.bf16.msra.mxu0 0
    %5356 = vmatprep.subr.bf16.mxu0 0
    %5357 = vmatpush1.bf16.msra.mxu0 0
    %5358 = vmatprep.subr.bf16.mxu0 0
    %5359 = vmatpush1.bf16.msra.mxu0 0
    %5360 = vmatprep.mubr.bf16.mxu0 0
    %5361 = vmatmul.mubr.bf16.gmra.mrb[0].mxu0 %v5262
    %v5362 = vpop.f32.mrb[0].mxu0
    %v5363 = vadd.f32 %v5279, %v5362
    %v5364 = vpop.f32.mrb[0].mxu0
    %v5365 = vpop.f32.mrb[0].mxu0
    %v5366 = vpop.f32.mrb[0].mxu0
    %5367 = vdwg.mxu0
    %v5368 = vsub.f32 0.0, %v5363
    %v5369 = vmul.f32 %v5368, 1.442695
    %v5370 = vpow.pop %v5369
    %v5371 = vadd.f32 %v5370, 1.0
    %v5372 = vrcp.pop %v5371
    %v5373 = vmul.f32 1.0, %v5372
    %vm5374 = vcmask 7168
    %v5375 = vsel %vm5374, %v5373, %v5363
    %s5376 = scalar_lea.vmem %s14, %s50
    %vm5377 = vcmask 32768
    %5378 = vst.msk [vmem:[%s5376] sm:$0x1] %vm5377, %v5375
  $region62: #{rnet_forward.1} parent=0 // loop_footer
    %s54 = sadd.s32 1, %s50
  $region63: #{rnet_forward.1} parent=0 // loop_footer_branch
    %49 = sbr.rel target = $region59
  $region64: #{rnet_forward.1} parent=0 // loop_exit
    _
  // Predicated region
  $region65: #{rnet_forward.1} parent=0 // pred_check
    _
  $region66: #{rnet_forward.1} parent=0 // pred_check_branch
    %5380 = sbr.rel (0) target = $region68
  $region67: #{rnet_forward.1} parent=0 // pred_region
    _
  $region68: #{rnet_forward.1} parent=0 // pred_fallthru
    _
  // Predicated region
  $region69: #{rnet_forward.1} parent=0 // pred_check
    _
  $region70: #{rnet_forward.1} parent=0 // pred_check_branch
    %5382 = sbr.rel (0) target = $region72
  $region71: #{rnet_forward.1} parent=0 // pred_region
    _
  $region72: #{rnet_forward.1} parent=0 // pred_fallthru
    _

</llo_original>
